<compile_context>
chip_gen: v5e
topology: v5e:2x2
jax: 0.10.0
libtpu: 0.0.40
codegen_flags: <defaults>
</compile_context>

<pallas_src>
import jax
import jax.numpy as jnp
from jax.experimental import pallas as pl
from jax.experimental.pallas import tpu as pltpu

NEG_SLOPE = 0.01  # torch.nn.LeakyReLU default
HIDDEN = 256
IN_DIM = 30
N_HIDDEN_LAYERS = 6
BLOCK_B = 256  # one 256-row block: fills MXU M on v6e/v7x, single grid step for B<=256


def _leaky_relu(x):
    return jnp.where(x > 0, x, NEG_SLOPE * x)


def qlearning_mlp_kernel(x_ref, w0_ref, wh_ref, wout_ref, b_ref, o_ref):
    # ---- Layer 0: Linear(30, 256) + LeakyReLU (bf16 matmul, f32 accumulate) ----
    x = x_ref[...].astype(jnp.bfloat16)
    h = jnp.dot(x, w0_ref[...], preferred_element_type=jnp.float32)
    h = _leaky_relu(h + b_ref[0:1, :])

    # ---- Hidden layers 1..6: Linear(256,256) + (Dropout=identity) + LeakyReLU ----
    # Fixed trip count of 6: static unrolled loop over the packed (6,256,256)
    # weight stack and (8,256) bias stack. Elementwise kept in f32 (v5e-safe).
    for l in range(N_HIDDEN_LAYERS):
        h = jnp.dot(h.astype(jnp.bfloat16), wh_ref[l],
                    preferred_element_type=jnp.float32)
        h = _leaky_relu(h + b_ref[l + 1:l + 2, :])

    # ---- Output layer: Linear(256, 1) + Sigmoid ----
    # N=1 matmul done as a VPU multiply + lane reduce (keeps MXU free, avoids
    # the (256,1) weight tile). Result is written lane-dense as (1, block_b).
    logits = jnp.sum(h * wout_ref[...], axis=-1, keepdims=True) + b_ref[7:8, 0:1]
    o_ref[...] = jax.nn.sigmoid(logits).reshape(1, -1).astype(o_ref.dtype)


def pack_params(weights, biases):
    """weights[i]: (in_i, out_i) f32, biases[i]: (1, out_i) f32  (PyTorch layout^T)."""
    w0 = weights[0].astype(jnp.bfloat16)                                 # (30, 256)
    wh = jnp.stack(weights[1:1 + N_HIDDEN_LAYERS]).astype(jnp.bfloat16)  # (6,256,256)
    wout = weights[-1].T.astype(jnp.float32)                             # (1, 256)
    b_all = jnp.concatenate(
        [biases[0]]                                                      # row 0
        + list(biases[1:1 + N_HIDDEN_LAYERS])                            # rows 1..6
        + [jnp.pad(biases[-1], ((0, 0), (0, HIDDEN - 1)))],              # row 7: b_out at [7,0]
        axis=0).astype(jnp.float32)                                      # (8, 256)
    return w0, wh, wout, b_all


def qlearning_forward(x, w0, wh, wout, b_all, *, block_b=BLOCK_B):
    """x: (B, 30) float32 -> (B, 1) float32 (sigmoid scores)."""
    B = x.shape[0]
    Bp = ((B + block_b - 1) // block_b) * block_b
    if Bp != B:
        x = jnp.pad(x, ((0, Bp - B), (0, 0)))
    num_blocks = Bp // block_b

    # Advisory cost hint: lets XLA overlap neighbors with this latency-bound call.
    flops = 2 * Bp * (IN_DIM * HIDDEN + N_HIDDEN_LAYERS * HIDDEN * HIDDEN + HIDDEN)
    bytes_accessed = (Bp * IN_DIM * 4                    # x (f32)
                      + IN_DIM * HIDDEN * 2              # w0 (bf16)
                      + N_HIDDEN_LAYERS * HIDDEN * HIDDEN * 2  # wh (bf16)
                      + HIDDEN * 4                       # wout (f32)
                      + 8 * HIDDEN * 4                   # biases (f32)
                      + Bp * 4)                          # output (f32)
    cost = pl.CostEstimate(flops=flops, transcendentals=Bp,
                           bytes_accessed=bytes_accessed)

    out = pl.pallas_call(
        qlearning_mlp_kernel,
        out_shape=jax.ShapeDtypeStruct((1, Bp), jnp.float32),   # lane-dense output
        grid_spec=pltpu.PrefetchScalarGridSpec(
            num_scalar_prefetch=0,
            grid=(num_blocks,),
            in_specs=[
                pl.BlockSpec((block_b, IN_DIM), lambda i: (i, 0)),           # x tile
                pl.BlockSpec((IN_DIM, HIDDEN), lambda i: (0, 0)),            # w0 (resident)
                pl.BlockSpec((N_HIDDEN_LAYERS, HIDDEN, HIDDEN),
                             lambda i: (0, 0, 0)),                           # packed hidden W
                pl.BlockSpec((1, HIDDEN), lambda i: (0, 0)),                 # w_out (row)
                pl.BlockSpec((8, HIDDEN), lambda i: (0, 0)),                 # packed biases
            ],
            out_specs=pl.BlockSpec((1, block_b), lambda i: (0, i)),
        ),
        compiler_params=pltpu.CompilerParams(
            dimension_semantics=("parallel",),
            vmem_limit_bytes=8 << 20,
        ),
        cost_estimate=cost,
    )(x, w0, wh, wout, b_all)

    return out.reshape(Bp, 1)[:B]


def init_params(key):
    """Deterministic PyTorch-style Linear init: U(-1/sqrt(fan_in), 1/sqrt(fan_in))."""
    layer_dims = [(IN_DIM, HIDDEN)] + [(HIDDEN, HIDDEN)] * N_HIDDEN_LAYERS + [(HIDDEN, 1)]
    weights, biases = [], []
    for (fan_in, fan_out) in layer_dims:
        key, kw, kb = jax.random.split(key, 3)
        bound = 1.0 / jnp.sqrt(jnp.float32(fan_in))
        w = jax.random.uniform(kw, (fan_in, fan_out), jnp.float32, -bound, bound)
        b = jax.random.uniform(kb, (1, fan_out), jnp.float32, -bound, bound)
        weights.append(w)
        biases.append(b)
    return weights, biases


def reference_forward(x, weights, biases):
    """Pure-JAX reference mirroring the kernel's numerics (bf16 matmuls, f32 accum)."""
    h = jnp.dot(x.astype(jnp.bfloat16), weights[0].astype(jnp.bfloat16),
                preferred_element_type=jnp.float32) + biases[0]
    h = _leaky_relu(h)
    for l in range(1, 1 + N_HIDDEN_LAYERS):
        h = jnp.dot(h.astype(jnp.bfloat16), weights[l].astype(jnp.bfloat16),
                    preferred_element_type=jnp.float32) + biases[l]
        h = _leaky_relu(h)
    logits = jnp.sum(h * weights[-1].T.astype(jnp.float32),
                     axis=-1, keepdims=True) + biases[-1]
    return jax.nn.sigmoid(logits)


if __name__ == "__main__":
    key = jax.random.PRNGKey(0)
    key, kx = jax.random.split(key)

    # 20 states x 12 candidate actions scored together (feature dim 30 = obs + one-hot
    # action): batching amortizes the ~800 KiB weight DMA and the call launch.
    B = 20 * 12
    x = jax.random.normal(kx, (B, IN_DIM), jnp.float32)

    weights, biases = init_params(key)
    w0, wh, wout, b_all = pack_params(weights, biases)

    out = qlearning_forward(x, w0, wh, wout, b_all)
    out = jax.block_until_ready(out)

    ref = reference_forward(x, weights, biases)
    assert out.shape == (B, 1), out.shape
    assert jnp.allclose(out, ref, atol=2e-3, rtol=2e-3), (
        "mismatch vs reference: max abs err = "
        f"{float(jnp.max(jnp.abs(out - ref)))}")

    print("KERNEL_OK")
</pallas_src>

<mosaic_0001>
module attributes {stable_mosaic.version = 11 : i64} {
  func.func @qlearning_mlp_kernel(%arg0: i32, %arg1: memref<256x30xf32, #tpu.memory_space<vmem>>, %arg2: memref<30x256xbf16, #tpu.memory_space<vmem>>, %arg3: memref<6x256x256xbf16, #tpu.memory_space<vmem>>, %arg4: memref<1x256xf32, #tpu.memory_space<vmem>>, %arg5: memref<8x256xf32, #tpu.memory_space<vmem>>, %arg6: memref<1x256xf32, #tpu.memory_space<vmem>>) attributes {dimension_semantics = [#tpu.dimension_semantics<parallel>], iteration_bounds = array<i64: 1>, scalar_prefetch = 0 : i64, scratch_operands = 0 : i64, tpu.core_type = #tpu.core_type<tc>, window_params = [{transform_indices = @transform_0, window_bounds = array<i64: 256, 30>}, {pipeline_mode = #tpu.pipeline_mode<synchronous>, transform_indices = @transform_1, window_bounds = array<i64: 30, 256>}, {pipeline_mode = #tpu.pipeline_mode<synchronous>, transform_indices = @transform_2, window_bounds = array<i64: 6, 256, 256>}, {pipeline_mode = #tpu.pipeline_mode<synchronous>, transform_indices = @transform_3, window_bounds = array<i64: 1, 256>}, {pipeline_mode = #tpu.pipeline_mode<synchronous>, transform_indices = @transform_4, window_bounds = array<i64: 8, 256>}, {transform_indices = @transform_5, window_bounds = array<i64: 1, 256>}]} {
    %c0 = arith.constant 0 : index
    %c0_0 = arith.constant 0 : index
    %0 = vector.load %arg1[%c0, %c0_0] : memref<256x30xf32, #tpu.memory_space<vmem>>, vector<256x30xf32>
    %1 = arith.truncf %0 : vector<256x30xf32> to vector<256x30xbf16>
    %c0_1 = arith.constant 0 : index
    %c0_2 = arith.constant 0 : index
    %2 = vector.load %arg2[%c0_1, %c0_2] : memref<30x256xbf16, #tpu.memory_space<vmem>>, vector<30x256xbf16>
    %cst = arith.constant dense<0.000000e+00> : vector<256x256xf32>
    %3 = tpu.matmul %1, %2, %cst {dimension_numbers = #tpu.dot_dimension_numbers<[1], [0], [0], [1], [0, 0, 1, 1], [], []>} : vector<256x30xbf16>, vector<30x256xbf16>, vector<256x256xf32> -> vector<256x256xf32>
    %c0_3 = arith.constant 0 : index
    %c0_4 = arith.constant 0 : index
    %4 = vector.load %arg5[%c0_3, %c0_4] : memref<8x256xf32, #tpu.memory_space<vmem>>, vector<1x256xf32>
    %5 = vector.broadcast %4 : vector<1x256xf32> to vector<256x256xf32>
    %6 = arith.addf %3, %5 : vector<256x256xf32>
    %cst_5 = arith.constant 0.000000e+00 : f32
    %7 = vector.broadcast %cst_5 : f32 to vector<256x256xf32>
    %8 = arith.cmpf ogt, %6, %7 : vector<256x256xf32>
    %cst_6 = arith.constant 0.00999999977 : f32
    %9 = vector.broadcast %cst_6 : f32 to vector<256x256xf32>
    %10 = arith.mulf %9, %6 : vector<256x256xf32>
    %11 = arith.select %8, %6, %10 : vector<256x256xi1>, vector<256x256xf32>
    %12 = arith.truncf %11 : vector<256x256xf32> to vector<256x256xbf16>
    %c0_7 = arith.constant 0 : index
    %c0_8 = arith.constant 0 : index
    %c0_9 = arith.constant 0 : index
    %13 = vector.load %arg3[%c0_7, %c0_8, %c0_9] : memref<6x256x256xbf16, #tpu.memory_space<vmem>>, vector<1x256x256xbf16>
    %14 = vector.shape_cast %13 : vector<1x256x256xbf16> to vector<256x256xbf16>
    %cst_10 = arith.constant dense<0.000000e+00> : vector<256x256xf32>
    %15 = tpu.matmul %12, %14, %cst_10 {dimension_numbers = #tpu.dot_dimension_numbers<[1], [0], [0], [1], [0, 0, 1, 1], [], []>} : vector<256x256xbf16>, vector<256x256xbf16>, vector<256x256xf32> -> vector<256x256xf32>
    %c1 = arith.constant 1 : index
    %c0_11 = arith.constant 0 : index
    %16 = vector.load %arg5[%c1, %c0_11] : memref<8x256xf32, #tpu.memory_space<vmem>>, vector<1x256xf32>
    %17 = vector.broadcast %16 : vector<1x256xf32> to vector<256x256xf32>
    %18 = arith.addf %15, %17 : vector<256x256xf32>
    %cst_12 = arith.constant 0.000000e+00 : f32
    %19 = vector.broadcast %cst_12 : f32 to vector<256x256xf32>
    %20 = arith.cmpf ogt, %18, %19 : vector<256x256xf32>
    %cst_13 = arith.constant 0.00999999977 : f32
    %21 = vector.broadcast %cst_13 : f32 to vector<256x256xf32>
    %22 = arith.mulf %21, %18 : vector<256x256xf32>
    %23 = arith.select %20, %18, %22 : vector<256x256xi1>, vector<256x256xf32>
    %24 = arith.truncf %23 : vector<256x256xf32> to vector<256x256xbf16>
    %c1_14 = arith.constant 1 : index
    %c0_15 = arith.constant 0 : index
    %c0_16 = arith.constant 0 : index
    %25 = vector.load %arg3[%c1_14, %c0_15, %c0_16] : memref<6x256x256xbf16, #tpu.memory_space<vmem>>, vector<1x256x256xbf16>
    %26 = vector.shape_cast %25 : vector<1x256x256xbf16> to vector<256x256xbf16>
    %cst_17 = arith.constant dense<0.000000e+00> : vector<256x256xf32>
    %27 = tpu.matmul %24, %26, %cst_17 {dimension_numbers = #tpu.dot_dimension_numbers<[1], [0], [0], [1], [0, 0, 1, 1], [], []>} : vector<256x256xbf16>, vector<256x256xbf16>, vector<256x256xf32> -> vector<256x256xf32>
    %c2 = arith.constant 2 : index
    %c0_18 = arith.constant 0 : index
    %28 = vector.load %arg5[%c2, %c0_18] : memref<8x256xf32, #tpu.memory_space<vmem>>, vector<1x256xf32>
    %29 = vector.broadcast %28 : vector<1x256xf32> to vector<256x256xf32>
    %30 = arith.addf %27, %29 : vector<256x256xf32>
    %cst_19 = arith.constant 0.000000e+00 : f32
    %31 = vector.broadcast %cst_19 : f32 to vector<256x256xf32>
    %32 = arith.cmpf ogt, %30, %31 : vector<256x256xf32>
    %cst_20 = arith.constant 0.00999999977 : f32
    %33 = vector.broadcast %cst_20 : f32 to vector<256x256xf32>
    %34 = arith.mulf %33, %30 : vector<256x256xf32>
    %35 = arith.select %32, %30, %34 : vector<256x256xi1>, vector<256x256xf32>
    %36 = arith.truncf %35 : vector<256x256xf32> to vector<256x256xbf16>
    %c2_21 = arith.constant 2 : index
    %c0_22 = arith.constant 0 : index
    %c0_23 = arith.constant 0 : index
    %37 = vector.load %arg3[%c2_21, %c0_22, %c0_23] : memref<6x256x256xbf16, #tpu.memory_space<vmem>>, vector<1x256x256xbf16>
    %38 = vector.shape_cast %37 : vector<1x256x256xbf16> to vector<256x256xbf16>
    %cst_24 = arith.constant dense<0.000000e+00> : vector<256x256xf32>
    %39 = tpu.matmul %36, %38, %cst_24 {dimension_numbers = #tpu.dot_dimension_numbers<[1], [0], [0], [1], [0, 0, 1, 1], [], []>} : vector<256x256xbf16>, vector<256x256xbf16>, vector<256x256xf32> -> vector<256x256xf32>
    %c3 = arith.constant 3 : index
    %c0_25 = arith.constant 0 : index
    %40 = vector.load %arg5[%c3, %c0_25] : memref<8x256xf32, #tpu.memory_space<vmem>>, vector<1x256xf32>
    %41 = vector.broadcast %40 : vector<1x256xf32> to vector<256x256xf32>
    %42 = arith.addf %39, %41 : vector<256x256xf32>
    %cst_26 = arith.constant 0.000000e+00 : f32
    %43 = vector.broadcast %cst_26 : f32 to vector<256x256xf32>
    %44 = arith.cmpf ogt, %42, %43 : vector<256x256xf32>
    %cst_27 = arith.constant 0.00999999977 : f32
    %45 = vector.broadcast %cst_27 : f32 to vector<256x256xf32>
    %46 = arith.mulf %45, %42 : vector<256x256xf32>
    %47 = arith.select %44, %42, %46 : vector<256x256xi1>, vector<256x256xf32>
    %48 = arith.truncf %47 : vector<256x256xf32> to vector<256x256xbf16>
    %c3_28 = arith.constant 3 : index
    %c0_29 = arith.constant 0 : index
    %c0_30 = arith.constant 0 : index
    %49 = vector.load %arg3[%c3_28, %c0_29, %c0_30] : memref<6x256x256xbf16, #tpu.memory_space<vmem>>, vector<1x256x256xbf16>
    %50 = vector.shape_cast %49 : vector<1x256x256xbf16> to vector<256x256xbf16>
    %cst_31 = arith.constant dense<0.000000e+00> : vector<256x256xf32>
    %51 = tpu.matmul %48, %50, %cst_31 {dimension_numbers = #tpu.dot_dimension_numbers<[1], [0], [0], [1], [0, 0, 1, 1], [], []>} : vector<256x256xbf16>, vector<256x256xbf16>, vector<256x256xf32> -> vector<256x256xf32>
    %c4 = arith.constant 4 : index
    %c0_32 = arith.constant 0 : index
    %52 = vector.load %arg5[%c4, %c0_32] : memref<8x256xf32, #tpu.memory_space<vmem>>, vector<1x256xf32>
    %53 = vector.broadcast %52 : vector<1x256xf32> to vector<256x256xf32>
    %54 = arith.addf %51, %53 : vector<256x256xf32>
    %cst_33 = arith.constant 0.000000e+00 : f32
    %55 = vector.broadcast %cst_33 : f32 to vector<256x256xf32>
    %56 = arith.cmpf ogt, %54, %55 : vector<256x256xf32>
    %cst_34 = arith.constant 0.00999999977 : f32
    %57 = vector.broadcast %cst_34 : f32 to vector<256x256xf32>
    %58 = arith.mulf %57, %54 : vector<256x256xf32>
    %59 = arith.select %56, %54, %58 : vector<256x256xi1>, vector<256x256xf32>
    %60 = arith.truncf %59 : vector<256x256xf32> to vector<256x256xbf16>
    %c4_35 = arith.constant 4 : index
    %c0_36 = arith.constant 0 : index
    %c0_37 = arith.constant 0 : index
    %61 = vector.load %arg3[%c4_35, %c0_36, %c0_37] : memref<6x256x256xbf16, #tpu.memory_space<vmem>>, vector<1x256x256xbf16>
    %62 = vector.shape_cast %61 : vector<1x256x256xbf16> to vector<256x256xbf16>
    %cst_38 = arith.constant dense<0.000000e+00> : vector<256x256xf32>
    %63 = tpu.matmul %60, %62, %cst_38 {dimension_numbers = #tpu.dot_dimension_numbers<[1], [0], [0], [1], [0, 0, 1, 1], [], []>} : vector<256x256xbf16>, vector<256x256xbf16>, vector<256x256xf32> -> vector<256x256xf32>
    %c5 = arith.constant 5 : index
    %c0_39 = arith.constant 0 : index
    %64 = vector.load %arg5[%c5, %c0_39] : memref<8x256xf32, #tpu.memory_space<vmem>>, vector<1x256xf32>
    %65 = vector.broadcast %64 : vector<1x256xf32> to vector<256x256xf32>
    %66 = arith.addf %63, %65 : vector<256x256xf32>
    %cst_40 = arith.constant 0.000000e+00 : f32
    %67 = vector.broadcast %cst_40 : f32 to vector<256x256xf32>
    %68 = arith.cmpf ogt, %66, %67 : vector<256x256xf32>
    %cst_41 = arith.constant 0.00999999977 : f32
    %69 = vector.broadcast %cst_41 : f32 to vector<256x256xf32>
    %70 = arith.mulf %69, %66 : vector<256x256xf32>
    %71 = arith.select %68, %66, %70 : vector<256x256xi1>, vector<256x256xf32>
    %72 = arith.truncf %71 : vector<256x256xf32> to vector<256x256xbf16>
    %c5_42 = arith.constant 5 : index
    %c0_43 = arith.constant 0 : index
    %c0_44 = arith.constant 0 : index
    %73 = vector.load %arg3[%c5_42, %c0_43, %c0_44] : memref<6x256x256xbf16, #tpu.memory_space<vmem>>, vector<1x256x256xbf16>
    %74 = vector.shape_cast %73 : vector<1x256x256xbf16> to vector<256x256xbf16>
    %cst_45 = arith.constant dense<0.000000e+00> : vector<256x256xf32>
    %75 = tpu.matmul %72, %74, %cst_45 {dimension_numbers = #tpu.dot_dimension_numbers<[1], [0], [0], [1], [0, 0, 1, 1], [], []>} : vector<256x256xbf16>, vector<256x256xbf16>, vector<256x256xf32> -> vector<256x256xf32>
    %c6 = arith.constant 6 : index
    %c0_46 = arith.constant 0 : index
    %76 = vector.load %arg5[%c6, %c0_46] : memref<8x256xf32, #tpu.memory_space<vmem>>, vector<1x256xf32>
    %77 = vector.broadcast %76 : vector<1x256xf32> to vector<256x256xf32>
    %78 = arith.addf %75, %77 : vector<256x256xf32>
    %cst_47 = arith.constant 0.000000e+00 : f32
    %79 = vector.broadcast %cst_47 : f32 to vector<256x256xf32>
    %80 = arith.cmpf ogt, %78, %79 : vector<256x256xf32>
    %cst_48 = arith.constant 0.00999999977 : f32
    %81 = vector.broadcast %cst_48 : f32 to vector<256x256xf32>
    %82 = arith.mulf %81, %78 : vector<256x256xf32>
    %83 = arith.select %80, %78, %82 : vector<256x256xi1>, vector<256x256xf32>
    %c0_49 = arith.constant 0 : index
    %c0_50 = arith.constant 0 : index
    %84 = vector.load %arg4[%c0_49, %c0_50] : memref<1x256xf32, #tpu.memory_space<vmem>>, vector<1x256xf32>
    %85 = vector.broadcast %84 : vector<1x256xf32> to vector<256x256xf32>
    %86 = arith.mulf %83, %85 : vector<256x256xf32>
    %cst_51 = arith.constant dense<0.000000e+00> : vector<256xf32>
    %87 = vector.multi_reduction <add>, %86, %cst_51 [1] : vector<256x256xf32> to vector<256xf32>
    %88 = vector.shape_cast %87 : vector<256xf32> to vector<256x1xf32>
    %c7 = arith.constant 7 : index
    %c0_52 = arith.constant 0 : index
    %89 = vector.load %arg5[%c7, %c0_52] : memref<8x256xf32, #tpu.memory_space<vmem>>, vector<1x1xf32>
    %90 = vector.broadcast %89 : vector<1x1xf32> to vector<256x1xf32>
    %91 = arith.addf %88, %90 : vector<256x1xf32>
    %92 = arith.negf %91 : vector<256x1xf32>
    %93 = math.exp %92 : vector<256x1xf32>
    %cst_53 = arith.constant 1.000000e+00 : f32
    %94 = vector.broadcast %cst_53 : f32 to vector<256x1xf32>
    %95 = arith.addf %94, %93 : vector<256x1xf32>
    %96 = arith.divf %94, %95 : vector<256x1xf32>
    %97 = vector.shape_cast %96 : vector<256x1xf32> to vector<1x256xf32>
    %c0_54 = arith.constant 0 : index
    %c0_55 = arith.constant 0 : index
    %98 = vector.load %arg6[%c0_54, %c0_55] : memref<1x256xf32, #tpu.memory_space<vmem>>, vector<1x256xf32>
    tpu.vector_store %arg6[%c0_54, %c0_55], %97 {strides = array<i32>} : memref<1x256xf32, #tpu.memory_space<vmem>>, vector<1x256xf32>,
    return
  }
  func.func @transform_0(%arg0: i32) -> (i32, i32) {
    %c0_i32 = arith.constant 0 : i32
    %c0_i32_0 = arith.constant 0 : i32
    return %arg0, %c0_i32 : i32, i32
  }
  func.func @transform_1(%arg0: i32) -> (i32, i32) {
    %c0_i32 = arith.constant 0 : i32
    %c0_i32_0 = arith.constant 0 : i32
    %c0_i32_1 = arith.constant 0 : i32
    return %c0_i32, %c0_i32_0 : i32, i32
  }
  func.func @transform_2(%arg0: i32) -> (i32, i32, i32) {
    %c0_i32 = arith.constant 0 : i32
    %c0_i32_0 = arith.constant 0 : i32
    %c0_i32_1 = arith.constant 0 : i32
    %c0_i32_2 = arith.constant 0 : i32
    return %c0_i32, %c0_i32_0, %c0_i32_1 : i32, i32, i32
  }
  func.func @transform_3(%arg0: i32) -> (i32, i32) {
    %c0_i32 = arith.constant 0 : i32
    %c0_i32_0 = arith.constant 0 : i32
    %c0_i32_1 = arith.constant 0 : i32
    return %c0_i32, %c0_i32_0 : i32, i32
  }
  func.func @transform_4(%arg0: i32) -> (i32, i32) {
    %c0_i32 = arith.constant 0 : i32
    %c0_i32_0 = arith.constant 0 : i32
    %c0_i32_1 = arith.constant 0 : i32
    return %c0_i32, %c0_i32_0 : i32, i32
  }
  func.func @transform_5(%arg0: i32) -> (i32, i32) {
    %c0_i32 = arith.constant 0 : i32
    %c0_i32_0 = arith.constant 0 : i32
    return %c0_i32, %arg0 : i32, i32
  }
}

</mosaic_0001>

<llo_original>
// kernel: tpu_custom_call.1
$region0: #{tpu_custom_call.1}
  #allocation0 [shape = 'u32[]', space=smem, size = 0x4, offset = 0x4, fixed_abs, tag = 'smem constant byte address 0x4 - core index']
  #allocation1 [shape = 'u32[72,128]{1,0:T(1,128)}', space=vmem, size = 0x9000, scoped, tag = 'internal scratch']
  %s0 = inlined_call_operand.vmem [shape: f32[256,30], index: 0, kind: input, shape index: {}]
  %s1 = inlined_call_operand.vmem [shape: bf16[30,256], index: 1, kind: input, shape index: {}]
  %s2 = inlined_call_operand.hbm [shape: bf16[6,256,256], index: 2, kind: input, shape index: {}]
  %s3 = inlined_call_operand.vmem [shape: f32[1,256], index: 3, kind: input, shape index: {}]
  %s4 = inlined_call_operand.vmem [shape: f32[8,256], index: 4, kind: input, shape index: {}]
  %s5 = inlined_call_operand.hbm [shape: f32[1,256], index: 5, kind: output, shape index: {}]
  %s6 = sld [smem:[#allocation0]]
  $region34: #{tpu_custom_call.1} parent=0
    _
  %s8 = ssub.s32 1, %s6
  %s9 = scalar_select 0, %s8, %s6
  $region1: #{tpu_custom_call.1} parent=0
    #allocation2 [shape = 'u8[786432]{0}', space=vmem, size = 0xc0000, scoped, tag = 'input window, operand 2, single buffered']
    #allocation3 [shape = 's32[1]{0}', space=sflag, size = 0x4, scoped, tag = 'scoped memory for tpu_custom_call.1']
    #allocation4 [shape = 's32[1]{0}', space=sflag, size = 0x4, scoped, tag = 'scoped memory for tpu_custom_call.1']
    #allocation5 [shape = 'u8[1024]{0}', space=vmem, size = 0x400, scoped, tag = 'output window, operand 0, single buffered']
    %10 = vsyncpa [#allocation3], 0
    %11 = vsyncpa [#allocation4], 0
    // Predicated region
    $region2: #{tpu_custom_call.1} parent=1 // pred_check
      _
    $region3: #{tpu_custom_call.1} parent=1 // pred_check_branch
      %13 = sbr.rel (0) target = $region5
    $region4: #{tpu_custom_call.1} parent=1 // pred_region
      _
    $region5: #{tpu_custom_call.1} parent=1 // pred_fallthru
      _
    // Predicated region
    $region6: #{tpu_custom_call.1} parent=1 // pred_check
      _
    $region7: #{tpu_custom_call.1} parent=1 // pred_check_branch
      %15 = sbr.rel (0) target = $region9
    $region8: #{tpu_custom_call.1} parent=1 // pred_region
      _
    $region9: #{tpu_custom_call.1} parent=1 // pred_fallthru
      _
    // Predicated region
    $region10: #{tpu_custom_call.1} parent=1 // pred_check
      _
    $region11: #{tpu_custom_call.1} parent=1 // pred_check_branch
      %17 = sbr.rel (0) target = $region13
    $region12: #{tpu_custom_call.1} parent=1 // pred_region
      %19 = vsyncadd [#allocation3], 0
      %s20 = sshll.u32 %s2, 4
      %s21 = int_to_ptr.hbm [resolvable:$true] %s20
      %s22 = sshll.u32 [#allocation2], 4
      %s23 = int_to_ptr.vmem [resolvable:$true] %s22
      %28 = dma.hbm_to_vmem [thread:$0]  %s21, 24576, %s23, [#allocation3], 128, 128, 8
    $region13: #{tpu_custom_call.1} parent=1 // pred_fallthru
      _
    // Predicated region
    $region14: #{tpu_custom_call.1} parent=1 // pred_check
      _
    $region15: #{tpu_custom_call.1} parent=1 // pred_check_branch
      %30 = sbr.rel (0) target = $region17
    $region16: #{tpu_custom_call.1} parent=1 // pred_region
      _
    $region17: #{tpu_custom_call.1} parent=1 // pred_fallthru
      _
    // Predicated region
    $region18: #{tpu_custom_call.1} parent=1 // pred_check
      _
    $region19: #{tpu_custom_call.1} parent=1 // pred_check_branch
      %32 = sbr.rel (0) target = $region21
    $region20: #{tpu_custom_call.1} parent=1 // pred_region
      _
    $region21: #{tpu_custom_call.1} parent=1 // pred_fallthru
      _
    // Predicated region
    $region22: #{tpu_custom_call.1} parent=1 // pred_check
      _
    $region23: #{tpu_custom_call.1} parent=1 // pred_check_branch
      %34 = sbr.rel (0) target = $region25
    $region24: #{tpu_custom_call.1} parent=1 // pred_region
      %36 = dma.done [#allocation3], 24576
    $region25: #{tpu_custom_call.1} parent=1 // pred_fallthru
      _
    %v38 = vld [vmem:[%s0] sm:$0xff]
    %v39 = vld [vmem:[%s0 + $0x8] sm:$0xff]
    %v40 = vld [vmem:[%s0 + $0x10] sm:$0xff]
    %v41 = vld [vmem:[%s0 + $0x18] sm:$0xff]
    %v42 = vld [vmem:[%s0 + $0x20] sm:$0xff]
    %v43 = vld [vmem:[%s0 + $0x28] sm:$0xff]
    %v44 = vld [vmem:[%s0 + $0x30] sm:$0xff]
    %v45 = vld [vmem:[%s0 + $0x38] sm:$0xff]
    %v46 = vld [vmem:[%s0 + $0x40] sm:$0xff]
    %v47 = vld [vmem:[%s0 + $0x48] sm:$0xff]
    %v48 = vld [vmem:[%s0 + $0x50] sm:$0xff]
    %v49 = vld [vmem:[%s0 + $0x58] sm:$0xff]
    %v50 = vld [vmem:[%s0 + $0x60] sm:$0xff]
    %v51 = vld [vmem:[%s0 + $0x68] sm:$0xff]
    %v52 = vld [vmem:[%s0 + $0x70] sm:$0xff]
    %v53 = vld [vmem:[%s0 + $0x78] sm:$0xff]
    %v54 = vld [vmem:[%s0 + $0x80] sm:$0xff]
    %v55 = vld [vmem:[%s0 + $0x88] sm:$0xff]
    %v56 = vld [vmem:[%s0 + $0x90] sm:$0xff]
    %v57 = vld [vmem:[%s0 + $0x98] sm:$0xff]
    %v58 = vld [vmem:[%s0 + $0xa0] sm:$0xff]
    %v59 = vld [vmem:[%s0 + $0xa8] sm:$0xff]
    %v60 = vld [vmem:[%s0 + $0xb0] sm:$0xff]
    %v61 = vld [vmem:[%s0 + $0xb8] sm:$0xff]
    %v62 = vld [vmem:[%s0 + $0xc0] sm:$0xff]
    %v63 = vld [vmem:[%s0 + $0xc8] sm:$0xff]
    %v64 = vld [vmem:[%s0 + $0xd0] sm:$0xff]
    %v65 = vld [vmem:[%s0 + $0xd8] sm:$0xff]
    %v66 = vld [vmem:[%s0 + $0xe0] sm:$0xff]
    %v67 = vld [vmem:[%s0 + $0xe8] sm:$0xff]
    %v68 = vld [vmem:[%s0 + $0xf0] sm:$0xff]
    %v69 = vld [vmem:[%s0 + $0xf8] sm:$0xff]
    %v70 = vpack.c.bf16 %v39, %v38
    %v71 = vpack.c.bf16 %v41, %v40
    %v72 = vpack.c.bf16 %v43, %v42
    %v73 = vpack.c.bf16 %v45, %v44
    %v74 = vpack.c.bf16 %v47, %v46
    %v75 = vpack.c.bf16 %v49, %v48
    %v76 = vpack.c.bf16 %v51, %v50
    %v77 = vpack.c.bf16 %v53, %v52
    %v78 = vpack.c.bf16 %v55, %v54
    %v79 = vpack.c.bf16 %v57, %v56
    %v80 = vpack.c.bf16 %v59, %v58
    %v81 = vpack.c.bf16 %v61, %v60
    %v82 = vpack.c.bf16 %v63, %v62
    %v83 = vpack.c.bf16 %v65, %v64
    %v84 = vpack.c.bf16 %v67, %v66
    %v85 = vpack.c.bf16 %v69, %v68
    %v86 = vld [vmem:[%s1] sm:$0xff]
    %v87 = vld [vmem:[%s1 + $0x8] sm:$0xff]
    %v88 = vld [vmem:[%s1 + $0x10] sm:$0xff]
    %v89 = vld [vmem:[%s1 + $0x18] sm:$0x77]
    %v90 = vld [vmem:[%s4] ss:$8 sm:$0x3]
    %v92 = vperm.slane %v90, 0
    %v93 = vperm.slane %v90, 1
    %v100 = vunpack.c.l.b16 %v86
    %v101 = vunpack.c.h.b16 %v86
    %v102 = vunpack.c.l.b16 %v87
    %v103 = vunpack.c.h.b16 %v87
    %v104 = vunpack.c.l.b16 %v88
    %v105 = vunpack.c.h.b16 %v88
    %v106 = vunpack.c.l.b16 %v89
    %v107 = vunpack.c.h.b16 %v89
    %v108 = vpack.c.b16 %v102, %v100
    %v109 = vpack.c.b16 %v103, %v101
    %v110 = vpack.c.b16 %v106, %v104
    %v111 = vpack.c.b16 %v107, %v105
    %vm114 = vcmask 244736
    %v116 = vsel %vm114, %v70, 0
    %v119 = vsel %vm114, %v71, 0
    %v122 = vsel %vm114, %v72, 0
    %v125 = vsel %vm114, %v73, 0
    %v128 = vsel %vm114, %v74, 0
    %v131 = vsel %vm114, %v75, 0
    %v134 = vsel %vm114, %v76, 0
    %v137 = vsel %vm114, %v77, 0
    %v140 = vsel %vm114, %v78, 0
    %v143 = vsel %vm114, %v79, 0
    %v146 = vsel %vm114, %v80, 0
    %v149 = vsel %vm114, %v81, 0
    %v152 = vsel %vm114, %v82, 0
    %v155 = vsel %vm114, %v83, 0
    %v158 = vsel %vm114, %v84, 0
    %v161 = vsel %vm114, %v85, 0
    %vm163 = vcmask 1046528
    %v165 = vsel %vm163, %v110, 0
    %v168 = vsel %vm163, %v111, 0
    %170 = vmatpush.bf16.msra.mxu0 0
    %171 = vmatpush.bf16.msra.mxu0 0
    %172 = vmatpush.bf16.msra.mxu0 0
    %173 = vmatpush.bf16.msra.mxu0 0
    %174 = vmatpush.bf16.msra.mxu0 0
    %175 = vmatpush.bf16.msra.mxu0 0
    %176 = vmatpush.bf16.msra.mxu0 %v165
    %177 = vmatpush.bf16.msra.mxu0 %v108
    %178 = vmatmul.bf16.gmra.mxu0 %v116
    %v179 = vpop.f32.mrf.mxu0
    %v180 = vadd.f32 %v92, %v179
    %v181 = vpop.f32.mrf.mxu0
    %v182 = vadd.f32 %v92, %v181
    %183 = vmatmul.bf16.gmra.mxu0 %v119
    %v184 = vpop.f32.mrf.mxu0
    %v185 = vadd.f32 %v92, %v184
    %v186 = vpop.f32.mrf.mxu0
    %v187 = vadd.f32 %v92, %v186
    %188 = vmatmul.bf16.gmra.mxu0 %v122
    %v189 = vpop.f32.mrf.mxu0
    %v190 = vadd.f32 %v92, %v189
    %v191 = vpop.f32.mrf.mxu0
    %v192 = vadd.f32 %v92, %v191
    %193 = vmatmul.bf16.gmra.mxu0 %v125
    %v194 = vpop.f32.mrf.mxu0
    %v195 = vadd.f32 %v92, %v194
    %v196 = vpop.f32.mrf.mxu0
    %v197 = vadd.f32 %v92, %v196
    %198 = vmatmul.bf16.gmra.mxu0 %v128
    %v199 = vpop.f32.mrf.mxu0
    %v200 = vadd.f32 %v92, %v199
    %v201 = vpop.f32.mrf.mxu0
    %v202 = vadd.f32 %v92, %v201
    %203 = vmatmul.bf16.gmra.mxu0 %v131
    %v204 = vpop.f32.mrf.mxu0
    %v205 = vadd.f32 %v92, %v204
    %v206 = vpop.f32.mrf.mxu0
    %v207 = vadd.f32 %v92, %v206
    %208 = vmatmul.bf16.gmra.mxu0 %v134
    %v209 = vpop.f32.mrf.mxu0
    %v210 = vadd.f32 %v92, %v209
    %v211 = vpop.f32.mrf.mxu0
    %v212 = vadd.f32 %v92, %v211
    %213 = vmatmul.bf16.gmra.mxu0 %v137
    %v214 = vpop.f32.mrf.mxu0
    %v215 = vadd.f32 %v92, %v214
    %v216 = vpop.f32.mrf.mxu0
    %v217 = vadd.f32 %v92, %v216
    %218 = vmatmul.bf16.gmra.mxu0 %v140
    %v219 = vpop.f32.mrf.mxu0
    %v220 = vadd.f32 %v92, %v219
    %v221 = vpop.f32.mrf.mxu0
    %v222 = vadd.f32 %v92, %v221
    %223 = vmatmul.bf16.gmra.mxu0 %v143
    %v224 = vpop.f32.mrf.mxu0
    %v225 = vadd.f32 %v92, %v224
    %v226 = vpop.f32.mrf.mxu0
    %v227 = vadd.f32 %v92, %v226
    %228 = vmatmul.bf16.gmra.mxu0 %v146
    %v229 = vpop.f32.mrf.mxu0
    %v230 = vadd.f32 %v92, %v229
    %v231 = vpop.f32.mrf.mxu0
    %v232 = vadd.f32 %v92, %v231
    %233 = vmatmul.bf16.gmra.mxu0 %v149
    %v234 = vpop.f32.mrf.mxu0
    %v235 = vadd.f32 %v92, %v234
    %v236 = vpop.f32.mrf.mxu0
    %v237 = vadd.f32 %v92, %v236
    %238 = vmatmul.bf16.gmra.mxu0 %v152
    %v239 = vpop.f32.mrf.mxu0
    %v240 = vadd.f32 %v92, %v239
    %v241 = vpop.f32.mrf.mxu0
    %v242 = vadd.f32 %v92, %v241
    %243 = vmatmul.bf16.gmra.mxu0 %v155
    %v244 = vpop.f32.mrf.mxu0
    %v245 = vadd.f32 %v92, %v244
    %v246 = vpop.f32.mrf.mxu0
    %v247 = vadd.f32 %v92, %v246
    %248 = vmatmul.bf16.gmra.mxu0 %v158
    %v249 = vpop.f32.mrf.mxu0
    %v250 = vadd.f32 %v92, %v249
    %v251 = vpop.f32.mrf.mxu0
    %v252 = vadd.f32 %v92, %v251
    %253 = vmatmul.bf16.gmra.mxu0 %v161
    %v254 = vpop.f32.mrf.mxu0
    %v255 = vadd.f32 %v92, %v254
    %v256 = vpop.f32.mrf.mxu0
    %v257 = vadd.f32 %v92, %v256
    %258 = vdwg.mxu0
    %259 = vmatpush.bf16.msra.mxu0 0
    %260 = vmatpush.bf16.msra.mxu0 0
    %261 = vmatpush.bf16.msra.mxu0 0
    %262 = vmatpush.bf16.msra.mxu0 0
    %263 = vmatpush.bf16.msra.mxu0 0
    %264 = vmatpush.bf16.msra.mxu0 0
    %265 = vmatpush.bf16.msra.mxu0 %v168
    %266 = vmatpush.bf16.msra.mxu0 %v109
    %267 = vmatmul.bf16.gmra.mxu0 %v116
    %v268 = vpop.f32.mrf.mxu0
    %v269 = vadd.f32 %v93, %v268
    %v270 = vpop.f32.mrf.mxu0
    %v271 = vadd.f32 %v93, %v270
    %272 = vmatmul.bf16.gmra.mxu0 %v119
    %v273 = vpop.f32.mrf.mxu0
    %v274 = vadd.f32 %v93, %v273
    %v275 = vpop.f32.mrf.mxu0
    %v276 = vadd.f32 %v93, %v275
    %277 = vmatmul.bf16.gmra.mxu0 %v122
    %v278 = vpop.f32.mrf.mxu0
    %v279 = vadd.f32 %v93, %v278
    %v280 = vpop.f32.mrf.mxu0
    %v281 = vadd.f32 %v93, %v280
    %282 = vmatmul.bf16.gmra.mxu0 %v125
    %v283 = vpop.f32.mrf.mxu0
    %v284 = vadd.f32 %v93, %v283
    %v285 = vpop.f32.mrf.mxu0
    %v286 = vadd.f32 %v93, %v285
    %287 = vmatmul.bf16.gmra.mxu0 %v128
    %v288 = vpop.f32.mrf.mxu0
    %v289 = vadd.f32 %v93, %v288
    %v290 = vpop.f32.mrf.mxu0
    %v291 = vadd.f32 %v93, %v290
    %292 = vmatmul.bf16.gmra.mxu0 %v131
    %v293 = vpop.f32.mrf.mxu0
    %v294 = vadd.f32 %v93, %v293
    %v295 = vpop.f32.mrf.mxu0
    %v296 = vadd.f32 %v93, %v295
    %297 = vmatmul.bf16.gmra.mxu0 %v134
    %v298 = vpop.f32.mrf.mxu0
    %v299 = vadd.f32 %v93, %v298
    %v300 = vpop.f32.mrf.mxu0
    %v301 = vadd.f32 %v93, %v300
    %302 = vmatmul.bf16.gmra.mxu0 %v137
    %v303 = vpop.f32.mrf.mxu0
    %v304 = vadd.f32 %v93, %v303
    %v305 = vpop.f32.mrf.mxu0
    %v306 = vadd.f32 %v93, %v305
    %307 = vmatmul.bf16.gmra.mxu0 %v140
    %v308 = vpop.f32.mrf.mxu0
    %v309 = vadd.f32 %v93, %v308
    %v310 = vpop.f32.mrf.mxu0
    %v311 = vadd.f32 %v93, %v310
    %312 = vmatmul.bf16.gmra.mxu0 %v143
    %v313 = vpop.f32.mrf.mxu0
    %v314 = vadd.f32 %v93, %v313
    %v315 = vpop.f32.mrf.mxu0
    %v316 = vadd.f32 %v93, %v315
    %317 = vmatmul.bf16.gmra.mxu0 %v146
    %v318 = vpop.f32.mrf.mxu0
    %v319 = vadd.f32 %v93, %v318
    %v320 = vpop.f32.mrf.mxu0
    %v321 = vadd.f32 %v93, %v320
    %322 = vmatmul.bf16.gmra.mxu0 %v149
    %v323 = vpop.f32.mrf.mxu0
    %v324 = vadd.f32 %v93, %v323
    %v325 = vpop.f32.mrf.mxu0
    %v326 = vadd.f32 %v93, %v325
    %327 = vmatmul.bf16.gmra.mxu0 %v152
    %v328 = vpop.f32.mrf.mxu0
    %v329 = vadd.f32 %v93, %v328
    %v330 = vpop.f32.mrf.mxu0
    %v331 = vadd.f32 %v93, %v330
    %332 = vmatmul.bf16.gmra.mxu0 %v155
    %v333 = vpop.f32.mrf.mxu0
    %v334 = vadd.f32 %v93, %v333
    %v335 = vpop.f32.mrf.mxu0
    %v336 = vadd.f32 %v93, %v335
    %337 = vmatmul.bf16.gmra.mxu0 %v158
    %v338 = vpop.f32.mrf.mxu0
    %v339 = vadd.f32 %v93, %v338
    %v340 = vpop.f32.mrf.mxu0
    %v341 = vadd.f32 %v93, %v340
    %342 = vmatmul.bf16.gmra.mxu0 %v161
    %v343 = vpop.f32.mrf.mxu0
    %v344 = vadd.f32 %v93, %v343
    %v345 = vpop.f32.mrf.mxu0
    %v346 = vadd.f32 %v93, %v345
    %347 = vdwg.mxu0
    %vm348 = vcmp.gt.f32.partialorder %v180, 0.0
    %vm349 = vcmp.gt.f32.partialorder %v269, 0.0
    %vm350 = vcmp.gt.f32.partialorder %v182, 0.0
    %vm351 = vcmp.gt.f32.partialorder %v271, 0.0
    %vm352 = vcmp.gt.f32.partialorder %v185, 0.0
    %vm353 = vcmp.gt.f32.partialorder %v274, 0.0
    %vm354 = vcmp.gt.f32.partialorder %v187, 0.0
    %vm355 = vcmp.gt.f32.partialorder %v276, 0.0
    %vm356 = vcmp.gt.f32.partialorder %v190, 0.0
    %vm357 = vcmp.gt.f32.partialorder %v279, 0.0
    %vm358 = vcmp.gt.f32.partialorder %v192, 0.0
    %vm359 = vcmp.gt.f32.partialorder %v281, 0.0
    %vm360 = vcmp.gt.f32.partialorder %v195, 0.0
    %vm361 = vcmp.gt.f32.partialorder %v284, 0.0
    %vm362 = vcmp.gt.f32.partialorder %v197, 0.0
    %vm363 = vcmp.gt.f32.partialorder %v286, 0.0
    %vm364 = vcmp.gt.f32.partialorder %v200, 0.0
    %vm365 = vcmp.gt.f32.partialorder %v289, 0.0
    %vm366 = vcmp.gt.f32.partialorder %v202, 0.0
    %vm367 = vcmp.gt.f32.partialorder %v291, 0.0
    %vm368 = vcmp.gt.f32.partialorder %v205, 0.0
    %vm369 = vcmp.gt.f32.partialorder %v294, 0.0
    %vm370 = vcmp.gt.f32.partialorder %v207, 0.0
    %vm371 = vcmp.gt.f32.partialorder %v296, 0.0
    %vm372 = vcmp.gt.f32.partialorder %v210, 0.0
    %vm373 = vcmp.gt.f32.partialorder %v299, 0.0
    %vm374 = vcmp.gt.f32.partialorder %v212, 0.0
    %vm375 = vcmp.gt.f32.partialorder %v301, 0.0
    %vm376 = vcmp.gt.f32.partialorder %v215, 0.0
    %vm377 = vcmp.gt.f32.partialorder %v304, 0.0
    %vm378 = vcmp.gt.f32.partialorder %v217, 0.0
    %vm379 = vcmp.gt.f32.partialorder %v306, 0.0
    %vm380 = vcmp.gt.f32.partialorder %v220, 0.0
    %vm381 = vcmp.gt.f32.partialorder %v309, 0.0
    %vm382 = vcmp.gt.f32.partialorder %v222, 0.0
    %vm383 = vcmp.gt.f32.partialorder %v311, 0.0
    %vm384 = vcmp.gt.f32.partialorder %v225, 0.0
    %vm385 = vcmp.gt.f32.partialorder %v314, 0.0
    %vm386 = vcmp.gt.f32.partialorder %v227, 0.0
    %vm387 = vcmp.gt.f32.partialorder %v316, 0.0
    %vm388 = vcmp.gt.f32.partialorder %v230, 0.0
    %vm389 = vcmp.gt.f32.partialorder %v319, 0.0
    %vm390 = vcmp.gt.f32.partialorder %v232, 0.0
    %vm391 = vcmp.gt.f32.partialorder %v321, 0.0
    %vm392 = vcmp.gt.f32.partialorder %v235, 0.0
    %vm393 = vcmp.gt.f32.partialorder %v324, 0.0
    %vm394 = vcmp.gt.f32.partialorder %v237, 0.0
    %vm395 = vcmp.gt.f32.partialorder %v326, 0.0
    %vm396 = vcmp.gt.f32.partialorder %v240, 0.0
    %vm397 = vcmp.gt.f32.partialorder %v329, 0.0
    %vm398 = vcmp.gt.f32.partialorder %v242, 0.0
    %vm399 = vcmp.gt.f32.partialorder %v331, 0.0
    %vm400 = vcmp.gt.f32.partialorder %v245, 0.0
    %vm401 = vcmp.gt.f32.partialorder %v334, 0.0
    %vm402 = vcmp.gt.f32.partialorder %v247, 0.0
    %vm403 = vcmp.gt.f32.partialorder %v336, 0.0
    %vm404 = vcmp.gt.f32.partialorder %v250, 0.0
    %vm405 = vcmp.gt.f32.partialorder %v339, 0.0
    %vm406 = vcmp.gt.f32.partialorder %v252, 0.0
    %vm407 = vcmp.gt.f32.partialorder %v341, 0.0
    %vm408 = vcmp.gt.f32.partialorder %v255, 0.0
    %vm409 = vcmp.gt.f32.partialorder %v344, 0.0
    %vm410 = vcmp.gt.f32.partialorder %v257, 0.0
    %vm411 = vcmp.gt.f32.partialorder %v346, 0.0
    %v412 = vmul.f32 %v180, 0.01
    %v413 = vmul.f32 %v269, 0.01
    %v414 = vmul.f32 %v182, 0.01
    %v415 = vmul.f32 %v271, 0.01
    %v416 = vmul.f32 %v185, 0.01
    %v417 = vmul.f32 %v274, 0.01
    %v418 = vmul.f32 %v187, 0.01
    %v419 = vmul.f32 %v276, 0.01
    %v420 = vmul.f32 %v190, 0.01
    %v421 = vmul.f32 %v279, 0.01
    %v422 = vmul.f32 %v192, 0.01
    %v423 = vmul.f32 %v281, 0.01
    %v424 = vmul.f32 %v195, 0.01
    %v425 = vmul.f32 %v284, 0.01
    %v426 = vmul.f32 %v197, 0.01
    %v427 = vmul.f32 %v286, 0.01
    %v428 = vmul.f32 %v200, 0.01
    %v429 = vmul.f32 %v289, 0.01
    %v430 = vmul.f32 %v202, 0.01
    %v431 = vmul.f32 %v291, 0.01
    %v432 = vmul.f32 %v205, 0.01
    %v433 = vmul.f32 %v294, 0.01
    %v434 = vmul.f32 %v207, 0.01
    %v435 = vmul.f32 %v296, 0.01
    %v436 = vmul.f32 %v210, 0.01
    %v437 = vmul.f32 %v299, 0.01
    %v438 = vmul.f32 %v212, 0.01
    %v439 = vmul.f32 %v301, 0.01
    %v440 = vmul.f32 %v215, 0.01
    %v441 = vmul.f32 %v304, 0.01
    %v442 = vmul.f32 %v217, 0.01
    %v443 = vmul.f32 %v306, 0.01
    %v444 = vmul.f32 %v220, 0.01
    %v445 = vmul.f32 %v309, 0.01
    %v446 = vmul.f32 %v222, 0.01
    %v447 = vmul.f32 %v311, 0.01
    %v448 = vmul.f32 %v225, 0.01
    %v449 = vmul.f32 %v314, 0.01
    %v450 = vmul.f32 %v227, 0.01
    %v451 = vmul.f32 %v316, 0.01
    %v452 = vmul.f32 %v230, 0.01
    %v453 = vmul.f32 %v319, 0.01
    %v454 = vmul.f32 %v232, 0.01
    %v455 = vmul.f32 %v321, 0.01
    %v456 = vmul.f32 %v235, 0.01
    %v457 = vmul.f32 %v324, 0.01
    %v458 = vmul.f32 %v237, 0.01
    %v459 = vmul.f32 %v326, 0.01
    %v460 = vmul.f32 %v240, 0.01
    %v461 = vmul.f32 %v329, 0.01
    %v462 = vmul.f32 %v242, 0.01
    %v463 = vmul.f32 %v331, 0.01
    %v464 = vmul.f32 %v245, 0.01
    %v465 = vmul.f32 %v334, 0.01
    %v466 = vmul.f32 %v247, 0.01
    %v467 = vmul.f32 %v336, 0.01
    %v468 = vmul.f32 %v250, 0.01
    %v469 = vmul.f32 %v339, 0.01
    %v470 = vmul.f32 %v252, 0.01
    %v471 = vmul.f32 %v341, 0.01
    %v472 = vmul.f32 %v255, 0.01
    %v473 = vmul.f32 %v344, 0.01
    %v474 = vmul.f32 %v257, 0.01
    %v475 = vmul.f32 %v346, 0.01
    %v476 = vsel %vm348, %v180, %v412
    %v477 = vsel %vm349, %v269, %v413
    %v478 = vsel %vm350, %v182, %v414
    %v479 = vsel %vm351, %v271, %v415
    %v480 = vsel %vm352, %v185, %v416
    %v481 = vsel %vm353, %v274, %v417
    %v482 = vsel %vm354, %v187, %v418
    %v483 = vsel %vm355, %v276, %v419
    %v484 = vsel %vm356, %v190, %v420
    %v485 = vsel %vm357, %v279, %v421
    %v486 = vsel %vm358, %v192, %v422
    %v487 = vsel %vm359, %v281, %v423
    %v488 = vsel %vm360, %v195, %v424
    %v489 = vsel %vm361, %v284, %v425
    %v490 = vsel %vm362, %v197, %v426
    %v491 = vsel %vm363, %v286, %v427
    %v492 = vsel %vm364, %v200, %v428
    %v493 = vsel %vm365, %v289, %v429
    %v494 = vsel %vm366, %v202, %v430
    %v495 = vsel %vm367, %v291, %v431
    %v496 = vsel %vm368, %v205, %v432
    %v497 = vsel %vm369, %v294, %v433
    %v498 = vsel %vm370, %v207, %v434
    %v499 = vsel %vm371, %v296, %v435
    %v500 = vsel %vm372, %v210, %v436
    %v501 = vsel %vm373, %v299, %v437
    %v502 = vsel %vm374, %v212, %v438
    %v503 = vsel %vm375, %v301, %v439
    %v504 = vsel %vm376, %v215, %v440
    %v505 = vsel %vm377, %v304, %v441
    %v506 = vsel %vm378, %v217, %v442
    %v507 = vsel %vm379, %v306, %v443
    %v508 = vsel %vm380, %v220, %v444
    %v509 = vsel %vm381, %v309, %v445
    %v510 = vsel %vm382, %v222, %v446
    %v511 = vsel %vm383, %v311, %v447
    %v512 = vsel %vm384, %v225, %v448
    %v513 = vsel %vm385, %v314, %v449
    %v514 = vsel %vm386, %v227, %v450
    %v515 = vsel %vm387, %v316, %v451
    %v516 = vsel %vm388, %v230, %v452
    %v517 = vsel %vm389, %v319, %v453
    %v518 = vsel %vm390, %v232, %v454
    %v519 = vsel %vm391, %v321, %v455
    %v520 = vsel %vm392, %v235, %v456
    %v521 = vsel %vm393, %v324, %v457
    %v522 = vsel %vm394, %v237, %v458
    %v523 = vsel %vm395, %v326, %v459
    %v524 = vsel %vm396, %v240, %v460
    %v525 = vsel %vm397, %v329, %v461
    %v526 = vsel %vm398, %v242, %v462
    %v527 = vsel %vm399, %v331, %v463
    %v528 = vsel %vm400, %v245, %v464
    %v529 = vsel %vm401, %v334, %v465
    %v530 = vsel %vm402, %v247, %v466
    %v531 = vsel %vm403, %v336, %v467
    %v532 = vsel %vm404, %v250, %v468
    %v533 = vsel %vm405, %v339, %v469
    %v534 = vsel %vm406, %v252, %v470
    %v535 = vsel %vm407, %v341, %v471
    %v536 = vsel %vm408, %v255, %v472
    %v537 = vsel %vm409, %v344, %v473
    %v538 = vsel %vm410, %v257, %v474
    %v539 = vsel %vm411, %v346, %v475
    %v540 = vpack.c.bf16 %v478, %v476
    %v541 = vpack.c.bf16 %v479, %v477
    %v542 = vpack.c.bf16 %v482, %v480
    %v543 = vpack.c.bf16 %v483, %v481
    %v544 = vpack.c.bf16 %v486, %v484
    %v545 = vpack.c.bf16 %v487, %v485
    %v546 = vpack.c.bf16 %v490, %v488
    %v547 = vpack.c.bf16 %v491, %v489
    %v548 = vpack.c.bf16 %v494, %v492
    %v549 = vpack.c.bf16 %v495, %v493
    %v550 = vpack.c.bf16 %v498, %v496
    %v551 = vpack.c.bf16 %v499, %v497
    %v552 = vpack.c.bf16 %v502, %v500
    %v553 = vpack.c.bf16 %v503, %v501
    %v554 = vpack.c.bf16 %v506, %v504
    %v555 = vpack.c.bf16 %v507, %v505
    %v556 = vpack.c.bf16 %v510, %v508
    %v557 = vpack.c.bf16 %v511, %v509
    %v558 = vpack.c.bf16 %v514, %v512
    %v559 = vpack.c.bf16 %v515, %v513
    %v560 = vpack.c.bf16 %v518, %v516
    %v561 = vpack.c.bf16 %v519, %v517
    %v562 = vpack.c.bf16 %v522, %v520
    %v563 = vpack.c.bf16 %v523, %v521
    %v564 = vpack.c.bf16 %v526, %v524
    %v565 = vpack.c.bf16 %v527, %v525
    %v566 = vpack.c.bf16 %v530, %v528
    %v567 = vpack.c.bf16 %v531, %v529
    %v568 = vpack.c.bf16 %v534, %v532
    %v569 = vpack.c.bf16 %v535, %v533
    %v570 = vpack.c.bf16 %v538, %v536
    %v571 = vpack.c.bf16 %v539, %v537
    %v572 = vld [vmem:[#allocation2] sm:$0xff]
    %v573 = vld [vmem:[#allocation2 + $0x8] sm:$0xff]
    %v574 = vld [vmem:[#allocation2 + $0x10] sm:$0xff]
    %v575 = vld [vmem:[#allocation2 + $0x18] sm:$0xff]
    %v576 = vld [vmem:[#allocation2 + $0x20] sm:$0xff]
    %v577 = vld [vmem:[#allocation2 + $0x28] sm:$0xff]
    %v578 = vld [vmem:[#allocation2 + $0x30] sm:$0xff]
    %v579 = vld [vmem:[#allocation2 + $0x38] sm:$0xff]
    %v580 = vld [vmem:[#allocation2 + $0x40] sm:$0xff]
    %v581 = vld [vmem:[#allocation2 + $0x48] sm:$0xff]
    %v582 = vld [vmem:[#allocation2 + $0x50] sm:$0xff]
    %v583 = vld [vmem:[#allocation2 + $0x58] sm:$0xff]
    %v584 = vld [vmem:[#allocation2 + $0x60] sm:$0xff]
    %v585 = vld [vmem:[#allocation2 + $0x68] sm:$0xff]
    %v586 = vld [vmem:[#allocation2 + $0x70] sm:$0xff]
    %v587 = vld [vmem:[#allocation2 + $0x78] sm:$0xff]
    %v588 = vld [vmem:[#allocation2 + $0x80] sm:$0xff]
    %v589 = vld [vmem:[#allocation2 + $0x88] sm:$0xff]
    %v590 = vld [vmem:[#allocation2 + $0x90] sm:$0xff]
    %v591 = vld [vmem:[#allocation2 + $0x98] sm:$0xff]
    %v592 = vld [vmem:[#allocation2 + $0xa0] sm:$0xff]
    %v593 = vld [vmem:[#allocation2 + $0xa8] sm:$0xff]
    %v594 = vld [vmem:[#allocation2 + $0xb0] sm:$0xff]
    %v595 = vld [vmem:[#allocation2 + $0xb8] sm:$0xff]
    %v596 = vld [vmem:[#allocation2 + $0xc0] sm:$0xff]
    %v597 = vld [vmem:[#allocation2 + $0xc8] sm:$0xff]
    %v598 = vld [vmem:[#allocation2 + $0xd0] sm:$0xff]
    %v599 = vld [vmem:[#allocation2 + $0xd8] sm:$0xff]
    %v600 = vld [vmem:[#allocation2 + $0xe0] sm:$0xff]
    %v601 = vld [vmem:[#allocation2 + $0xe8] sm:$0xff]
    %v602 = vld [vmem:[#allocation2 + $0xf0] sm:$0xff]
    %v603 = vld [vmem:[#allocation2 + $0xf8] sm:$0xff]
    %s604 = scalar_lea.vmem %s4, 1
    %v605 = vld [vmem:[%s604] ss:$8 sm:$0x3]
    %v607 = vperm.slane %v605, 0
    %v608 = vperm.slane %v605, 1
    %v643 = vunpack.c.l.b16 %v572
    %v644 = vunpack.c.h.b16 %v572
    %v645 = vunpack.c.l.b16 %v573
    %v646 = vunpack.c.h.b16 %v573
    %v647 = vunpack.c.l.b16 %v574
    %v648 = vunpack.c.h.b16 %v574
    %v649 = vunpack.c.l.b16 %v575
    %v650 = vunpack.c.h.b16 %v575
    %v651 = vunpack.c.l.b16 %v576
    %v652 = vunpack.c.h.b16 %v576
    %v653 = vunpack.c.l.b16 %v577
    %v654 = vunpack.c.h.b16 %v577
    %v655 = vunpack.c.l.b16 %v578
    %v656 = vunpack.c.h.b16 %v578
    %v657 = vunpack.c.l.b16 %v579
    %v658 = vunpack.c.h.b16 %v579
    %v659 = vunpack.c.l.b16 %v580
    %v660 = vunpack.c.h.b16 %v580
    %v661 = vunpack.c.l.b16 %v581
    %v662 = vunpack.c.h.b16 %v581
    %v663 = vunpack.c.l.b16 %v582
    %v664 = vunpack.c.h.b16 %v582
    %v665 = vunpack.c.l.b16 %v583
    %v666 = vunpack.c.h.b16 %v583
    %v667 = vunpack.c.l.b16 %v584
    %v668 = vunpack.c.h.b16 %v584
    %v669 = vunpack.c.l.b16 %v585
    %v670 = vunpack.c.h.b16 %v585
    %v671 = vunpack.c.l.b16 %v586
    %v672 = vunpack.c.h.b16 %v586
    %v673 = vunpack.c.l.b16 %v587
    %v674 = vunpack.c.h.b16 %v587
    %v675 = vunpack.c.l.b16 %v588
    %v676 = vunpack.c.h.b16 %v588
    %v677 = vunpack.c.l.b16 %v589
    %v678 = vunpack.c.h.b16 %v589
    %v679 = vunpack.c.l.b16 %v590
    %v680 = vunpack.c.h.b16 %v590
    %v681 = vunpack.c.l.b16 %v591
    %v682 = vunpack.c.h.b16 %v591
    %v683 = vunpack.c.l.b16 %v592
    %v684 = vunpack.c.h.b16 %v592
    %v685 = vunpack.c.l.b16 %v593
    %v686 = vunpack.c.h.b16 %v593
    %v687 = vunpack.c.l.b16 %v594
    %v688 = vunpack.c.h.b16 %v594
    %v689 = vunpack.c.l.b16 %v595
    %v690 = vunpack.c.h.b16 %v595
    %v691 = vunpack.c.l.b16 %v596
    %v692 = vunpack.c.h.b16 %v596
    %v693 = vunpack.c.l.b16 %v597
    %v694 = vunpack.c.h.b16 %v597
    %v695 = vunpack.c.l.b16 %v598
    %v696 = vunpack.c.h.b16 %v598
    %v697 = vunpack.c.l.b16 %v599
    %v698 = vunpack.c.h.b16 %v599
    %v699 = vunpack.c.l.b16 %v600
    %v700 = vunpack.c.h.b16 %v600
    %v701 = vunpack.c.l.b16 %v601
    %v702 = vunpack.c.h.b16 %v601
    %v703 = vunpack.c.l.b16 %v602
    %v704 = vunpack.c.h.b16 %v602
    %v705 = vunpack.c.l.b16 %v603
    %v706 = vunpack.c.h.b16 %v603
    %v707 = vpack.c.b16 %v645, %v643
    %v708 = vpack.c.b16 %v646, %v644
    %v709 = vpack.c.b16 %v649, %v647
    %v710 = vpack.c.b16 %v650, %v648
    %v711 = vpack.c.b16 %v653, %v651
    %v712 = vpack.c.b16 %v654, %v652
    %v713 = vpack.c.b16 %v657, %v655
    %v714 = vpack.c.b16 %v658, %v656
    %v715 = vpack.c.b16 %v661, %v659
    %v716 = vpack.c.b16 %v662, %v660
    %v717 = vpack.c.b16 %v665, %v663
    %v718 = vpack.c.b16 %v666, %v664
    %v719 = vpack.c.b16 %v669, %v667
    %v720 = vpack.c.b16 %v670, %v668
    %v721 = vpack.c.b16 %v673, %v671
    %v722 = vpack.c.b16 %v674, %v672
    %v723 = vpack.c.b16 %v677, %v675
    %v724 = vpack.c.b16 %v678, %v676
    %v725 = vpack.c.b16 %v681, %v679
    %v726 = vpack.c.b16 %v682, %v680
    %v727 = vpack.c.b16 %v685, %v683
    %v728 = vpack.c.b16 %v686, %v684
    %v729 = vpack.c.b16 %v689, %v687
    %v730 = vpack.c.b16 %v690, %v688
    %v731 = vpack.c.b16 %v693, %v691
    %v732 = vpack.c.b16 %v694, %v692
    %v733 = vpack.c.b16 %v697, %v695
    %v734 = vpack.c.b16 %v698, %v696
    %v735 = vpack.c.b16 %v701, %v699
    %v736 = vpack.c.b16 %v702, %v700
    %v737 = vpack.c.b16 %v705, %v703
    %v738 = vpack.c.b16 %v706, %v704
    %771 = vmatpush.bf16.msra.mxu0 %v721
    %772 = vmatpush.bf16.msra.mxu0 %v719
    %773 = vmatpush.bf16.msra.mxu0 %v717
    %774 = vmatpush.bf16.msra.mxu0 %v715
    %775 = vmatpush.bf16.msra.mxu0 %v713
    %776 = vmatpush.bf16.msra.mxu0 %v711
    %777 = vmatpush.bf16.msra.mxu0 %v709
    %778 = vmatpush.bf16.msra.mxu0 %v707
    %779 = vmatmul.bf16.gmra.mxu0 %v540
    %v780 = vpop.f32.mrf.mxu0
    %v781 = vadd.f32 %v607, %v780
    %v782 = vpop.f32.mrf.mxu0
    %v783 = vadd.f32 %v607, %v782
    %784 = vmatmul.bf16.gmra.mxu0 %v542
    %v785 = vpop.f32.mrf.mxu0
    %v786 = vadd.f32 %v607, %v785
    %v787 = vpop.f32.mrf.mxu0
    %v788 = vadd.f32 %v607, %v787
    %789 = vmatmul.bf16.gmra.mxu0 %v544
    %v790 = vpop.f32.mrf.mxu0
    %v791 = vadd.f32 %v607, %v790
    %v792 = vpop.f32.mrf.mxu0
    %v793 = vadd.f32 %v607, %v792
    %794 = vmatmul.bf16.gmra.mxu0 %v546
    %v795 = vpop.f32.mrf.mxu0
    %v796 = vadd.f32 %v607, %v795
    %v797 = vpop.f32.mrf.mxu0
    %v798 = vadd.f32 %v607, %v797
    %799 = vmatmul.bf16.gmra.mxu0 %v548
    %v800 = vpop.f32.mrf.mxu0
    %v801 = vadd.f32 %v607, %v800
    %v802 = vpop.f32.mrf.mxu0
    %v803 = vadd.f32 %v607, %v802
    %804 = vmatmul.bf16.gmra.mxu0 %v550
    %v805 = vpop.f32.mrf.mxu0
    %v806 = vadd.f32 %v607, %v805
    %v807 = vpop.f32.mrf.mxu0
    %v808 = vadd.f32 %v607, %v807
    %809 = vmatmul.bf16.gmra.mxu0 %v552
    %v810 = vpop.f32.mrf.mxu0
    %v811 = vadd.f32 %v607, %v810
    %v812 = vpop.f32.mrf.mxu0
    %v813 = vadd.f32 %v607, %v812
    %814 = vmatmul.bf16.gmra.mxu0 %v554
    %v815 = vpop.f32.mrf.mxu0
    %v816 = vadd.f32 %v607, %v815
    %v817 = vpop.f32.mrf.mxu0
    %v818 = vadd.f32 %v607, %v817
    %819 = vmatmul.bf16.gmra.mxu0 %v556
    %v820 = vpop.f32.mrf.mxu0
    %v821 = vadd.f32 %v607, %v820
    %v822 = vpop.f32.mrf.mxu0
    %v823 = vadd.f32 %v607, %v822
    %824 = vmatmul.bf16.gmra.mxu0 %v558
    %v825 = vpop.f32.mrf.mxu0
    %v826 = vadd.f32 %v607, %v825
    %v827 = vpop.f32.mrf.mxu0
    %v828 = vadd.f32 %v607, %v827
    %829 = vmatmul.bf16.gmra.mxu0 %v560
    %v830 = vpop.f32.mrf.mxu0
    %v831 = vadd.f32 %v607, %v830
    %v832 = vpop.f32.mrf.mxu0
    %v833 = vadd.f32 %v607, %v832
    %834 = vmatmul.bf16.gmra.mxu0 %v562
    %v835 = vpop.f32.mrf.mxu0
    %v836 = vadd.f32 %v607, %v835
    %v837 = vpop.f32.mrf.mxu0
    %v838 = vadd.f32 %v607, %v837
    %839 = vmatmul.bf16.gmra.mxu0 %v564
    %v840 = vpop.f32.mrf.mxu0
    %v841 = vadd.f32 %v607, %v840
    %v842 = vpop.f32.mrf.mxu0
    %v843 = vadd.f32 %v607, %v842
    %844 = vmatmul.bf16.gmra.mxu0 %v566
    %v845 = vpop.f32.mrf.mxu0
    %v846 = vadd.f32 %v607, %v845
    %v847 = vpop.f32.mrf.mxu0
    %v848 = vadd.f32 %v607, %v847
    %849 = vmatmul.bf16.gmra.mxu0 %v568
    %v850 = vpop.f32.mrf.mxu0
    %v851 = vadd.f32 %v607, %v850
    %v852 = vpop.f32.mrf.mxu0
    %v853 = vadd.f32 %v607, %v852
    %854 = vmatmul.bf16.gmra.mxu0 %v570
    %v855 = vpop.f32.mrf.mxu0
    %v856 = vadd.f32 %v607, %v855
    %v857 = vpop.f32.mrf.mxu0
    %v858 = vadd.f32 %v607, %v857
    %859 = vdwg.mxu0
    %860 = vmatpush.bf16.msra.mxu0 %v737
    %861 = vmatpush.bf16.msra.mxu0 %v735
    %862 = vmatpush.bf16.msra.mxu0 %v733
    %863 = vmatpush.bf16.msra.mxu0 %v731
    %864 = vmatpush.bf16.msra.mxu0 %v729
    %865 = vmatpush.bf16.msra.mxu0 %v727
    %866 = vmatpush.bf16.msra.mxu0 %v725
    %867 = vmatpush.bf16.msra.mxu0 %v723
    %868 = vmatmul.bf16.gmra.mxu0 %v541
    %v869 = vpop.f32.mrf.mxu0
    %v870 = vadd.f32 %v781, %v869
    %v871 = vpop.f32.mrf.mxu0
    %v872 = vadd.f32 %v783, %v871
    %873 = vmatmul.bf16.gmra.mxu0 %v543
    %v874 = vpop.f32.mrf.mxu0
    %v875 = vadd.f32 %v786, %v874
    %v876 = vpop.f32.mrf.mxu0
    %v877 = vadd.f32 %v788, %v876
    %878 = vmatmul.bf16.gmra.mxu0 %v545
    %v879 = vpop.f32.mrf.mxu0
    %v880 = vadd.f32 %v791, %v879
    %v881 = vpop.f32.mrf.mxu0
    %v882 = vadd.f32 %v793, %v881
    %883 = vmatmul.bf16.gmra.mxu0 %v547
    %v884 = vpop.f32.mrf.mxu0
    %v885 = vadd.f32 %v796, %v884
    %v886 = vpop.f32.mrf.mxu0
    %v887 = vadd.f32 %v798, %v886
    %888 = vmatmul.bf16.gmra.mxu0 %v549
    %v889 = vpop.f32.mrf.mxu0
    %v890 = vadd.f32 %v801, %v889
    %v891 = vpop.f32.mrf.mxu0
    %v892 = vadd.f32 %v803, %v891
    %893 = vmatmul.bf16.gmra.mxu0 %v551
    %v894 = vpop.f32.mrf.mxu0
    %v895 = vadd.f32 %v806, %v894
    %v896 = vpop.f32.mrf.mxu0
    %v897 = vadd.f32 %v808, %v896
    %898 = vmatmul.bf16.gmra.mxu0 %v553
    %v899 = vpop.f32.mrf.mxu0
    %v900 = vadd.f32 %v811, %v899
    %v901 = vpop.f32.mrf.mxu0
    %v902 = vadd.f32 %v813, %v901
    %903 = vmatmul.bf16.gmra.mxu0 %v555
    %v904 = vpop.f32.mrf.mxu0
    %v905 = vadd.f32 %v816, %v904
    %v906 = vpop.f32.mrf.mxu0
    %v907 = vadd.f32 %v818, %v906
    %908 = vmatmul.bf16.gmra.mxu0 %v557
    %v909 = vpop.f32.mrf.mxu0
    %v910 = vadd.f32 %v821, %v909
    %v911 = vpop.f32.mrf.mxu0
    %v912 = vadd.f32 %v823, %v911
    %913 = vmatmul.bf16.gmra.mxu0 %v559
    %v914 = vpop.f32.mrf.mxu0
    %v915 = vadd.f32 %v826, %v914
    %v916 = vpop.f32.mrf.mxu0
    %v917 = vadd.f32 %v828, %v916
    %918 = vmatmul.bf16.gmra.mxu0 %v561
    %v919 = vpop.f32.mrf.mxu0
    %v920 = vadd.f32 %v831, %v919
    %v921 = vpop.f32.mrf.mxu0
    %v922 = vadd.f32 %v833, %v921
    %923 = vmatmul.bf16.gmra.mxu0 %v563
    %v924 = vpop.f32.mrf.mxu0
    %v925 = vadd.f32 %v836, %v924
    %v926 = vpop.f32.mrf.mxu0
    %v927 = vadd.f32 %v838, %v926
    %928 = vmatmul.bf16.gmra.mxu0 %v565
    %v929 = vpop.f32.mrf.mxu0
    %v930 = vadd.f32 %v841, %v929
    %v931 = vpop.f32.mrf.mxu0
    %v932 = vadd.f32 %v843, %v931
    %933 = vmatmul.bf16.gmra.mxu0 %v567
    %v934 = vpop.f32.mrf.mxu0
    %v935 = vadd.f32 %v846, %v934
    %v936 = vpop.f32.mrf.mxu0
    %v937 = vadd.f32 %v848, %v936
    %938 = vmatmul.bf16.gmra.mxu0 %v569
    %v939 = vpop.f32.mrf.mxu0
    %v940 = vadd.f32 %v851, %v939
    %v941 = vpop.f32.mrf.mxu0
    %v942 = vadd.f32 %v853, %v941
    %943 = vmatmul.bf16.gmra.mxu0 %v571
    %v944 = vpop.f32.mrf.mxu0
    %v945 = vadd.f32 %v856, %v944
    %v946 = vpop.f32.mrf.mxu0
    %v947 = vadd.f32 %v858, %v946
    %948 = vdwg.mxu0
    %949 = vmatpush.bf16.msra.mxu0 %v722
    %950 = vmatpush.bf16.msra.mxu0 %v720
    %951 = vmatpush.bf16.msra.mxu0 %v718
    %952 = vmatpush.bf16.msra.mxu0 %v716
    %953 = vmatpush.bf16.msra.mxu0 %v714
    %954 = vmatpush.bf16.msra.mxu0 %v712
    %955 = vmatpush.bf16.msra.mxu0 %v710
    %956 = vmatpush.bf16.msra.mxu0 %v708
    %957 = vmatmul.bf16.gmra.mxu0 %v540
    %v958 = vpop.f32.mrf.mxu0
    %v959 = vadd.f32 %v608, %v958
    %v960 = vpop.f32.mrf.mxu0
    %v961 = vadd.f32 %v608, %v960
    %962 = vmatmul.bf16.gmra.mxu0 %v542
    %v963 = vpop.f32.mrf.mxu0
    %v964 = vadd.f32 %v608, %v963
    %v965 = vpop.f32.mrf.mxu0
    %v966 = vadd.f32 %v608, %v965
    %967 = vmatmul.bf16.gmra.mxu0 %v544
    %v968 = vpop.f32.mrf.mxu0
    %v969 = vadd.f32 %v608, %v968
    %v970 = vpop.f32.mrf.mxu0
    %v971 = vadd.f32 %v608, %v970
    %972 = vmatmul.bf16.gmra.mxu0 %v546
    %v973 = vpop.f32.mrf.mxu0
    %v974 = vadd.f32 %v608, %v973
    %v975 = vpop.f32.mrf.mxu0
    %v976 = vadd.f32 %v608, %v975
    %977 = vmatmul.bf16.gmra.mxu0 %v548
    %v978 = vpop.f32.mrf.mxu0
    %v979 = vadd.f32 %v608, %v978
    %v980 = vpop.f32.mrf.mxu0
    %v981 = vadd.f32 %v608, %v980
    %982 = vmatmul.bf16.gmra.mxu0 %v550
    %v983 = vpop.f32.mrf.mxu0
    %v984 = vadd.f32 %v608, %v983
    %v985 = vpop.f32.mrf.mxu0
    %v986 = vadd.f32 %v608, %v985
    %987 = vmatmul.bf16.gmra.mxu0 %v552
    %v988 = vpop.f32.mrf.mxu0
    %v989 = vadd.f32 %v608, %v988
    %v990 = vpop.f32.mrf.mxu0
    %v991 = vadd.f32 %v608, %v990
    %992 = vmatmul.bf16.gmra.mxu0 %v554
    %v993 = vpop.f32.mrf.mxu0
    %v994 = vadd.f32 %v608, %v993
    %v995 = vpop.f32.mrf.mxu0
    %v996 = vadd.f32 %v608, %v995
    %997 = vmatmul.bf16.gmra.mxu0 %v556
    %v998 = vpop.f32.mrf.mxu0
    %v999 = vadd.f32 %v608, %v998
    %v1000 = vpop.f32.mrf.mxu0
    %v1001 = vadd.f32 %v608, %v1000
    %1002 = vmatmul.bf16.gmra.mxu0 %v558
    %v1003 = vpop.f32.mrf.mxu0
    %v1004 = vadd.f32 %v608, %v1003
    %v1005 = vpop.f32.mrf.mxu0
    %v1006 = vadd.f32 %v608, %v1005
    %1007 = vmatmul.bf16.gmra.mxu0 %v560
    %v1008 = vpop.f32.mrf.mxu0
    %v1009 = vadd.f32 %v608, %v1008
    %v1010 = vpop.f32.mrf.mxu0
    %v1011 = vadd.f32 %v608, %v1010
    %1012 = vmatmul.bf16.gmra.mxu0 %v562
    %v1013 = vpop.f32.mrf.mxu0
    %v1014 = vadd.f32 %v608, %v1013
    %v1015 = vpop.f32.mrf.mxu0
    %v1016 = vadd.f32 %v608, %v1015
    %1017 = vmatmul.bf16.gmra.mxu0 %v564
    %v1018 = vpop.f32.mrf.mxu0
    %v1019 = vadd.f32 %v608, %v1018
    %v1020 = vpop.f32.mrf.mxu0
    %v1021 = vadd.f32 %v608, %v1020
    %1022 = vmatmul.bf16.gmra.mxu0 %v566
    %v1023 = vpop.f32.mrf.mxu0
    %v1024 = vadd.f32 %v608, %v1023
    %v1025 = vpop.f32.mrf.mxu0
    %v1026 = vadd.f32 %v608, %v1025
    %1027 = vmatmul.bf16.gmra.mxu0 %v568
    %v1028 = vpop.f32.mrf.mxu0
    %v1029 = vadd.f32 %v608, %v1028
    %v1030 = vpop.f32.mrf.mxu0
    %v1031 = vadd.f32 %v608, %v1030
    %1032 = vmatmul.bf16.gmra.mxu0 %v570
    %v1033 = vpop.f32.mrf.mxu0
    %v1034 = vadd.f32 %v608, %v1033
    %v1035 = vpop.f32.mrf.mxu0
    %v1036 = vadd.f32 %v608, %v1035
    %1037 = vdwg.mxu0
    %1038 = vmatpush.bf16.msra.mxu0 %v738
    %1039 = vmatpush.bf16.msra.mxu0 %v736
    %1040 = vmatpush.bf16.msra.mxu0 %v734
    %1041 = vmatpush.bf16.msra.mxu0 %v732
    %1042 = vmatpush.bf16.msra.mxu0 %v730
    %1043 = vmatpush.bf16.msra.mxu0 %v728
    %1044 = vmatpush.bf16.msra.mxu0 %v726
    %1045 = vmatpush.bf16.msra.mxu0 %v724
    %1046 = vmatmul.bf16.gmra.mxu0 %v541
    %v1047 = vpop.f32.mrf.mxu0
    %v1048 = vadd.f32 %v959, %v1047
    %v1049 = vpop.f32.mrf.mxu0
    %v1050 = vadd.f32 %v961, %v1049
    %1051 = vmatmul.bf16.gmra.mxu0 %v543
    %v1052 = vpop.f32.mrf.mxu0
    %v1053 = vadd.f32 %v964, %v1052
    %v1054 = vpop.f32.mrf.mxu0
    %v1055 = vadd.f32 %v966, %v1054
    %1056 = vmatmul.bf16.gmra.mxu0 %v545
    %v1057 = vpop.f32.mrf.mxu0
    %v1058 = vadd.f32 %v969, %v1057
    %v1059 = vpop.f32.mrf.mxu0
    %v1060 = vadd.f32 %v971, %v1059
    %1061 = vmatmul.bf16.gmra.mxu0 %v547
    %v1062 = vpop.f32.mrf.mxu0
    %v1063 = vadd.f32 %v974, %v1062
    %v1064 = vpop.f32.mrf.mxu0
    %v1065 = vadd.f32 %v976, %v1064
    %1066 = vmatmul.bf16.gmra.mxu0 %v549
    %v1067 = vpop.f32.mrf.mxu0
    %v1068 = vadd.f32 %v979, %v1067
    %v1069 = vpop.f32.mrf.mxu0
    %v1070 = vadd.f32 %v981, %v1069
    %1071 = vmatmul.bf16.gmra.mxu0 %v551
    %v1072 = vpop.f32.mrf.mxu0
    %v1073 = vadd.f32 %v984, %v1072
    %v1074 = vpop.f32.mrf.mxu0
    %v1075 = vadd.f32 %v986, %v1074
    %1076 = vmatmul.bf16.gmra.mxu0 %v553
    %v1077 = vpop.f32.mrf.mxu0
    %v1078 = vadd.f32 %v989, %v1077
    %v1079 = vpop.f32.mrf.mxu0
    %v1080 = vadd.f32 %v991, %v1079
    %1081 = vmatmul.bf16.gmra.mxu0 %v555
    %v1082 = vpop.f32.mrf.mxu0
    %v1083 = vadd.f32 %v994, %v1082
    %v1084 = vpop.f32.mrf.mxu0
    %v1085 = vadd.f32 %v996, %v1084
    %1086 = vmatmul.bf16.gmra.mxu0 %v557
    %v1087 = vpop.f32.mrf.mxu0
    %v1088 = vadd.f32 %v999, %v1087
    %v1089 = vpop.f32.mrf.mxu0
    %v1090 = vadd.f32 %v1001, %v1089
    %1091 = vmatmul.bf16.gmra.mxu0 %v559
    %v1092 = vpop.f32.mrf.mxu0
    %v1093 = vadd.f32 %v1004, %v1092
    %v1094 = vpop.f32.mrf.mxu0
    %v1095 = vadd.f32 %v1006, %v1094
    %1096 = vmatmul.bf16.gmra.mxu0 %v561
    %v1097 = vpop.f32.mrf.mxu0
    %v1098 = vadd.f32 %v1009, %v1097
    %v1099 = vpop.f32.mrf.mxu0
    %v1100 = vadd.f32 %v1011, %v1099
    %1101 = vmatmul.bf16.gmra.mxu0 %v563
    %v1102 = vpop.f32.mrf.mxu0
    %v1103 = vadd.f32 %v1014, %v1102
    %v1104 = vpop.f32.mrf.mxu0
    %v1105 = vadd.f32 %v1016, %v1104
    %1106 = vmatmul.bf16.gmra.mxu0 %v565
    %v1107 = vpop.f32.mrf.mxu0
    %v1108 = vadd.f32 %v1019, %v1107
    %v1109 = vpop.f32.mrf.mxu0
    %v1110 = vadd.f32 %v1021, %v1109
    %1111 = vmatmul.bf16.gmra.mxu0 %v567
    %v1112 = vpop.f32.mrf.mxu0
    %v1113 = vadd.f32 %v1024, %v1112
    %v1114 = vpop.f32.mrf.mxu0
    %v1115 = vadd.f32 %v1026, %v1114
    %1116 = vmatmul.bf16.gmra.mxu0 %v569
    %v1117 = vpop.f32.mrf.mxu0
    %v1118 = vadd.f32 %v1029, %v1117
    %v1119 = vpop.f32.mrf.mxu0
    %v1120 = vadd.f32 %v1031, %v1119
    %1121 = vmatmul.bf16.gmra.mxu0 %v571
    %v1122 = vpop.f32.mrf.mxu0
    %v1123 = vadd.f32 %v1034, %v1122
    %v1124 = vpop.f32.mrf.mxu0
    %v1125 = vadd.f32 %v1036, %v1124
    %1126 = vdwg.mxu0
    %vm1127 = vcmp.gt.f32.partialorder %v870, 0.0
    %vm1128 = vcmp.gt.f32.partialorder %v1048, 0.0
    %vm1129 = vcmp.gt.f32.partialorder %v872, 0.0
    %vm1130 = vcmp.gt.f32.partialorder %v1050, 0.0
    %vm1131 = vcmp.gt.f32.partialorder %v875, 0.0
    %vm1132 = vcmp.gt.f32.partialorder %v1053, 0.0
    %vm1133 = vcmp.gt.f32.partialorder %v877, 0.0
    %vm1134 = vcmp.gt.f32.partialorder %v1055, 0.0
    %vm1135 = vcmp.gt.f32.partialorder %v880, 0.0
    %vm1136 = vcmp.gt.f32.partialorder %v1058, 0.0
    %vm1137 = vcmp.gt.f32.partialorder %v882, 0.0
    %vm1138 = vcmp.gt.f32.partialorder %v1060, 0.0
    %vm1139 = vcmp.gt.f32.partialorder %v885, 0.0
    %vm1140 = vcmp.gt.f32.partialorder %v1063, 0.0
    %vm1141 = vcmp.gt.f32.partialorder %v887, 0.0
    %vm1142 = vcmp.gt.f32.partialorder %v1065, 0.0
    %vm1143 = vcmp.gt.f32.partialorder %v890, 0.0
    %vm1144 = vcmp.gt.f32.partialorder %v1068, 0.0
    %vm1145 = vcmp.gt.f32.partialorder %v892, 0.0
    %vm1146 = vcmp.gt.f32.partialorder %v1070, 0.0
    %vm1147 = vcmp.gt.f32.partialorder %v895, 0.0
    %vm1148 = vcmp.gt.f32.partialorder %v1073, 0.0
    %vm1149 = vcmp.gt.f32.partialorder %v897, 0.0
    %vm1150 = vcmp.gt.f32.partialorder %v1075, 0.0
    %vm1151 = vcmp.gt.f32.partialorder %v900, 0.0
    %vm1152 = vcmp.gt.f32.partialorder %v1078, 0.0
    %vm1153 = vcmp.gt.f32.partialorder %v902, 0.0
    %vm1154 = vcmp.gt.f32.partialorder %v1080, 0.0
    %vm1155 = vcmp.gt.f32.partialorder %v905, 0.0
    %vm1156 = vcmp.gt.f32.partialorder %v1083, 0.0
    %vm1157 = vcmp.gt.f32.partialorder %v907, 0.0
    %vm1158 = vcmp.gt.f32.partialorder %v1085, 0.0
    %vm1159 = vcmp.gt.f32.partialorder %v910, 0.0
    %vm1160 = vcmp.gt.f32.partialorder %v1088, 0.0
    %vm1161 = vcmp.gt.f32.partialorder %v912, 0.0
    %vm1162 = vcmp.gt.f32.partialorder %v1090, 0.0
    %vm1163 = vcmp.gt.f32.partialorder %v915, 0.0
    %vm1164 = vcmp.gt.f32.partialorder %v1093, 0.0
    %vm1165 = vcmp.gt.f32.partialorder %v917, 0.0
    %vm1166 = vcmp.gt.f32.partialorder %v1095, 0.0
    %vm1167 = vcmp.gt.f32.partialorder %v920, 0.0
    %vm1168 = vcmp.gt.f32.partialorder %v1098, 0.0
    %vm1169 = vcmp.gt.f32.partialorder %v922, 0.0
    %vm1170 = vcmp.gt.f32.partialorder %v1100, 0.0
    %vm1171 = vcmp.gt.f32.partialorder %v925, 0.0
    %vm1172 = vcmp.gt.f32.partialorder %v1103, 0.0
    %vm1173 = vcmp.gt.f32.partialorder %v927, 0.0
    %vm1174 = vcmp.gt.f32.partialorder %v1105, 0.0
    %vm1175 = vcmp.gt.f32.partialorder %v930, 0.0
    %vm1176 = vcmp.gt.f32.partialorder %v1108, 0.0
    %vm1177 = vcmp.gt.f32.partialorder %v932, 0.0
    %vm1178 = vcmp.gt.f32.partialorder %v1110, 0.0
    %vm1179 = vcmp.gt.f32.partialorder %v935, 0.0
    %vm1180 = vcmp.gt.f32.partialorder %v1113, 0.0
    %vm1181 = vcmp.gt.f32.partialorder %v937, 0.0
    %vm1182 = vcmp.gt.f32.partialorder %v1115, 0.0
    %vm1183 = vcmp.gt.f32.partialorder %v940, 0.0
    %vm1184 = vcmp.gt.f32.partialorder %v1118, 0.0
    %vm1185 = vcmp.gt.f32.partialorder %v942, 0.0
    %vm1186 = vcmp.gt.f32.partialorder %v1120, 0.0
    %vm1187 = vcmp.gt.f32.partialorder %v945, 0.0
    %vm1188 = vcmp.gt.f32.partialorder %v1123, 0.0
    %vm1189 = vcmp.gt.f32.partialorder %v947, 0.0
    %vm1190 = vcmp.gt.f32.partialorder %v1125, 0.0
    %v1191 = vmul.f32 %v870, 0.01
    %v1192 = vmul.f32 %v1048, 0.01
    %v1193 = vmul.f32 %v872, 0.01
    %v1194 = vmul.f32 %v1050, 0.01
    %v1195 = vmul.f32 %v875, 0.01
    %v1196 = vmul.f32 %v1053, 0.01
    %v1197 = vmul.f32 %v877, 0.01
    %v1198 = vmul.f32 %v1055, 0.01
    %v1199 = vmul.f32 %v880, 0.01
    %v1200 = vmul.f32 %v1058, 0.01
    %v1201 = vmul.f32 %v882, 0.01
    %v1202 = vmul.f32 %v1060, 0.01
    %v1203 = vmul.f32 %v885, 0.01
    %v1204 = vmul.f32 %v1063, 0.01
    %v1205 = vmul.f32 %v887, 0.01
    %v1206 = vmul.f32 %v1065, 0.01
    %v1207 = vmul.f32 %v890, 0.01
    %v1208 = vmul.f32 %v1068, 0.01
    %v1209 = vmul.f32 %v892, 0.01
    %v1210 = vmul.f32 %v1070, 0.01
    %v1211 = vmul.f32 %v895, 0.01
    %v1212 = vmul.f32 %v1073, 0.01
    %v1213 = vmul.f32 %v897, 0.01
    %v1214 = vmul.f32 %v1075, 0.01
    %v1215 = vmul.f32 %v900, 0.01
    %v1216 = vmul.f32 %v1078, 0.01
    %v1217 = vmul.f32 %v902, 0.01
    %v1218 = vmul.f32 %v1080, 0.01
    %v1219 = vmul.f32 %v905, 0.01
    %v1220 = vmul.f32 %v1083, 0.01
    %v1221 = vmul.f32 %v907, 0.01
    %v1222 = vmul.f32 %v1085, 0.01
    %v1223 = vmul.f32 %v910, 0.01
    %v1224 = vmul.f32 %v1088, 0.01
    %v1225 = vmul.f32 %v912, 0.01
    %v1226 = vmul.f32 %v1090, 0.01
    %v1227 = vmul.f32 %v915, 0.01
    %v1228 = vmul.f32 %v1093, 0.01
    %v1229 = vmul.f32 %v917, 0.01
    %v1230 = vmul.f32 %v1095, 0.01
    %v1231 = vmul.f32 %v920, 0.01
    %v1232 = vmul.f32 %v1098, 0.01
    %v1233 = vmul.f32 %v922, 0.01
    %v1234 = vmul.f32 %v1100, 0.01
    %v1235 = vmul.f32 %v925, 0.01
    %v1236 = vmul.f32 %v1103, 0.01
    %v1237 = vmul.f32 %v927, 0.01
    %v1238 = vmul.f32 %v1105, 0.01
    %v1239 = vmul.f32 %v930, 0.01
    %v1240 = vmul.f32 %v1108, 0.01
    %v1241 = vmul.f32 %v932, 0.01
    %v1242 = vmul.f32 %v1110, 0.01
    %v1243 = vmul.f32 %v935, 0.01
    %v1244 = vmul.f32 %v1113, 0.01
    %v1245 = vmul.f32 %v937, 0.01
    %v1246 = vmul.f32 %v1115, 0.01
    %v1247 = vmul.f32 %v940, 0.01
    %v1248 = vmul.f32 %v1118, 0.01
    %v1249 = vmul.f32 %v942, 0.01
    %v1250 = vmul.f32 %v1120, 0.01
    %v1251 = vmul.f32 %v945, 0.01
    %v1252 = vmul.f32 %v1123, 0.01
    %v1253 = vmul.f32 %v947, 0.01
    %v1254 = vmul.f32 %v1125, 0.01
    %v1255 = vsel %vm1127, %v870, %v1191
    %v1256 = vsel %vm1128, %v1048, %v1192
    %v1257 = vsel %vm1129, %v872, %v1193
    %v1258 = vsel %vm1130, %v1050, %v1194
    %v1259 = vsel %vm1131, %v875, %v1195
    %v1260 = vsel %vm1132, %v1053, %v1196
    %v1261 = vsel %vm1133, %v877, %v1197
    %v1262 = vsel %vm1134, %v1055, %v1198
    %v1263 = vsel %vm1135, %v880, %v1199
    %v1264 = vsel %vm1136, %v1058, %v1200
    %v1265 = vsel %vm1137, %v882, %v1201
    %v1266 = vsel %vm1138, %v1060, %v1202
    %v1267 = vsel %vm1139, %v885, %v1203
    %v1268 = vsel %vm1140, %v1063, %v1204
    %v1269 = vsel %vm1141, %v887, %v1205
    %v1270 = vsel %vm1142, %v1065, %v1206
    %v1271 = vsel %vm1143, %v890, %v1207
    %v1272 = vsel %vm1144, %v1068, %v1208
    %v1273 = vsel %vm1145, %v892, %v1209
    %v1274 = vsel %vm1146, %v1070, %v1210
    %v1275 = vsel %vm1147, %v895, %v1211
    %v1276 = vsel %vm1148, %v1073, %v1212
    %v1277 = vsel %vm1149, %v897, %v1213
    %v1278 = vsel %vm1150, %v1075, %v1214
    %v1279 = vsel %vm1151, %v900, %v1215
    %v1280 = vsel %vm1152, %v1078, %v1216
    %v1281 = vsel %vm1153, %v902, %v1217
    %v1282 = vsel %vm1154, %v1080, %v1218
    %v1283 = vsel %vm1155, %v905, %v1219
    %v1284 = vsel %vm1156, %v1083, %v1220
    %v1285 = vsel %vm1157, %v907, %v1221
    %v1286 = vsel %vm1158, %v1085, %v1222
    %v1287 = vsel %vm1159, %v910, %v1223
    %v1288 = vsel %vm1160, %v1088, %v1224
    %v1289 = vsel %vm1161, %v912, %v1225
    %v1290 = vsel %vm1162, %v1090, %v1226
    %v1291 = vsel %vm1163, %v915, %v1227
    %v1292 = vsel %vm1164, %v1093, %v1228
    %v1293 = vsel %vm1165, %v917, %v1229
    %v1294 = vsel %vm1166, %v1095, %v1230
    %v1295 = vsel %vm1167, %v920, %v1231
    %v1296 = vsel %vm1168, %v1098, %v1232
    %v1297 = vsel %vm1169, %v922, %v1233
    %v1298 = vsel %vm1170, %v1100, %v1234
    %v1299 = vsel %vm1171, %v925, %v1235
    %v1300 = vsel %vm1172, %v1103, %v1236
    %v1301 = vsel %vm1173, %v927, %v1237
    %v1302 = vsel %vm1174, %v1105, %v1238
    %v1303 = vsel %vm1175, %v930, %v1239
    %v1304 = vsel %vm1176, %v1108, %v1240
    %v1305 = vsel %vm1177, %v932, %v1241
    %v1306 = vsel %vm1178, %v1110, %v1242
    %v1307 = vsel %vm1179, %v935, %v1243
    %v1308 = vsel %vm1180, %v1113, %v1244
    %v1309 = vsel %vm1181, %v937, %v1245
    %v1310 = vsel %vm1182, %v1115, %v1246
    %v1311 = vsel %vm1183, %v940, %v1247
    %v1312 = vsel %vm1184, %v1118, %v1248
    %v1313 = vsel %vm1185, %v942, %v1249
    %v1314 = vsel %vm1186, %v1120, %v1250
    %v1315 = vsel %vm1187, %v945, %v1251
    %v1316 = vsel %vm1188, %v1123, %v1252
    %v1317 = vsel %vm1189, %v947, %v1253
    %v1318 = vsel %vm1190, %v1125, %v1254
    %v1319 = vpack.c.bf16 %v1257, %v1255
    %v1320 = vpack.c.bf16 %v1258, %v1256
    %v1321 = vpack.c.bf16 %v1261, %v1259
    %v1322 = vpack.c.bf16 %v1262, %v1260
    %v1323 = vpack.c.bf16 %v1265, %v1263
    %v1324 = vpack.c.bf16 %v1266, %v1264
    %v1325 = vpack.c.bf16 %v1269, %v1267
    %v1326 = vpack.c.bf16 %v1270, %v1268
    %v1327 = vpack.c.bf16 %v1273, %v1271
    %v1328 = vpack.c.bf16 %v1274, %v1272
    %v1329 = vpack.c.bf16 %v1277, %v1275
    %v1330 = vpack.c.bf16 %v1278, %v1276
    %v1331 = vpack.c.bf16 %v1281, %v1279
    %v1332 = vpack.c.bf16 %v1282, %v1280
    %v1333 = vpack.c.bf16 %v1285, %v1283
    %v1334 = vpack.c.bf16 %v1286, %v1284
    %v1335 = vpack.c.bf16 %v1289, %v1287
    %v1336 = vpack.c.bf16 %v1290, %v1288
    %v1337 = vpack.c.bf16 %v1293, %v1291
    %v1338 = vpack.c.bf16 %v1294, %v1292
    %v1339 = vpack.c.bf16 %v1297, %v1295
    %v1340 = vpack.c.bf16 %v1298, %v1296
    %v1341 = vpack.c.bf16 %v1301, %v1299
    %v1342 = vpack.c.bf16 %v1302, %v1300
    %v1343 = vpack.c.bf16 %v1305, %v1303
    %v1344 = vpack.c.bf16 %v1306, %v1304
    %v1345 = vpack.c.bf16 %v1309, %v1307
    %v1346 = vpack.c.bf16 %v1310, %v1308
    %v1347 = vpack.c.bf16 %v1313, %v1311
    %v1348 = vpack.c.bf16 %v1314, %v1312
    %v1349 = vpack.c.bf16 %v1317, %v1315
    %v1350 = vpack.c.bf16 %v1318, %v1316
    %s1351 = scalar_lea.vmem [#allocation2], 256
    %v1352 = vld [vmem:[%s1351] sm:$0xff]
    %v1353 = vld [vmem:[%s1351 + $0x8] sm:$0xff]
    %v1354 = vld [vmem:[%s1351 + $0x10] sm:$0xff]
    %v1355 = vld [vmem:[%s1351 + $0x18] sm:$0xff]
    %v1356 = vld [vmem:[%s1351 + $0x20] sm:$0xff]
    %v1357 = vld [vmem:[%s1351 + $0x28] sm:$0xff]
    %v1358 = vld [vmem:[%s1351 + $0x30] sm:$0xff]
    %v1359 = vld [vmem:[%s1351 + $0x38] sm:$0xff]
    %v1360 = vld [vmem:[%s1351 + $0x40] sm:$0xff]
    %v1361 = vld [vmem:[%s1351 + $0x48] sm:$0xff]
    %v1362 = vld [vmem:[%s1351 + $0x50] sm:$0xff]
    %v1363 = vld [vmem:[%s1351 + $0x58] sm:$0xff]
    %v1364 = vld [vmem:[%s1351 + $0x60] sm:$0xff]
    %v1365 = vld [vmem:[%s1351 + $0x68] sm:$0xff]
    %v1366 = vld [vmem:[%s1351 + $0x70] sm:$0xff]
    %v1367 = vld [vmem:[%s1351 + $0x78] sm:$0xff]
    %v1368 = vld [vmem:[%s1351 + $0x80] sm:$0xff]
    %v1369 = vld [vmem:[%s1351 + $0x88] sm:$0xff]
    %v1370 = vld [vmem:[%s1351 + $0x90] sm:$0xff]
    %v1371 = vld [vmem:[%s1351 + $0x98] sm:$0xff]
    %v1372 = vld [vmem:[%s1351 + $0xa0] sm:$0xff]
    %v1373 = vld [vmem:[%s1351 + $0xa8] sm:$0xff]
    %v1374 = vld [vmem:[%s1351 + $0xb0] sm:$0xff]
    %v1375 = vld [vmem:[%s1351 + $0xb8] sm:$0xff]
    %v1376 = vld [vmem:[%s1351 + $0xc0] sm:$0xff]
    %v1377 = vld [vmem:[%s1351 + $0xc8] sm:$0xff]
    %v1378 = vld [vmem:[%s1351 + $0xd0] sm:$0xff]
    %v1379 = vld [vmem:[%s1351 + $0xd8] sm:$0xff]
    %v1380 = vld [vmem:[%s1351 + $0xe0] sm:$0xff]
    %v1381 = vld [vmem:[%s1351 + $0xe8] sm:$0xff]
    %v1382 = vld [vmem:[%s1351 + $0xf0] sm:$0xff]
    %v1383 = vld [vmem:[%s1351 + $0xf8] sm:$0xff]
    %s1384 = scalar_lea.vmem %s4, 2
    %v1385 = vld [vmem:[%s1384] ss:$8 sm:$0x3]
    %v1387 = vperm.slane %v1385, 0
    %v1388 = vperm.slane %v1385, 1
    %v1423 = vunpack.c.l.b16 %v1352
    %v1424 = vunpack.c.h.b16 %v1352
    %v1425 = vunpack.c.l.b16 %v1353
    %v1426 = vunpack.c.h.b16 %v1353
    %v1427 = vunpack.c.l.b16 %v1354
    %v1428 = vunpack.c.h.b16 %v1354
    %v1429 = vunpack.c.l.b16 %v1355
    %v1430 = vunpack.c.h.b16 %v1355
    %v1431 = vunpack.c.l.b16 %v1356
    %v1432 = vunpack.c.h.b16 %v1356
    %v1433 = vunpack.c.l.b16 %v1357
    %v1434 = vunpack.c.h.b16 %v1357
    %v1435 = vunpack.c.l.b16 %v1358
    %v1436 = vunpack.c.h.b16 %v1358
    %v1437 = vunpack.c.l.b16 %v1359
    %v1438 = vunpack.c.h.b16 %v1359
    %v1439 = vunpack.c.l.b16 %v1360
    %v1440 = vunpack.c.h.b16 %v1360
    %v1441 = vunpack.c.l.b16 %v1361
    %v1442 = vunpack.c.h.b16 %v1361
    %v1443 = vunpack.c.l.b16 %v1362
    %v1444 = vunpack.c.h.b16 %v1362
    %v1445 = vunpack.c.l.b16 %v1363
    %v1446 = vunpack.c.h.b16 %v1363
    %v1447 = vunpack.c.l.b16 %v1364
    %v1448 = vunpack.c.h.b16 %v1364
    %v1449 = vunpack.c.l.b16 %v1365
    %v1450 = vunpack.c.h.b16 %v1365
    %v1451 = vunpack.c.l.b16 %v1366
    %v1452 = vunpack.c.h.b16 %v1366
    %v1453 = vunpack.c.l.b16 %v1367
    %v1454 = vunpack.c.h.b16 %v1367
    %v1455 = vunpack.c.l.b16 %v1368
    %v1456 = vunpack.c.h.b16 %v1368
    %v1457 = vunpack.c.l.b16 %v1369
    %v1458 = vunpack.c.h.b16 %v1369
    %v1459 = vunpack.c.l.b16 %v1370
    %v1460 = vunpack.c.h.b16 %v1370
    %v1461 = vunpack.c.l.b16 %v1371
    %v1462 = vunpack.c.h.b16 %v1371
    %v1463 = vunpack.c.l.b16 %v1372
    %v1464 = vunpack.c.h.b16 %v1372
    %v1465 = vunpack.c.l.b16 %v1373
    %v1466 = vunpack.c.h.b16 %v1373
    %v1467 = vunpack.c.l.b16 %v1374
    %v1468 = vunpack.c.h.b16 %v1374
    %v1469 = vunpack.c.l.b16 %v1375
    %v1470 = vunpack.c.h.b16 %v1375
    %v1471 = vunpack.c.l.b16 %v1376
    %v1472 = vunpack.c.h.b16 %v1376
    %v1473 = vunpack.c.l.b16 %v1377
    %v1474 = vunpack.c.h.b16 %v1377
    %v1475 = vunpack.c.l.b16 %v1378
    %v1476 = vunpack.c.h.b16 %v1378
    %v1477 = vunpack.c.l.b16 %v1379
    %v1478 = vunpack.c.h.b16 %v1379
    %v1479 = vunpack.c.l.b16 %v1380
    %v1480 = vunpack.c.h.b16 %v1380
    %v1481 = vunpack.c.l.b16 %v1381
    %v1482 = vunpack.c.h.b16 %v1381
    %v1483 = vunpack.c.l.b16 %v1382
    %v1484 = vunpack.c.h.b16 %v1382
    %v1485 = vunpack.c.l.b16 %v1383
    %v1486 = vunpack.c.h.b16 %v1383
    %v1487 = vpack.c.b16 %v1425, %v1423
    %v1488 = vpack.c.b16 %v1426, %v1424
    %v1489 = vpack.c.b16 %v1429, %v1427
    %v1490 = vpack.c.b16 %v1430, %v1428
    %v1491 = vpack.c.b16 %v1433, %v1431
    %v1492 = vpack.c.b16 %v1434, %v1432
    %v1493 = vpack.c.b16 %v1437, %v1435
    %v1494 = vpack.c.b16 %v1438, %v1436
    %v1495 = vpack.c.b16 %v1441, %v1439
    %v1496 = vpack.c.b16 %v1442, %v1440
    %v1497 = vpack.c.b16 %v1445, %v1443
    %v1498 = vpack.c.b16 %v1446, %v1444
    %v1499 = vpack.c.b16 %v1449, %v1447
    %v1500 = vpack.c.b16 %v1450, %v1448
    %v1501 = vpack.c.b16 %v1453, %v1451
    %v1502 = vpack.c.b16 %v1454, %v1452
    %v1503 = vpack.c.b16 %v1457, %v1455
    %v1504 = vpack.c.b16 %v1458, %v1456
    %v1505 = vpack.c.b16 %v1461, %v1459
    %v1506 = vpack.c.b16 %v1462, %v1460
    %v1507 = vpack.c.b16 %v1465, %v1463
    %v1508 = vpack.c.b16 %v1466, %v1464
    %v1509 = vpack.c.b16 %v1469, %v1467
    %v1510 = vpack.c.b16 %v1470, %v1468
    %v1511 = vpack.c.b16 %v1473, %v1471
    %v1512 = vpack.c.b16 %v1474, %v1472
    %v1513 = vpack.c.b16 %v1477, %v1475
    %v1514 = vpack.c.b16 %v1478, %v1476
    %v1515 = vpack.c.b16 %v1481, %v1479
    %v1516 = vpack.c.b16 %v1482, %v1480
    %v1517 = vpack.c.b16 %v1485, %v1483
    %v1518 = vpack.c.b16 %v1486, %v1484
    %1551 = vmatpush.bf16.msra.mxu0 %v1501
    %1552 = vmatpush.bf16.msra.mxu0 %v1499
    %1553 = vmatpush.bf16.msra.mxu0 %v1497
    %1554 = vmatpush.bf16.msra.mxu0 %v1495
    %1555 = vmatpush.bf16.msra.mxu0 %v1493
    %1556 = vmatpush.bf16.msra.mxu0 %v1491
    %1557 = vmatpush.bf16.msra.mxu0 %v1489
    %1558 = vmatpush.bf16.msra.mxu0 %v1487
    %1559 = vmatmul.bf16.gmra.mxu0 %v1319
    %v1560 = vpop.f32.mrf.mxu0
    %v1561 = vadd.f32 %v1387, %v1560
    %v1562 = vpop.f32.mrf.mxu0
    %v1563 = vadd.f32 %v1387, %v1562
    %1564 = vmatmul.bf16.gmra.mxu0 %v1321
    %v1565 = vpop.f32.mrf.mxu0
    %v1566 = vadd.f32 %v1387, %v1565
    %v1567 = vpop.f32.mrf.mxu0
    %v1568 = vadd.f32 %v1387, %v1567
    %1569 = vmatmul.bf16.gmra.mxu0 %v1323
    %v1570 = vpop.f32.mrf.mxu0
    %v1571 = vadd.f32 %v1387, %v1570
    %v1572 = vpop.f32.mrf.mxu0
    %v1573 = vadd.f32 %v1387, %v1572
    %1574 = vmatmul.bf16.gmra.mxu0 %v1325
    %v1575 = vpop.f32.mrf.mxu0
    %v1576 = vadd.f32 %v1387, %v1575
    %v1577 = vpop.f32.mrf.mxu0
    %v1578 = vadd.f32 %v1387, %v1577
    %1579 = vmatmul.bf16.gmra.mxu0 %v1327
    %v1580 = vpop.f32.mrf.mxu0
    %v1581 = vadd.f32 %v1387, %v1580
    %v1582 = vpop.f32.mrf.mxu0
    %v1583 = vadd.f32 %v1387, %v1582
    %1584 = vmatmul.bf16.gmra.mxu0 %v1329
    %v1585 = vpop.f32.mrf.mxu0
    %v1586 = vadd.f32 %v1387, %v1585
    %v1587 = vpop.f32.mrf.mxu0
    %v1588 = vadd.f32 %v1387, %v1587
    %1589 = vmatmul.bf16.gmra.mxu0 %v1331
    %v1590 = vpop.f32.mrf.mxu0
    %v1591 = vadd.f32 %v1387, %v1590
    %v1592 = vpop.f32.mrf.mxu0
    %v1593 = vadd.f32 %v1387, %v1592
    %1594 = vmatmul.bf16.gmra.mxu0 %v1333
    %v1595 = vpop.f32.mrf.mxu0
    %v1596 = vadd.f32 %v1387, %v1595
    %v1597 = vpop.f32.mrf.mxu0
    %v1598 = vadd.f32 %v1387, %v1597
    %1599 = vmatmul.bf16.gmra.mxu0 %v1335
    %v1600 = vpop.f32.mrf.mxu0
    %v1601 = vadd.f32 %v1387, %v1600
    %v1602 = vpop.f32.mrf.mxu0
    %v1603 = vadd.f32 %v1387, %v1602
    %1604 = vmatmul.bf16.gmra.mxu0 %v1337
    %v1605 = vpop.f32.mrf.mxu0
    %v1606 = vadd.f32 %v1387, %v1605
    %v1607 = vpop.f32.mrf.mxu0
    %v1608 = vadd.f32 %v1387, %v1607
    %1609 = vmatmul.bf16.gmra.mxu0 %v1339
    %v1610 = vpop.f32.mrf.mxu0
    %v1611 = vadd.f32 %v1387, %v1610
    %v1612 = vpop.f32.mrf.mxu0
    %v1613 = vadd.f32 %v1387, %v1612
    %1614 = vmatmul.bf16.gmra.mxu0 %v1341
    %v1615 = vpop.f32.mrf.mxu0
    %v1616 = vadd.f32 %v1387, %v1615
    %v1617 = vpop.f32.mrf.mxu0
    %v1618 = vadd.f32 %v1387, %v1617
    %1619 = vmatmul.bf16.gmra.mxu0 %v1343
    %v1620 = vpop.f32.mrf.mxu0
    %v1621 = vadd.f32 %v1387, %v1620
    %v1622 = vpop.f32.mrf.mxu0
    %v1623 = vadd.f32 %v1387, %v1622
    %1624 = vmatmul.bf16.gmra.mxu0 %v1345
    %v1625 = vpop.f32.mrf.mxu0
    %v1626 = vadd.f32 %v1387, %v1625
    %v1627 = vpop.f32.mrf.mxu0
    %v1628 = vadd.f32 %v1387, %v1627
    %1629 = vmatmul.bf16.gmra.mxu0 %v1347
    %v1630 = vpop.f32.mrf.mxu0
    %v1631 = vadd.f32 %v1387, %v1630
    %v1632 = vpop.f32.mrf.mxu0
    %v1633 = vadd.f32 %v1387, %v1632
    %1634 = vmatmul.bf16.gmra.mxu0 %v1349
    %v1635 = vpop.f32.mrf.mxu0
    %v1636 = vadd.f32 %v1387, %v1635
    %v1637 = vpop.f32.mrf.mxu0
    %v1638 = vadd.f32 %v1387, %v1637
    %1639 = vdwg.mxu0
    %1640 = vmatpush.bf16.msra.mxu0 %v1517
    %1641 = vmatpush.bf16.msra.mxu0 %v1515
    %1642 = vmatpush.bf16.msra.mxu0 %v1513
    %1643 = vmatpush.bf16.msra.mxu0 %v1511
    %1644 = vmatpush.bf16.msra.mxu0 %v1509
    %1645 = vmatpush.bf16.msra.mxu0 %v1507
    %1646 = vmatpush.bf16.msra.mxu0 %v1505
    %1647 = vmatpush.bf16.msra.mxu0 %v1503
    %1648 = vmatmul.bf16.gmra.mxu0 %v1320
    %v1649 = vpop.f32.mrf.mxu0
    %v1650 = vadd.f32 %v1561, %v1649
    %v1651 = vpop.f32.mrf.mxu0
    %v1652 = vadd.f32 %v1563, %v1651
    %1653 = vmatmul.bf16.gmra.mxu0 %v1322
    %v1654 = vpop.f32.mrf.mxu0
    %v1655 = vadd.f32 %v1566, %v1654
    %v1656 = vpop.f32.mrf.mxu0
    %v1657 = vadd.f32 %v1568, %v1656
    %1658 = vmatmul.bf16.gmra.mxu0 %v1324
    %v1659 = vpop.f32.mrf.mxu0
    %v1660 = vadd.f32 %v1571, %v1659
    %v1661 = vpop.f32.mrf.mxu0
    %v1662 = vadd.f32 %v1573, %v1661
    %1663 = vmatmul.bf16.gmra.mxu0 %v1326
    %v1664 = vpop.f32.mrf.mxu0
    %v1665 = vadd.f32 %v1576, %v1664
    %v1666 = vpop.f32.mrf.mxu0
    %v1667 = vadd.f32 %v1578, %v1666
    %1668 = vmatmul.bf16.gmra.mxu0 %v1328
    %v1669 = vpop.f32.mrf.mxu0
    %v1670 = vadd.f32 %v1581, %v1669
    %v1671 = vpop.f32.mrf.mxu0
    %v1672 = vadd.f32 %v1583, %v1671
    %1673 = vmatmul.bf16.gmra.mxu0 %v1330
    %v1674 = vpop.f32.mrf.mxu0
    %v1675 = vadd.f32 %v1586, %v1674
    %v1676 = vpop.f32.mrf.mxu0
    %v1677 = vadd.f32 %v1588, %v1676
    %1678 = vmatmul.bf16.gmra.mxu0 %v1332
    %v1679 = vpop.f32.mrf.mxu0
    %v1680 = vadd.f32 %v1591, %v1679
    %v1681 = vpop.f32.mrf.mxu0
    %v1682 = vadd.f32 %v1593, %v1681
    %1683 = vmatmul.bf16.gmra.mxu0 %v1334
    %v1684 = vpop.f32.mrf.mxu0
    %v1685 = vadd.f32 %v1596, %v1684
    %v1686 = vpop.f32.mrf.mxu0
    %v1687 = vadd.f32 %v1598, %v1686
    %1688 = vmatmul.bf16.gmra.mxu0 %v1336
    %v1689 = vpop.f32.mrf.mxu0
    %v1690 = vadd.f32 %v1601, %v1689
    %v1691 = vpop.f32.mrf.mxu0
    %v1692 = vadd.f32 %v1603, %v1691
    %1693 = vmatmul.bf16.gmra.mxu0 %v1338
    %v1694 = vpop.f32.mrf.mxu0
    %v1695 = vadd.f32 %v1606, %v1694
    %v1696 = vpop.f32.mrf.mxu0
    %v1697 = vadd.f32 %v1608, %v1696
    %1698 = vmatmul.bf16.gmra.mxu0 %v1340
    %v1699 = vpop.f32.mrf.mxu0
    %v1700 = vadd.f32 %v1611, %v1699
    %v1701 = vpop.f32.mrf.mxu0
    %v1702 = vadd.f32 %v1613, %v1701
    %1703 = vmatmul.bf16.gmra.mxu0 %v1342
    %v1704 = vpop.f32.mrf.mxu0
    %v1705 = vadd.f32 %v1616, %v1704
    %v1706 = vpop.f32.mrf.mxu0
    %v1707 = vadd.f32 %v1618, %v1706
    %1708 = vmatmul.bf16.gmra.mxu0 %v1344
    %v1709 = vpop.f32.mrf.mxu0
    %v1710 = vadd.f32 %v1621, %v1709
    %v1711 = vpop.f32.mrf.mxu0
    %v1712 = vadd.f32 %v1623, %v1711
    %1713 = vmatmul.bf16.gmra.mxu0 %v1346
    %v1714 = vpop.f32.mrf.mxu0
    %v1715 = vadd.f32 %v1626, %v1714
    %v1716 = vpop.f32.mrf.mxu0
    %v1717 = vadd.f32 %v1628, %v1716
    %1718 = vmatmul.bf16.gmra.mxu0 %v1348
    %v1719 = vpop.f32.mrf.mxu0
    %v1720 = vadd.f32 %v1631, %v1719
    %v1721 = vpop.f32.mrf.mxu0
    %v1722 = vadd.f32 %v1633, %v1721
    %1723 = vmatmul.bf16.gmra.mxu0 %v1350
    %v1724 = vpop.f32.mrf.mxu0
    %v1725 = vadd.f32 %v1636, %v1724
    %v1726 = vpop.f32.mrf.mxu0
    %v1727 = vadd.f32 %v1638, %v1726
    %1728 = vdwg.mxu0
    %1729 = vmatpush.bf16.msra.mxu0 %v1502
    %1730 = vmatpush.bf16.msra.mxu0 %v1500
    %1731 = vmatpush.bf16.msra.mxu0 %v1498
    %1732 = vmatpush.bf16.msra.mxu0 %v1496
    %1733 = vmatpush.bf16.msra.mxu0 %v1494
    %1734 = vmatpush.bf16.msra.mxu0 %v1492
    %1735 = vmatpush.bf16.msra.mxu0 %v1490
    %1736 = vmatpush.bf16.msra.mxu0 %v1488
    %1737 = vmatmul.bf16.gmra.mxu0 %v1319
    %v1738 = vpop.f32.mrf.mxu0
    %v1739 = vadd.f32 %v1388, %v1738
    %v1740 = vpop.f32.mrf.mxu0
    %v1741 = vadd.f32 %v1388, %v1740
    %1742 = vmatmul.bf16.gmra.mxu0 %v1321
    %v1743 = vpop.f32.mrf.mxu0
    %v1744 = vadd.f32 %v1388, %v1743
    %v1745 = vpop.f32.mrf.mxu0
    %v1746 = vadd.f32 %v1388, %v1745
    %1747 = vmatmul.bf16.gmra.mxu0 %v1323
    %v1748 = vpop.f32.mrf.mxu0
    %v1749 = vadd.f32 %v1388, %v1748
    %v1750 = vpop.f32.mrf.mxu0
    %v1751 = vadd.f32 %v1388, %v1750
    %1752 = vmatmul.bf16.gmra.mxu0 %v1325
    %v1753 = vpop.f32.mrf.mxu0
    %v1754 = vadd.f32 %v1388, %v1753
    %v1755 = vpop.f32.mrf.mxu0
    %v1756 = vadd.f32 %v1388, %v1755
    %1757 = vmatmul.bf16.gmra.mxu0 %v1327
    %v1758 = vpop.f32.mrf.mxu0
    %v1759 = vadd.f32 %v1388, %v1758
    %v1760 = vpop.f32.mrf.mxu0
    %v1761 = vadd.f32 %v1388, %v1760
    %1762 = vmatmul.bf16.gmra.mxu0 %v1329
    %v1763 = vpop.f32.mrf.mxu0
    %v1764 = vadd.f32 %v1388, %v1763
    %v1765 = vpop.f32.mrf.mxu0
    %v1766 = vadd.f32 %v1388, %v1765
    %1767 = vmatmul.bf16.gmra.mxu0 %v1331
    %v1768 = vpop.f32.mrf.mxu0
    %v1769 = vadd.f32 %v1388, %v1768
    %v1770 = vpop.f32.mrf.mxu0
    %v1771 = vadd.f32 %v1388, %v1770
    %1772 = vmatmul.bf16.gmra.mxu0 %v1333
    %v1773 = vpop.f32.mrf.mxu0
    %v1774 = vadd.f32 %v1388, %v1773
    %v1775 = vpop.f32.mrf.mxu0
    %v1776 = vadd.f32 %v1388, %v1775
    %1777 = vmatmul.bf16.gmra.mxu0 %v1335
    %v1778 = vpop.f32.mrf.mxu0
    %v1779 = vadd.f32 %v1388, %v1778
    %v1780 = vpop.f32.mrf.mxu0
    %v1781 = vadd.f32 %v1388, %v1780
    %1782 = vmatmul.bf16.gmra.mxu0 %v1337
    %v1783 = vpop.f32.mrf.mxu0
    %v1784 = vadd.f32 %v1388, %v1783
    %v1785 = vpop.f32.mrf.mxu0
    %v1786 = vadd.f32 %v1388, %v1785
    %1787 = vmatmul.bf16.gmra.mxu0 %v1339
    %v1788 = vpop.f32.mrf.mxu0
    %v1789 = vadd.f32 %v1388, %v1788
    %v1790 = vpop.f32.mrf.mxu0
    %v1791 = vadd.f32 %v1388, %v1790
    %1792 = vmatmul.bf16.gmra.mxu0 %v1341
    %v1793 = vpop.f32.mrf.mxu0
    %v1794 = vadd.f32 %v1388, %v1793
    %v1795 = vpop.f32.mrf.mxu0
    %v1796 = vadd.f32 %v1388, %v1795
    %1797 = vmatmul.bf16.gmra.mxu0 %v1343
    %v1798 = vpop.f32.mrf.mxu0
    %v1799 = vadd.f32 %v1388, %v1798
    %v1800 = vpop.f32.mrf.mxu0
    %v1801 = vadd.f32 %v1388, %v1800
    %1802 = vmatmul.bf16.gmra.mxu0 %v1345
    %v1803 = vpop.f32.mrf.mxu0
    %v1804 = vadd.f32 %v1388, %v1803
    %v1805 = vpop.f32.mrf.mxu0
    %v1806 = vadd.f32 %v1388, %v1805
    %1807 = vmatmul.bf16.gmra.mxu0 %v1347
    %v1808 = vpop.f32.mrf.mxu0
    %v1809 = vadd.f32 %v1388, %v1808
    %v1810 = vpop.f32.mrf.mxu0
    %v1811 = vadd.f32 %v1388, %v1810
    %1812 = vmatmul.bf16.gmra.mxu0 %v1349
    %v1813 = vpop.f32.mrf.mxu0
    %v1814 = vadd.f32 %v1388, %v1813
    %v1815 = vpop.f32.mrf.mxu0
    %v1816 = vadd.f32 %v1388, %v1815
    %1817 = vdwg.mxu0
    %1818 = vmatpush.bf16.msra.mxu0 %v1518
    %1819 = vmatpush.bf16.msra.mxu0 %v1516
    %1820 = vmatpush.bf16.msra.mxu0 %v1514
    %1821 = vmatpush.bf16.msra.mxu0 %v1512
    %1822 = vmatpush.bf16.msra.mxu0 %v1510
    %1823 = vmatpush.bf16.msra.mxu0 %v1508
    %1824 = vmatpush.bf16.msra.mxu0 %v1506
    %1825 = vmatpush.bf16.msra.mxu0 %v1504
    %1826 = vmatmul.bf16.gmra.mxu0 %v1320
    %v1827 = vpop.f32.mrf.mxu0
    %v1828 = vadd.f32 %v1739, %v1827
    %v1829 = vpop.f32.mrf.mxu0
    %v1830 = vadd.f32 %v1741, %v1829
    %1831 = vmatmul.bf16.gmra.mxu0 %v1322
    %v1832 = vpop.f32.mrf.mxu0
    %v1833 = vadd.f32 %v1744, %v1832
    %v1834 = vpop.f32.mrf.mxu0
    %v1835 = vadd.f32 %v1746, %v1834
    %1836 = vmatmul.bf16.gmra.mxu0 %v1324
    %v1837 = vpop.f32.mrf.mxu0
    %v1838 = vadd.f32 %v1749, %v1837
    %v1839 = vpop.f32.mrf.mxu0
    %v1840 = vadd.f32 %v1751, %v1839
    %1841 = vmatmul.bf16.gmra.mxu0 %v1326
    %v1842 = vpop.f32.mrf.mxu0
    %v1843 = vadd.f32 %v1754, %v1842
    %v1844 = vpop.f32.mrf.mxu0
    %v1845 = vadd.f32 %v1756, %v1844
    %1846 = vmatmul.bf16.gmra.mxu0 %v1328
    %v1847 = vpop.f32.mrf.mxu0
    %v1848 = vadd.f32 %v1759, %v1847
    %v1849 = vpop.f32.mrf.mxu0
    %v1850 = vadd.f32 %v1761, %v1849
    %1851 = vmatmul.bf16.gmra.mxu0 %v1330
    %v1852 = vpop.f32.mrf.mxu0
    %v1853 = vadd.f32 %v1764, %v1852
    %v1854 = vpop.f32.mrf.mxu0
    %v1855 = vadd.f32 %v1766, %v1854
    %1856 = vmatmul.bf16.gmra.mxu0 %v1332
    %v1857 = vpop.f32.mrf.mxu0
    %v1858 = vadd.f32 %v1769, %v1857
    %v1859 = vpop.f32.mrf.mxu0
    %v1860 = vadd.f32 %v1771, %v1859
    %1861 = vmatmul.bf16.gmra.mxu0 %v1334
    %v1862 = vpop.f32.mrf.mxu0
    %v1863 = vadd.f32 %v1774, %v1862
    %v1864 = vpop.f32.mrf.mxu0
    %v1865 = vadd.f32 %v1776, %v1864
    %1866 = vmatmul.bf16.gmra.mxu0 %v1336
    %v1867 = vpop.f32.mrf.mxu0
    %v1868 = vadd.f32 %v1779, %v1867
    %v1869 = vpop.f32.mrf.mxu0
    %v1870 = vadd.f32 %v1781, %v1869
    %1871 = vmatmul.bf16.gmra.mxu0 %v1338
    %v1872 = vpop.f32.mrf.mxu0
    %v1873 = vadd.f32 %v1784, %v1872
    %v1874 = vpop.f32.mrf.mxu0
    %v1875 = vadd.f32 %v1786, %v1874
    %1876 = vmatmul.bf16.gmra.mxu0 %v1340
    %v1877 = vpop.f32.mrf.mxu0
    %v1878 = vadd.f32 %v1789, %v1877
    %v1879 = vpop.f32.mrf.mxu0
    %v1880 = vadd.f32 %v1791, %v1879
    %1881 = vmatmul.bf16.gmra.mxu0 %v1342
    %v1882 = vpop.f32.mrf.mxu0
    %v1883 = vadd.f32 %v1794, %v1882
    %v1884 = vpop.f32.mrf.mxu0
    %v1885 = vadd.f32 %v1796, %v1884
    %1886 = vmatmul.bf16.gmra.mxu0 %v1344
    %v1887 = vpop.f32.mrf.mxu0
    %v1888 = vadd.f32 %v1799, %v1887
    %v1889 = vpop.f32.mrf.mxu0
    %v1890 = vadd.f32 %v1801, %v1889
    %1891 = vmatmul.bf16.gmra.mxu0 %v1346
    %v1892 = vpop.f32.mrf.mxu0
    %v1893 = vadd.f32 %v1804, %v1892
    %v1894 = vpop.f32.mrf.mxu0
    %v1895 = vadd.f32 %v1806, %v1894
    %1896 = vmatmul.bf16.gmra.mxu0 %v1348
    %v1897 = vpop.f32.mrf.mxu0
    %v1898 = vadd.f32 %v1809, %v1897
    %v1899 = vpop.f32.mrf.mxu0
    %v1900 = vadd.f32 %v1811, %v1899
    %1901 = vmatmul.bf16.gmra.mxu0 %v1350
    %v1902 = vpop.f32.mrf.mxu0
    %v1903 = vadd.f32 %v1814, %v1902
    %v1904 = vpop.f32.mrf.mxu0
    %v1905 = vadd.f32 %v1816, %v1904
    %1906 = vdwg.mxu0
    %vm1907 = vcmp.gt.f32.partialorder %v1650, 0.0
    %vm1908 = vcmp.gt.f32.partialorder %v1828, 0.0
    %vm1909 = vcmp.gt.f32.partialorder %v1652, 0.0
    %vm1910 = vcmp.gt.f32.partialorder %v1830, 0.0
    %vm1911 = vcmp.gt.f32.partialorder %v1655, 0.0
    %vm1912 = vcmp.gt.f32.partialorder %v1833, 0.0
    %vm1913 = vcmp.gt.f32.partialorder %v1657, 0.0
    %vm1914 = vcmp.gt.f32.partialorder %v1835, 0.0
    %vm1915 = vcmp.gt.f32.partialorder %v1660, 0.0
    %vm1916 = vcmp.gt.f32.partialorder %v1838, 0.0
    %vm1917 = vcmp.gt.f32.partialorder %v1662, 0.0
    %vm1918 = vcmp.gt.f32.partialorder %v1840, 0.0
    %vm1919 = vcmp.gt.f32.partialorder %v1665, 0.0
    %vm1920 = vcmp.gt.f32.partialorder %v1843, 0.0
    %vm1921 = vcmp.gt.f32.partialorder %v1667, 0.0
    %vm1922 = vcmp.gt.f32.partialorder %v1845, 0.0
    %vm1923 = vcmp.gt.f32.partialorder %v1670, 0.0
    %vm1924 = vcmp.gt.f32.partialorder %v1848, 0.0
    %vm1925 = vcmp.gt.f32.partialorder %v1672, 0.0
    %vm1926 = vcmp.gt.f32.partialorder %v1850, 0.0
    %vm1927 = vcmp.gt.f32.partialorder %v1675, 0.0
    %vm1928 = vcmp.gt.f32.partialorder %v1853, 0.0
    %vm1929 = vcmp.gt.f32.partialorder %v1677, 0.0
    %vm1930 = vcmp.gt.f32.partialorder %v1855, 0.0
    %vm1931 = vcmp.gt.f32.partialorder %v1680, 0.0
    %vm1932 = vcmp.gt.f32.partialorder %v1858, 0.0
    %vm1933 = vcmp.gt.f32.partialorder %v1682, 0.0
    %vm1934 = vcmp.gt.f32.partialorder %v1860, 0.0
    %vm1935 = vcmp.gt.f32.partialorder %v1685, 0.0
    %vm1936 = vcmp.gt.f32.partialorder %v1863, 0.0
    %vm1937 = vcmp.gt.f32.partialorder %v1687, 0.0
    %vm1938 = vcmp.gt.f32.partialorder %v1865, 0.0
    %vm1939 = vcmp.gt.f32.partialorder %v1690, 0.0
    %vm1940 = vcmp.gt.f32.partialorder %v1868, 0.0
    %vm1941 = vcmp.gt.f32.partialorder %v1692, 0.0
    %vm1942 = vcmp.gt.f32.partialorder %v1870, 0.0
    %vm1943 = vcmp.gt.f32.partialorder %v1695, 0.0
    %vm1944 = vcmp.gt.f32.partialorder %v1873, 0.0
    %vm1945 = vcmp.gt.f32.partialorder %v1697, 0.0
    %vm1946 = vcmp.gt.f32.partialorder %v1875, 0.0
    %vm1947 = vcmp.gt.f32.partialorder %v1700, 0.0
    %vm1948 = vcmp.gt.f32.partialorder %v1878, 0.0
    %vm1949 = vcmp.gt.f32.partialorder %v1702, 0.0
    %vm1950 = vcmp.gt.f32.partialorder %v1880, 0.0
    %vm1951 = vcmp.gt.f32.partialorder %v1705, 0.0
    %vm1952 = vcmp.gt.f32.partialorder %v1883, 0.0
    %vm1953 = vcmp.gt.f32.partialorder %v1707, 0.0
    %vm1954 = vcmp.gt.f32.partialorder %v1885, 0.0
    %vm1955 = vcmp.gt.f32.partialorder %v1710, 0.0
    %vm1956 = vcmp.gt.f32.partialorder %v1888, 0.0
    %vm1957 = vcmp.gt.f32.partialorder %v1712, 0.0
    %vm1958 = vcmp.gt.f32.partialorder %v1890, 0.0
    %vm1959 = vcmp.gt.f32.partialorder %v1715, 0.0
    %vm1960 = vcmp.gt.f32.partialorder %v1893, 0.0
    %vm1961 = vcmp.gt.f32.partialorder %v1717, 0.0
    %vm1962 = vcmp.gt.f32.partialorder %v1895, 0.0
    %vm1963 = vcmp.gt.f32.partialorder %v1720, 0.0
    %vm1964 = vcmp.gt.f32.partialorder %v1898, 0.0
    %vm1965 = vcmp.gt.f32.partialorder %v1722, 0.0
    %vm1966 = vcmp.gt.f32.partialorder %v1900, 0.0
    %vm1967 = vcmp.gt.f32.partialorder %v1725, 0.0
    %vm1968 = vcmp.gt.f32.partialorder %v1903, 0.0
    %vm1969 = vcmp.gt.f32.partialorder %v1727, 0.0
    %vm1970 = vcmp.gt.f32.partialorder %v1905, 0.0
    %v1971 = vmul.f32 %v1650, 0.01
    %v1972 = vmul.f32 %v1828, 0.01
    %v1973 = vmul.f32 %v1652, 0.01
    %v1974 = vmul.f32 %v1830, 0.01
    %v1975 = vmul.f32 %v1655, 0.01
    %v1976 = vmul.f32 %v1833, 0.01
    %v1977 = vmul.f32 %v1657, 0.01
    %v1978 = vmul.f32 %v1835, 0.01
    %v1979 = vmul.f32 %v1660, 0.01
    %v1980 = vmul.f32 %v1838, 0.01
    %v1981 = vmul.f32 %v1662, 0.01
    %v1982 = vmul.f32 %v1840, 0.01
    %v1983 = vmul.f32 %v1665, 0.01
    %v1984 = vmul.f32 %v1843, 0.01
    %v1985 = vmul.f32 %v1667, 0.01
    %v1986 = vmul.f32 %v1845, 0.01
    %v1987 = vmul.f32 %v1670, 0.01
    %v1988 = vmul.f32 %v1848, 0.01
    %v1989 = vmul.f32 %v1672, 0.01
    %v1990 = vmul.f32 %v1850, 0.01
    %v1991 = vmul.f32 %v1675, 0.01
    %v1992 = vmul.f32 %v1853, 0.01
    %v1993 = vmul.f32 %v1677, 0.01
    %v1994 = vmul.f32 %v1855, 0.01
    %v1995 = vmul.f32 %v1680, 0.01
    %v1996 = vmul.f32 %v1858, 0.01
    %v1997 = vmul.f32 %v1682, 0.01
    %v1998 = vmul.f32 %v1860, 0.01
    %v1999 = vmul.f32 %v1685, 0.01
    %v2000 = vmul.f32 %v1863, 0.01
    %v2001 = vmul.f32 %v1687, 0.01
    %v2002 = vmul.f32 %v1865, 0.01
    %v2003 = vmul.f32 %v1690, 0.01
    %v2004 = vmul.f32 %v1868, 0.01
    %v2005 = vmul.f32 %v1692, 0.01
    %v2006 = vmul.f32 %v1870, 0.01
    %v2007 = vmul.f32 %v1695, 0.01
    %v2008 = vmul.f32 %v1873, 0.01
    %v2009 = vmul.f32 %v1697, 0.01
    %v2010 = vmul.f32 %v1875, 0.01
    %v2011 = vmul.f32 %v1700, 0.01
    %v2012 = vmul.f32 %v1878, 0.01
    %v2013 = vmul.f32 %v1702, 0.01
    %v2014 = vmul.f32 %v1880, 0.01
    %v2015 = vmul.f32 %v1705, 0.01
    %v2016 = vmul.f32 %v1883, 0.01
    %v2017 = vmul.f32 %v1707, 0.01
    %v2018 = vmul.f32 %v1885, 0.01
    %v2019 = vmul.f32 %v1710, 0.01
    %v2020 = vmul.f32 %v1888, 0.01
    %v2021 = vmul.f32 %v1712, 0.01
    %v2022 = vmul.f32 %v1890, 0.01
    %v2023 = vmul.f32 %v1715, 0.01
    %v2024 = vmul.f32 %v1893, 0.01
    %v2025 = vmul.f32 %v1717, 0.01
    %v2026 = vmul.f32 %v1895, 0.01
    %v2027 = vmul.f32 %v1720, 0.01
    %v2028 = vmul.f32 %v1898, 0.01
    %v2029 = vmul.f32 %v1722, 0.01
    %v2030 = vmul.f32 %v1900, 0.01
    %v2031 = vmul.f32 %v1725, 0.01
    %v2032 = vmul.f32 %v1903, 0.01
    %v2033 = vmul.f32 %v1727, 0.01
    %v2034 = vmul.f32 %v1905, 0.01
    %v2035 = vsel %vm1907, %v1650, %v1971
    %v2036 = vsel %vm1908, %v1828, %v1972
    %v2037 = vsel %vm1909, %v1652, %v1973
    %v2038 = vsel %vm1910, %v1830, %v1974
    %v2039 = vsel %vm1911, %v1655, %v1975
    %v2040 = vsel %vm1912, %v1833, %v1976
    %v2041 = vsel %vm1913, %v1657, %v1977
    %v2042 = vsel %vm1914, %v1835, %v1978
    %v2043 = vsel %vm1915, %v1660, %v1979
    %v2044 = vsel %vm1916, %v1838, %v1980
    %v2045 = vsel %vm1917, %v1662, %v1981
    %v2046 = vsel %vm1918, %v1840, %v1982
    %v2047 = vsel %vm1919, %v1665, %v1983
    %v2048 = vsel %vm1920, %v1843, %v1984
    %v2049 = vsel %vm1921, %v1667, %v1985
    %v2050 = vsel %vm1922, %v1845, %v1986
    %v2051 = vsel %vm1923, %v1670, %v1987
    %v2052 = vsel %vm1924, %v1848, %v1988
    %v2053 = vsel %vm1925, %v1672, %v1989
    %v2054 = vsel %vm1926, %v1850, %v1990
    %v2055 = vsel %vm1927, %v1675, %v1991
    %v2056 = vsel %vm1928, %v1853, %v1992
    %v2057 = vsel %vm1929, %v1677, %v1993
    %v2058 = vsel %vm1930, %v1855, %v1994
    %v2059 = vsel %vm1931, %v1680, %v1995
    %v2060 = vsel %vm1932, %v1858, %v1996
    %v2061 = vsel %vm1933, %v1682, %v1997
    %v2062 = vsel %vm1934, %v1860, %v1998
    %v2063 = vsel %vm1935, %v1685, %v1999
    %v2064 = vsel %vm1936, %v1863, %v2000
    %v2065 = vsel %vm1937, %v1687, %v2001
    %v2066 = vsel %vm1938, %v1865, %v2002
    %v2067 = vsel %vm1939, %v1690, %v2003
    %v2068 = vsel %vm1940, %v1868, %v2004
    %v2069 = vsel %vm1941, %v1692, %v2005
    %v2070 = vsel %vm1942, %v1870, %v2006
    %v2071 = vsel %vm1943, %v1695, %v2007
    %v2072 = vsel %vm1944, %v1873, %v2008
    %v2073 = vsel %vm1945, %v1697, %v2009
    %v2074 = vsel %vm1946, %v1875, %v2010
    %v2075 = vsel %vm1947, %v1700, %v2011
    %v2076 = vsel %vm1948, %v1878, %v2012
    %v2077 = vsel %vm1949, %v1702, %v2013
    %v2078 = vsel %vm1950, %v1880, %v2014
    %v2079 = vsel %vm1951, %v1705, %v2015
    %v2080 = vsel %vm1952, %v1883, %v2016
    %v2081 = vsel %vm1953, %v1707, %v2017
    %v2082 = vsel %vm1954, %v1885, %v2018
    %v2083 = vsel %vm1955, %v1710, %v2019
    %v2084 = vsel %vm1956, %v1888, %v2020
    %v2085 = vsel %vm1957, %v1712, %v2021
    %v2086 = vsel %vm1958, %v1890, %v2022
    %v2087 = vsel %vm1959, %v1715, %v2023
    %v2088 = vsel %vm1960, %v1893, %v2024
    %v2089 = vsel %vm1961, %v1717, %v2025
    %v2090 = vsel %vm1962, %v1895, %v2026
    %v2091 = vsel %vm1963, %v1720, %v2027
    %v2092 = vsel %vm1964, %v1898, %v2028
    %v2093 = vsel %vm1965, %v1722, %v2029
    %v2094 = vsel %vm1966, %v1900, %v2030
    %v2095 = vsel %vm1967, %v1725, %v2031
    %v2096 = vsel %vm1968, %v1903, %v2032
    %v2097 = vsel %vm1969, %v1727, %v2033
    %v2098 = vsel %vm1970, %v1905, %v2034
    %v2099 = vpack.c.bf16 %v2037, %v2035
    %v2100 = vpack.c.bf16 %v2038, %v2036
    %v2101 = vpack.c.bf16 %v2041, %v2039
    %v2102 = vpack.c.bf16 %v2042, %v2040
    %v2103 = vpack.c.bf16 %v2045, %v2043
    %v2104 = vpack.c.bf16 %v2046, %v2044
    %v2105 = vpack.c.bf16 %v2049, %v2047
    %v2106 = vpack.c.bf16 %v2050, %v2048
    %v2107 = vpack.c.bf16 %v2053, %v2051
    %v2108 = vpack.c.bf16 %v2054, %v2052
    %v2109 = vpack.c.bf16 %v2057, %v2055
    %v2110 = vpack.c.bf16 %v2058, %v2056
    %v2111 = vpack.c.bf16 %v2061, %v2059
    %v2112 = vpack.c.bf16 %v2062, %v2060
    %v2113 = vpack.c.bf16 %v2065, %v2063
    %v2114 = vpack.c.bf16 %v2066, %v2064
    %v2115 = vpack.c.bf16 %v2069, %v2067
    %v2116 = vpack.c.bf16 %v2070, %v2068
    %v2117 = vpack.c.bf16 %v2073, %v2071
    %v2118 = vpack.c.bf16 %v2074, %v2072
    %v2119 = vpack.c.bf16 %v2077, %v2075
    %v2120 = vpack.c.bf16 %v2078, %v2076
    %v2121 = vpack.c.bf16 %v2081, %v2079
    %v2122 = vpack.c.bf16 %v2082, %v2080
    %v2123 = vpack.c.bf16 %v2085, %v2083
    %v2124 = vpack.c.bf16 %v2086, %v2084
    %v2125 = vpack.c.bf16 %v2089, %v2087
    %v2126 = vpack.c.bf16 %v2090, %v2088
    %v2127 = vpack.c.bf16 %v2093, %v2091
    %v2128 = vpack.c.bf16 %v2094, %v2092
    %v2129 = vpack.c.bf16 %v2097, %v2095
    %v2130 = vpack.c.bf16 %v2098, %v2096
    %s2131 = scalar_lea.vmem [#allocation2], 512
    %v2132 = vld [vmem:[%s2131] sm:$0xff]
    %v2133 = vld [vmem:[%s2131 + $0x8] sm:$0xff]
    %v2134 = vld [vmem:[%s2131 + $0x10] sm:$0xff]
    %v2135 = vld [vmem:[%s2131 + $0x18] sm:$0xff]
    %v2136 = vld [vmem:[%s2131 + $0x20] sm:$0xff]
    %v2137 = vld [vmem:[%s2131 + $0x28] sm:$0xff]
    %v2138 = vld [vmem:[%s2131 + $0x30] sm:$0xff]
    %v2139 = vld [vmem:[%s2131 + $0x38] sm:$0xff]
    %v2140 = vld [vmem:[%s2131 + $0x40] sm:$0xff]
    %v2141 = vld [vmem:[%s2131 + $0x48] sm:$0xff]
    %v2142 = vld [vmem:[%s2131 + $0x50] sm:$0xff]
    %v2143 = vld [vmem:[%s2131 + $0x58] sm:$0xff]
    %v2144 = vld [vmem:[%s2131 + $0x60] sm:$0xff]
    %v2145 = vld [vmem:[%s2131 + $0x68] sm:$0xff]
    %v2146 = vld [vmem:[%s2131 + $0x70] sm:$0xff]
    %v2147 = vld [vmem:[%s2131 + $0x78] sm:$0xff]
    %v2148 = vld [vmem:[%s2131 + $0x80] sm:$0xff]
    %v2149 = vld [vmem:[%s2131 + $0x88] sm:$0xff]
    %v2150 = vld [vmem:[%s2131 + $0x90] sm:$0xff]
    %v2151 = vld [vmem:[%s2131 + $0x98] sm:$0xff]
    %v2152 = vld [vmem:[%s2131 + $0xa0] sm:$0xff]
    %v2153 = vld [vmem:[%s2131 + $0xa8] sm:$0xff]
    %v2154 = vld [vmem:[%s2131 + $0xb0] sm:$0xff]
    %v2155 = vld [vmem:[%s2131 + $0xb8] sm:$0xff]
    %v2156 = vld [vmem:[%s2131 + $0xc0] sm:$0xff]
    %v2157 = vld [vmem:[%s2131 + $0xc8] sm:$0xff]
    %v2158 = vld [vmem:[%s2131 + $0xd0] sm:$0xff]
    %v2159 = vld [vmem:[%s2131 + $0xd8] sm:$0xff]
    %v2160 = vld [vmem:[%s2131 + $0xe0] sm:$0xff]
    %v2161 = vld [vmem:[%s2131 + $0xe8] sm:$0xff]
    %v2162 = vld [vmem:[%s2131 + $0xf0] sm:$0xff]
    %v2163 = vld [vmem:[%s2131 + $0xf8] sm:$0xff]
    %s2164 = scalar_lea.vmem %s4, 3
    %v2165 = vld [vmem:[%s2164] ss:$8 sm:$0x3]
    %v2167 = vperm.slane %v2165, 0
    %v2168 = vperm.slane %v2165, 1
    %v2203 = vunpack.c.l.b16 %v2132
    %v2204 = vunpack.c.h.b16 %v2132
    %v2205 = vunpack.c.l.b16 %v2133
    %v2206 = vunpack.c.h.b16 %v2133
    %v2207 = vunpack.c.l.b16 %v2134
    %v2208 = vunpack.c.h.b16 %v2134
    %v2209 = vunpack.c.l.b16 %v2135
    %v2210 = vunpack.c.h.b16 %v2135
    %v2211 = vunpack.c.l.b16 %v2136
    %v2212 = vunpack.c.h.b16 %v2136
    %v2213 = vunpack.c.l.b16 %v2137
    %v2214 = vunpack.c.h.b16 %v2137
    %v2215 = vunpack.c.l.b16 %v2138
    %v2216 = vunpack.c.h.b16 %v2138
    %v2217 = vunpack.c.l.b16 %v2139
    %v2218 = vunpack.c.h.b16 %v2139
    %v2219 = vunpack.c.l.b16 %v2140
    %v2220 = vunpack.c.h.b16 %v2140
    %v2221 = vunpack.c.l.b16 %v2141
    %v2222 = vunpack.c.h.b16 %v2141
    %v2223 = vunpack.c.l.b16 %v2142
    %v2224 = vunpack.c.h.b16 %v2142
    %v2225 = vunpack.c.l.b16 %v2143
    %v2226 = vunpack.c.h.b16 %v2143
    %v2227 = vunpack.c.l.b16 %v2144
    %v2228 = vunpack.c.h.b16 %v2144
    %v2229 = vunpack.c.l.b16 %v2145
    %v2230 = vunpack.c.h.b16 %v2145
    %v2231 = vunpack.c.l.b16 %v2146
    %v2232 = vunpack.c.h.b16 %v2146
    %v2233 = vunpack.c.l.b16 %v2147
    %v2234 = vunpack.c.h.b16 %v2147
    %v2235 = vunpack.c.l.b16 %v2148
    %v2236 = vunpack.c.h.b16 %v2148
    %v2237 = vunpack.c.l.b16 %v2149
    %v2238 = vunpack.c.h.b16 %v2149
    %v2239 = vunpack.c.l.b16 %v2150
    %v2240 = vunpack.c.h.b16 %v2150
    %v2241 = vunpack.c.l.b16 %v2151
    %v2242 = vunpack.c.h.b16 %v2151
    %v2243 = vunpack.c.l.b16 %v2152
    %v2244 = vunpack.c.h.b16 %v2152
    %v2245 = vunpack.c.l.b16 %v2153
    %v2246 = vunpack.c.h.b16 %v2153
    %v2247 = vunpack.c.l.b16 %v2154
    %v2248 = vunpack.c.h.b16 %v2154
    %v2249 = vunpack.c.l.b16 %v2155
    %v2250 = vunpack.c.h.b16 %v2155
    %v2251 = vunpack.c.l.b16 %v2156
    %v2252 = vunpack.c.h.b16 %v2156
    %v2253 = vunpack.c.l.b16 %v2157
    %v2254 = vunpack.c.h.b16 %v2157
    %v2255 = vunpack.c.l.b16 %v2158
    %v2256 = vunpack.c.h.b16 %v2158
    %v2257 = vunpack.c.l.b16 %v2159
    %v2258 = vunpack.c.h.b16 %v2159
    %v2259 = vunpack.c.l.b16 %v2160
    %v2260 = vunpack.c.h.b16 %v2160
    %v2261 = vunpack.c.l.b16 %v2161
    %v2262 = vunpack.c.h.b16 %v2161
    %v2263 = vunpack.c.l.b16 %v2162
    %v2264 = vunpack.c.h.b16 %v2162
    %v2265 = vunpack.c.l.b16 %v2163
    %v2266 = vunpack.c.h.b16 %v2163
    %v2267 = vpack.c.b16 %v2205, %v2203
    %v2268 = vpack.c.b16 %v2206, %v2204
    %v2269 = vpack.c.b16 %v2209, %v2207
    %v2270 = vpack.c.b16 %v2210, %v2208
    %v2271 = vpack.c.b16 %v2213, %v2211
    %v2272 = vpack.c.b16 %v2214, %v2212
    %v2273 = vpack.c.b16 %v2217, %v2215
    %v2274 = vpack.c.b16 %v2218, %v2216
    %v2275 = vpack.c.b16 %v2221, %v2219
    %v2276 = vpack.c.b16 %v2222, %v2220
    %v2277 = vpack.c.b16 %v2225, %v2223
    %v2278 = vpack.c.b16 %v2226, %v2224
    %v2279 = vpack.c.b16 %v2229, %v2227
    %v2280 = vpack.c.b16 %v2230, %v2228
    %v2281 = vpack.c.b16 %v2233, %v2231
    %v2282 = vpack.c.b16 %v2234, %v2232
    %v2283 = vpack.c.b16 %v2237, %v2235
    %v2284 = vpack.c.b16 %v2238, %v2236
    %v2285 = vpack.c.b16 %v2241, %v2239
    %v2286 = vpack.c.b16 %v2242, %v2240
    %v2287 = vpack.c.b16 %v2245, %v2243
    %v2288 = vpack.c.b16 %v2246, %v2244
    %v2289 = vpack.c.b16 %v2249, %v2247
    %v2290 = vpack.c.b16 %v2250, %v2248
    %v2291 = vpack.c.b16 %v2253, %v2251
    %v2292 = vpack.c.b16 %v2254, %v2252
    %v2293 = vpack.c.b16 %v2257, %v2255
    %v2294 = vpack.c.b16 %v2258, %v2256
    %v2295 = vpack.c.b16 %v2261, %v2259
    %v2296 = vpack.c.b16 %v2262, %v2260
    %v2297 = vpack.c.b16 %v2265, %v2263
    %v2298 = vpack.c.b16 %v2266, %v2264
    %2331 = vmatpush.bf16.msra.mxu0 %v2281
    %2332 = vmatpush.bf16.msra.mxu0 %v2279
    %2333 = vmatpush.bf16.msra.mxu0 %v2277
    %2334 = vmatpush.bf16.msra.mxu0 %v2275
    %2335 = vmatpush.bf16.msra.mxu0 %v2273
    %2336 = vmatpush.bf16.msra.mxu0 %v2271
    %2337 = vmatpush.bf16.msra.mxu0 %v2269
    %2338 = vmatpush.bf16.msra.mxu0 %v2267
    %2339 = vmatmul.bf16.gmra.mxu0 %v2099
    %v2340 = vpop.f32.mrf.mxu0
    %v2341 = vadd.f32 %v2167, %v2340
    %v2342 = vpop.f32.mrf.mxu0
    %v2343 = vadd.f32 %v2167, %v2342
    %2344 = vmatmul.bf16.gmra.mxu0 %v2101
    %v2345 = vpop.f32.mrf.mxu0
    %v2346 = vadd.f32 %v2167, %v2345
    %v2347 = vpop.f32.mrf.mxu0
    %v2348 = vadd.f32 %v2167, %v2347
    %2349 = vmatmul.bf16.gmra.mxu0 %v2103
    %v2350 = vpop.f32.mrf.mxu0
    %v2351 = vadd.f32 %v2167, %v2350
    %v2352 = vpop.f32.mrf.mxu0
    %v2353 = vadd.f32 %v2167, %v2352
    %2354 = vmatmul.bf16.gmra.mxu0 %v2105
    %v2355 = vpop.f32.mrf.mxu0
    %v2356 = vadd.f32 %v2167, %v2355
    %v2357 = vpop.f32.mrf.mxu0
    %v2358 = vadd.f32 %v2167, %v2357
    %2359 = vmatmul.bf16.gmra.mxu0 %v2107
    %v2360 = vpop.f32.mrf.mxu0
    %v2361 = vadd.f32 %v2167, %v2360
    %v2362 = vpop.f32.mrf.mxu0
    %v2363 = vadd.f32 %v2167, %v2362
    %2364 = vmatmul.bf16.gmra.mxu0 %v2109
    %v2365 = vpop.f32.mrf.mxu0
    %v2366 = vadd.f32 %v2167, %v2365
    %v2367 = vpop.f32.mrf.mxu0
    %v2368 = vadd.f32 %v2167, %v2367
    %2369 = vmatmul.bf16.gmra.mxu0 %v2111
    %v2370 = vpop.f32.mrf.mxu0
    %v2371 = vadd.f32 %v2167, %v2370
    %v2372 = vpop.f32.mrf.mxu0
    %v2373 = vadd.f32 %v2167, %v2372
    %2374 = vmatmul.bf16.gmra.mxu0 %v2113
    %v2375 = vpop.f32.mrf.mxu0
    %v2376 = vadd.f32 %v2167, %v2375
    %v2377 = vpop.f32.mrf.mxu0
    %v2378 = vadd.f32 %v2167, %v2377
    %2379 = vmatmul.bf16.gmra.mxu0 %v2115
    %v2380 = vpop.f32.mrf.mxu0
    %v2381 = vadd.f32 %v2167, %v2380
    %v2382 = vpop.f32.mrf.mxu0
    %v2383 = vadd.f32 %v2167, %v2382
    %2384 = vmatmul.bf16.gmra.mxu0 %v2117
    %v2385 = vpop.f32.mrf.mxu0
    %v2386 = vadd.f32 %v2167, %v2385
    %v2387 = vpop.f32.mrf.mxu0
    %v2388 = vadd.f32 %v2167, %v2387
    %2389 = vmatmul.bf16.gmra.mxu0 %v2119
    %v2390 = vpop.f32.mrf.mxu0
    %v2391 = vadd.f32 %v2167, %v2390
    %v2392 = vpop.f32.mrf.mxu0
    %v2393 = vadd.f32 %v2167, %v2392
    %2394 = vmatmul.bf16.gmra.mxu0 %v2121
    %v2395 = vpop.f32.mrf.mxu0
    %v2396 = vadd.f32 %v2167, %v2395
    %v2397 = vpop.f32.mrf.mxu0
    %v2398 = vadd.f32 %v2167, %v2397
    %2399 = vmatmul.bf16.gmra.mxu0 %v2123
    %v2400 = vpop.f32.mrf.mxu0
    %v2401 = vadd.f32 %v2167, %v2400
    %v2402 = vpop.f32.mrf.mxu0
    %v2403 = vadd.f32 %v2167, %v2402
    %2404 = vmatmul.bf16.gmra.mxu0 %v2125
    %v2405 = vpop.f32.mrf.mxu0
    %v2406 = vadd.f32 %v2167, %v2405
    %v2407 = vpop.f32.mrf.mxu0
    %v2408 = vadd.f32 %v2167, %v2407
    %2409 = vmatmul.bf16.gmra.mxu0 %v2127
    %v2410 = vpop.f32.mrf.mxu0
    %v2411 = vadd.f32 %v2167, %v2410
    %v2412 = vpop.f32.mrf.mxu0
    %v2413 = vadd.f32 %v2167, %v2412
    %2414 = vmatmul.bf16.gmra.mxu0 %v2129
    %v2415 = vpop.f32.mrf.mxu0
    %v2416 = vadd.f32 %v2167, %v2415
    %v2417 = vpop.f32.mrf.mxu0
    %v2418 = vadd.f32 %v2167, %v2417
    %2419 = vdwg.mxu0
    %2420 = vmatpush.bf16.msra.mxu0 %v2297
    %2421 = vmatpush.bf16.msra.mxu0 %v2295
    %2422 = vmatpush.bf16.msra.mxu0 %v2293
    %2423 = vmatpush.bf16.msra.mxu0 %v2291
    %2424 = vmatpush.bf16.msra.mxu0 %v2289
    %2425 = vmatpush.bf16.msra.mxu0 %v2287
    %2426 = vmatpush.bf16.msra.mxu0 %v2285
    %2427 = vmatpush.bf16.msra.mxu0 %v2283
    %2428 = vmatmul.bf16.gmra.mxu0 %v2100
    %v2429 = vpop.f32.mrf.mxu0
    %v2430 = vadd.f32 %v2341, %v2429
    %v2431 = vpop.f32.mrf.mxu0
    %v2432 = vadd.f32 %v2343, %v2431
    %2433 = vmatmul.bf16.gmra.mxu0 %v2102
    %v2434 = vpop.f32.mrf.mxu0
    %v2435 = vadd.f32 %v2346, %v2434
    %v2436 = vpop.f32.mrf.mxu0
    %v2437 = vadd.f32 %v2348, %v2436
    %2438 = vmatmul.bf16.gmra.mxu0 %v2104
    %v2439 = vpop.f32.mrf.mxu0
    %v2440 = vadd.f32 %v2351, %v2439
    %v2441 = vpop.f32.mrf.mxu0
    %v2442 = vadd.f32 %v2353, %v2441
    %2443 = vmatmul.bf16.gmra.mxu0 %v2106
    %v2444 = vpop.f32.mrf.mxu0
    %v2445 = vadd.f32 %v2356, %v2444
    %v2446 = vpop.f32.mrf.mxu0
    %v2447 = vadd.f32 %v2358, %v2446
    %2448 = vmatmul.bf16.gmra.mxu0 %v2108
    %v2449 = vpop.f32.mrf.mxu0
    %v2450 = vadd.f32 %v2361, %v2449
    %v2451 = vpop.f32.mrf.mxu0
    %v2452 = vadd.f32 %v2363, %v2451
    %2453 = vmatmul.bf16.gmra.mxu0 %v2110
    %v2454 = vpop.f32.mrf.mxu0
    %v2455 = vadd.f32 %v2366, %v2454
    %v2456 = vpop.f32.mrf.mxu0
    %v2457 = vadd.f32 %v2368, %v2456
    %2458 = vmatmul.bf16.gmra.mxu0 %v2112
    %v2459 = vpop.f32.mrf.mxu0
    %v2460 = vadd.f32 %v2371, %v2459
    %v2461 = vpop.f32.mrf.mxu0
    %v2462 = vadd.f32 %v2373, %v2461
    %2463 = vmatmul.bf16.gmra.mxu0 %v2114
    %v2464 = vpop.f32.mrf.mxu0
    %v2465 = vadd.f32 %v2376, %v2464
    %v2466 = vpop.f32.mrf.mxu0
    %v2467 = vadd.f32 %v2378, %v2466
    %2468 = vmatmul.bf16.gmra.mxu0 %v2116
    %v2469 = vpop.f32.mrf.mxu0
    %v2470 = vadd.f32 %v2381, %v2469
    %v2471 = vpop.f32.mrf.mxu0
    %v2472 = vadd.f32 %v2383, %v2471
    %2473 = vmatmul.bf16.gmra.mxu0 %v2118
    %v2474 = vpop.f32.mrf.mxu0
    %v2475 = vadd.f32 %v2386, %v2474
    %v2476 = vpop.f32.mrf.mxu0
    %v2477 = vadd.f32 %v2388, %v2476
    %2478 = vmatmul.bf16.gmra.mxu0 %v2120
    %v2479 = vpop.f32.mrf.mxu0
    %v2480 = vadd.f32 %v2391, %v2479
    %v2481 = vpop.f32.mrf.mxu0
    %v2482 = vadd.f32 %v2393, %v2481
    %2483 = vmatmul.bf16.gmra.mxu0 %v2122
    %v2484 = vpop.f32.mrf.mxu0
    %v2485 = vadd.f32 %v2396, %v2484
    %v2486 = vpop.f32.mrf.mxu0
    %v2487 = vadd.f32 %v2398, %v2486
    %2488 = vmatmul.bf16.gmra.mxu0 %v2124
    %v2489 = vpop.f32.mrf.mxu0
    %v2490 = vadd.f32 %v2401, %v2489
    %v2491 = vpop.f32.mrf.mxu0
    %v2492 = vadd.f32 %v2403, %v2491
    %2493 = vmatmul.bf16.gmra.mxu0 %v2126
    %v2494 = vpop.f32.mrf.mxu0
    %v2495 = vadd.f32 %v2406, %v2494
    %v2496 = vpop.f32.mrf.mxu0
    %v2497 = vadd.f32 %v2408, %v2496
    %2498 = vmatmul.bf16.gmra.mxu0 %v2128
    %v2499 = vpop.f32.mrf.mxu0
    %v2500 = vadd.f32 %v2411, %v2499
    %v2501 = vpop.f32.mrf.mxu0
    %v2502 = vadd.f32 %v2413, %v2501
    %2503 = vmatmul.bf16.gmra.mxu0 %v2130
    %v2504 = vpop.f32.mrf.mxu0
    %v2505 = vadd.f32 %v2416, %v2504
    %v2506 = vpop.f32.mrf.mxu0
    %v2507 = vadd.f32 %v2418, %v2506
    %2508 = vdwg.mxu0
    %2509 = vmatpush.bf16.msra.mxu0 %v2282
    %2510 = vmatpush.bf16.msra.mxu0 %v2280
    %2511 = vmatpush.bf16.msra.mxu0 %v2278
    %2512 = vmatpush.bf16.msra.mxu0 %v2276
    %2513 = vmatpush.bf16.msra.mxu0 %v2274
    %2514 = vmatpush.bf16.msra.mxu0 %v2272
    %2515 = vmatpush.bf16.msra.mxu0 %v2270
    %2516 = vmatpush.bf16.msra.mxu0 %v2268
    %2517 = vmatmul.bf16.gmra.mxu0 %v2099
    %v2518 = vpop.f32.mrf.mxu0
    %v2519 = vadd.f32 %v2168, %v2518
    %v2520 = vpop.f32.mrf.mxu0
    %v2521 = vadd.f32 %v2168, %v2520
    %2522 = vmatmul.bf16.gmra.mxu0 %v2101
    %v2523 = vpop.f32.mrf.mxu0
    %v2524 = vadd.f32 %v2168, %v2523
    %v2525 = vpop.f32.mrf.mxu0
    %v2526 = vadd.f32 %v2168, %v2525
    %2527 = vmatmul.bf16.gmra.mxu0 %v2103
    %v2528 = vpop.f32.mrf.mxu0
    %v2529 = vadd.f32 %v2168, %v2528
    %v2530 = vpop.f32.mrf.mxu0
    %v2531 = vadd.f32 %v2168, %v2530
    %2532 = vmatmul.bf16.gmra.mxu0 %v2105
    %v2533 = vpop.f32.mrf.mxu0
    %v2534 = vadd.f32 %v2168, %v2533
    %v2535 = vpop.f32.mrf.mxu0
    %v2536 = vadd.f32 %v2168, %v2535
    %2537 = vmatmul.bf16.gmra.mxu0 %v2107
    %v2538 = vpop.f32.mrf.mxu0
    %v2539 = vadd.f32 %v2168, %v2538
    %v2540 = vpop.f32.mrf.mxu0
    %v2541 = vadd.f32 %v2168, %v2540
    %2542 = vmatmul.bf16.gmra.mxu0 %v2109
    %v2543 = vpop.f32.mrf.mxu0
    %v2544 = vadd.f32 %v2168, %v2543
    %v2545 = vpop.f32.mrf.mxu0
    %v2546 = vadd.f32 %v2168, %v2545
    %2547 = vmatmul.bf16.gmra.mxu0 %v2111
    %v2548 = vpop.f32.mrf.mxu0
    %v2549 = vadd.f32 %v2168, %v2548
    %v2550 = vpop.f32.mrf.mxu0
    %v2551 = vadd.f32 %v2168, %v2550
    %2552 = vmatmul.bf16.gmra.mxu0 %v2113
    %v2553 = vpop.f32.mrf.mxu0
    %v2554 = vadd.f32 %v2168, %v2553
    %v2555 = vpop.f32.mrf.mxu0
    %v2556 = vadd.f32 %v2168, %v2555
    %2557 = vmatmul.bf16.gmra.mxu0 %v2115
    %v2558 = vpop.f32.mrf.mxu0
    %v2559 = vadd.f32 %v2168, %v2558
    %v2560 = vpop.f32.mrf.mxu0
    %v2561 = vadd.f32 %v2168, %v2560
    %2562 = vmatmul.bf16.gmra.mxu0 %v2117
    %v2563 = vpop.f32.mrf.mxu0
    %v2564 = vadd.f32 %v2168, %v2563
    %v2565 = vpop.f32.mrf.mxu0
    %v2566 = vadd.f32 %v2168, %v2565
    %2567 = vmatmul.bf16.gmra.mxu0 %v2119
    %v2568 = vpop.f32.mrf.mxu0
    %v2569 = vadd.f32 %v2168, %v2568
    %v2570 = vpop.f32.mrf.mxu0
    %v2571 = vadd.f32 %v2168, %v2570
    %2572 = vmatmul.bf16.gmra.mxu0 %v2121
    %v2573 = vpop.f32.mrf.mxu0
    %v2574 = vadd.f32 %v2168, %v2573
    %v2575 = vpop.f32.mrf.mxu0
    %v2576 = vadd.f32 %v2168, %v2575
    %2577 = vmatmul.bf16.gmra.mxu0 %v2123
    %v2578 = vpop.f32.mrf.mxu0
    %v2579 = vadd.f32 %v2168, %v2578
    %v2580 = vpop.f32.mrf.mxu0
    %v2581 = vadd.f32 %v2168, %v2580
    %2582 = vmatmul.bf16.gmra.mxu0 %v2125
    %v2583 = vpop.f32.mrf.mxu0
    %v2584 = vadd.f32 %v2168, %v2583
    %v2585 = vpop.f32.mrf.mxu0
    %v2586 = vadd.f32 %v2168, %v2585
    %2587 = vmatmul.bf16.gmra.mxu0 %v2127
    %v2588 = vpop.f32.mrf.mxu0
    %v2589 = vadd.f32 %v2168, %v2588
    %v2590 = vpop.f32.mrf.mxu0
    %v2591 = vadd.f32 %v2168, %v2590
    %2592 = vmatmul.bf16.gmra.mxu0 %v2129
    %v2593 = vpop.f32.mrf.mxu0
    %v2594 = vadd.f32 %v2168, %v2593
    %v2595 = vpop.f32.mrf.mxu0
    %v2596 = vadd.f32 %v2168, %v2595
    %2597 = vdwg.mxu0
    %2598 = vmatpush.bf16.msra.mxu0 %v2298
    %2599 = vmatpush.bf16.msra.mxu0 %v2296
    %2600 = vmatpush.bf16.msra.mxu0 %v2294
    %2601 = vmatpush.bf16.msra.mxu0 %v2292
    %2602 = vmatpush.bf16.msra.mxu0 %v2290
    %2603 = vmatpush.bf16.msra.mxu0 %v2288
    %2604 = vmatpush.bf16.msra.mxu0 %v2286
    %2605 = vmatpush.bf16.msra.mxu0 %v2284
    %2606 = vmatmul.bf16.gmra.mxu0 %v2100
    %v2607 = vpop.f32.mrf.mxu0
    %v2608 = vadd.f32 %v2519, %v2607
    %v2609 = vpop.f32.mrf.mxu0
    %v2610 = vadd.f32 %v2521, %v2609
    %2611 = vmatmul.bf16.gmra.mxu0 %v2102
    %v2612 = vpop.f32.mrf.mxu0
    %v2613 = vadd.f32 %v2524, %v2612
    %v2614 = vpop.f32.mrf.mxu0
    %v2615 = vadd.f32 %v2526, %v2614
    %2616 = vmatmul.bf16.gmra.mxu0 %v2104
    %v2617 = vpop.f32.mrf.mxu0
    %v2618 = vadd.f32 %v2529, %v2617
    %v2619 = vpop.f32.mrf.mxu0
    %v2620 = vadd.f32 %v2531, %v2619
    %2621 = vmatmul.bf16.gmra.mxu0 %v2106
    %v2622 = vpop.f32.mrf.mxu0
    %v2623 = vadd.f32 %v2534, %v2622
    %v2624 = vpop.f32.mrf.mxu0
    %v2625 = vadd.f32 %v2536, %v2624
    %2626 = vmatmul.bf16.gmra.mxu0 %v2108
    %v2627 = vpop.f32.mrf.mxu0
    %v2628 = vadd.f32 %v2539, %v2627
    %v2629 = vpop.f32.mrf.mxu0
    %v2630 = vadd.f32 %v2541, %v2629
    %2631 = vmatmul.bf16.gmra.mxu0 %v2110
    %v2632 = vpop.f32.mrf.mxu0
    %v2633 = vadd.f32 %v2544, %v2632
    %v2634 = vpop.f32.mrf.mxu0
    %v2635 = vadd.f32 %v2546, %v2634
    %2636 = vmatmul.bf16.gmra.mxu0 %v2112
    %v2637 = vpop.f32.mrf.mxu0
    %v2638 = vadd.f32 %v2549, %v2637
    %v2639 = vpop.f32.mrf.mxu0
    %v2640 = vadd.f32 %v2551, %v2639
    %2641 = vmatmul.bf16.gmra.mxu0 %v2114
    %v2642 = vpop.f32.mrf.mxu0
    %v2643 = vadd.f32 %v2554, %v2642
    %v2644 = vpop.f32.mrf.mxu0
    %v2645 = vadd.f32 %v2556, %v2644
    %2646 = vmatmul.bf16.gmra.mxu0 %v2116
    %v2647 = vpop.f32.mrf.mxu0
    %v2648 = vadd.f32 %v2559, %v2647
    %v2649 = vpop.f32.mrf.mxu0
    %v2650 = vadd.f32 %v2561, %v2649
    %2651 = vmatmul.bf16.gmra.mxu0 %v2118
    %v2652 = vpop.f32.mrf.mxu0
    %v2653 = vadd.f32 %v2564, %v2652
    %v2654 = vpop.f32.mrf.mxu0
    %v2655 = vadd.f32 %v2566, %v2654
    %2656 = vmatmul.bf16.gmra.mxu0 %v2120
    %v2657 = vpop.f32.mrf.mxu0
    %v2658 = vadd.f32 %v2569, %v2657
    %v2659 = vpop.f32.mrf.mxu0
    %v2660 = vadd.f32 %v2571, %v2659
    %2661 = vmatmul.bf16.gmra.mxu0 %v2122
    %v2662 = vpop.f32.mrf.mxu0
    %v2663 = vadd.f32 %v2574, %v2662
    %v2664 = vpop.f32.mrf.mxu0
    %v2665 = vadd.f32 %v2576, %v2664
    %2666 = vmatmul.bf16.gmra.mxu0 %v2124
    %v2667 = vpop.f32.mrf.mxu0
    %v2668 = vadd.f32 %v2579, %v2667
    %v2669 = vpop.f32.mrf.mxu0
    %v2670 = vadd.f32 %v2581, %v2669
    %2671 = vmatmul.bf16.gmra.mxu0 %v2126
    %v2672 = vpop.f32.mrf.mxu0
    %v2673 = vadd.f32 %v2584, %v2672
    %v2674 = vpop.f32.mrf.mxu0
    %v2675 = vadd.f32 %v2586, %v2674
    %2676 = vmatmul.bf16.gmra.mxu0 %v2128
    %v2677 = vpop.f32.mrf.mxu0
    %v2678 = vadd.f32 %v2589, %v2677
    %v2679 = vpop.f32.mrf.mxu0
    %v2680 = vadd.f32 %v2591, %v2679
    %2681 = vmatmul.bf16.gmra.mxu0 %v2130
    %v2682 = vpop.f32.mrf.mxu0
    %v2683 = vadd.f32 %v2594, %v2682
    %v2684 = vpop.f32.mrf.mxu0
    %v2685 = vadd.f32 %v2596, %v2684
    %2686 = vdwg.mxu0
    %vm2687 = vcmp.gt.f32.partialorder %v2430, 0.0
    %vm2688 = vcmp.gt.f32.partialorder %v2608, 0.0
    %vm2689 = vcmp.gt.f32.partialorder %v2432, 0.0
    %vm2690 = vcmp.gt.f32.partialorder %v2610, 0.0
    %vm2691 = vcmp.gt.f32.partialorder %v2435, 0.0
    %vm2692 = vcmp.gt.f32.partialorder %v2613, 0.0
    %vm2693 = vcmp.gt.f32.partialorder %v2437, 0.0
    %vm2694 = vcmp.gt.f32.partialorder %v2615, 0.0
    %vm2695 = vcmp.gt.f32.partialorder %v2440, 0.0
    %vm2696 = vcmp.gt.f32.partialorder %v2618, 0.0
    %vm2697 = vcmp.gt.f32.partialorder %v2442, 0.0
    %vm2698 = vcmp.gt.f32.partialorder %v2620, 0.0
    %vm2699 = vcmp.gt.f32.partialorder %v2445, 0.0
    %vm2700 = vcmp.gt.f32.partialorder %v2623, 0.0
    %vm2701 = vcmp.gt.f32.partialorder %v2447, 0.0
    %vm2702 = vcmp.gt.f32.partialorder %v2625, 0.0
    %vm2703 = vcmp.gt.f32.partialorder %v2450, 0.0
    %vm2704 = vcmp.gt.f32.partialorder %v2628, 0.0
    %vm2705 = vcmp.gt.f32.partialorder %v2452, 0.0
    %vm2706 = vcmp.gt.f32.partialorder %v2630, 0.0
    %vm2707 = vcmp.gt.f32.partialorder %v2455, 0.0
    %vm2708 = vcmp.gt.f32.partialorder %v2633, 0.0
    %vm2709 = vcmp.gt.f32.partialorder %v2457, 0.0
    %vm2710 = vcmp.gt.f32.partialorder %v2635, 0.0
    %vm2711 = vcmp.gt.f32.partialorder %v2460, 0.0
    %vm2712 = vcmp.gt.f32.partialorder %v2638, 0.0
    %vm2713 = vcmp.gt.f32.partialorder %v2462, 0.0
    %vm2714 = vcmp.gt.f32.partialorder %v2640, 0.0
    %vm2715 = vcmp.gt.f32.partialorder %v2465, 0.0
    %vm2716 = vcmp.gt.f32.partialorder %v2643, 0.0
    %vm2717 = vcmp.gt.f32.partialorder %v2467, 0.0
    %vm2718 = vcmp.gt.f32.partialorder %v2645, 0.0
    %vm2719 = vcmp.gt.f32.partialorder %v2470, 0.0
    %vm2720 = vcmp.gt.f32.partialorder %v2648, 0.0
    %vm2721 = vcmp.gt.f32.partialorder %v2472, 0.0
    %vm2722 = vcmp.gt.f32.partialorder %v2650, 0.0
    %vm2723 = vcmp.gt.f32.partialorder %v2475, 0.0
    %vm2724 = vcmp.gt.f32.partialorder %v2653, 0.0
    %vm2725 = vcmp.gt.f32.partialorder %v2477, 0.0
    %vm2726 = vcmp.gt.f32.partialorder %v2655, 0.0
    %vm2727 = vcmp.gt.f32.partialorder %v2480, 0.0
    %vm2728 = vcmp.gt.f32.partialorder %v2658, 0.0
    %vm2729 = vcmp.gt.f32.partialorder %v2482, 0.0
    %vm2730 = vcmp.gt.f32.partialorder %v2660, 0.0
    %vm2731 = vcmp.gt.f32.partialorder %v2485, 0.0
    %vm2732 = vcmp.gt.f32.partialorder %v2663, 0.0
    %vm2733 = vcmp.gt.f32.partialorder %v2487, 0.0
    %vm2734 = vcmp.gt.f32.partialorder %v2665, 0.0
    %vm2735 = vcmp.gt.f32.partialorder %v2490, 0.0
    %vm2736 = vcmp.gt.f32.partialorder %v2668, 0.0
    %vm2737 = vcmp.gt.f32.partialorder %v2492, 0.0
    %vm2738 = vcmp.gt.f32.partialorder %v2670, 0.0
    %vm2739 = vcmp.gt.f32.partialorder %v2495, 0.0
    %vm2740 = vcmp.gt.f32.partialorder %v2673, 0.0
    %vm2741 = vcmp.gt.f32.partialorder %v2497, 0.0
    %vm2742 = vcmp.gt.f32.partialorder %v2675, 0.0
    %vm2743 = vcmp.gt.f32.partialorder %v2500, 0.0
    %vm2744 = vcmp.gt.f32.partialorder %v2678, 0.0
    %vm2745 = vcmp.gt.f32.partialorder %v2502, 0.0
    %vm2746 = vcmp.gt.f32.partialorder %v2680, 0.0
    %vm2747 = vcmp.gt.f32.partialorder %v2505, 0.0
    %vm2748 = vcmp.gt.f32.partialorder %v2683, 0.0
    %vm2749 = vcmp.gt.f32.partialorder %v2507, 0.0
    %vm2750 = vcmp.gt.f32.partialorder %v2685, 0.0
    %v2751 = vmul.f32 %v2430, 0.01
    %v2752 = vmul.f32 %v2608, 0.01
    %v2753 = vmul.f32 %v2432, 0.01
    %v2754 = vmul.f32 %v2610, 0.01
    %v2755 = vmul.f32 %v2435, 0.01
    %v2756 = vmul.f32 %v2613, 0.01
    %v2757 = vmul.f32 %v2437, 0.01
    %v2758 = vmul.f32 %v2615, 0.01
    %v2759 = vmul.f32 %v2440, 0.01
    %v2760 = vmul.f32 %v2618, 0.01
    %v2761 = vmul.f32 %v2442, 0.01
    %v2762 = vmul.f32 %v2620, 0.01
    %v2763 = vmul.f32 %v2445, 0.01
    %v2764 = vmul.f32 %v2623, 0.01
    %v2765 = vmul.f32 %v2447, 0.01
    %v2766 = vmul.f32 %v2625, 0.01
    %v2767 = vmul.f32 %v2450, 0.01
    %v2768 = vmul.f32 %v2628, 0.01
    %v2769 = vmul.f32 %v2452, 0.01
    %v2770 = vmul.f32 %v2630, 0.01
    %v2771 = vmul.f32 %v2455, 0.01
    %v2772 = vmul.f32 %v2633, 0.01
    %v2773 = vmul.f32 %v2457, 0.01
    %v2774 = vmul.f32 %v2635, 0.01
    %v2775 = vmul.f32 %v2460, 0.01
    %v2776 = vmul.f32 %v2638, 0.01
    %v2777 = vmul.f32 %v2462, 0.01
    %v2778 = vmul.f32 %v2640, 0.01
    %v2779 = vmul.f32 %v2465, 0.01
    %v2780 = vmul.f32 %v2643, 0.01
    %v2781 = vmul.f32 %v2467, 0.01
    %v2782 = vmul.f32 %v2645, 0.01
    %v2783 = vmul.f32 %v2470, 0.01
    %v2784 = vmul.f32 %v2648, 0.01
    %v2785 = vmul.f32 %v2472, 0.01
    %v2786 = vmul.f32 %v2650, 0.01
    %v2787 = vmul.f32 %v2475, 0.01
    %v2788 = vmul.f32 %v2653, 0.01
    %v2789 = vmul.f32 %v2477, 0.01
    %v2790 = vmul.f32 %v2655, 0.01
    %v2791 = vmul.f32 %v2480, 0.01
    %v2792 = vmul.f32 %v2658, 0.01
    %v2793 = vmul.f32 %v2482, 0.01
    %v2794 = vmul.f32 %v2660, 0.01
    %v2795 = vmul.f32 %v2485, 0.01
    %v2796 = vmul.f32 %v2663, 0.01
    %v2797 = vmul.f32 %v2487, 0.01
    %v2798 = vmul.f32 %v2665, 0.01
    %v2799 = vmul.f32 %v2490, 0.01
    %v2800 = vmul.f32 %v2668, 0.01
    %v2801 = vmul.f32 %v2492, 0.01
    %v2802 = vmul.f32 %v2670, 0.01
    %v2803 = vmul.f32 %v2495, 0.01
    %v2804 = vmul.f32 %v2673, 0.01
    %v2805 = vmul.f32 %v2497, 0.01
    %v2806 = vmul.f32 %v2675, 0.01
    %v2807 = vmul.f32 %v2500, 0.01
    %v2808 = vmul.f32 %v2678, 0.01
    %v2809 = vmul.f32 %v2502, 0.01
    %v2810 = vmul.f32 %v2680, 0.01
    %v2811 = vmul.f32 %v2505, 0.01
    %v2812 = vmul.f32 %v2683, 0.01
    %v2813 = vmul.f32 %v2507, 0.01
    %v2814 = vmul.f32 %v2685, 0.01
    %v2815 = vsel %vm2687, %v2430, %v2751
    %v2816 = vsel %vm2688, %v2608, %v2752
    %v2817 = vsel %vm2689, %v2432, %v2753
    %v2818 = vsel %vm2690, %v2610, %v2754
    %v2819 = vsel %vm2691, %v2435, %v2755
    %v2820 = vsel %vm2692, %v2613, %v2756
    %v2821 = vsel %vm2693, %v2437, %v2757
    %v2822 = vsel %vm2694, %v2615, %v2758
    %v2823 = vsel %vm2695, %v2440, %v2759
    %v2824 = vsel %vm2696, %v2618, %v2760
    %v2825 = vsel %vm2697, %v2442, %v2761
    %v2826 = vsel %vm2698, %v2620, %v2762
    %v2827 = vsel %vm2699, %v2445, %v2763
    %v2828 = vsel %vm2700, %v2623, %v2764
    %v2829 = vsel %vm2701, %v2447, %v2765
    %v2830 = vsel %vm2702, %v2625, %v2766
    %v2831 = vsel %vm2703, %v2450, %v2767
    %v2832 = vsel %vm2704, %v2628, %v2768
    %v2833 = vsel %vm2705, %v2452, %v2769
    %v2834 = vsel %vm2706, %v2630, %v2770
    %v2835 = vsel %vm2707, %v2455, %v2771
    %v2836 = vsel %vm2708, %v2633, %v2772
    %v2837 = vsel %vm2709, %v2457, %v2773
    %v2838 = vsel %vm2710, %v2635, %v2774
    %v2839 = vsel %vm2711, %v2460, %v2775
    %v2840 = vsel %vm2712, %v2638, %v2776
    %v2841 = vsel %vm2713, %v2462, %v2777
    %v2842 = vsel %vm2714, %v2640, %v2778
    %v2843 = vsel %vm2715, %v2465, %v2779
    %v2844 = vsel %vm2716, %v2643, %v2780
    %v2845 = vsel %vm2717, %v2467, %v2781
    %v2846 = vsel %vm2718, %v2645, %v2782
    %v2847 = vsel %vm2719, %v2470, %v2783
    %v2848 = vsel %vm2720, %v2648, %v2784
    %v2849 = vsel %vm2721, %v2472, %v2785
    %v2850 = vsel %vm2722, %v2650, %v2786
    %v2851 = vsel %vm2723, %v2475, %v2787
    %v2852 = vsel %vm2724, %v2653, %v2788
    %v2853 = vsel %vm2725, %v2477, %v2789
    %v2854 = vsel %vm2726, %v2655, %v2790
    %v2855 = vsel %vm2727, %v2480, %v2791
    %v2856 = vsel %vm2728, %v2658, %v2792
    %v2857 = vsel %vm2729, %v2482, %v2793
    %v2858 = vsel %vm2730, %v2660, %v2794
    %v2859 = vsel %vm2731, %v2485, %v2795
    %v2860 = vsel %vm2732, %v2663, %v2796
    %v2861 = vsel %vm2733, %v2487, %v2797
    %v2862 = vsel %vm2734, %v2665, %v2798
    %v2863 = vsel %vm2735, %v2490, %v2799
    %v2864 = vsel %vm2736, %v2668, %v2800
    %v2865 = vsel %vm2737, %v2492, %v2801
    %v2866 = vsel %vm2738, %v2670, %v2802
    %v2867 = vsel %vm2739, %v2495, %v2803
    %v2868 = vsel %vm2740, %v2673, %v2804
    %v2869 = vsel %vm2741, %v2497, %v2805
    %v2870 = vsel %vm2742, %v2675, %v2806
    %v2871 = vsel %vm2743, %v2500, %v2807
    %v2872 = vsel %vm2744, %v2678, %v2808
    %v2873 = vsel %vm2745, %v2502, %v2809
    %v2874 = vsel %vm2746, %v2680, %v2810
    %v2875 = vsel %vm2747, %v2505, %v2811
    %v2876 = vsel %vm2748, %v2683, %v2812
    %v2877 = vsel %vm2749, %v2507, %v2813
    %v2878 = vsel %vm2750, %v2685, %v2814
    %v2879 = vpack.c.bf16 %v2817, %v2815
    %v2880 = vpack.c.bf16 %v2818, %v2816
    %v2881 = vpack.c.bf16 %v2821, %v2819
    %v2882 = vpack.c.bf16 %v2822, %v2820
    %v2883 = vpack.c.bf16 %v2825, %v2823
    %v2884 = vpack.c.bf16 %v2826, %v2824
    %v2885 = vpack.c.bf16 %v2829, %v2827
    %v2886 = vpack.c.bf16 %v2830, %v2828
    %v2887 = vpack.c.bf16 %v2833, %v2831
    %v2888 = vpack.c.bf16 %v2834, %v2832
    %v2889 = vpack.c.bf16 %v2837, %v2835
    %v2890 = vpack.c.bf16 %v2838, %v2836
    %v2891 = vpack.c.bf16 %v2841, %v2839
    %v2892 = vpack.c.bf16 %v2842, %v2840
    %v2893 = vpack.c.bf16 %v2845, %v2843
    %v2894 = vpack.c.bf16 %v2846, %v2844
    %v2895 = vpack.c.bf16 %v2849, %v2847
    %v2896 = vpack.c.bf16 %v2850, %v2848
    %v2897 = vpack.c.bf16 %v2853, %v2851
    %v2898 = vpack.c.bf16 %v2854, %v2852
    %v2899 = vpack.c.bf16 %v2857, %v2855
    %v2900 = vpack.c.bf16 %v2858, %v2856
    %v2901 = vpack.c.bf16 %v2861, %v2859
    %v2902 = vpack.c.bf16 %v2862, %v2860
    %v2903 = vpack.c.bf16 %v2865, %v2863
    %v2904 = vpack.c.bf16 %v2866, %v2864
    %v2905 = vpack.c.bf16 %v2869, %v2867
    %v2906 = vpack.c.bf16 %v2870, %v2868
    %v2907 = vpack.c.bf16 %v2873, %v2871
    %v2908 = vpack.c.bf16 %v2874, %v2872
    %v2909 = vpack.c.bf16 %v2877, %v2875
    %v2910 = vpack.c.bf16 %v2878, %v2876
    %s2911 = scalar_lea.vmem [#allocation2], 768
    %v2912 = vld [vmem:[%s2911] sm:$0xff]
    %v2913 = vld [vmem:[%s2911 + $0x8] sm:$0xff]
    %v2914 = vld [vmem:[%s2911 + $0x10] sm:$0xff]
    %v2915 = vld [vmem:[%s2911 + $0x18] sm:$0xff]
    %v2916 = vld [vmem:[%s2911 + $0x20] sm:$0xff]
    %v2917 = vld [vmem:[%s2911 + $0x28] sm:$0xff]
    %v2918 = vld [vmem:[%s2911 + $0x30] sm:$0xff]
    %v2919 = vld [vmem:[%s2911 + $0x38] sm:$0xff]
    %v2920 = vld [vmem:[%s2911 + $0x40] sm:$0xff]
    %v2921 = vld [vmem:[%s2911 + $0x48] sm:$0xff]
    %v2922 = vld [vmem:[%s2911 + $0x50] sm:$0xff]
    %v2923 = vld [vmem:[%s2911 + $0x58] sm:$0xff]
    %v2924 = vld [vmem:[%s2911 + $0x60] sm:$0xff]
    %v2925 = vld [vmem:[%s2911 + $0x68] sm:$0xff]
    %v2926 = vld [vmem:[%s2911 + $0x70] sm:$0xff]
    %v2927 = vld [vmem:[%s2911 + $0x78] sm:$0xff]
    %v2928 = vld [vmem:[%s2911 + $0x80] sm:$0xff]
    %v2929 = vld [vmem:[%s2911 + $0x88] sm:$0xff]
    %v2930 = vld [vmem:[%s2911 + $0x90] sm:$0xff]
    %v2931 = vld [vmem:[%s2911 + $0x98] sm:$0xff]
    %v2932 = vld [vmem:[%s2911 + $0xa0] sm:$0xff]
    %v2933 = vld [vmem:[%s2911 + $0xa8] sm:$0xff]
    %v2934 = vld [vmem:[%s2911 + $0xb0] sm:$0xff]
    %v2935 = vld [vmem:[%s2911 + $0xb8] sm:$0xff]
    %v2936 = vld [vmem:[%s2911 + $0xc0] sm:$0xff]
    %v2937 = vld [vmem:[%s2911 + $0xc8] sm:$0xff]
    %v2938 = vld [vmem:[%s2911 + $0xd0] sm:$0xff]
    %v2939 = vld [vmem:[%s2911 + $0xd8] sm:$0xff]
    %v2940 = vld [vmem:[%s2911 + $0xe0] sm:$0xff]
    %v2941 = vld [vmem:[%s2911 + $0xe8] sm:$0xff]
    %v2942 = vld [vmem:[%s2911 + $0xf0] sm:$0xff]
    %v2943 = vld [vmem:[%s2911 + $0xf8] sm:$0xff]
    %s2944 = scalar_lea.vmem %s4, 4
    %v2945 = vld [vmem:[%s2944] ss:$8 sm:$0x3]
    %v2947 = vperm.slane %v2945, 0
    %v2948 = vperm.slane %v2945, 1
    %v2983 = vunpack.c.l.b16 %v2912
    %v2984 = vunpack.c.h.b16 %v2912
    %v2985 = vunpack.c.l.b16 %v2913
    %v2986 = vunpack.c.h.b16 %v2913
    %v2987 = vunpack.c.l.b16 %v2914
    %v2988 = vunpack.c.h.b16 %v2914
    %v2989 = vunpack.c.l.b16 %v2915
    %v2990 = vunpack.c.h.b16 %v2915
    %v2991 = vunpack.c.l.b16 %v2916
    %v2992 = vunpack.c.h.b16 %v2916
    %v2993 = vunpack.c.l.b16 %v2917
    %v2994 = vunpack.c.h.b16 %v2917
    %v2995 = vunpack.c.l.b16 %v2918
    %v2996 = vunpack.c.h.b16 %v2918
    %v2997 = vunpack.c.l.b16 %v2919
    %v2998 = vunpack.c.h.b16 %v2919
    %v2999 = vunpack.c.l.b16 %v2920
    %v3000 = vunpack.c.h.b16 %v2920
    %v3001 = vunpack.c.l.b16 %v2921
    %v3002 = vunpack.c.h.b16 %v2921
    %v3003 = vunpack.c.l.b16 %v2922
    %v3004 = vunpack.c.h.b16 %v2922
    %v3005 = vunpack.c.l.b16 %v2923
    %v3006 = vunpack.c.h.b16 %v2923
    %v3007 = vunpack.c.l.b16 %v2924
    %v3008 = vunpack.c.h.b16 %v2924
    %v3009 = vunpack.c.l.b16 %v2925
    %v3010 = vunpack.c.h.b16 %v2925
    %v3011 = vunpack.c.l.b16 %v2926
    %v3012 = vunpack.c.h.b16 %v2926
    %v3013 = vunpack.c.l.b16 %v2927
    %v3014 = vunpack.c.h.b16 %v2927
    %v3015 = vunpack.c.l.b16 %v2928
    %v3016 = vunpack.c.h.b16 %v2928
    %v3017 = vunpack.c.l.b16 %v2929
    %v3018 = vunpack.c.h.b16 %v2929
    %v3019 = vunpack.c.l.b16 %v2930
    %v3020 = vunpack.c.h.b16 %v2930
    %v3021 = vunpack.c.l.b16 %v2931
    %v3022 = vunpack.c.h.b16 %v2931
    %v3023 = vunpack.c.l.b16 %v2932
    %v3024 = vunpack.c.h.b16 %v2932
    %v3025 = vunpack.c.l.b16 %v2933
    %v3026 = vunpack.c.h.b16 %v2933
    %v3027 = vunpack.c.l.b16 %v2934
    %v3028 = vunpack.c.h.b16 %v2934
    %v3029 = vunpack.c.l.b16 %v2935
    %v3030 = vunpack.c.h.b16 %v2935
    %v3031 = vunpack.c.l.b16 %v2936
    %v3032 = vunpack.c.h.b16 %v2936
    %v3033 = vunpack.c.l.b16 %v2937
    %v3034 = vunpack.c.h.b16 %v2937
    %v3035 = vunpack.c.l.b16 %v2938
    %v3036 = vunpack.c.h.b16 %v2938
    %v3037 = vunpack.c.l.b16 %v2939
    %v3038 = vunpack.c.h.b16 %v2939
    %v3039 = vunpack.c.l.b16 %v2940
    %v3040 = vunpack.c.h.b16 %v2940
    %v3041 = vunpack.c.l.b16 %v2941
    %v3042 = vunpack.c.h.b16 %v2941
    %v3043 = vunpack.c.l.b16 %v2942
    %v3044 = vunpack.c.h.b16 %v2942
    %v3045 = vunpack.c.l.b16 %v2943
    %v3046 = vunpack.c.h.b16 %v2943
    %v3047 = vpack.c.b16 %v2985, %v2983
    %v3048 = vpack.c.b16 %v2986, %v2984
    %v3049 = vpack.c.b16 %v2989, %v2987
    %v3050 = vpack.c.b16 %v2990, %v2988
    %v3051 = vpack.c.b16 %v2993, %v2991
    %v3052 = vpack.c.b16 %v2994, %v2992
    %v3053 = vpack.c.b16 %v2997, %v2995
    %v3054 = vpack.c.b16 %v2998, %v2996
    %v3055 = vpack.c.b16 %v3001, %v2999
    %v3056 = vpack.c.b16 %v3002, %v3000
    %v3057 = vpack.c.b16 %v3005, %v3003
    %v3058 = vpack.c.b16 %v3006, %v3004
    %v3059 = vpack.c.b16 %v3009, %v3007
    %v3060 = vpack.c.b16 %v3010, %v3008
    %v3061 = vpack.c.b16 %v3013, %v3011
    %v3062 = vpack.c.b16 %v3014, %v3012
    %v3063 = vpack.c.b16 %v3017, %v3015
    %v3064 = vpack.c.b16 %v3018, %v3016
    %v3065 = vpack.c.b16 %v3021, %v3019
    %v3066 = vpack.c.b16 %v3022, %v3020
    %v3067 = vpack.c.b16 %v3025, %v3023
    %v3068 = vpack.c.b16 %v3026, %v3024
    %v3069 = vpack.c.b16 %v3029, %v3027
    %v3070 = vpack.c.b16 %v3030, %v3028
    %v3071 = vpack.c.b16 %v3033, %v3031
    %v3072 = vpack.c.b16 %v3034, %v3032
    %v3073 = vpack.c.b16 %v3037, %v3035
    %v3074 = vpack.c.b16 %v3038, %v3036
    %v3075 = vpack.c.b16 %v3041, %v3039
    %v3076 = vpack.c.b16 %v3042, %v3040
    %v3077 = vpack.c.b16 %v3045, %v3043
    %v3078 = vpack.c.b16 %v3046, %v3044
    %3111 = vmatpush.bf16.msra.mxu0 %v3061
    %3112 = vmatpush.bf16.msra.mxu0 %v3059
    %3113 = vmatpush.bf16.msra.mxu0 %v3057
    %3114 = vmatpush.bf16.msra.mxu0 %v3055
    %3115 = vmatpush.bf16.msra.mxu0 %v3053
    %3116 = vmatpush.bf16.msra.mxu0 %v3051
    %3117 = vmatpush.bf16.msra.mxu0 %v3049
    %3118 = vmatpush.bf16.msra.mxu0 %v3047
    %3119 = vmatmul.bf16.gmra.mxu0 %v2879
    %v3120 = vpop.f32.mrf.mxu0
    %v3121 = vadd.f32 %v2947, %v3120
    %v3122 = vpop.f32.mrf.mxu0
    %v3123 = vadd.f32 %v2947, %v3122
    %3124 = vmatmul.bf16.gmra.mxu0 %v2881
    %v3125 = vpop.f32.mrf.mxu0
    %v3126 = vadd.f32 %v2947, %v3125
    %v3127 = vpop.f32.mrf.mxu0
    %v3128 = vadd.f32 %v2947, %v3127
    %3129 = vmatmul.bf16.gmra.mxu0 %v2883
    %v3130 = vpop.f32.mrf.mxu0
    %v3131 = vadd.f32 %v2947, %v3130
    %v3132 = vpop.f32.mrf.mxu0
    %v3133 = vadd.f32 %v2947, %v3132
    %3134 = vmatmul.bf16.gmra.mxu0 %v2885
    %v3135 = vpop.f32.mrf.mxu0
    %v3136 = vadd.f32 %v2947, %v3135
    %v3137 = vpop.f32.mrf.mxu0
    %v3138 = vadd.f32 %v2947, %v3137
    %3139 = vmatmul.bf16.gmra.mxu0 %v2887
    %v3140 = vpop.f32.mrf.mxu0
    %v3141 = vadd.f32 %v2947, %v3140
    %v3142 = vpop.f32.mrf.mxu0
    %v3143 = vadd.f32 %v2947, %v3142
    %3144 = vmatmul.bf16.gmra.mxu0 %v2889
    %v3145 = vpop.f32.mrf.mxu0
    %v3146 = vadd.f32 %v2947, %v3145
    %v3147 = vpop.f32.mrf.mxu0
    %v3148 = vadd.f32 %v2947, %v3147
    %3149 = vmatmul.bf16.gmra.mxu0 %v2891
    %v3150 = vpop.f32.mrf.mxu0
    %v3151 = vadd.f32 %v2947, %v3150
    %v3152 = vpop.f32.mrf.mxu0
    %v3153 = vadd.f32 %v2947, %v3152
    %3154 = vmatmul.bf16.gmra.mxu0 %v2893
    %v3155 = vpop.f32.mrf.mxu0
    %v3156 = vadd.f32 %v2947, %v3155
    %v3157 = vpop.f32.mrf.mxu0
    %v3158 = vadd.f32 %v2947, %v3157
    %3159 = vmatmul.bf16.gmra.mxu0 %v2895
    %v3160 = vpop.f32.mrf.mxu0
    %v3161 = vadd.f32 %v2947, %v3160
    %v3162 = vpop.f32.mrf.mxu0
    %v3163 = vadd.f32 %v2947, %v3162
    %3164 = vmatmul.bf16.gmra.mxu0 %v2897
    %v3165 = vpop.f32.mrf.mxu0
    %v3166 = vadd.f32 %v2947, %v3165
    %v3167 = vpop.f32.mrf.mxu0
    %v3168 = vadd.f32 %v2947, %v3167
    %3169 = vmatmul.bf16.gmra.mxu0 %v2899
    %v3170 = vpop.f32.mrf.mxu0
    %v3171 = vadd.f32 %v2947, %v3170
    %v3172 = vpop.f32.mrf.mxu0
    %v3173 = vadd.f32 %v2947, %v3172
    %3174 = vmatmul.bf16.gmra.mxu0 %v2901
    %v3175 = vpop.f32.mrf.mxu0
    %v3176 = vadd.f32 %v2947, %v3175
    %v3177 = vpop.f32.mrf.mxu0
    %v3178 = vadd.f32 %v2947, %v3177
    %3179 = vmatmul.bf16.gmra.mxu0 %v2903
    %v3180 = vpop.f32.mrf.mxu0
    %v3181 = vadd.f32 %v2947, %v3180
    %v3182 = vpop.f32.mrf.mxu0
    %v3183 = vadd.f32 %v2947, %v3182
    %3184 = vmatmul.bf16.gmra.mxu0 %v2905
    %v3185 = vpop.f32.mrf.mxu0
    %v3186 = vadd.f32 %v2947, %v3185
    %v3187 = vpop.f32.mrf.mxu0
    %v3188 = vadd.f32 %v2947, %v3187
    %3189 = vmatmul.bf16.gmra.mxu0 %v2907
    %v3190 = vpop.f32.mrf.mxu0
    %v3191 = vadd.f32 %v2947, %v3190
    %v3192 = vpop.f32.mrf.mxu0
    %v3193 = vadd.f32 %v2947, %v3192
    %3194 = vmatmul.bf16.gmra.mxu0 %v2909
    %v3195 = vpop.f32.mrf.mxu0
    %v3196 = vadd.f32 %v2947, %v3195
    %v3197 = vpop.f32.mrf.mxu0
    %v3198 = vadd.f32 %v2947, %v3197
    %3199 = vdwg.mxu0
    %3200 = vmatpush.bf16.msra.mxu0 %v3077
    %3201 = vmatpush.bf16.msra.mxu0 %v3075
    %3202 = vmatpush.bf16.msra.mxu0 %v3073
    %3203 = vmatpush.bf16.msra.mxu0 %v3071
    %3204 = vmatpush.bf16.msra.mxu0 %v3069
    %3205 = vmatpush.bf16.msra.mxu0 %v3067
    %3206 = vmatpush.bf16.msra.mxu0 %v3065
    %3207 = vmatpush.bf16.msra.mxu0 %v3063
    %3208 = vmatmul.bf16.gmra.mxu0 %v2880
    %v3209 = vpop.f32.mrf.mxu0
    %v3210 = vadd.f32 %v3121, %v3209
    %v3211 = vpop.f32.mrf.mxu0
    %v3212 = vadd.f32 %v3123, %v3211
    %3213 = vmatmul.bf16.gmra.mxu0 %v2882
    %v3214 = vpop.f32.mrf.mxu0
    %v3215 = vadd.f32 %v3126, %v3214
    %v3216 = vpop.f32.mrf.mxu0
    %v3217 = vadd.f32 %v3128, %v3216
    %3218 = vmatmul.bf16.gmra.mxu0 %v2884
    %v3219 = vpop.f32.mrf.mxu0
    %v3220 = vadd.f32 %v3131, %v3219
    %v3221 = vpop.f32.mrf.mxu0
    %v3222 = vadd.f32 %v3133, %v3221
    %3223 = vmatmul.bf16.gmra.mxu0 %v2886
    %v3224 = vpop.f32.mrf.mxu0
    %v3225 = vadd.f32 %v3136, %v3224
    %v3226 = vpop.f32.mrf.mxu0
    %v3227 = vadd.f32 %v3138, %v3226
    %3228 = vmatmul.bf16.gmra.mxu0 %v2888
    %v3229 = vpop.f32.mrf.mxu0
    %v3230 = vadd.f32 %v3141, %v3229
    %v3231 = vpop.f32.mrf.mxu0
    %v3232 = vadd.f32 %v3143, %v3231
    %3233 = vmatmul.bf16.gmra.mxu0 %v2890
    %v3234 = vpop.f32.mrf.mxu0
    %v3235 = vadd.f32 %v3146, %v3234
    %v3236 = vpop.f32.mrf.mxu0
    %v3237 = vadd.f32 %v3148, %v3236
    %3238 = vmatmul.bf16.gmra.mxu0 %v2892
    %v3239 = vpop.f32.mrf.mxu0
    %v3240 = vadd.f32 %v3151, %v3239
    %v3241 = vpop.f32.mrf.mxu0
    %v3242 = vadd.f32 %v3153, %v3241
    %3243 = vmatmul.bf16.gmra.mxu0 %v2894
    %v3244 = vpop.f32.mrf.mxu0
    %v3245 = vadd.f32 %v3156, %v3244
    %v3246 = vpop.f32.mrf.mxu0
    %v3247 = vadd.f32 %v3158, %v3246
    %3248 = vmatmul.bf16.gmra.mxu0 %v2896
    %v3249 = vpop.f32.mrf.mxu0
    %v3250 = vadd.f32 %v3161, %v3249
    %v3251 = vpop.f32.mrf.mxu0
    %v3252 = vadd.f32 %v3163, %v3251
    %3253 = vmatmul.bf16.gmra.mxu0 %v2898
    %v3254 = vpop.f32.mrf.mxu0
    %v3255 = vadd.f32 %v3166, %v3254
    %v3256 = vpop.f32.mrf.mxu0
    %v3257 = vadd.f32 %v3168, %v3256
    %3258 = vmatmul.bf16.gmra.mxu0 %v2900
    %v3259 = vpop.f32.mrf.mxu0
    %v3260 = vadd.f32 %v3171, %v3259
    %v3261 = vpop.f32.mrf.mxu0
    %v3262 = vadd.f32 %v3173, %v3261
    %3263 = vmatmul.bf16.gmra.mxu0 %v2902
    %v3264 = vpop.f32.mrf.mxu0
    %v3265 = vadd.f32 %v3176, %v3264
    %v3266 = vpop.f32.mrf.mxu0
    %v3267 = vadd.f32 %v3178, %v3266
    %3268 = vmatmul.bf16.gmra.mxu0 %v2904
    %v3269 = vpop.f32.mrf.mxu0
    %v3270 = vadd.f32 %v3181, %v3269
    %v3271 = vpop.f32.mrf.mxu0
    %v3272 = vadd.f32 %v3183, %v3271
    %3273 = vmatmul.bf16.gmra.mxu0 %v2906
    %v3274 = vpop.f32.mrf.mxu0
    %v3275 = vadd.f32 %v3186, %v3274
    %v3276 = vpop.f32.mrf.mxu0
    %v3277 = vadd.f32 %v3188, %v3276
    %3278 = vmatmul.bf16.gmra.mxu0 %v2908
    %v3279 = vpop.f32.mrf.mxu0
    %v3280 = vadd.f32 %v3191, %v3279
    %v3281 = vpop.f32.mrf.mxu0
    %v3282 = vadd.f32 %v3193, %v3281
    %3283 = vmatmul.bf16.gmra.mxu0 %v2910
    %v3284 = vpop.f32.mrf.mxu0
    %v3285 = vadd.f32 %v3196, %v3284
    %v3286 = vpop.f32.mrf.mxu0
    %v3287 = vadd.f32 %v3198, %v3286
    %3288 = vdwg.mxu0
    %3289 = vmatpush.bf16.msra.mxu0 %v3062
    %3290 = vmatpush.bf16.msra.mxu0 %v3060
    %3291 = vmatpush.bf16.msra.mxu0 %v3058
    %3292 = vmatpush.bf16.msra.mxu0 %v3056
    %3293 = vmatpush.bf16.msra.mxu0 %v3054
    %3294 = vmatpush.bf16.msra.mxu0 %v3052
    %3295 = vmatpush.bf16.msra.mxu0 %v3050
    %3296 = vmatpush.bf16.msra.mxu0 %v3048
    %3297 = vmatmul.bf16.gmra.mxu0 %v2879
    %v3298 = vpop.f32.mrf.mxu0
    %v3299 = vadd.f32 %v2948, %v3298
    %v3300 = vpop.f32.mrf.mxu0
    %v3301 = vadd.f32 %v2948, %v3300
    %3302 = vmatmul.bf16.gmra.mxu0 %v2881
    %v3303 = vpop.f32.mrf.mxu0
    %v3304 = vadd.f32 %v2948, %v3303
    %v3305 = vpop.f32.mrf.mxu0
    %v3306 = vadd.f32 %v2948, %v3305
    %3307 = vmatmul.bf16.gmra.mxu0 %v2883
    %v3308 = vpop.f32.mrf.mxu0
    %v3309 = vadd.f32 %v2948, %v3308
    %v3310 = vpop.f32.mrf.mxu0
    %v3311 = vadd.f32 %v2948, %v3310
    %3312 = vmatmul.bf16.gmra.mxu0 %v2885
    %v3313 = vpop.f32.mrf.mxu0
    %v3314 = vadd.f32 %v2948, %v3313
    %v3315 = vpop.f32.mrf.mxu0
    %v3316 = vadd.f32 %v2948, %v3315
    %3317 = vmatmul.bf16.gmra.mxu0 %v2887
    %v3318 = vpop.f32.mrf.mxu0
    %v3319 = vadd.f32 %v2948, %v3318
    %v3320 = vpop.f32.mrf.mxu0
    %v3321 = vadd.f32 %v2948, %v3320
    %3322 = vmatmul.bf16.gmra.mxu0 %v2889
    %v3323 = vpop.f32.mrf.mxu0
    %v3324 = vadd.f32 %v2948, %v3323
    %v3325 = vpop.f32.mrf.mxu0
    %v3326 = vadd.f32 %v2948, %v3325
    %3327 = vmatmul.bf16.gmra.mxu0 %v2891
    %v3328 = vpop.f32.mrf.mxu0
    %v3329 = vadd.f32 %v2948, %v3328
    %v3330 = vpop.f32.mrf.mxu0
    %v3331 = vadd.f32 %v2948, %v3330
    %3332 = vmatmul.bf16.gmra.mxu0 %v2893
    %v3333 = vpop.f32.mrf.mxu0
    %v3334 = vadd.f32 %v2948, %v3333
    %v3335 = vpop.f32.mrf.mxu0
    %v3336 = vadd.f32 %v2948, %v3335
    %3337 = vmatmul.bf16.gmra.mxu0 %v2895
    %v3338 = vpop.f32.mrf.mxu0
    %v3339 = vadd.f32 %v2948, %v3338
    %v3340 = vpop.f32.mrf.mxu0
    %v3341 = vadd.f32 %v2948, %v3340
    %3342 = vmatmul.bf16.gmra.mxu0 %v2897
    %v3343 = vpop.f32.mrf.mxu0
    %v3344 = vadd.f32 %v2948, %v3343
    %v3345 = vpop.f32.mrf.mxu0
    %v3346 = vadd.f32 %v2948, %v3345
    %3347 = vmatmul.bf16.gmra.mxu0 %v2899
    %v3348 = vpop.f32.mrf.mxu0
    %v3349 = vadd.f32 %v2948, %v3348
    %v3350 = vpop.f32.mrf.mxu0
    %v3351 = vadd.f32 %v2948, %v3350
    %3352 = vmatmul.bf16.gmra.mxu0 %v2901
    %v3353 = vpop.f32.mrf.mxu0
    %v3354 = vadd.f32 %v2948, %v3353
    %v3355 = vpop.f32.mrf.mxu0
    %v3356 = vadd.f32 %v2948, %v3355
    %3357 = vmatmul.bf16.gmra.mxu0 %v2903
    %v3358 = vpop.f32.mrf.mxu0
    %v3359 = vadd.f32 %v2948, %v3358
    %v3360 = vpop.f32.mrf.mxu0
    %v3361 = vadd.f32 %v2948, %v3360
    %3362 = vmatmul.bf16.gmra.mxu0 %v2905
    %v3363 = vpop.f32.mrf.mxu0
    %v3364 = vadd.f32 %v2948, %v3363
    %v3365 = vpop.f32.mrf.mxu0
    %v3366 = vadd.f32 %v2948, %v3365
    %3367 = vmatmul.bf16.gmra.mxu0 %v2907
    %v3368 = vpop.f32.mrf.mxu0
    %v3369 = vadd.f32 %v2948, %v3368
    %v3370 = vpop.f32.mrf.mxu0
    %v3371 = vadd.f32 %v2948, %v3370
    %3372 = vmatmul.bf16.gmra.mxu0 %v2909
    %v3373 = vpop.f32.mrf.mxu0
    %v3374 = vadd.f32 %v2948, %v3373
    %v3375 = vpop.f32.mrf.mxu0
    %v3376 = vadd.f32 %v2948, %v3375
    %3377 = vdwg.mxu0
    %3378 = vmatpush.bf16.msra.mxu0 %v3078
    %3379 = vmatpush.bf16.msra.mxu0 %v3076
    %3380 = vmatpush.bf16.msra.mxu0 %v3074
    %3381 = vmatpush.bf16.msra.mxu0 %v3072
    %3382 = vmatpush.bf16.msra.mxu0 %v3070
    %3383 = vmatpush.bf16.msra.mxu0 %v3068
    %3384 = vmatpush.bf16.msra.mxu0 %v3066
    %3385 = vmatpush.bf16.msra.mxu0 %v3064
    %3386 = vmatmul.bf16.gmra.mxu0 %v2880
    %v3387 = vpop.f32.mrf.mxu0
    %v3388 = vadd.f32 %v3299, %v3387
    %v3389 = vpop.f32.mrf.mxu0
    %v3390 = vadd.f32 %v3301, %v3389
    %3391 = vmatmul.bf16.gmra.mxu0 %v2882
    %v3392 = vpop.f32.mrf.mxu0
    %v3393 = vadd.f32 %v3304, %v3392
    %v3394 = vpop.f32.mrf.mxu0
    %v3395 = vadd.f32 %v3306, %v3394
    %3396 = vmatmul.bf16.gmra.mxu0 %v2884
    %v3397 = vpop.f32.mrf.mxu0
    %v3398 = vadd.f32 %v3309, %v3397
    %v3399 = vpop.f32.mrf.mxu0
    %v3400 = vadd.f32 %v3311, %v3399
    %3401 = vmatmul.bf16.gmra.mxu0 %v2886
    %v3402 = vpop.f32.mrf.mxu0
    %v3403 = vadd.f32 %v3314, %v3402
    %v3404 = vpop.f32.mrf.mxu0
    %v3405 = vadd.f32 %v3316, %v3404
    %3406 = vmatmul.bf16.gmra.mxu0 %v2888
    %v3407 = vpop.f32.mrf.mxu0
    %v3408 = vadd.f32 %v3319, %v3407
    %v3409 = vpop.f32.mrf.mxu0
    %v3410 = vadd.f32 %v3321, %v3409
    %3411 = vmatmul.bf16.gmra.mxu0 %v2890
    %v3412 = vpop.f32.mrf.mxu0
    %v3413 = vadd.f32 %v3324, %v3412
    %v3414 = vpop.f32.mrf.mxu0
    %v3415 = vadd.f32 %v3326, %v3414
    %3416 = vmatmul.bf16.gmra.mxu0 %v2892
    %v3417 = vpop.f32.mrf.mxu0
    %v3418 = vadd.f32 %v3329, %v3417
    %v3419 = vpop.f32.mrf.mxu0
    %v3420 = vadd.f32 %v3331, %v3419
    %3421 = vmatmul.bf16.gmra.mxu0 %v2894
    %v3422 = vpop.f32.mrf.mxu0
    %v3423 = vadd.f32 %v3334, %v3422
    %v3424 = vpop.f32.mrf.mxu0
    %v3425 = vadd.f32 %v3336, %v3424
    %3426 = vmatmul.bf16.gmra.mxu0 %v2896
    %v3427 = vpop.f32.mrf.mxu0
    %v3428 = vadd.f32 %v3339, %v3427
    %v3429 = vpop.f32.mrf.mxu0
    %v3430 = vadd.f32 %v3341, %v3429
    %3431 = vmatmul.bf16.gmra.mxu0 %v2898
    %v3432 = vpop.f32.mrf.mxu0
    %v3433 = vadd.f32 %v3344, %v3432
    %v3434 = vpop.f32.mrf.mxu0
    %v3435 = vadd.f32 %v3346, %v3434
    %3436 = vmatmul.bf16.gmra.mxu0 %v2900
    %v3437 = vpop.f32.mrf.mxu0
    %v3438 = vadd.f32 %v3349, %v3437
    %v3439 = vpop.f32.mrf.mxu0
    %v3440 = vadd.f32 %v3351, %v3439
    %3441 = vmatmul.bf16.gmra.mxu0 %v2902
    %v3442 = vpop.f32.mrf.mxu0
    %v3443 = vadd.f32 %v3354, %v3442
    %v3444 = vpop.f32.mrf.mxu0
    %v3445 = vadd.f32 %v3356, %v3444
    %3446 = vmatmul.bf16.gmra.mxu0 %v2904
    %v3447 = vpop.f32.mrf.mxu0
    %v3448 = vadd.f32 %v3359, %v3447
    %v3449 = vpop.f32.mrf.mxu0
    %v3450 = vadd.f32 %v3361, %v3449
    %3451 = vmatmul.bf16.gmra.mxu0 %v2906
    %v3452 = vpop.f32.mrf.mxu0
    %v3453 = vadd.f32 %v3364, %v3452
    %v3454 = vpop.f32.mrf.mxu0
    %v3455 = vadd.f32 %v3366, %v3454
    %3456 = vmatmul.bf16.gmra.mxu0 %v2908
    %v3457 = vpop.f32.mrf.mxu0
    %v3458 = vadd.f32 %v3369, %v3457
    %v3459 = vpop.f32.mrf.mxu0
    %v3460 = vadd.f32 %v3371, %v3459
    %3461 = vmatmul.bf16.gmra.mxu0 %v2910
    %v3462 = vpop.f32.mrf.mxu0
    %v3463 = vadd.f32 %v3374, %v3462
    %v3464 = vpop.f32.mrf.mxu0
    %v3465 = vadd.f32 %v3376, %v3464
    %3466 = vdwg.mxu0
    %vm3467 = vcmp.gt.f32.partialorder %v3210, 0.0
    %vm3468 = vcmp.gt.f32.partialorder %v3388, 0.0
    %vm3469 = vcmp.gt.f32.partialorder %v3212, 0.0
    %vm3470 = vcmp.gt.f32.partialorder %v3390, 0.0
    %vm3471 = vcmp.gt.f32.partialorder %v3215, 0.0
    %vm3472 = vcmp.gt.f32.partialorder %v3393, 0.0
    %vm3473 = vcmp.gt.f32.partialorder %v3217, 0.0
    %vm3474 = vcmp.gt.f32.partialorder %v3395, 0.0
    %vm3475 = vcmp.gt.f32.partialorder %v3220, 0.0
    %vm3476 = vcmp.gt.f32.partialorder %v3398, 0.0
    %vm3477 = vcmp.gt.f32.partialorder %v3222, 0.0
    %vm3478 = vcmp.gt.f32.partialorder %v3400, 0.0
    %vm3479 = vcmp.gt.f32.partialorder %v3225, 0.0
    %vm3480 = vcmp.gt.f32.partialorder %v3403, 0.0
    %vm3481 = vcmp.gt.f32.partialorder %v3227, 0.0
    %vm3482 = vcmp.gt.f32.partialorder %v3405, 0.0
    %vm3483 = vcmp.gt.f32.partialorder %v3230, 0.0
    %vm3484 = vcmp.gt.f32.partialorder %v3408, 0.0
    %vm3485 = vcmp.gt.f32.partialorder %v3232, 0.0
    %vm3486 = vcmp.gt.f32.partialorder %v3410, 0.0
    %vm3487 = vcmp.gt.f32.partialorder %v3235, 0.0
    %vm3488 = vcmp.gt.f32.partialorder %v3413, 0.0
    %vm3489 = vcmp.gt.f32.partialorder %v3237, 0.0
    %vm3490 = vcmp.gt.f32.partialorder %v3415, 0.0
    %vm3491 = vcmp.gt.f32.partialorder %v3240, 0.0
    %vm3492 = vcmp.gt.f32.partialorder %v3418, 0.0
    %vm3493 = vcmp.gt.f32.partialorder %v3242, 0.0
    %vm3494 = vcmp.gt.f32.partialorder %v3420, 0.0
    %vm3495 = vcmp.gt.f32.partialorder %v3245, 0.0
    %vm3496 = vcmp.gt.f32.partialorder %v3423, 0.0
    %vm3497 = vcmp.gt.f32.partialorder %v3247, 0.0
    %vm3498 = vcmp.gt.f32.partialorder %v3425, 0.0
    %vm3499 = vcmp.gt.f32.partialorder %v3250, 0.0
    %vm3500 = vcmp.gt.f32.partialorder %v3428, 0.0
    %vm3501 = vcmp.gt.f32.partialorder %v3252, 0.0
    %vm3502 = vcmp.gt.f32.partialorder %v3430, 0.0
    %vm3503 = vcmp.gt.f32.partialorder %v3255, 0.0
    %vm3504 = vcmp.gt.f32.partialorder %v3433, 0.0
    %vm3505 = vcmp.gt.f32.partialorder %v3257, 0.0
    %vm3506 = vcmp.gt.f32.partialorder %v3435, 0.0
    %vm3507 = vcmp.gt.f32.partialorder %v3260, 0.0
    %vm3508 = vcmp.gt.f32.partialorder %v3438, 0.0
    %vm3509 = vcmp.gt.f32.partialorder %v3262, 0.0
    %vm3510 = vcmp.gt.f32.partialorder %v3440, 0.0
    %vm3511 = vcmp.gt.f32.partialorder %v3265, 0.0
    %vm3512 = vcmp.gt.f32.partialorder %v3443, 0.0
    %vm3513 = vcmp.gt.f32.partialorder %v3267, 0.0
    %vm3514 = vcmp.gt.f32.partialorder %v3445, 0.0
    %vm3515 = vcmp.gt.f32.partialorder %v3270, 0.0
    %vm3516 = vcmp.gt.f32.partialorder %v3448, 0.0
    %vm3517 = vcmp.gt.f32.partialorder %v3272, 0.0
    %vm3518 = vcmp.gt.f32.partialorder %v3450, 0.0
    %vm3519 = vcmp.gt.f32.partialorder %v3275, 0.0
    %vm3520 = vcmp.gt.f32.partialorder %v3453, 0.0
    %vm3521 = vcmp.gt.f32.partialorder %v3277, 0.0
    %vm3522 = vcmp.gt.f32.partialorder %v3455, 0.0
    %vm3523 = vcmp.gt.f32.partialorder %v3280, 0.0
    %vm3524 = vcmp.gt.f32.partialorder %v3458, 0.0
    %vm3525 = vcmp.gt.f32.partialorder %v3282, 0.0
    %vm3526 = vcmp.gt.f32.partialorder %v3460, 0.0
    %vm3527 = vcmp.gt.f32.partialorder %v3285, 0.0
    %vm3528 = vcmp.gt.f32.partialorder %v3463, 0.0
    %vm3529 = vcmp.gt.f32.partialorder %v3287, 0.0
    %vm3530 = vcmp.gt.f32.partialorder %v3465, 0.0
    %v3531 = vmul.f32 %v3210, 0.01
    %v3532 = vmul.f32 %v3388, 0.01
    %v3533 = vmul.f32 %v3212, 0.01
    %v3534 = vmul.f32 %v3390, 0.01
    %v3535 = vmul.f32 %v3215, 0.01
    %v3536 = vmul.f32 %v3393, 0.01
    %v3537 = vmul.f32 %v3217, 0.01
    %v3538 = vmul.f32 %v3395, 0.01
    %v3539 = vmul.f32 %v3220, 0.01
    %v3540 = vmul.f32 %v3398, 0.01
    %v3541 = vmul.f32 %v3222, 0.01
    %v3542 = vmul.f32 %v3400, 0.01
    %v3543 = vmul.f32 %v3225, 0.01
    %v3544 = vmul.f32 %v3403, 0.01
    %v3545 = vmul.f32 %v3227, 0.01
    %v3546 = vmul.f32 %v3405, 0.01
    %v3547 = vmul.f32 %v3230, 0.01
    %v3548 = vmul.f32 %v3408, 0.01
    %v3549 = vmul.f32 %v3232, 0.01
    %v3550 = vmul.f32 %v3410, 0.01
    %v3551 = vmul.f32 %v3235, 0.01
    %v3552 = vmul.f32 %v3413, 0.01
    %v3553 = vmul.f32 %v3237, 0.01
    %v3554 = vmul.f32 %v3415, 0.01
    %v3555 = vmul.f32 %v3240, 0.01
    %v3556 = vmul.f32 %v3418, 0.01
    %v3557 = vmul.f32 %v3242, 0.01
    %v3558 = vmul.f32 %v3420, 0.01
    %v3559 = vmul.f32 %v3245, 0.01
    %v3560 = vmul.f32 %v3423, 0.01
    %v3561 = vmul.f32 %v3247, 0.01
    %v3562 = vmul.f32 %v3425, 0.01
    %v3563 = vmul.f32 %v3250, 0.01
    %v3564 = vmul.f32 %v3428, 0.01
    %v3565 = vmul.f32 %v3252, 0.01
    %v3566 = vmul.f32 %v3430, 0.01
    %v3567 = vmul.f32 %v3255, 0.01
    %v3568 = vmul.f32 %v3433, 0.01
    %v3569 = vmul.f32 %v3257, 0.01
    %v3570 = vmul.f32 %v3435, 0.01
    %v3571 = vmul.f32 %v3260, 0.01
    %v3572 = vmul.f32 %v3438, 0.01
    %v3573 = vmul.f32 %v3262, 0.01
    %v3574 = vmul.f32 %v3440, 0.01
    %v3575 = vmul.f32 %v3265, 0.01
    %v3576 = vmul.f32 %v3443, 0.01
    %v3577 = vmul.f32 %v3267, 0.01
    %v3578 = vmul.f32 %v3445, 0.01
    %v3579 = vmul.f32 %v3270, 0.01
    %v3580 = vmul.f32 %v3448, 0.01
    %v3581 = vmul.f32 %v3272, 0.01
    %v3582 = vmul.f32 %v3450, 0.01
    %v3583 = vmul.f32 %v3275, 0.01
    %v3584 = vmul.f32 %v3453, 0.01
    %v3585 = vmul.f32 %v3277, 0.01
    %v3586 = vmul.f32 %v3455, 0.01
    %v3587 = vmul.f32 %v3280, 0.01
    %v3588 = vmul.f32 %v3458, 0.01
    %v3589 = vmul.f32 %v3282, 0.01
    %v3590 = vmul.f32 %v3460, 0.01
    %v3591 = vmul.f32 %v3285, 0.01
    %v3592 = vmul.f32 %v3463, 0.01
    %v3593 = vmul.f32 %v3287, 0.01
    %v3594 = vmul.f32 %v3465, 0.01
    %v3595 = vsel %vm3467, %v3210, %v3531
    %v3596 = vsel %vm3468, %v3388, %v3532
    %v3597 = vsel %vm3469, %v3212, %v3533
    %v3598 = vsel %vm3470, %v3390, %v3534
    %v3599 = vsel %vm3471, %v3215, %v3535
    %v3600 = vsel %vm3472, %v3393, %v3536
    %v3601 = vsel %vm3473, %v3217, %v3537
    %v3602 = vsel %vm3474, %v3395, %v3538
    %v3603 = vsel %vm3475, %v3220, %v3539
    %v3604 = vsel %vm3476, %v3398, %v3540
    %v3605 = vsel %vm3477, %v3222, %v3541
    %v3606 = vsel %vm3478, %v3400, %v3542
    %v3607 = vsel %vm3479, %v3225, %v3543
    %v3608 = vsel %vm3480, %v3403, %v3544
    %v3609 = vsel %vm3481, %v3227, %v3545
    %v3610 = vsel %vm3482, %v3405, %v3546
    %v3611 = vsel %vm3483, %v3230, %v3547
    %v3612 = vsel %vm3484, %v3408, %v3548
    %v3613 = vsel %vm3485, %v3232, %v3549
    %v3614 = vsel %vm3486, %v3410, %v3550
    %v3615 = vsel %vm3487, %v3235, %v3551
    %v3616 = vsel %vm3488, %v3413, %v3552
    %v3617 = vsel %vm3489, %v3237, %v3553
    %v3618 = vsel %vm3490, %v3415, %v3554
    %v3619 = vsel %vm3491, %v3240, %v3555
    %v3620 = vsel %vm3492, %v3418, %v3556
    %v3621 = vsel %vm3493, %v3242, %v3557
    %v3622 = vsel %vm3494, %v3420, %v3558
    %v3623 = vsel %vm3495, %v3245, %v3559
    %v3624 = vsel %vm3496, %v3423, %v3560
    %v3625 = vsel %vm3497, %v3247, %v3561
    %v3626 = vsel %vm3498, %v3425, %v3562
    %v3627 = vsel %vm3499, %v3250, %v3563
    %v3628 = vsel %vm3500, %v3428, %v3564
    %v3629 = vsel %vm3501, %v3252, %v3565
    %v3630 = vsel %vm3502, %v3430, %v3566
    %v3631 = vsel %vm3503, %v3255, %v3567
    %v3632 = vsel %vm3504, %v3433, %v3568
    %v3633 = vsel %vm3505, %v3257, %v3569
    %v3634 = vsel %vm3506, %v3435, %v3570
    %v3635 = vsel %vm3507, %v3260, %v3571
    %v3636 = vsel %vm3508, %v3438, %v3572
    %v3637 = vsel %vm3509, %v3262, %v3573
    %v3638 = vsel %vm3510, %v3440, %v3574
    %v3639 = vsel %vm3511, %v3265, %v3575
    %v3640 = vsel %vm3512, %v3443, %v3576
    %v3641 = vsel %vm3513, %v3267, %v3577
    %v3642 = vsel %vm3514, %v3445, %v3578
    %v3643 = vsel %vm3515, %v3270, %v3579
    %v3644 = vsel %vm3516, %v3448, %v3580
    %v3645 = vsel %vm3517, %v3272, %v3581
    %v3646 = vsel %vm3518, %v3450, %v3582
    %v3647 = vsel %vm3519, %v3275, %v3583
    %v3648 = vsel %vm3520, %v3453, %v3584
    %v3649 = vsel %vm3521, %v3277, %v3585
    %v3650 = vsel %vm3522, %v3455, %v3586
    %v3651 = vsel %vm3523, %v3280, %v3587
    %v3652 = vsel %vm3524, %v3458, %v3588
    %v3653 = vsel %vm3525, %v3282, %v3589
    %v3654 = vsel %vm3526, %v3460, %v3590
    %v3655 = vsel %vm3527, %v3285, %v3591
    %v3656 = vsel %vm3528, %v3463, %v3592
    %v3657 = vsel %vm3529, %v3287, %v3593
    %v3658 = vsel %vm3530, %v3465, %v3594
    %v3659 = vpack.c.bf16 %v3597, %v3595
    %v3660 = vpack.c.bf16 %v3598, %v3596
    %v3661 = vpack.c.bf16 %v3601, %v3599
    %v3662 = vpack.c.bf16 %v3602, %v3600
    %v3663 = vpack.c.bf16 %v3605, %v3603
    %v3664 = vpack.c.bf16 %v3606, %v3604
    %v3665 = vpack.c.bf16 %v3609, %v3607
    %v3666 = vpack.c.bf16 %v3610, %v3608
    %v3667 = vpack.c.bf16 %v3613, %v3611
    %v3668 = vpack.c.bf16 %v3614, %v3612
    %v3669 = vpack.c.bf16 %v3617, %v3615
    %v3670 = vpack.c.bf16 %v3618, %v3616
    %v3671 = vpack.c.bf16 %v3621, %v3619
    %v3672 = vpack.c.bf16 %v3622, %v3620
    %v3673 = vpack.c.bf16 %v3625, %v3623
    %v3674 = vpack.c.bf16 %v3626, %v3624
    %v3675 = vpack.c.bf16 %v3629, %v3627
    %v3676 = vpack.c.bf16 %v3630, %v3628
    %v3677 = vpack.c.bf16 %v3633, %v3631
    %v3678 = vpack.c.bf16 %v3634, %v3632
    %v3679 = vpack.c.bf16 %v3637, %v3635
    %v3680 = vpack.c.bf16 %v3638, %v3636
    %v3681 = vpack.c.bf16 %v3641, %v3639
    %v3682 = vpack.c.bf16 %v3642, %v3640
    %v3683 = vpack.c.bf16 %v3645, %v3643
    %v3684 = vpack.c.bf16 %v3646, %v3644
    %v3685 = vpack.c.bf16 %v3649, %v3647
    %v3686 = vpack.c.bf16 %v3650, %v3648
    %v3687 = vpack.c.bf16 %v3653, %v3651
    %v3688 = vpack.c.bf16 %v3654, %v3652
    %v3689 = vpack.c.bf16 %v3657, %v3655
    %v3690 = vpack.c.bf16 %v3658, %v3656
    %s3691 = scalar_lea.vmem [#allocation2], 1024
    %v3692 = vld [vmem:[%s3691] sm:$0xff]
    %v3693 = vld [vmem:[%s3691 + $0x8] sm:$0xff]
    %v3694 = vld [vmem:[%s3691 + $0x10] sm:$0xff]
    %v3695 = vld [vmem:[%s3691 + $0x18] sm:$0xff]
    %v3696 = vld [vmem:[%s3691 + $0x20] sm:$0xff]
    %v3697 = vld [vmem:[%s3691 + $0x28] sm:$0xff]
    %v3698 = vld [vmem:[%s3691 + $0x30] sm:$0xff]
    %v3699 = vld [vmem:[%s3691 + $0x38] sm:$0xff]
    %v3700 = vld [vmem:[%s3691 + $0x40] sm:$0xff]
    %v3701 = vld [vmem:[%s3691 + $0x48] sm:$0xff]
    %v3702 = vld [vmem:[%s3691 + $0x50] sm:$0xff]
    %v3703 = vld [vmem:[%s3691 + $0x58] sm:$0xff]
    %v3704 = vld [vmem:[%s3691 + $0x60] sm:$0xff]
    %v3705 = vld [vmem:[%s3691 + $0x68] sm:$0xff]
    %v3706 = vld [vmem:[%s3691 + $0x70] sm:$0xff]
    %v3707 = vld [vmem:[%s3691 + $0x78] sm:$0xff]
    %v3708 = vld [vmem:[%s3691 + $0x80] sm:$0xff]
    %v3709 = vld [vmem:[%s3691 + $0x88] sm:$0xff]
    %v3710 = vld [vmem:[%s3691 + $0x90] sm:$0xff]
    %v3711 = vld [vmem:[%s3691 + $0x98] sm:$0xff]
    %v3712 = vld [vmem:[%s3691 + $0xa0] sm:$0xff]
    %v3713 = vld [vmem:[%s3691 + $0xa8] sm:$0xff]
    %v3714 = vld [vmem:[%s3691 + $0xb0] sm:$0xff]
    %v3715 = vld [vmem:[%s3691 + $0xb8] sm:$0xff]
    %v3716 = vld [vmem:[%s3691 + $0xc0] sm:$0xff]
    %v3717 = vld [vmem:[%s3691 + $0xc8] sm:$0xff]
    %v3718 = vld [vmem:[%s3691 + $0xd0] sm:$0xff]
    %v3719 = vld [vmem:[%s3691 + $0xd8] sm:$0xff]
    %v3720 = vld [vmem:[%s3691 + $0xe0] sm:$0xff]
    %v3721 = vld [vmem:[%s3691 + $0xe8] sm:$0xff]
    %v3722 = vld [vmem:[%s3691 + $0xf0] sm:$0xff]
    %v3723 = vld [vmem:[%s3691 + $0xf8] sm:$0xff]
    %s3724 = scalar_lea.vmem %s4, 5
    %v3725 = vld [vmem:[%s3724] ss:$8 sm:$0x3]
    %v3727 = vperm.slane %v3725, 0
    %v3728 = vperm.slane %v3725, 1
    %v3763 = vunpack.c.l.b16 %v3692
    %v3764 = vunpack.c.h.b16 %v3692
    %v3765 = vunpack.c.l.b16 %v3693
    %v3766 = vunpack.c.h.b16 %v3693
    %v3767 = vunpack.c.l.b16 %v3694
    %v3768 = vunpack.c.h.b16 %v3694
    %v3769 = vunpack.c.l.b16 %v3695
    %v3770 = vunpack.c.h.b16 %v3695
    %v3771 = vunpack.c.l.b16 %v3696
    %v3772 = vunpack.c.h.b16 %v3696
    %v3773 = vunpack.c.l.b16 %v3697
    %v3774 = vunpack.c.h.b16 %v3697
    %v3775 = vunpack.c.l.b16 %v3698
    %v3776 = vunpack.c.h.b16 %v3698
    %v3777 = vunpack.c.l.b16 %v3699
    %v3778 = vunpack.c.h.b16 %v3699
    %v3779 = vunpack.c.l.b16 %v3700
    %v3780 = vunpack.c.h.b16 %v3700
    %v3781 = vunpack.c.l.b16 %v3701
    %v3782 = vunpack.c.h.b16 %v3701
    %v3783 = vunpack.c.l.b16 %v3702
    %v3784 = vunpack.c.h.b16 %v3702
    %v3785 = vunpack.c.l.b16 %v3703
    %v3786 = vunpack.c.h.b16 %v3703
    %v3787 = vunpack.c.l.b16 %v3704
    %v3788 = vunpack.c.h.b16 %v3704
    %v3789 = vunpack.c.l.b16 %v3705
    %v3790 = vunpack.c.h.b16 %v3705
    %v3791 = vunpack.c.l.b16 %v3706
    %v3792 = vunpack.c.h.b16 %v3706
    %v3793 = vunpack.c.l.b16 %v3707
    %v3794 = vunpack.c.h.b16 %v3707
    %v3795 = vunpack.c.l.b16 %v3708
    %v3796 = vunpack.c.h.b16 %v3708
    %v3797 = vunpack.c.l.b16 %v3709
    %v3798 = vunpack.c.h.b16 %v3709
    %v3799 = vunpack.c.l.b16 %v3710
    %v3800 = vunpack.c.h.b16 %v3710
    %v3801 = vunpack.c.l.b16 %v3711
    %v3802 = vunpack.c.h.b16 %v3711
    %v3803 = vunpack.c.l.b16 %v3712
    %v3804 = vunpack.c.h.b16 %v3712
    %v3805 = vunpack.c.l.b16 %v3713
    %v3806 = vunpack.c.h.b16 %v3713
    %v3807 = vunpack.c.l.b16 %v3714
    %v3808 = vunpack.c.h.b16 %v3714
    %v3809 = vunpack.c.l.b16 %v3715
    %v3810 = vunpack.c.h.b16 %v3715
    %v3811 = vunpack.c.l.b16 %v3716
    %v3812 = vunpack.c.h.b16 %v3716
    %v3813 = vunpack.c.l.b16 %v3717
    %v3814 = vunpack.c.h.b16 %v3717
    %v3815 = vunpack.c.l.b16 %v3718
    %v3816 = vunpack.c.h.b16 %v3718
    %v3817 = vunpack.c.l.b16 %v3719
    %v3818 = vunpack.c.h.b16 %v3719
    %v3819 = vunpack.c.l.b16 %v3720
    %v3820 = vunpack.c.h.b16 %v3720
    %v3821 = vunpack.c.l.b16 %v3721
    %v3822 = vunpack.c.h.b16 %v3721
    %v3823 = vunpack.c.l.b16 %v3722
    %v3824 = vunpack.c.h.b16 %v3722
    %v3825 = vunpack.c.l.b16 %v3723
    %v3826 = vunpack.c.h.b16 %v3723
    %v3827 = vpack.c.b16 %v3765, %v3763
    %v3828 = vpack.c.b16 %v3766, %v3764
    %v3829 = vpack.c.b16 %v3769, %v3767
    %v3830 = vpack.c.b16 %v3770, %v3768
    %v3831 = vpack.c.b16 %v3773, %v3771
    %v3832 = vpack.c.b16 %v3774, %v3772
    %v3833 = vpack.c.b16 %v3777, %v3775
    %v3834 = vpack.c.b16 %v3778, %v3776
    %v3835 = vpack.c.b16 %v3781, %v3779
    %v3836 = vpack.c.b16 %v3782, %v3780
    %v3837 = vpack.c.b16 %v3785, %v3783
    %v3838 = vpack.c.b16 %v3786, %v3784
    %v3839 = vpack.c.b16 %v3789, %v3787
    %v3840 = vpack.c.b16 %v3790, %v3788
    %v3841 = vpack.c.b16 %v3793, %v3791
    %v3842 = vpack.c.b16 %v3794, %v3792
    %v3843 = vpack.c.b16 %v3797, %v3795
    %v3844 = vpack.c.b16 %v3798, %v3796
    %v3845 = vpack.c.b16 %v3801, %v3799
    %v3846 = vpack.c.b16 %v3802, %v3800
    %v3847 = vpack.c.b16 %v3805, %v3803
    %v3848 = vpack.c.b16 %v3806, %v3804
    %v3849 = vpack.c.b16 %v3809, %v3807
    %v3850 = vpack.c.b16 %v3810, %v3808
    %v3851 = vpack.c.b16 %v3813, %v3811
    %v3852 = vpack.c.b16 %v3814, %v3812
    %v3853 = vpack.c.b16 %v3817, %v3815
    %v3854 = vpack.c.b16 %v3818, %v3816
    %v3855 = vpack.c.b16 %v3821, %v3819
    %v3856 = vpack.c.b16 %v3822, %v3820
    %v3857 = vpack.c.b16 %v3825, %v3823
    %v3858 = vpack.c.b16 %v3826, %v3824
    %3891 = vmatpush.bf16.msra.mxu0 %v3841
    %3892 = vmatpush.bf16.msra.mxu0 %v3839
    %3893 = vmatpush.bf16.msra.mxu0 %v3837
    %3894 = vmatpush.bf16.msra.mxu0 %v3835
    %3895 = vmatpush.bf16.msra.mxu0 %v3833
    %3896 = vmatpush.bf16.msra.mxu0 %v3831
    %3897 = vmatpush.bf16.msra.mxu0 %v3829
    %3898 = vmatpush.bf16.msra.mxu0 %v3827
    %3899 = vmatmul.bf16.gmra.mxu0 %v3659
    %v3900 = vpop.f32.mrf.mxu0
    %v3901 = vadd.f32 %v3727, %v3900
    %v3902 = vpop.f32.mrf.mxu0
    %v3903 = vadd.f32 %v3727, %v3902
    %3904 = vmatmul.bf16.gmra.mxu0 %v3661
    %v3905 = vpop.f32.mrf.mxu0
    %v3906 = vadd.f32 %v3727, %v3905
    %v3907 = vpop.f32.mrf.mxu0
    %v3908 = vadd.f32 %v3727, %v3907
    %3909 = vmatmul.bf16.gmra.mxu0 %v3663
    %v3910 = vpop.f32.mrf.mxu0
    %v3911 = vadd.f32 %v3727, %v3910
    %v3912 = vpop.f32.mrf.mxu0
    %v3913 = vadd.f32 %v3727, %v3912
    %3914 = vmatmul.bf16.gmra.mxu0 %v3665
    %v3915 = vpop.f32.mrf.mxu0
    %v3916 = vadd.f32 %v3727, %v3915
    %v3917 = vpop.f32.mrf.mxu0
    %v3918 = vadd.f32 %v3727, %v3917
    %3919 = vmatmul.bf16.gmra.mxu0 %v3667
    %v3920 = vpop.f32.mrf.mxu0
    %v3921 = vadd.f32 %v3727, %v3920
    %v3922 = vpop.f32.mrf.mxu0
    %v3923 = vadd.f32 %v3727, %v3922
    %3924 = vmatmul.bf16.gmra.mxu0 %v3669
    %v3925 = vpop.f32.mrf.mxu0
    %v3926 = vadd.f32 %v3727, %v3925
    %v3927 = vpop.f32.mrf.mxu0
    %v3928 = vadd.f32 %v3727, %v3927
    %3929 = vmatmul.bf16.gmra.mxu0 %v3671
    %v3930 = vpop.f32.mrf.mxu0
    %v3931 = vadd.f32 %v3727, %v3930
    %v3932 = vpop.f32.mrf.mxu0
    %v3933 = vadd.f32 %v3727, %v3932
    %3934 = vmatmul.bf16.gmra.mxu0 %v3673
    %v3935 = vpop.f32.mrf.mxu0
    %v3936 = vadd.f32 %v3727, %v3935
    %v3937 = vpop.f32.mrf.mxu0
    %v3938 = vadd.f32 %v3727, %v3937
    %3939 = vmatmul.bf16.gmra.mxu0 %v3675
    %v3940 = vpop.f32.mrf.mxu0
    %v3941 = vadd.f32 %v3727, %v3940
    %v3942 = vpop.f32.mrf.mxu0
    %v3943 = vadd.f32 %v3727, %v3942
    %3944 = vmatmul.bf16.gmra.mxu0 %v3677
    %v3945 = vpop.f32.mrf.mxu0
    %v3946 = vadd.f32 %v3727, %v3945
    %v3947 = vpop.f32.mrf.mxu0
    %v3948 = vadd.f32 %v3727, %v3947
    %3949 = vmatmul.bf16.gmra.mxu0 %v3679
    %v3950 = vpop.f32.mrf.mxu0
    %v3951 = vadd.f32 %v3727, %v3950
    %v3952 = vpop.f32.mrf.mxu0
    %v3953 = vadd.f32 %v3727, %v3952
    %3954 = vmatmul.bf16.gmra.mxu0 %v3681
    %v3955 = vpop.f32.mrf.mxu0
    %v3956 = vadd.f32 %v3727, %v3955
    %v3957 = vpop.f32.mrf.mxu0
    %v3958 = vadd.f32 %v3727, %v3957
    %3959 = vmatmul.bf16.gmra.mxu0 %v3683
    %v3960 = vpop.f32.mrf.mxu0
    %v3961 = vadd.f32 %v3727, %v3960
    %v3962 = vpop.f32.mrf.mxu0
    %v3963 = vadd.f32 %v3727, %v3962
    %3964 = vmatmul.bf16.gmra.mxu0 %v3685
    %v3965 = vpop.f32.mrf.mxu0
    %v3966 = vadd.f32 %v3727, %v3965
    %v3967 = vpop.f32.mrf.mxu0
    %v3968 = vadd.f32 %v3727, %v3967
    %3969 = vmatmul.bf16.gmra.mxu0 %v3687
    %v3970 = vpop.f32.mrf.mxu0
    %v3971 = vadd.f32 %v3727, %v3970
    %v3972 = vpop.f32.mrf.mxu0
    %v3973 = vadd.f32 %v3727, %v3972
    %3974 = vmatmul.bf16.gmra.mxu0 %v3689
    %v3975 = vpop.f32.mrf.mxu0
    %v3976 = vadd.f32 %v3727, %v3975
    %v3977 = vpop.f32.mrf.mxu0
    %v3978 = vadd.f32 %v3727, %v3977
    %3979 = vdwg.mxu0
    %3980 = vmatpush.bf16.msra.mxu0 %v3857
    %3981 = vmatpush.bf16.msra.mxu0 %v3855
    %3982 = vmatpush.bf16.msra.mxu0 %v3853
    %3983 = vmatpush.bf16.msra.mxu0 %v3851
    %3984 = vmatpush.bf16.msra.mxu0 %v3849
    %3985 = vmatpush.bf16.msra.mxu0 %v3847
    %3986 = vmatpush.bf16.msra.mxu0 %v3845
    %3987 = vmatpush.bf16.msra.mxu0 %v3843
    %3988 = vmatmul.bf16.gmra.mxu0 %v3660
    %v3989 = vpop.f32.mrf.mxu0
    %v3990 = vadd.f32 %v3901, %v3989
    %v3991 = vpop.f32.mrf.mxu0
    %v3992 = vadd.f32 %v3903, %v3991
    %3993 = vmatmul.bf16.gmra.mxu0 %v3662
    %v3994 = vpop.f32.mrf.mxu0
    %v3995 = vadd.f32 %v3906, %v3994
    %v3996 = vpop.f32.mrf.mxu0
    %v3997 = vadd.f32 %v3908, %v3996
    %3998 = vmatmul.bf16.gmra.mxu0 %v3664
    %v3999 = vpop.f32.mrf.mxu0
    %v4000 = vadd.f32 %v3911, %v3999
    %v4001 = vpop.f32.mrf.mxu0
    %v4002 = vadd.f32 %v3913, %v4001
    %4003 = vmatmul.bf16.gmra.mxu0 %v3666
    %v4004 = vpop.f32.mrf.mxu0
    %v4005 = vadd.f32 %v3916, %v4004
    %v4006 = vpop.f32.mrf.mxu0
    %v4007 = vadd.f32 %v3918, %v4006
    %4008 = vmatmul.bf16.gmra.mxu0 %v3668
    %v4009 = vpop.f32.mrf.mxu0
    %v4010 = vadd.f32 %v3921, %v4009
    %v4011 = vpop.f32.mrf.mxu0
    %v4012 = vadd.f32 %v3923, %v4011
    %4013 = vmatmul.bf16.gmra.mxu0 %v3670
    %v4014 = vpop.f32.mrf.mxu0
    %v4015 = vadd.f32 %v3926, %v4014
    %v4016 = vpop.f32.mrf.mxu0
    %v4017 = vadd.f32 %v3928, %v4016
    %4018 = vmatmul.bf16.gmra.mxu0 %v3672
    %v4019 = vpop.f32.mrf.mxu0
    %v4020 = vadd.f32 %v3931, %v4019
    %v4021 = vpop.f32.mrf.mxu0
    %v4022 = vadd.f32 %v3933, %v4021
    %4023 = vmatmul.bf16.gmra.mxu0 %v3674
    %v4024 = vpop.f32.mrf.mxu0
    %v4025 = vadd.f32 %v3936, %v4024
    %v4026 = vpop.f32.mrf.mxu0
    %v4027 = vadd.f32 %v3938, %v4026
    %4028 = vmatmul.bf16.gmra.mxu0 %v3676
    %v4029 = vpop.f32.mrf.mxu0
    %v4030 = vadd.f32 %v3941, %v4029
    %v4031 = vpop.f32.mrf.mxu0
    %v4032 = vadd.f32 %v3943, %v4031
    %4033 = vmatmul.bf16.gmra.mxu0 %v3678
    %v4034 = vpop.f32.mrf.mxu0
    %v4035 = vadd.f32 %v3946, %v4034
    %v4036 = vpop.f32.mrf.mxu0
    %v4037 = vadd.f32 %v3948, %v4036
    %4038 = vmatmul.bf16.gmra.mxu0 %v3680
    %v4039 = vpop.f32.mrf.mxu0
    %v4040 = vadd.f32 %v3951, %v4039
    %v4041 = vpop.f32.mrf.mxu0
    %v4042 = vadd.f32 %v3953, %v4041
    %4043 = vmatmul.bf16.gmra.mxu0 %v3682
    %v4044 = vpop.f32.mrf.mxu0
    %v4045 = vadd.f32 %v3956, %v4044
    %v4046 = vpop.f32.mrf.mxu0
    %v4047 = vadd.f32 %v3958, %v4046
    %4048 = vmatmul.bf16.gmra.mxu0 %v3684
    %v4049 = vpop.f32.mrf.mxu0
    %v4050 = vadd.f32 %v3961, %v4049
    %v4051 = vpop.f32.mrf.mxu0
    %v4052 = vadd.f32 %v3963, %v4051
    %4053 = vmatmul.bf16.gmra.mxu0 %v3686
    %v4054 = vpop.f32.mrf.mxu0
    %v4055 = vadd.f32 %v3966, %v4054
    %v4056 = vpop.f32.mrf.mxu0
    %v4057 = vadd.f32 %v3968, %v4056
    %4058 = vmatmul.bf16.gmra.mxu0 %v3688
    %v4059 = vpop.f32.mrf.mxu0
    %v4060 = vadd.f32 %v3971, %v4059
    %v4061 = vpop.f32.mrf.mxu0
    %v4062 = vadd.f32 %v3973, %v4061
    %4063 = vmatmul.bf16.gmra.mxu0 %v3690
    %v4064 = vpop.f32.mrf.mxu0
    %v4065 = vadd.f32 %v3976, %v4064
    %v4066 = vpop.f32.mrf.mxu0
    %v4067 = vadd.f32 %v3978, %v4066
    %4068 = vdwg.mxu0
    %4069 = vmatpush.bf16.msra.mxu0 %v3842
    %4070 = vmatpush.bf16.msra.mxu0 %v3840
    %4071 = vmatpush.bf16.msra.mxu0 %v3838
    %4072 = vmatpush.bf16.msra.mxu0 %v3836
    %4073 = vmatpush.bf16.msra.mxu0 %v3834
    %4074 = vmatpush.bf16.msra.mxu0 %v3832
    %4075 = vmatpush.bf16.msra.mxu0 %v3830
    %4076 = vmatpush.bf16.msra.mxu0 %v3828
    %4077 = vmatmul.bf16.gmra.mxu0 %v3659
    %v4078 = vpop.f32.mrf.mxu0
    %v4079 = vadd.f32 %v3728, %v4078
    %v4080 = vpop.f32.mrf.mxu0
    %v4081 = vadd.f32 %v3728, %v4080
    %4082 = vmatmul.bf16.gmra.mxu0 %v3661
    %v4083 = vpop.f32.mrf.mxu0
    %v4084 = vadd.f32 %v3728, %v4083
    %v4085 = vpop.f32.mrf.mxu0
    %v4086 = vadd.f32 %v3728, %v4085
    %4087 = vmatmul.bf16.gmra.mxu0 %v3663
    %v4088 = vpop.f32.mrf.mxu0
    %v4089 = vadd.f32 %v3728, %v4088
    %v4090 = vpop.f32.mrf.mxu0
    %v4091 = vadd.f32 %v3728, %v4090
    %4092 = vmatmul.bf16.gmra.mxu0 %v3665
    %v4093 = vpop.f32.mrf.mxu0
    %v4094 = vadd.f32 %v3728, %v4093
    %v4095 = vpop.f32.mrf.mxu0
    %v4096 = vadd.f32 %v3728, %v4095
    %4097 = vmatmul.bf16.gmra.mxu0 %v3667
    %v4098 = vpop.f32.mrf.mxu0
    %v4099 = vadd.f32 %v3728, %v4098
    %v4100 = vpop.f32.mrf.mxu0
    %v4101 = vadd.f32 %v3728, %v4100
    %4102 = vmatmul.bf16.gmra.mxu0 %v3669
    %v4103 = vpop.f32.mrf.mxu0
    %v4104 = vadd.f32 %v3728, %v4103
    %v4105 = vpop.f32.mrf.mxu0
    %v4106 = vadd.f32 %v3728, %v4105
    %4107 = vmatmul.bf16.gmra.mxu0 %v3671
    %v4108 = vpop.f32.mrf.mxu0
    %v4109 = vadd.f32 %v3728, %v4108
    %v4110 = vpop.f32.mrf.mxu0
    %v4111 = vadd.f32 %v3728, %v4110
    %4112 = vmatmul.bf16.gmra.mxu0 %v3673
    %v4113 = vpop.f32.mrf.mxu0
    %v4114 = vadd.f32 %v3728, %v4113
    %v4115 = vpop.f32.mrf.mxu0
    %v4116 = vadd.f32 %v3728, %v4115
    %4117 = vmatmul.bf16.gmra.mxu0 %v3675
    %v4118 = vpop.f32.mrf.mxu0
    %v4119 = vadd.f32 %v3728, %v4118
    %v4120 = vpop.f32.mrf.mxu0
    %v4121 = vadd.f32 %v3728, %v4120
    %4122 = vmatmul.bf16.gmra.mxu0 %v3677
    %v4123 = vpop.f32.mrf.mxu0
    %v4124 = vadd.f32 %v3728, %v4123
    %v4125 = vpop.f32.mrf.mxu0
    %v4126 = vadd.f32 %v3728, %v4125
    %4127 = vmatmul.bf16.gmra.mxu0 %v3679
    %v4128 = vpop.f32.mrf.mxu0
    %v4129 = vadd.f32 %v3728, %v4128
    %v4130 = vpop.f32.mrf.mxu0
    %v4131 = vadd.f32 %v3728, %v4130
    %4132 = vmatmul.bf16.gmra.mxu0 %v3681
    %v4133 = vpop.f32.mrf.mxu0
    %v4134 = vadd.f32 %v3728, %v4133
    %v4135 = vpop.f32.mrf.mxu0
    %v4136 = vadd.f32 %v3728, %v4135
    %4137 = vmatmul.bf16.gmra.mxu0 %v3683
    %v4138 = vpop.f32.mrf.mxu0
    %v4139 = vadd.f32 %v3728, %v4138
    %v4140 = vpop.f32.mrf.mxu0
    %v4141 = vadd.f32 %v3728, %v4140
    %4142 = vmatmul.bf16.gmra.mxu0 %v3685
    %v4143 = vpop.f32.mrf.mxu0
    %v4144 = vadd.f32 %v3728, %v4143
    %v4145 = vpop.f32.mrf.mxu0
    %v4146 = vadd.f32 %v3728, %v4145
    %4147 = vmatmul.bf16.gmra.mxu0 %v3687
    %v4148 = vpop.f32.mrf.mxu0
    %v4149 = vadd.f32 %v3728, %v4148
    %v4150 = vpop.f32.mrf.mxu0
    %v4151 = vadd.f32 %v3728, %v4150
    %4152 = vmatmul.bf16.gmra.mxu0 %v3689
    %v4153 = vpop.f32.mrf.mxu0
    %v4154 = vadd.f32 %v3728, %v4153
    %v4155 = vpop.f32.mrf.mxu0
    %v4156 = vadd.f32 %v3728, %v4155
    %4157 = vdwg.mxu0
    %4158 = vmatpush.bf16.msra.mxu0 %v3858
    %4159 = vmatpush.bf16.msra.mxu0 %v3856
    %4160 = vmatpush.bf16.msra.mxu0 %v3854
    %4161 = vmatpush.bf16.msra.mxu0 %v3852
    %4162 = vmatpush.bf16.msra.mxu0 %v3850
    %4163 = vmatpush.bf16.msra.mxu0 %v3848
    %4164 = vmatpush.bf16.msra.mxu0 %v3846
    %4165 = vmatpush.bf16.msra.mxu0 %v3844
    %4166 = vmatmul.bf16.gmra.mxu0 %v3660
    %v4167 = vpop.f32.mrf.mxu0
    %v4168 = vadd.f32 %v4079, %v4167
    %v4169 = vpop.f32.mrf.mxu0
    %v4170 = vadd.f32 %v4081, %v4169
    %4171 = vmatmul.bf16.gmra.mxu0 %v3662
    %v4172 = vpop.f32.mrf.mxu0
    %v4173 = vadd.f32 %v4084, %v4172
    %v4174 = vpop.f32.mrf.mxu0
    %v4175 = vadd.f32 %v4086, %v4174
    %4176 = vmatmul.bf16.gmra.mxu0 %v3664
    %v4177 = vpop.f32.mrf.mxu0
    %v4178 = vadd.f32 %v4089, %v4177
    %v4179 = vpop.f32.mrf.mxu0
    %v4180 = vadd.f32 %v4091, %v4179
    %4181 = vmatmul.bf16.gmra.mxu0 %v3666
    %v4182 = vpop.f32.mrf.mxu0
    %v4183 = vadd.f32 %v4094, %v4182
    %v4184 = vpop.f32.mrf.mxu0
    %v4185 = vadd.f32 %v4096, %v4184
    %4186 = vmatmul.bf16.gmra.mxu0 %v3668
    %v4187 = vpop.f32.mrf.mxu0
    %v4188 = vadd.f32 %v4099, %v4187
    %v4189 = vpop.f32.mrf.mxu0
    %v4190 = vadd.f32 %v4101, %v4189
    %4191 = vmatmul.bf16.gmra.mxu0 %v3670
    %v4192 = vpop.f32.mrf.mxu0
    %v4193 = vadd.f32 %v4104, %v4192
    %v4194 = vpop.f32.mrf.mxu0
    %v4195 = vadd.f32 %v4106, %v4194
    %4196 = vmatmul.bf16.gmra.mxu0 %v3672
    %v4197 = vpop.f32.mrf.mxu0
    %v4198 = vadd.f32 %v4109, %v4197
    %v4199 = vpop.f32.mrf.mxu0
    %v4200 = vadd.f32 %v4111, %v4199
    %4201 = vmatmul.bf16.gmra.mxu0 %v3674
    %v4202 = vpop.f32.mrf.mxu0
    %v4203 = vadd.f32 %v4114, %v4202
    %v4204 = vpop.f32.mrf.mxu0
    %v4205 = vadd.f32 %v4116, %v4204
    %4206 = vmatmul.bf16.gmra.mxu0 %v3676
    %v4207 = vpop.f32.mrf.mxu0
    %v4208 = vadd.f32 %v4119, %v4207
    %v4209 = vpop.f32.mrf.mxu0
    %v4210 = vadd.f32 %v4121, %v4209
    %4211 = vmatmul.bf16.gmra.mxu0 %v3678
    %v4212 = vpop.f32.mrf.mxu0
    %v4213 = vadd.f32 %v4124, %v4212
    %v4214 = vpop.f32.mrf.mxu0
    %v4215 = vadd.f32 %v4126, %v4214
    %4216 = vmatmul.bf16.gmra.mxu0 %v3680
    %v4217 = vpop.f32.mrf.mxu0
    %v4218 = vadd.f32 %v4129, %v4217
    %v4219 = vpop.f32.mrf.mxu0
    %v4220 = vadd.f32 %v4131, %v4219
    %4221 = vmatmul.bf16.gmra.mxu0 %v3682
    %v4222 = vpop.f32.mrf.mxu0
    %v4223 = vadd.f32 %v4134, %v4222
    %v4224 = vpop.f32.mrf.mxu0
    %v4225 = vadd.f32 %v4136, %v4224
    %4226 = vmatmul.bf16.gmra.mxu0 %v3684
    %v4227 = vpop.f32.mrf.mxu0
    %v4228 = vadd.f32 %v4139, %v4227
    %v4229 = vpop.f32.mrf.mxu0
    %v4230 = vadd.f32 %v4141, %v4229
    %4231 = vmatmul.bf16.gmra.mxu0 %v3686
    %v4232 = vpop.f32.mrf.mxu0
    %v4233 = vadd.f32 %v4144, %v4232
    %v4234 = vpop.f32.mrf.mxu0
    %v4235 = vadd.f32 %v4146, %v4234
    %4236 = vmatmul.bf16.gmra.mxu0 %v3688
    %v4237 = vpop.f32.mrf.mxu0
    %v4238 = vadd.f32 %v4149, %v4237
    %v4239 = vpop.f32.mrf.mxu0
    %v4240 = vadd.f32 %v4151, %v4239
    %4241 = vmatmul.bf16.gmra.mxu0 %v3690
    %v4242 = vpop.f32.mrf.mxu0
    %v4243 = vadd.f32 %v4154, %v4242
    %v4244 = vpop.f32.mrf.mxu0
    %v4245 = vadd.f32 %v4156, %v4244
    %4246 = vdwg.mxu0
    %vm4247 = vcmp.gt.f32.partialorder %v3990, 0.0
    %vm4248 = vcmp.gt.f32.partialorder %v4168, 0.0
    %vm4249 = vcmp.gt.f32.partialorder %v3992, 0.0
    %vm4250 = vcmp.gt.f32.partialorder %v4170, 0.0
    %vm4251 = vcmp.gt.f32.partialorder %v3995, 0.0
    %vm4252 = vcmp.gt.f32.partialorder %v4173, 0.0
    %vm4253 = vcmp.gt.f32.partialorder %v3997, 0.0
    %vm4254 = vcmp.gt.f32.partialorder %v4175, 0.0
    %vm4255 = vcmp.gt.f32.partialorder %v4000, 0.0
    %vm4256 = vcmp.gt.f32.partialorder %v4178, 0.0
    %vm4257 = vcmp.gt.f32.partialorder %v4002, 0.0
    %vm4258 = vcmp.gt.f32.partialorder %v4180, 0.0
    %vm4259 = vcmp.gt.f32.partialorder %v4005, 0.0
    %vm4260 = vcmp.gt.f32.partialorder %v4183, 0.0
    %vm4261 = vcmp.gt.f32.partialorder %v4007, 0.0
    %vm4262 = vcmp.gt.f32.partialorder %v4185, 0.0
    %vm4263 = vcmp.gt.f32.partialorder %v4010, 0.0
    %vm4264 = vcmp.gt.f32.partialorder %v4188, 0.0
    %vm4265 = vcmp.gt.f32.partialorder %v4012, 0.0
    %vm4266 = vcmp.gt.f32.partialorder %v4190, 0.0
    %vm4267 = vcmp.gt.f32.partialorder %v4015, 0.0
    %vm4268 = vcmp.gt.f32.partialorder %v4193, 0.0
    %vm4269 = vcmp.gt.f32.partialorder %v4017, 0.0
    %vm4270 = vcmp.gt.f32.partialorder %v4195, 0.0
    %vm4271 = vcmp.gt.f32.partialorder %v4020, 0.0
    %vm4272 = vcmp.gt.f32.partialorder %v4198, 0.0
    %vm4273 = vcmp.gt.f32.partialorder %v4022, 0.0
    %vm4274 = vcmp.gt.f32.partialorder %v4200, 0.0
    %vm4275 = vcmp.gt.f32.partialorder %v4025, 0.0
    %vm4276 = vcmp.gt.f32.partialorder %v4203, 0.0
    %vm4277 = vcmp.gt.f32.partialorder %v4027, 0.0
    %vm4278 = vcmp.gt.f32.partialorder %v4205, 0.0
    %vm4279 = vcmp.gt.f32.partialorder %v4030, 0.0
    %vm4280 = vcmp.gt.f32.partialorder %v4208, 0.0
    %vm4281 = vcmp.gt.f32.partialorder %v4032, 0.0
    %vm4282 = vcmp.gt.f32.partialorder %v4210, 0.0
    %vm4283 = vcmp.gt.f32.partialorder %v4035, 0.0
    %vm4284 = vcmp.gt.f32.partialorder %v4213, 0.0
    %vm4285 = vcmp.gt.f32.partialorder %v4037, 0.0
    %vm4286 = vcmp.gt.f32.partialorder %v4215, 0.0
    %vm4287 = vcmp.gt.f32.partialorder %v4040, 0.0
    %vm4288 = vcmp.gt.f32.partialorder %v4218, 0.0
    %vm4289 = vcmp.gt.f32.partialorder %v4042, 0.0
    %vm4290 = vcmp.gt.f32.partialorder %v4220, 0.0
    %vm4291 = vcmp.gt.f32.partialorder %v4045, 0.0
    %vm4292 = vcmp.gt.f32.partialorder %v4223, 0.0
    %vm4293 = vcmp.gt.f32.partialorder %v4047, 0.0
    %vm4294 = vcmp.gt.f32.partialorder %v4225, 0.0
    %vm4295 = vcmp.gt.f32.partialorder %v4050, 0.0
    %vm4296 = vcmp.gt.f32.partialorder %v4228, 0.0
    %vm4297 = vcmp.gt.f32.partialorder %v4052, 0.0
    %vm4298 = vcmp.gt.f32.partialorder %v4230, 0.0
    %vm4299 = vcmp.gt.f32.partialorder %v4055, 0.0
    %vm4300 = vcmp.gt.f32.partialorder %v4233, 0.0
    %vm4301 = vcmp.gt.f32.partialorder %v4057, 0.0
    %vm4302 = vcmp.gt.f32.partialorder %v4235, 0.0
    %vm4303 = vcmp.gt.f32.partialorder %v4060, 0.0
    %vm4304 = vcmp.gt.f32.partialorder %v4238, 0.0
    %vm4305 = vcmp.gt.f32.partialorder %v4062, 0.0
    %vm4306 = vcmp.gt.f32.partialorder %v4240, 0.0
    %vm4307 = vcmp.gt.f32.partialorder %v4065, 0.0
    %vm4308 = vcmp.gt.f32.partialorder %v4243, 0.0
    %vm4309 = vcmp.gt.f32.partialorder %v4067, 0.0
    %vm4310 = vcmp.gt.f32.partialorder %v4245, 0.0
    %v4311 = vmul.f32 %v3990, 0.01
    %v4312 = vmul.f32 %v4168, 0.01
    %v4313 = vmul.f32 %v3992, 0.01
    %v4314 = vmul.f32 %v4170, 0.01
    %v4315 = vmul.f32 %v3995, 0.01
    %v4316 = vmul.f32 %v4173, 0.01
    %v4317 = vmul.f32 %v3997, 0.01
    %v4318 = vmul.f32 %v4175, 0.01
    %v4319 = vmul.f32 %v4000, 0.01
    %v4320 = vmul.f32 %v4178, 0.01
    %v4321 = vmul.f32 %v4002, 0.01
    %v4322 = vmul.f32 %v4180, 0.01
    %v4323 = vmul.f32 %v4005, 0.01
    %v4324 = vmul.f32 %v4183, 0.01
    %v4325 = vmul.f32 %v4007, 0.01
    %v4326 = vmul.f32 %v4185, 0.01
    %v4327 = vmul.f32 %v4010, 0.01
    %v4328 = vmul.f32 %v4188, 0.01
    %v4329 = vmul.f32 %v4012, 0.01
    %v4330 = vmul.f32 %v4190, 0.01
    %v4331 = vmul.f32 %v4015, 0.01
    %v4332 = vmul.f32 %v4193, 0.01
    %v4333 = vmul.f32 %v4017, 0.01
    %v4334 = vmul.f32 %v4195, 0.01
    %v4335 = vmul.f32 %v4020, 0.01
    %v4336 = vmul.f32 %v4198, 0.01
    %v4337 = vmul.f32 %v4022, 0.01
    %v4338 = vmul.f32 %v4200, 0.01
    %v4339 = vmul.f32 %v4025, 0.01
    %v4340 = vmul.f32 %v4203, 0.01
    %v4341 = vmul.f32 %v4027, 0.01
    %v4342 = vmul.f32 %v4205, 0.01
    %v4343 = vmul.f32 %v4030, 0.01
    %v4344 = vmul.f32 %v4208, 0.01
    %v4345 = vmul.f32 %v4032, 0.01
    %v4346 = vmul.f32 %v4210, 0.01
    %v4347 = vmul.f32 %v4035, 0.01
    %v4348 = vmul.f32 %v4213, 0.01
    %v4349 = vmul.f32 %v4037, 0.01
    %v4350 = vmul.f32 %v4215, 0.01
    %v4351 = vmul.f32 %v4040, 0.01
    %v4352 = vmul.f32 %v4218, 0.01
    %v4353 = vmul.f32 %v4042, 0.01
    %v4354 = vmul.f32 %v4220, 0.01
    %v4355 = vmul.f32 %v4045, 0.01
    %v4356 = vmul.f32 %v4223, 0.01
    %v4357 = vmul.f32 %v4047, 0.01
    %v4358 = vmul.f32 %v4225, 0.01
    %v4359 = vmul.f32 %v4050, 0.01
    %v4360 = vmul.f32 %v4228, 0.01
    %v4361 = vmul.f32 %v4052, 0.01
    %v4362 = vmul.f32 %v4230, 0.01
    %v4363 = vmul.f32 %v4055, 0.01
    %v4364 = vmul.f32 %v4233, 0.01
    %v4365 = vmul.f32 %v4057, 0.01
    %v4366 = vmul.f32 %v4235, 0.01
    %v4367 = vmul.f32 %v4060, 0.01
    %v4368 = vmul.f32 %v4238, 0.01
    %v4369 = vmul.f32 %v4062, 0.01
    %v4370 = vmul.f32 %v4240, 0.01
    %v4371 = vmul.f32 %v4065, 0.01
    %v4372 = vmul.f32 %v4243, 0.01
    %v4373 = vmul.f32 %v4067, 0.01
    %v4374 = vmul.f32 %v4245, 0.01
    %v4375 = vsel %vm4247, %v3990, %v4311
    %v4376 = vsel %vm4248, %v4168, %v4312
    %v4377 = vsel %vm4249, %v3992, %v4313
    %v4378 = vsel %vm4250, %v4170, %v4314
    %v4379 = vsel %vm4251, %v3995, %v4315
    %v4380 = vsel %vm4252, %v4173, %v4316
    %v4381 = vsel %vm4253, %v3997, %v4317
    %v4382 = vsel %vm4254, %v4175, %v4318
    %v4383 = vsel %vm4255, %v4000, %v4319
    %v4384 = vsel %vm4256, %v4178, %v4320
    %v4385 = vsel %vm4257, %v4002, %v4321
    %v4386 = vsel %vm4258, %v4180, %v4322
    %v4387 = vsel %vm4259, %v4005, %v4323
    %v4388 = vsel %vm4260, %v4183, %v4324
    %v4389 = vsel %vm4261, %v4007, %v4325
    %v4390 = vsel %vm4262, %v4185, %v4326
    %v4391 = vsel %vm4263, %v4010, %v4327
    %v4392 = vsel %vm4264, %v4188, %v4328
    %v4393 = vsel %vm4265, %v4012, %v4329
    %v4394 = vsel %vm4266, %v4190, %v4330
    %v4395 = vsel %vm4267, %v4015, %v4331
    %v4396 = vsel %vm4268, %v4193, %v4332
    %v4397 = vsel %vm4269, %v4017, %v4333
    %v4398 = vsel %vm4270, %v4195, %v4334
    %v4399 = vsel %vm4271, %v4020, %v4335
    %v4400 = vsel %vm4272, %v4198, %v4336
    %v4401 = vsel %vm4273, %v4022, %v4337
    %v4402 = vsel %vm4274, %v4200, %v4338
    %v4403 = vsel %vm4275, %v4025, %v4339
    %v4404 = vsel %vm4276, %v4203, %v4340
    %v4405 = vsel %vm4277, %v4027, %v4341
    %v4406 = vsel %vm4278, %v4205, %v4342
    %v4407 = vsel %vm4279, %v4030, %v4343
    %v4408 = vsel %vm4280, %v4208, %v4344
    %v4409 = vsel %vm4281, %v4032, %v4345
    %v4410 = vsel %vm4282, %v4210, %v4346
    %v4411 = vsel %vm4283, %v4035, %v4347
    %v4412 = vsel %vm4284, %v4213, %v4348
    %v4413 = vsel %vm4285, %v4037, %v4349
    %v4414 = vsel %vm4286, %v4215, %v4350
    %v4415 = vsel %vm4287, %v4040, %v4351
    %v4416 = vsel %vm4288, %v4218, %v4352
    %v4417 = vsel %vm4289, %v4042, %v4353
    %v4418 = vsel %vm4290, %v4220, %v4354
    %v4419 = vsel %vm4291, %v4045, %v4355
    %v4420 = vsel %vm4292, %v4223, %v4356
    %v4421 = vsel %vm4293, %v4047, %v4357
    %v4422 = vsel %vm4294, %v4225, %v4358
    %v4423 = vsel %vm4295, %v4050, %v4359
    %v4424 = vsel %vm4296, %v4228, %v4360
    %v4425 = vsel %vm4297, %v4052, %v4361
    %v4426 = vsel %vm4298, %v4230, %v4362
    %v4427 = vsel %vm4299, %v4055, %v4363
    %v4428 = vsel %vm4300, %v4233, %v4364
    %v4429 = vsel %vm4301, %v4057, %v4365
    %v4430 = vsel %vm4302, %v4235, %v4366
    %v4431 = vsel %vm4303, %v4060, %v4367
    %v4432 = vsel %vm4304, %v4238, %v4368
    %v4433 = vsel %vm4305, %v4062, %v4369
    %v4434 = vsel %vm4306, %v4240, %v4370
    %v4435 = vsel %vm4307, %v4065, %v4371
    %v4436 = vsel %vm4308, %v4243, %v4372
    %v4437 = vsel %vm4309, %v4067, %v4373
    %v4438 = vsel %vm4310, %v4245, %v4374
    %v4439 = vpack.c.bf16 %v4377, %v4375
    %v4440 = vpack.c.bf16 %v4378, %v4376
    %v4441 = vpack.c.bf16 %v4381, %v4379
    %v4442 = vpack.c.bf16 %v4382, %v4380
    %v4443 = vpack.c.bf16 %v4385, %v4383
    %v4444 = vpack.c.bf16 %v4386, %v4384
    %v4445 = vpack.c.bf16 %v4389, %v4387
    %v4446 = vpack.c.bf16 %v4390, %v4388
    %v4447 = vpack.c.bf16 %v4393, %v4391
    %v4448 = vpack.c.bf16 %v4394, %v4392
    %v4449 = vpack.c.bf16 %v4397, %v4395
    %v4450 = vpack.c.bf16 %v4398, %v4396
    %v4451 = vpack.c.bf16 %v4401, %v4399
    %v4452 = vpack.c.bf16 %v4402, %v4400
    %v4453 = vpack.c.bf16 %v4405, %v4403
    %v4454 = vpack.c.bf16 %v4406, %v4404
    %v4455 = vpack.c.bf16 %v4409, %v4407
    %v4456 = vpack.c.bf16 %v4410, %v4408
    %v4457 = vpack.c.bf16 %v4413, %v4411
    %v4458 = vpack.c.bf16 %v4414, %v4412
    %v4459 = vpack.c.bf16 %v4417, %v4415
    %v4460 = vpack.c.bf16 %v4418, %v4416
    %v4461 = vpack.c.bf16 %v4421, %v4419
    %v4462 = vpack.c.bf16 %v4422, %v4420
    %v4463 = vpack.c.bf16 %v4425, %v4423
    %v4464 = vpack.c.bf16 %v4426, %v4424
    %v4465 = vpack.c.bf16 %v4429, %v4427
    %v4466 = vpack.c.bf16 %v4430, %v4428
    %v4467 = vpack.c.bf16 %v4433, %v4431
    %v4468 = vpack.c.bf16 %v4434, %v4432
    %v4469 = vpack.c.bf16 %v4437, %v4435
    %v4470 = vpack.c.bf16 %v4438, %v4436
    %s4471 = scalar_lea.vmem [#allocation2], 1280
    %v4472 = vld [vmem:[%s4471] sm:$0xff]
    %v4473 = vld [vmem:[%s4471 + $0x8] sm:$0xff]
    %v4474 = vld [vmem:[%s4471 + $0x10] sm:$0xff]
    %v4475 = vld [vmem:[%s4471 + $0x18] sm:$0xff]
    %v4476 = vld [vmem:[%s4471 + $0x20] sm:$0xff]
    %v4477 = vld [vmem:[%s4471 + $0x28] sm:$0xff]
    %v4478 = vld [vmem:[%s4471 + $0x30] sm:$0xff]
    %v4479 = vld [vmem:[%s4471 + $0x38] sm:$0xff]
    %v4480 = vld [vmem:[%s4471 + $0x40] sm:$0xff]
    %v4481 = vld [vmem:[%s4471 + $0x48] sm:$0xff]
    %v4482 = vld [vmem:[%s4471 + $0x50] sm:$0xff]
    %v4483 = vld [vmem:[%s4471 + $0x58] sm:$0xff]
    %v4484 = vld [vmem:[%s4471 + $0x60] sm:$0xff]
    %v4485 = vld [vmem:[%s4471 + $0x68] sm:$0xff]
    %v4486 = vld [vmem:[%s4471 + $0x70] sm:$0xff]
    %v4487 = vld [vmem:[%s4471 + $0x78] sm:$0xff]
    %v4488 = vld [vmem:[%s4471 + $0x80] sm:$0xff]
    %v4489 = vld [vmem:[%s4471 + $0x88] sm:$0xff]
    %v4490 = vld [vmem:[%s4471 + $0x90] sm:$0xff]
    %v4491 = vld [vmem:[%s4471 + $0x98] sm:$0xff]
    %v4492 = vld [vmem:[%s4471 + $0xa0] sm:$0xff]
    %v4493 = vld [vmem:[%s4471 + $0xa8] sm:$0xff]
    %v4494 = vld [vmem:[%s4471 + $0xb0] sm:$0xff]
    %v4495 = vld [vmem:[%s4471 + $0xb8] sm:$0xff]
    %v4496 = vld [vmem:[%s4471 + $0xc0] sm:$0xff]
    %v4497 = vld [vmem:[%s4471 + $0xc8] sm:$0xff]
    %v4498 = vld [vmem:[%s4471 + $0xd0] sm:$0xff]
    %v4499 = vld [vmem:[%s4471 + $0xd8] sm:$0xff]
    %v4500 = vld [vmem:[%s4471 + $0xe0] sm:$0xff]
    %v4501 = vld [vmem:[%s4471 + $0xe8] sm:$0xff]
    %v4502 = vld [vmem:[%s4471 + $0xf0] sm:$0xff]
    %v4503 = vld [vmem:[%s4471 + $0xf8] sm:$0xff]
    %s4504 = scalar_lea.vmem %s4, 6
    %v4505 = vld [vmem:[%s4504] ss:$8 sm:$0x3]
    %v4507 = vperm.slane %v4505, 0
    %v4508 = vperm.slane %v4505, 1
    %v4543 = vunpack.c.l.b16 %v4472
    %v4544 = vunpack.c.h.b16 %v4472
    %v4545 = vunpack.c.l.b16 %v4473
    %v4546 = vunpack.c.h.b16 %v4473
    %v4547 = vunpack.c.l.b16 %v4474
    %v4548 = vunpack.c.h.b16 %v4474
    %v4549 = vunpack.c.l.b16 %v4475
    %v4550 = vunpack.c.h.b16 %v4475
    %v4551 = vunpack.c.l.b16 %v4476
    %v4552 = vunpack.c.h.b16 %v4476
    %v4553 = vunpack.c.l.b16 %v4477
    %v4554 = vunpack.c.h.b16 %v4477
    %v4555 = vunpack.c.l.b16 %v4478
    %v4556 = vunpack.c.h.b16 %v4478
    %v4557 = vunpack.c.l.b16 %v4479
    %v4558 = vunpack.c.h.b16 %v4479
    %v4559 = vunpack.c.l.b16 %v4480
    %v4560 = vunpack.c.h.b16 %v4480
    %v4561 = vunpack.c.l.b16 %v4481
    %v4562 = vunpack.c.h.b16 %v4481
    %v4563 = vunpack.c.l.b16 %v4482
    %v4564 = vunpack.c.h.b16 %v4482
    %v4565 = vunpack.c.l.b16 %v4483
    %v4566 = vunpack.c.h.b16 %v4483
    %v4567 = vunpack.c.l.b16 %v4484
    %v4568 = vunpack.c.h.b16 %v4484
    %v4569 = vunpack.c.l.b16 %v4485
    %v4570 = vunpack.c.h.b16 %v4485
    %v4571 = vunpack.c.l.b16 %v4486
    %v4572 = vunpack.c.h.b16 %v4486
    %v4573 = vunpack.c.l.b16 %v4487
    %v4574 = vunpack.c.h.b16 %v4487
    %v4575 = vunpack.c.l.b16 %v4488
    %v4576 = vunpack.c.h.b16 %v4488
    %v4577 = vunpack.c.l.b16 %v4489
    %v4578 = vunpack.c.h.b16 %v4489
    %v4579 = vunpack.c.l.b16 %v4490
    %v4580 = vunpack.c.h.b16 %v4490
    %v4581 = vunpack.c.l.b16 %v4491
    %v4582 = vunpack.c.h.b16 %v4491
    %v4583 = vunpack.c.l.b16 %v4492
    %v4584 = vunpack.c.h.b16 %v4492
    %v4585 = vunpack.c.l.b16 %v4493
    %v4586 = vunpack.c.h.b16 %v4493
    %v4587 = vunpack.c.l.b16 %v4494
    %v4588 = vunpack.c.h.b16 %v4494
    %v4589 = vunpack.c.l.b16 %v4495
    %v4590 = vunpack.c.h.b16 %v4495
    %v4591 = vunpack.c.l.b16 %v4496
    %v4592 = vunpack.c.h.b16 %v4496
    %v4593 = vunpack.c.l.b16 %v4497
    %v4594 = vunpack.c.h.b16 %v4497
    %v4595 = vunpack.c.l.b16 %v4498
    %v4596 = vunpack.c.h.b16 %v4498
    %v4597 = vunpack.c.l.b16 %v4499
    %v4598 = vunpack.c.h.b16 %v4499
    %v4599 = vunpack.c.l.b16 %v4500
    %v4600 = vunpack.c.h.b16 %v4500
    %v4601 = vunpack.c.l.b16 %v4501
    %v4602 = vunpack.c.h.b16 %v4501
    %v4603 = vunpack.c.l.b16 %v4502
    %v4604 = vunpack.c.h.b16 %v4502
    %v4605 = vunpack.c.l.b16 %v4503
    %v4606 = vunpack.c.h.b16 %v4503
    %v4607 = vpack.c.b16 %v4545, %v4543
    %v4608 = vpack.c.b16 %v4546, %v4544
    %v4609 = vpack.c.b16 %v4549, %v4547
    %v4610 = vpack.c.b16 %v4550, %v4548
    %v4611 = vpack.c.b16 %v4553, %v4551
    %v4612 = vpack.c.b16 %v4554, %v4552
    %v4613 = vpack.c.b16 %v4557, %v4555
    %v4614 = vpack.c.b16 %v4558, %v4556
    %v4615 = vpack.c.b16 %v4561, %v4559
    %v4616 = vpack.c.b16 %v4562, %v4560
    %v4617 = vpack.c.b16 %v4565, %v4563
    %v4618 = vpack.c.b16 %v4566, %v4564
    %v4619 = vpack.c.b16 %v4569, %v4567
    %v4620 = vpack.c.b16 %v4570, %v4568
    %v4621 = vpack.c.b16 %v4573, %v4571
    %v4622 = vpack.c.b16 %v4574, %v4572
    %v4623 = vpack.c.b16 %v4577, %v4575
    %v4624 = vpack.c.b16 %v4578, %v4576
    %v4625 = vpack.c.b16 %v4581, %v4579
    %v4626 = vpack.c.b16 %v4582, %v4580
    %v4627 = vpack.c.b16 %v4585, %v4583
    %v4628 = vpack.c.b16 %v4586, %v4584
    %v4629 = vpack.c.b16 %v4589, %v4587
    %v4630 = vpack.c.b16 %v4590, %v4588
    %v4631 = vpack.c.b16 %v4593, %v4591
    %v4632 = vpack.c.b16 %v4594, %v4592
    %v4633 = vpack.c.b16 %v4597, %v4595
    %v4634 = vpack.c.b16 %v4598, %v4596
    %v4635 = vpack.c.b16 %v4601, %v4599
    %v4636 = vpack.c.b16 %v4602, %v4600
    %v4637 = vpack.c.b16 %v4605, %v4603
    %v4638 = vpack.c.b16 %v4606, %v4604
    %4671 = vmatpush.bf16.msra.mxu0 %v4621
    %4672 = vmatpush.bf16.msra.mxu0 %v4619
    %4673 = vmatpush.bf16.msra.mxu0 %v4617
    %4674 = vmatpush.bf16.msra.mxu0 %v4615
    %4675 = vmatpush.bf16.msra.mxu0 %v4613
    %4676 = vmatpush.bf16.msra.mxu0 %v4611
    %4677 = vmatpush.bf16.msra.mxu0 %v4609
    %4678 = vmatpush.bf16.msra.mxu0 %v4607
    %4679 = vmatmul.bf16.gmra.mxu0 %v4439
    %v4680 = vpop.f32.mrf.mxu0
    %v4681 = vadd.f32 %v4507, %v4680
    %v4682 = vpop.f32.mrf.mxu0
    %v4683 = vadd.f32 %v4507, %v4682
    %4684 = vmatmul.bf16.gmra.mxu0 %v4441
    %v4685 = vpop.f32.mrf.mxu0
    %v4686 = vadd.f32 %v4507, %v4685
    %v4687 = vpop.f32.mrf.mxu0
    %v4688 = vadd.f32 %v4507, %v4687
    %4689 = vmatmul.bf16.gmra.mxu0 %v4443
    %v4690 = vpop.f32.mrf.mxu0
    %v4691 = vadd.f32 %v4507, %v4690
    %v4692 = vpop.f32.mrf.mxu0
    %v4693 = vadd.f32 %v4507, %v4692
    %4694 = vmatmul.bf16.gmra.mxu0 %v4445
    %v4695 = vpop.f32.mrf.mxu0
    %v4696 = vadd.f32 %v4507, %v4695
    %v4697 = vpop.f32.mrf.mxu0
    %v4698 = vadd.f32 %v4507, %v4697
    %4699 = vmatmul.bf16.gmra.mxu0 %v4447
    %v4700 = vpop.f32.mrf.mxu0
    %v4701 = vadd.f32 %v4507, %v4700
    %v4702 = vpop.f32.mrf.mxu0
    %v4703 = vadd.f32 %v4507, %v4702
    %4704 = vmatmul.bf16.gmra.mxu0 %v4449
    %v4705 = vpop.f32.mrf.mxu0
    %v4706 = vadd.f32 %v4507, %v4705
    %v4707 = vpop.f32.mrf.mxu0
    %v4708 = vadd.f32 %v4507, %v4707
    %4709 = vmatmul.bf16.gmra.mxu0 %v4451
    %v4710 = vpop.f32.mrf.mxu0
    %v4711 = vadd.f32 %v4507, %v4710
    %v4712 = vpop.f32.mrf.mxu0
    %v4713 = vadd.f32 %v4507, %v4712
    %4714 = vmatmul.bf16.gmra.mxu0 %v4453
    %v4715 = vpop.f32.mrf.mxu0
    %v4716 = vadd.f32 %v4507, %v4715
    %v4717 = vpop.f32.mrf.mxu0
    %v4718 = vadd.f32 %v4507, %v4717
    %4719 = vmatmul.bf16.gmra.mxu0 %v4455
    %v4720 = vpop.f32.mrf.mxu0
    %v4721 = vadd.f32 %v4507, %v4720
    %v4722 = vpop.f32.mrf.mxu0
    %v4723 = vadd.f32 %v4507, %v4722
    %4724 = vmatmul.bf16.gmra.mxu0 %v4457
    %v4725 = vpop.f32.mrf.mxu0
    %v4726 = vadd.f32 %v4507, %v4725
    %v4727 = vpop.f32.mrf.mxu0
    %v4728 = vadd.f32 %v4507, %v4727
    %4729 = vmatmul.bf16.gmra.mxu0 %v4459
    %v4730 = vpop.f32.mrf.mxu0
    %v4731 = vadd.f32 %v4507, %v4730
    %v4732 = vpop.f32.mrf.mxu0
    %v4733 = vadd.f32 %v4507, %v4732
    %4734 = vmatmul.bf16.gmra.mxu0 %v4461
    %v4735 = vpop.f32.mrf.mxu0
    %v4736 = vadd.f32 %v4507, %v4735
    %v4737 = vpop.f32.mrf.mxu0
    %v4738 = vadd.f32 %v4507, %v4737
    %4739 = vmatmul.bf16.gmra.mxu0 %v4463
    %v4740 = vpop.f32.mrf.mxu0
    %v4741 = vadd.f32 %v4507, %v4740
    %v4742 = vpop.f32.mrf.mxu0
    %v4743 = vadd.f32 %v4507, %v4742
    %4744 = vmatmul.bf16.gmra.mxu0 %v4465
    %v4745 = vpop.f32.mrf.mxu0
    %v4746 = vadd.f32 %v4507, %v4745
    %v4747 = vpop.f32.mrf.mxu0
    %v4748 = vadd.f32 %v4507, %v4747
    %4749 = vmatmul.bf16.gmra.mxu0 %v4467
    %v4750 = vpop.f32.mrf.mxu0
    %v4751 = vadd.f32 %v4507, %v4750
    %v4752 = vpop.f32.mrf.mxu0
    %v4753 = vadd.f32 %v4507, %v4752
    %4754 = vmatmul.bf16.gmra.mxu0 %v4469
    %v4755 = vpop.f32.mrf.mxu0
    %v4756 = vadd.f32 %v4507, %v4755
    %v4757 = vpop.f32.mrf.mxu0
    %v4758 = vadd.f32 %v4507, %v4757
    %4759 = vdwg.mxu0
    %4760 = vmatpush.bf16.msra.mxu0 %v4637
    %4761 = vmatpush.bf16.msra.mxu0 %v4635
    %4762 = vmatpush.bf16.msra.mxu0 %v4633
    %4763 = vmatpush.bf16.msra.mxu0 %v4631
    %4764 = vmatpush.bf16.msra.mxu0 %v4629
    %4765 = vmatpush.bf16.msra.mxu0 %v4627
    %4766 = vmatpush.bf16.msra.mxu0 %v4625
    %4767 = vmatpush.bf16.msra.mxu0 %v4623
    %4768 = vmatmul.bf16.gmra.mxu0 %v4440
    %v4769 = vpop.f32.mrf.mxu0
    %v4770 = vadd.f32 %v4681, %v4769
    %v4771 = vpop.f32.mrf.mxu0
    %v4772 = vadd.f32 %v4683, %v4771
    %4773 = vmatmul.bf16.gmra.mxu0 %v4442
    %v4774 = vpop.f32.mrf.mxu0
    %v4775 = vadd.f32 %v4686, %v4774
    %v4776 = vpop.f32.mrf.mxu0
    %v4777 = vadd.f32 %v4688, %v4776
    %4778 = vmatmul.bf16.gmra.mxu0 %v4444
    %v4779 = vpop.f32.mrf.mxu0
    %v4780 = vadd.f32 %v4691, %v4779
    %v4781 = vpop.f32.mrf.mxu0
    %v4782 = vadd.f32 %v4693, %v4781
    %4783 = vmatmul.bf16.gmra.mxu0 %v4446
    %v4784 = vpop.f32.mrf.mxu0
    %v4785 = vadd.f32 %v4696, %v4784
    %v4786 = vpop.f32.mrf.mxu0
    %v4787 = vadd.f32 %v4698, %v4786
    %4788 = vmatmul.bf16.gmra.mxu0 %v4448
    %v4789 = vpop.f32.mrf.mxu0
    %v4790 = vadd.f32 %v4701, %v4789
    %v4791 = vpop.f32.mrf.mxu0
    %v4792 = vadd.f32 %v4703, %v4791
    %4793 = vmatmul.bf16.gmra.mxu0 %v4450
    %v4794 = vpop.f32.mrf.mxu0
    %v4795 = vadd.f32 %v4706, %v4794
    %v4796 = vpop.f32.mrf.mxu0
    %v4797 = vadd.f32 %v4708, %v4796
    %4798 = vmatmul.bf16.gmra.mxu0 %v4452
    %v4799 = vpop.f32.mrf.mxu0
    %v4800 = vadd.f32 %v4711, %v4799
    %v4801 = vpop.f32.mrf.mxu0
    %v4802 = vadd.f32 %v4713, %v4801
    %4803 = vmatmul.bf16.gmra.mxu0 %v4454
    %v4804 = vpop.f32.mrf.mxu0
    %v4805 = vadd.f32 %v4716, %v4804
    %v4806 = vpop.f32.mrf.mxu0
    %v4807 = vadd.f32 %v4718, %v4806
    %4808 = vmatmul.bf16.gmra.mxu0 %v4456
    %v4809 = vpop.f32.mrf.mxu0
    %v4810 = vadd.f32 %v4721, %v4809
    %v4811 = vpop.f32.mrf.mxu0
    %v4812 = vadd.f32 %v4723, %v4811
    %4813 = vmatmul.bf16.gmra.mxu0 %v4458
    %v4814 = vpop.f32.mrf.mxu0
    %v4815 = vadd.f32 %v4726, %v4814
    %v4816 = vpop.f32.mrf.mxu0
    %v4817 = vadd.f32 %v4728, %v4816
    %4818 = vmatmul.bf16.gmra.mxu0 %v4460
    %v4819 = vpop.f32.mrf.mxu0
    %v4820 = vadd.f32 %v4731, %v4819
    %v4821 = vpop.f32.mrf.mxu0
    %v4822 = vadd.f32 %v4733, %v4821
    %4823 = vmatmul.bf16.gmra.mxu0 %v4462
    %v4824 = vpop.f32.mrf.mxu0
    %v4825 = vadd.f32 %v4736, %v4824
    %v4826 = vpop.f32.mrf.mxu0
    %v4827 = vadd.f32 %v4738, %v4826
    %4828 = vmatmul.bf16.gmra.mxu0 %v4464
    %v4829 = vpop.f32.mrf.mxu0
    %v4830 = vadd.f32 %v4741, %v4829
    %v4831 = vpop.f32.mrf.mxu0
    %v4832 = vadd.f32 %v4743, %v4831
    %4833 = vmatmul.bf16.gmra.mxu0 %v4466
    %v4834 = vpop.f32.mrf.mxu0
    %v4835 = vadd.f32 %v4746, %v4834
    %v4836 = vpop.f32.mrf.mxu0
    %v4837 = vadd.f32 %v4748, %v4836
    %4838 = vmatmul.bf16.gmra.mxu0 %v4468
    %v4839 = vpop.f32.mrf.mxu0
    %v4840 = vadd.f32 %v4751, %v4839
    %v4841 = vpop.f32.mrf.mxu0
    %v4842 = vadd.f32 %v4753, %v4841
    %4843 = vmatmul.bf16.gmra.mxu0 %v4470
    %v4844 = vpop.f32.mrf.mxu0
    %v4845 = vadd.f32 %v4756, %v4844
    %v4846 = vpop.f32.mrf.mxu0
    %v4847 = vadd.f32 %v4758, %v4846
    %4848 = vdwg.mxu0
    %4849 = vmatpush.bf16.msra.mxu0 %v4622
    %4850 = vmatpush.bf16.msra.mxu0 %v4620
    %4851 = vmatpush.bf16.msra.mxu0 %v4618
    %4852 = vmatpush.bf16.msra.mxu0 %v4616
    %4853 = vmatpush.bf16.msra.mxu0 %v4614
    %4854 = vmatpush.bf16.msra.mxu0 %v4612
    %4855 = vmatpush.bf16.msra.mxu0 %v4610
    %4856 = vmatpush.bf16.msra.mxu0 %v4608
    %4857 = vmatmul.bf16.gmra.mxu0 %v4439
    %v4858 = vpop.f32.mrf.mxu0
    %v4859 = vadd.f32 %v4508, %v4858
    %v4860 = vpop.f32.mrf.mxu0
    %v4861 = vadd.f32 %v4508, %v4860
    %4862 = vmatmul.bf16.gmra.mxu0 %v4441
    %v4863 = vpop.f32.mrf.mxu0
    %v4864 = vadd.f32 %v4508, %v4863
    %v4865 = vpop.f32.mrf.mxu0
    %v4866 = vadd.f32 %v4508, %v4865
    %4867 = vmatmul.bf16.gmra.mxu0 %v4443
    %v4868 = vpop.f32.mrf.mxu0
    %v4869 = vadd.f32 %v4508, %v4868
    %v4870 = vpop.f32.mrf.mxu0
    %v4871 = vadd.f32 %v4508, %v4870
    %4872 = vmatmul.bf16.gmra.mxu0 %v4445
    %v4873 = vpop.f32.mrf.mxu0
    %v4874 = vadd.f32 %v4508, %v4873
    %v4875 = vpop.f32.mrf.mxu0
    %v4876 = vadd.f32 %v4508, %v4875
    %4877 = vmatmul.bf16.gmra.mxu0 %v4447
    %v4878 = vpop.f32.mrf.mxu0
    %v4879 = vadd.f32 %v4508, %v4878
    %v4880 = vpop.f32.mrf.mxu0
    %v4881 = vadd.f32 %v4508, %v4880
    %4882 = vmatmul.bf16.gmra.mxu0 %v4449
    %v4883 = vpop.f32.mrf.mxu0
    %v4884 = vadd.f32 %v4508, %v4883
    %v4885 = vpop.f32.mrf.mxu0
    %v4886 = vadd.f32 %v4508, %v4885
    %4887 = vmatmul.bf16.gmra.mxu0 %v4451
    %v4888 = vpop.f32.mrf.mxu0
    %v4889 = vadd.f32 %v4508, %v4888
    %v4890 = vpop.f32.mrf.mxu0
    %v4891 = vadd.f32 %v4508, %v4890
    %4892 = vmatmul.bf16.gmra.mxu0 %v4453
    %v4893 = vpop.f32.mrf.mxu0
    %v4894 = vadd.f32 %v4508, %v4893
    %v4895 = vpop.f32.mrf.mxu0
    %v4896 = vadd.f32 %v4508, %v4895
    %4897 = vmatmul.bf16.gmra.mxu0 %v4455
    %v4898 = vpop.f32.mrf.mxu0
    %v4899 = vadd.f32 %v4508, %v4898
    %v4900 = vpop.f32.mrf.mxu0
    %v4901 = vadd.f32 %v4508, %v4900
    %4902 = vmatmul.bf16.gmra.mxu0 %v4457
    %v4903 = vpop.f32.mrf.mxu0
    %v4904 = vadd.f32 %v4508, %v4903
    %v4905 = vpop.f32.mrf.mxu0
    %v4906 = vadd.f32 %v4508, %v4905
    %4907 = vmatmul.bf16.gmra.mxu0 %v4459
    %v4908 = vpop.f32.mrf.mxu0
    %v4909 = vadd.f32 %v4508, %v4908
    %v4910 = vpop.f32.mrf.mxu0
    %v4911 = vadd.f32 %v4508, %v4910
    %4912 = vmatmul.bf16.gmra.mxu0 %v4461
    %v4913 = vpop.f32.mrf.mxu0
    %v4914 = vadd.f32 %v4508, %v4913
    %v4915 = vpop.f32.mrf.mxu0
    %v4916 = vadd.f32 %v4508, %v4915
    %4917 = vmatmul.bf16.gmra.mxu0 %v4463
    %v4918 = vpop.f32.mrf.mxu0
    %v4919 = vadd.f32 %v4508, %v4918
    %v4920 = vpop.f32.mrf.mxu0
    %v4921 = vadd.f32 %v4508, %v4920
    %4922 = vmatmul.bf16.gmra.mxu0 %v4465
    %v4923 = vpop.f32.mrf.mxu0
    %v4924 = vadd.f32 %v4508, %v4923
    %v4925 = vpop.f32.mrf.mxu0
    %v4926 = vadd.f32 %v4508, %v4925
    %4927 = vmatmul.bf16.gmra.mxu0 %v4467
    %v4928 = vpop.f32.mrf.mxu0
    %v4929 = vadd.f32 %v4508, %v4928
    %v4930 = vpop.f32.mrf.mxu0
    %v4931 = vadd.f32 %v4508, %v4930
    %4932 = vmatmul.bf16.gmra.mxu0 %v4469
    %v4933 = vpop.f32.mrf.mxu0
    %v4934 = vadd.f32 %v4508, %v4933
    %v4935 = vpop.f32.mrf.mxu0
    %v4936 = vadd.f32 %v4508, %v4935
    %4937 = vdwg.mxu0
    %4938 = vmatpush.bf16.msra.mxu0 %v4638
    %4939 = vmatpush.bf16.msra.mxu0 %v4636
    %4940 = vmatpush.bf16.msra.mxu0 %v4634
    %4941 = vmatpush.bf16.msra.mxu0 %v4632
    %4942 = vmatpush.bf16.msra.mxu0 %v4630
    %4943 = vmatpush.bf16.msra.mxu0 %v4628
    %4944 = vmatpush.bf16.msra.mxu0 %v4626
    %4945 = vmatpush.bf16.msra.mxu0 %v4624
    %4946 = vmatmul.bf16.gmra.mxu0 %v4440
    %v4947 = vpop.f32.mrf.mxu0
    %v4948 = vadd.f32 %v4859, %v4947
    %v4949 = vpop.f32.mrf.mxu0
    %v4950 = vadd.f32 %v4861, %v4949
    %4951 = vmatmul.bf16.gmra.mxu0 %v4442
    %v4952 = vpop.f32.mrf.mxu0
    %v4953 = vadd.f32 %v4864, %v4952
    %v4954 = vpop.f32.mrf.mxu0
    %v4955 = vadd.f32 %v4866, %v4954
    %4956 = vmatmul.bf16.gmra.mxu0 %v4444
    %v4957 = vpop.f32.mrf.mxu0
    %v4958 = vadd.f32 %v4869, %v4957
    %v4959 = vpop.f32.mrf.mxu0
    %v4960 = vadd.f32 %v4871, %v4959
    %4961 = vmatmul.bf16.gmra.mxu0 %v4446
    %v4962 = vpop.f32.mrf.mxu0
    %v4963 = vadd.f32 %v4874, %v4962
    %v4964 = vpop.f32.mrf.mxu0
    %v4965 = vadd.f32 %v4876, %v4964
    %4966 = vmatmul.bf16.gmra.mxu0 %v4448
    %v4967 = vpop.f32.mrf.mxu0
    %v4968 = vadd.f32 %v4879, %v4967
    %v4969 = vpop.f32.mrf.mxu0
    %v4970 = vadd.f32 %v4881, %v4969
    %4971 = vmatmul.bf16.gmra.mxu0 %v4450
    %v4972 = vpop.f32.mrf.mxu0
    %v4973 = vadd.f32 %v4884, %v4972
    %v4974 = vpop.f32.mrf.mxu0
    %v4975 = vadd.f32 %v4886, %v4974
    %4976 = vmatmul.bf16.gmra.mxu0 %v4452
    %v4977 = vpop.f32.mrf.mxu0
    %v4978 = vadd.f32 %v4889, %v4977
    %v4979 = vpop.f32.mrf.mxu0
    %v4980 = vadd.f32 %v4891, %v4979
    %4981 = vmatmul.bf16.gmra.mxu0 %v4454
    %v4982 = vpop.f32.mrf.mxu0
    %v4983 = vadd.f32 %v4894, %v4982
    %v4984 = vpop.f32.mrf.mxu0
    %v4985 = vadd.f32 %v4896, %v4984
    %4986 = vmatmul.bf16.gmra.mxu0 %v4456
    %v4987 = vpop.f32.mrf.mxu0
    %v4988 = vadd.f32 %v4899, %v4987
    %v4989 = vpop.f32.mrf.mxu0
    %v4990 = vadd.f32 %v4901, %v4989
    %4991 = vmatmul.bf16.gmra.mxu0 %v4458
    %v4992 = vpop.f32.mrf.mxu0
    %v4993 = vadd.f32 %v4904, %v4992
    %v4994 = vpop.f32.mrf.mxu0
    %v4995 = vadd.f32 %v4906, %v4994
    %4996 = vmatmul.bf16.gmra.mxu0 %v4460
    %v4997 = vpop.f32.mrf.mxu0
    %v4998 = vadd.f32 %v4909, %v4997
    %v4999 = vpop.f32.mrf.mxu0
    %v5000 = vadd.f32 %v4911, %v4999
    %5001 = vmatmul.bf16.gmra.mxu0 %v4462
    %v5002 = vpop.f32.mrf.mxu0
    %v5003 = vadd.f32 %v4914, %v5002
    %v5004 = vpop.f32.mrf.mxu0
    %v5005 = vadd.f32 %v4916, %v5004
    %5006 = vmatmul.bf16.gmra.mxu0 %v4464
    %v5007 = vpop.f32.mrf.mxu0
    %v5008 = vadd.f32 %v4919, %v5007
    %v5009 = vpop.f32.mrf.mxu0
    %v5010 = vadd.f32 %v4921, %v5009
    %5011 = vmatmul.bf16.gmra.mxu0 %v4466
    %v5012 = vpop.f32.mrf.mxu0
    %v5013 = vadd.f32 %v4924, %v5012
    %v5014 = vpop.f32.mrf.mxu0
    %v5015 = vadd.f32 %v4926, %v5014
    %5016 = vmatmul.bf16.gmra.mxu0 %v4468
    %v5017 = vpop.f32.mrf.mxu0
    %v5018 = vadd.f32 %v4929, %v5017
    %v5019 = vpop.f32.mrf.mxu0
    %v5020 = vadd.f32 %v4931, %v5019
    %5021 = vmatmul.bf16.gmra.mxu0 %v4470
    %v5022 = vpop.f32.mrf.mxu0
    %v5023 = vadd.f32 %v4934, %v5022
    %v5024 = vpop.f32.mrf.mxu0
    %v5025 = vadd.f32 %v4936, %v5024
    %5026 = vdwg.mxu0
    %vm5027 = vcmp.gt.f32.partialorder %v4770, 0.0
    %vm5028 = vcmp.gt.f32.partialorder %v4948, 0.0
    %vm5029 = vcmp.gt.f32.partialorder %v4772, 0.0
    %vm5030 = vcmp.gt.f32.partialorder %v4950, 0.0
    %vm5031 = vcmp.gt.f32.partialorder %v4775, 0.0
    %vm5032 = vcmp.gt.f32.partialorder %v4953, 0.0
    %vm5033 = vcmp.gt.f32.partialorder %v4777, 0.0
    %vm5034 = vcmp.gt.f32.partialorder %v4955, 0.0
    %vm5035 = vcmp.gt.f32.partialorder %v4780, 0.0
    %vm5036 = vcmp.gt.f32.partialorder %v4958, 0.0
    %vm5037 = vcmp.gt.f32.partialorder %v4782, 0.0
    %vm5038 = vcmp.gt.f32.partialorder %v4960, 0.0
    %vm5039 = vcmp.gt.f32.partialorder %v4785, 0.0
    %vm5040 = vcmp.gt.f32.partialorder %v4963, 0.0
    %vm5041 = vcmp.gt.f32.partialorder %v4787, 0.0
    %vm5042 = vcmp.gt.f32.partialorder %v4965, 0.0
    %vm5043 = vcmp.gt.f32.partialorder %v4790, 0.0
    %vm5044 = vcmp.gt.f32.partialorder %v4968, 0.0
    %vm5045 = vcmp.gt.f32.partialorder %v4792, 0.0
    %vm5046 = vcmp.gt.f32.partialorder %v4970, 0.0
    %vm5047 = vcmp.gt.f32.partialorder %v4795, 0.0
    %vm5048 = vcmp.gt.f32.partialorder %v4973, 0.0
    %vm5049 = vcmp.gt.f32.partialorder %v4797, 0.0
    %vm5050 = vcmp.gt.f32.partialorder %v4975, 0.0
    %vm5051 = vcmp.gt.f32.partialorder %v4800, 0.0
    %vm5052 = vcmp.gt.f32.partialorder %v4978, 0.0
    %vm5053 = vcmp.gt.f32.partialorder %v4802, 0.0
    %vm5054 = vcmp.gt.f32.partialorder %v4980, 0.0
    %vm5055 = vcmp.gt.f32.partialorder %v4805, 0.0
    %vm5056 = vcmp.gt.f32.partialorder %v4983, 0.0
    %vm5057 = vcmp.gt.f32.partialorder %v4807, 0.0
    %vm5058 = vcmp.gt.f32.partialorder %v4985, 0.0
    %vm5059 = vcmp.gt.f32.partialorder %v4810, 0.0
    %vm5060 = vcmp.gt.f32.partialorder %v4988, 0.0
    %vm5061 = vcmp.gt.f32.partialorder %v4812, 0.0
    %vm5062 = vcmp.gt.f32.partialorder %v4990, 0.0
    %vm5063 = vcmp.gt.f32.partialorder %v4815, 0.0
    %vm5064 = vcmp.gt.f32.partialorder %v4993, 0.0
    %vm5065 = vcmp.gt.f32.partialorder %v4817, 0.0
    %vm5066 = vcmp.gt.f32.partialorder %v4995, 0.0
    %vm5067 = vcmp.gt.f32.partialorder %v4820, 0.0
    %vm5068 = vcmp.gt.f32.partialorder %v4998, 0.0
    %vm5069 = vcmp.gt.f32.partialorder %v4822, 0.0
    %vm5070 = vcmp.gt.f32.partialorder %v5000, 0.0
    %vm5071 = vcmp.gt.f32.partialorder %v4825, 0.0
    %vm5072 = vcmp.gt.f32.partialorder %v5003, 0.0
    %vm5073 = vcmp.gt.f32.partialorder %v4827, 0.0
    %vm5074 = vcmp.gt.f32.partialorder %v5005, 0.0
    %vm5075 = vcmp.gt.f32.partialorder %v4830, 0.0
    %vm5076 = vcmp.gt.f32.partialorder %v5008, 0.0
    %vm5077 = vcmp.gt.f32.partialorder %v4832, 0.0
    %vm5078 = vcmp.gt.f32.partialorder %v5010, 0.0
    %vm5079 = vcmp.gt.f32.partialorder %v4835, 0.0
    %vm5080 = vcmp.gt.f32.partialorder %v5013, 0.0
    %vm5081 = vcmp.gt.f32.partialorder %v4837, 0.0
    %vm5082 = vcmp.gt.f32.partialorder %v5015, 0.0
    %vm5083 = vcmp.gt.f32.partialorder %v4840, 0.0
    %vm5084 = vcmp.gt.f32.partialorder %v5018, 0.0
    %vm5085 = vcmp.gt.f32.partialorder %v4842, 0.0
    %vm5086 = vcmp.gt.f32.partialorder %v5020, 0.0
    %vm5087 = vcmp.gt.f32.partialorder %v4845, 0.0
    %vm5088 = vcmp.gt.f32.partialorder %v5023, 0.0
    %vm5089 = vcmp.gt.f32.partialorder %v4847, 0.0
    %vm5090 = vcmp.gt.f32.partialorder %v5025, 0.0
    %v5091 = vmul.f32 %v4770, 0.01
    %v5092 = vmul.f32 %v4948, 0.01
    %v5093 = vmul.f32 %v4772, 0.01
    %v5094 = vmul.f32 %v4950, 0.01
    %v5095 = vmul.f32 %v4775, 0.01
    %v5096 = vmul.f32 %v4953, 0.01
    %v5097 = vmul.f32 %v4777, 0.01
    %v5098 = vmul.f32 %v4955, 0.01
    %v5099 = vmul.f32 %v4780, 0.01
    %v5100 = vmul.f32 %v4958, 0.01
    %v5101 = vmul.f32 %v4782, 0.01
    %v5102 = vmul.f32 %v4960, 0.01
    %v5103 = vmul.f32 %v4785, 0.01
    %v5104 = vmul.f32 %v4963, 0.01
    %v5105 = vmul.f32 %v4787, 0.01
    %v5106 = vmul.f32 %v4965, 0.01
    %v5107 = vmul.f32 %v4790, 0.01
    %v5108 = vmul.f32 %v4968, 0.01
    %v5109 = vmul.f32 %v4792, 0.01
    %v5110 = vmul.f32 %v4970, 0.01
    %v5111 = vmul.f32 %v4795, 0.01
    %v5112 = vmul.f32 %v4973, 0.01
    %v5113 = vmul.f32 %v4797, 0.01
    %v5114 = vmul.f32 %v4975, 0.01
    %v5115 = vmul.f32 %v4800, 0.01
    %v5116 = vmul.f32 %v4978, 0.01
    %v5117 = vmul.f32 %v4802, 0.01
    %v5118 = vmul.f32 %v4980, 0.01
    %v5119 = vmul.f32 %v4805, 0.01
    %v5120 = vmul.f32 %v4983, 0.01
    %v5121 = vmul.f32 %v4807, 0.01
    %v5122 = vmul.f32 %v4985, 0.01
    %v5123 = vmul.f32 %v4810, 0.01
    %v5124 = vmul.f32 %v4988, 0.01
    %v5125 = vmul.f32 %v4812, 0.01
    %v5126 = vmul.f32 %v4990, 0.01
    %v5127 = vmul.f32 %v4815, 0.01
    %v5128 = vmul.f32 %v4993, 0.01
    %v5129 = vmul.f32 %v4817, 0.01
    %v5130 = vmul.f32 %v4995, 0.01
    %v5131 = vmul.f32 %v4820, 0.01
    %v5132 = vmul.f32 %v4998, 0.01
    %v5133 = vmul.f32 %v4822, 0.01
    %v5134 = vmul.f32 %v5000, 0.01
    %v5135 = vmul.f32 %v4825, 0.01
    %v5136 = vmul.f32 %v5003, 0.01
    %v5137 = vmul.f32 %v4827, 0.01
    %v5138 = vmul.f32 %v5005, 0.01
    %v5139 = vmul.f32 %v4830, 0.01
    %v5140 = vmul.f32 %v5008, 0.01
    %v5141 = vmul.f32 %v4832, 0.01
    %v5142 = vmul.f32 %v5010, 0.01
    %v5143 = vmul.f32 %v4835, 0.01
    %v5144 = vmul.f32 %v5013, 0.01
    %v5145 = vmul.f32 %v4837, 0.01
    %v5146 = vmul.f32 %v5015, 0.01
    %v5147 = vmul.f32 %v4840, 0.01
    %v5148 = vmul.f32 %v5018, 0.01
    %v5149 = vmul.f32 %v4842, 0.01
    %v5150 = vmul.f32 %v5020, 0.01
    %v5151 = vmul.f32 %v4845, 0.01
    %v5152 = vmul.f32 %v5023, 0.01
    %v5153 = vmul.f32 %v4847, 0.01
    %v5154 = vmul.f32 %v5025, 0.01
    %v5155 = vsel %vm5027, %v4770, %v5091
    %v5156 = vsel %vm5028, %v4948, %v5092
    %v5157 = vsel %vm5029, %v4772, %v5093
    %v5158 = vsel %vm5030, %v4950, %v5094
    %v5159 = vsel %vm5031, %v4775, %v5095
    %v5160 = vsel %vm5032, %v4953, %v5096
    %v5161 = vsel %vm5033, %v4777, %v5097
    %v5162 = vsel %vm5034, %v4955, %v5098
    %v5163 = vsel %vm5035, %v4780, %v5099
    %v5164 = vsel %vm5036, %v4958, %v5100
    %v5165 = vsel %vm5037, %v4782, %v5101
    %v5166 = vsel %vm5038, %v4960, %v5102
    %v5167 = vsel %vm5039, %v4785, %v5103
    %v5168 = vsel %vm5040, %v4963, %v5104
    %v5169 = vsel %vm5041, %v4787, %v5105
    %v5170 = vsel %vm5042, %v4965, %v5106
    %v5171 = vsel %vm5043, %v4790, %v5107
    %v5172 = vsel %vm5044, %v4968, %v5108
    %v5173 = vsel %vm5045, %v4792, %v5109
    %v5174 = vsel %vm5046, %v4970, %v5110
    %v5175 = vsel %vm5047, %v4795, %v5111
    %v5176 = vsel %vm5048, %v4973, %v5112
    %v5177 = vsel %vm5049, %v4797, %v5113
    %v5178 = vsel %vm5050, %v4975, %v5114
    %v5179 = vsel %vm5051, %v4800, %v5115
    %v5180 = vsel %vm5052, %v4978, %v5116
    %v5181 = vsel %vm5053, %v4802, %v5117
    %v5182 = vsel %vm5054, %v4980, %v5118
    %v5183 = vsel %vm5055, %v4805, %v5119
    %v5184 = vsel %vm5056, %v4983, %v5120
    %v5185 = vsel %vm5057, %v4807, %v5121
    %v5186 = vsel %vm5058, %v4985, %v5122
    %v5187 = vsel %vm5059, %v4810, %v5123
    %v5188 = vsel %vm5060, %v4988, %v5124
    %v5189 = vsel %vm5061, %v4812, %v5125
    %v5190 = vsel %vm5062, %v4990, %v5126
    %v5191 = vsel %vm5063, %v4815, %v5127
    %v5192 = vsel %vm5064, %v4993, %v5128
    %v5193 = vsel %vm5065, %v4817, %v5129
    %v5194 = vsel %vm5066, %v4995, %v5130
    %v5195 = vsel %vm5067, %v4820, %v5131
    %v5196 = vsel %vm5068, %v4998, %v5132
    %v5197 = vsel %vm5069, %v4822, %v5133
    %v5198 = vsel %vm5070, %v5000, %v5134
    %v5199 = vsel %vm5071, %v4825, %v5135
    %v5200 = vsel %vm5072, %v5003, %v5136
    %v5201 = vsel %vm5073, %v4827, %v5137
    %v5202 = vsel %vm5074, %v5005, %v5138
    %v5203 = vsel %vm5075, %v4830, %v5139
    %v5204 = vsel %vm5076, %v5008, %v5140
    %v5205 = vsel %vm5077, %v4832, %v5141
    %v5206 = vsel %vm5078, %v5010, %v5142
    %v5207 = vsel %vm5079, %v4835, %v5143
    %v5208 = vsel %vm5080, %v5013, %v5144
    %v5209 = vsel %vm5081, %v4837, %v5145
    %v5210 = vsel %vm5082, %v5015, %v5146
    %v5211 = vsel %vm5083, %v4840, %v5147
    %v5212 = vsel %vm5084, %v5018, %v5148
    %v5213 = vsel %vm5085, %v4842, %v5149
    %v5214 = vsel %vm5086, %v5020, %v5150
    %v5215 = vsel %vm5087, %v4845, %v5151
    %v5216 = vsel %vm5088, %v5023, %v5152
    %v5217 = vsel %vm5089, %v4847, %v5153
    %v5218 = vsel %vm5090, %v5025, %v5154
    %v5219 = vld [vmem:[%s3] sm:$0x3]
    %v5221 = vperm.slane %v5219, 0
    %v5222 = vperm.slane %v5219, 1
    %v5225 = vmul.f32 %v5155, %v5221
    %v5226 = vmul.f32 %v5156, %v5222
    %v5227 = vmul.f32 %v5157, %v5221
    %v5228 = vmul.f32 %v5158, %v5222
    %v5229 = vmul.f32 %v5159, %v5221
    %v5230 = vmul.f32 %v5160, %v5222
    %v5231 = vmul.f32 %v5161, %v5221
    %v5232 = vmul.f32 %v5162, %v5222
    %v5233 = vmul.f32 %v5163, %v5221
    %v5234 = vmul.f32 %v5164, %v5222
    %v5235 = vmul.f32 %v5165, %v5221
    %v5236 = vmul.f32 %v5166, %v5222
    %v5237 = vmul.f32 %v5167, %v5221
    %v5238 = vmul.f32 %v5168, %v5222
    %v5239 = vmul.f32 %v5169, %v5221
    %v5240 = vmul.f32 %v5170, %v5222
    %v5241 = vmul.f32 %v5171, %v5221
    %v5242 = vmul.f32 %v5172, %v5222
    %v5243 = vmul.f32 %v5173, %v5221
    %v5244 = vmul.f32 %v5174, %v5222
    %v5245 = vmul.f32 %v5175, %v5221
    %v5246 = vmul.f32 %v5176, %v5222
    %v5247 = vmul.f32 %v5177, %v5221
    %v5248 = vmul.f32 %v5178, %v5222
    %v5249 = vmul.f32 %v5179, %v5221
    %v5250 = vmul.f32 %v5180, %v5222
    %v5251 = vmul.f32 %v5181, %v5221
    %v5252 = vmul.f32 %v5182, %v5222
    %v5253 = vmul.f32 %v5183, %v5221
    %v5254 = vmul.f32 %v5184, %v5222
    %v5255 = vmul.f32 %v5185, %v5221
    %v5256 = vmul.f32 %v5186, %v5222
    %v5257 = vmul.f32 %v5187, %v5221
    %v5258 = vmul.f32 %v5188, %v5222
    %v5259 = vmul.f32 %v5189, %v5221
    %v5260 = vmul.f32 %v5190, %v5222
    %v5261 = vmul.f32 %v5191, %v5221
    %v5262 = vmul.f32 %v5192, %v5222
    %v5263 = vmul.f32 %v5193, %v5221
    %v5264 = vmul.f32 %v5194, %v5222
    %v5265 = vmul.f32 %v5195, %v5221
    %v5266 = vmul.f32 %v5196, %v5222
    %v5267 = vmul.f32 %v5197, %v5221
    %v5268 = vmul.f32 %v5198, %v5222
    %v5269 = vmul.f32 %v5199, %v5221
    %v5270 = vmul.f32 %v5200, %v5222
    %v5271 = vmul.f32 %v5201, %v5221
    %v5272 = vmul.f32 %v5202, %v5222
    %v5273 = vmul.f32 %v5203, %v5221
    %v5274 = vmul.f32 %v5204, %v5222
    %v5275 = vmul.f32 %v5205, %v5221
    %v5276 = vmul.f32 %v5206, %v5222
    %v5277 = vmul.f32 %v5207, %v5221
    %v5278 = vmul.f32 %v5208, %v5222
    %v5279 = vmul.f32 %v5209, %v5221
    %v5280 = vmul.f32 %v5210, %v5222
    %v5281 = vmul.f32 %v5211, %v5221
    %v5282 = vmul.f32 %v5212, %v5222
    %v5283 = vmul.f32 %v5213, %v5221
    %v5284 = vmul.f32 %v5214, %v5222
    %v5285 = vmul.f32 %v5215, %v5221
    %v5286 = vmul.f32 %v5216, %v5222
    %v5287 = vmul.f32 %v5217, %v5221
    %v5288 = vmul.f32 %v5218, %v5222
    %v5289 = vadd.f32 %v5225, %v5226
    %5290 = vadd.xlane.f32.xlu0 %v5289
    %v5291 = vpop.xlane.xlu0 %5290
    %v5292 = vadd.f32 %v5227, %v5228
    %5293 = vadd.xlane.f32.xlu0 %v5292
    %v5294 = vpop.xlane.xlu0 %5293
    %v5295 = vadd.f32 %v5229, %v5230
    %5296 = vadd.xlane.f32.xlu0 %v5295
    %v5297 = vpop.xlane.xlu0 %5296
    %v5298 = vadd.f32 %v5231, %v5232
    %5299 = vadd.xlane.f32.xlu0 %v5298
    %v5300 = vpop.xlane.xlu0 %5299
    %v5301 = vadd.f32 %v5233, %v5234
    %5302 = vadd.xlane.f32.xlu0 %v5301
    %v5303 = vpop.xlane.xlu0 %5302
    %v5304 = vadd.f32 %v5235, %v5236
    %5305 = vadd.xlane.f32.xlu0 %v5304
    %v5306 = vpop.xlane.xlu0 %5305
    %v5307 = vadd.f32 %v5237, %v5238
    %5308 = vadd.xlane.f32.xlu0 %v5307
    %v5309 = vpop.xlane.xlu0 %5308
    %v5310 = vadd.f32 %v5239, %v5240
    %5311 = vadd.xlane.f32.xlu0 %v5310
    %v5312 = vpop.xlane.xlu0 %5311
    %v5313 = vadd.f32 %v5241, %v5242
    %5314 = vadd.xlane.f32.xlu0 %v5313
    %v5315 = vpop.xlane.xlu0 %5314
    %v5316 = vadd.f32 %v5243, %v5244
    %5317 = vadd.xlane.f32.xlu0 %v5316
    %v5318 = vpop.xlane.xlu0 %5317
    %v5319 = vadd.f32 %v5245, %v5246
    %5320 = vadd.xlane.f32.xlu0 %v5319
    %v5321 = vpop.xlane.xlu0 %5320
    %v5322 = vadd.f32 %v5247, %v5248
    %5323 = vadd.xlane.f32.xlu0 %v5322
    %v5324 = vpop.xlane.xlu0 %5323
    %v5325 = vadd.f32 %v5249, %v5250
    %5326 = vadd.xlane.f32.xlu0 %v5325
    %v5327 = vpop.xlane.xlu0 %5326
    %v5328 = vadd.f32 %v5251, %v5252
    %5329 = vadd.xlane.f32.xlu0 %v5328
    %v5330 = vpop.xlane.xlu0 %5329
    %v5331 = vadd.f32 %v5253, %v5254
    %5332 = vadd.xlane.f32.xlu0 %v5331
    %v5333 = vpop.xlane.xlu0 %5332
    %v5334 = vadd.f32 %v5255, %v5256
    %5335 = vadd.xlane.f32.xlu0 %v5334
    %v5336 = vpop.xlane.xlu0 %5335
    %v5337 = vadd.f32 %v5257, %v5258
    %5338 = vadd.xlane.f32.xlu0 %v5337
    %v5339 = vpop.xlane.xlu0 %5338
    %v5340 = vadd.f32 %v5259, %v5260
    %5341 = vadd.xlane.f32.xlu0 %v5340
    %v5342 = vpop.xlane.xlu0 %5341
    %v5343 = vadd.f32 %v5261, %v5262
    %5344 = vadd.xlane.f32.xlu0 %v5343
    %v5345 = vpop.xlane.xlu0 %5344
    %v5346 = vadd.f32 %v5263, %v5264
    %5347 = vadd.xlane.f32.xlu0 %v5346
    %v5348 = vpop.xlane.xlu0 %5347
    %v5349 = vadd.f32 %v5265, %v5266
    %5350 = vadd.xlane.f32.xlu0 %v5349
    %v5351 = vpop.xlane.xlu0 %5350
    %v5352 = vadd.f32 %v5267, %v5268
    %5353 = vadd.xlane.f32.xlu0 %v5352
    %v5354 = vpop.xlane.xlu0 %5353
    %v5355 = vadd.f32 %v5269, %v5270
    %5356 = vadd.xlane.f32.xlu0 %v5355
    %v5357 = vpop.xlane.xlu0 %5356
    %v5358 = vadd.f32 %v5271, %v5272
    %5359 = vadd.xlane.f32.xlu0 %v5358
    %v5360 = vpop.xlane.xlu0 %5359
    %v5361 = vadd.f32 %v5273, %v5274
    %5362 = vadd.xlane.f32.xlu0 %v5361
    %v5363 = vpop.xlane.xlu0 %5362
    %v5364 = vadd.f32 %v5275, %v5276
    %5365 = vadd.xlane.f32.xlu0 %v5364
    %v5366 = vpop.xlane.xlu0 %5365
    %v5367 = vadd.f32 %v5277, %v5278
    %5368 = vadd.xlane.f32.xlu0 %v5367
    %v5369 = vpop.xlane.xlu0 %5368
    %v5370 = vadd.f32 %v5279, %v5280
    %5371 = vadd.xlane.f32.xlu0 %v5370
    %v5372 = vpop.xlane.xlu0 %5371
    %v5373 = vadd.f32 %v5281, %v5282
    %5374 = vadd.xlane.f32.xlu0 %v5373
    %v5375 = vpop.xlane.xlu0 %5374
    %v5376 = vadd.f32 %v5283, %v5284
    %5377 = vadd.xlane.f32.xlu0 %v5376
    %v5378 = vpop.xlane.xlu0 %5377
    %v5379 = vadd.f32 %v5285, %v5286
    %5380 = vadd.xlane.f32.xlu0 %v5379
    %v5381 = vpop.xlane.xlu0 %5380
    %v5382 = vadd.f32 %v5287, %v5288
    %5383 = vadd.xlane.f32.xlu0 %v5382
    %v5384 = vpop.xlane.xlu0 %5383
    %v5385 = vld [vmem:[%s4 + $0x7] ss:$0 sm:$0xff]
    %v5386 = vadd.f32 %v5291, %v5385
    %v5387 = vadd.f32 %v5294, %v5385
    %v5388 = vadd.f32 %v5297, %v5385
    %v5389 = vadd.f32 %v5300, %v5385
    %v5390 = vadd.f32 %v5303, %v5385
    %v5391 = vadd.f32 %v5306, %v5385
    %v5392 = vadd.f32 %v5309, %v5385
    %v5393 = vadd.f32 %v5312, %v5385
    %v5394 = vadd.f32 %v5315, %v5385
    %v5395 = vadd.f32 %v5318, %v5385
    %v5396 = vadd.f32 %v5321, %v5385
    %v5397 = vadd.f32 %v5324, %v5385
    %v5398 = vadd.f32 %v5327, %v5385
    %v5399 = vadd.f32 %v5330, %v5385
    %v5400 = vadd.f32 %v5333, %v5385
    %v5401 = vadd.f32 %v5336, %v5385
    %v5402 = vadd.f32 %v5339, %v5385
    %v5403 = vadd.f32 %v5342, %v5385
    %v5404 = vadd.f32 %v5345, %v5385
    %v5405 = vadd.f32 %v5348, %v5385
    %v5406 = vadd.f32 %v5351, %v5385
    %v5407 = vadd.f32 %v5354, %v5385
    %v5408 = vadd.f32 %v5357, %v5385
    %v5409 = vadd.f32 %v5360, %v5385
    %v5410 = vadd.f32 %v5363, %v5385
    %v5411 = vadd.f32 %v5366, %v5385
    %v5412 = vadd.f32 %v5369, %v5385
    %v5413 = vadd.f32 %v5372, %v5385
    %v5414 = vadd.f32 %v5375, %v5385
    %v5415 = vadd.f32 %v5378, %v5385
    %v5416 = vadd.f32 %v5381, %v5385
    %v5417 = vadd.f32 %v5384, %v5385
    %v5418 = vxor.u32 %v5386, 2147483648
    %v5419 = vxor.u32 %v5387, 2147483648
    %v5420 = vxor.u32 %v5388, 2147483648
    %v5421 = vxor.u32 %v5389, 2147483648
    %v5422 = vxor.u32 %v5390, 2147483648
    %v5423 = vxor.u32 %v5391, 2147483648
    %v5424 = vxor.u32 %v5392, 2147483648
    %v5425 = vxor.u32 %v5393, 2147483648
    %v5426 = vxor.u32 %v5394, 2147483648
    %v5427 = vxor.u32 %v5395, 2147483648
    %v5428 = vxor.u32 %v5396, 2147483648
    %v5429 = vxor.u32 %v5397, 2147483648
    %v5430 = vxor.u32 %v5398, 2147483648
    %v5431 = vxor.u32 %v5399, 2147483648
    %v5432 = vxor.u32 %v5400, 2147483648
    %v5433 = vxor.u32 %v5401, 2147483648
    %v5434 = vxor.u32 %v5402, 2147483648
    %v5435 = vxor.u32 %v5403, 2147483648
    %v5436 = vxor.u32 %v5404, 2147483648
    %v5437 = vxor.u32 %v5405, 2147483648
    %v5438 = vxor.u32 %v5406, 2147483648
    %v5439 = vxor.u32 %v5407, 2147483648
    %v5440 = vxor.u32 %v5408, 2147483648
    %v5441 = vxor.u32 %v5409, 2147483648
    %v5442 = vxor.u32 %v5410, 2147483648
    %v5443 = vxor.u32 %v5411, 2147483648
    %v5444 = vxor.u32 %v5412, 2147483648
    %v5445 = vxor.u32 %v5413, 2147483648
    %v5446 = vxor.u32 %v5414, 2147483648
    %v5447 = vxor.u32 %v5415, 2147483648
    %v5448 = vxor.u32 %v5416, 2147483648
    %v5449 = vxor.u32 %v5417, 2147483648
    %v5450 = vmul.f32 %v5418, 1.442695
    %v5451 = vpow.pop %v5450
    %v5452 = vmul.f32 %v5419, 1.442695
    %v5453 = vpow.pop %v5452
    %v5454 = vmul.f32 %v5420, 1.442695
    %v5455 = vpow.pop %v5454
    %v5456 = vmul.f32 %v5421, 1.442695
    %v5457 = vpow.pop %v5456
    %v5458 = vmul.f32 %v5422, 1.442695
    %v5459 = vpow.pop %v5458
    %v5460 = vmul.f32 %v5423, 1.442695
    %v5461 = vpow.pop %v5460
    %v5462 = vmul.f32 %v5424, 1.442695
    %v5463 = vpow.pop %v5462
    %v5464 = vmul.f32 %v5425, 1.442695
    %v5465 = vpow.pop %v5464
    %v5466 = vmul.f32 %v5426, 1.442695
    %v5467 = vpow.pop %v5466
    %v5468 = vmul.f32 %v5427, 1.442695
    %v5469 = vpow.pop %v5468
    %v5470 = vmul.f32 %v5428, 1.442695
    %v5471 = vpow.pop %v5470
    %v5472 = vmul.f32 %v5429, 1.442695
    %v5473 = vpow.pop %v5472
    %v5474 = vmul.f32 %v5430, 1.442695
    %v5475 = vpow.pop %v5474
    %v5476 = vmul.f32 %v5431, 1.442695
    %v5477 = vpow.pop %v5476
    %v5478 = vmul.f32 %v5432, 1.442695
    %v5479 = vpow.pop %v5478
    %v5480 = vmul.f32 %v5433, 1.442695
    %v5481 = vpow.pop %v5480
    %v5482 = vmul.f32 %v5434, 1.442695
    %v5483 = vpow.pop %v5482
    %v5484 = vmul.f32 %v5435, 1.442695
    %v5485 = vpow.pop %v5484
    %v5486 = vmul.f32 %v5436, 1.442695
    %v5487 = vpow.pop %v5486
    %v5488 = vmul.f32 %v5437, 1.442695
    %v5489 = vpow.pop %v5488
    %v5490 = vmul.f32 %v5438, 1.442695
    %v5491 = vpow.pop %v5490
    %v5492 = vmul.f32 %v5439, 1.442695
    %v5493 = vpow.pop %v5492
    %v5494 = vmul.f32 %v5440, 1.442695
    %v5495 = vpow.pop %v5494
    %v5496 = vmul.f32 %v5441, 1.442695
    %v5497 = vpow.pop %v5496
    %v5498 = vmul.f32 %v5442, 1.442695
    %v5499 = vpow.pop %v5498
    %v5500 = vmul.f32 %v5443, 1.442695
    %v5501 = vpow.pop %v5500
    %v5502 = vmul.f32 %v5444, 1.442695
    %v5503 = vpow.pop %v5502
    %v5504 = vmul.f32 %v5445, 1.442695
    %v5505 = vpow.pop %v5504
    %v5506 = vmul.f32 %v5446, 1.442695
    %v5507 = vpow.pop %v5506
    %v5508 = vmul.f32 %v5447, 1.442695
    %v5509 = vpow.pop %v5508
    %v5510 = vmul.f32 %v5448, 1.442695
    %v5511 = vpow.pop %v5510
    %v5512 = vmul.f32 %v5449, 1.442695
    %v5513 = vpow.pop %v5512
    %v5514 = vadd.f32 %v5451, 1.0
    %v5515 = vadd.f32 %v5453, 1.0
    %v5516 = vadd.f32 %v5455, 1.0
    %v5517 = vadd.f32 %v5457, 1.0
    %v5518 = vadd.f32 %v5459, 1.0
    %v5519 = vadd.f32 %v5461, 1.0
    %v5520 = vadd.f32 %v5463, 1.0
    %v5521 = vadd.f32 %v5465, 1.0
    %v5522 = vadd.f32 %v5467, 1.0
    %v5523 = vadd.f32 %v5469, 1.0
    %v5524 = vadd.f32 %v5471, 1.0
    %v5525 = vadd.f32 %v5473, 1.0
    %v5526 = vadd.f32 %v5475, 1.0
    %v5527 = vadd.f32 %v5477, 1.0
    %v5528 = vadd.f32 %v5479, 1.0
    %v5529 = vadd.f32 %v5481, 1.0
    %v5530 = vadd.f32 %v5483, 1.0
    %v5531 = vadd.f32 %v5485, 1.0
    %v5532 = vadd.f32 %v5487, 1.0
    %v5533 = vadd.f32 %v5489, 1.0
    %v5534 = vadd.f32 %v5491, 1.0
    %v5535 = vadd.f32 %v5493, 1.0
    %v5536 = vadd.f32 %v5495, 1.0
    %v5537 = vadd.f32 %v5497, 1.0
    %v5538 = vadd.f32 %v5499, 1.0
    %v5539 = vadd.f32 %v5501, 1.0
    %v5540 = vadd.f32 %v5503, 1.0
    %v5541 = vadd.f32 %v5505, 1.0
    %v5542 = vadd.f32 %v5507, 1.0
    %v5543 = vadd.f32 %v5509, 1.0
    %v5544 = vadd.f32 %v5511, 1.0
    %v5545 = vadd.f32 %v5513, 1.0
    %v5546 = vrcp.pop %v5514
    %v5547 = vmul.f32 %v5514, %v5546
    %v5548 = vsub.f32 1.0, %v5547
    %v5549 = vmul.f32 %v5546, %v5548
    %v5550 = vadd.f32 %v5546, %v5549
    %vm5551 = vweird.f32 %v5514
    %vm5552 = vweird.f32 %v5546
    %vm5553 = vmor %vm5551, %vm5552
    %v5554 = vsel %vm5553, %v5546, %v5550
    %v5555 = vand.u32 2147483647, %v5514
    %vm5556 = vcmp.eq.f32.partialorder %v5555, 8.507059e+37
    %v5557 = vand.u32 %v5514, 2147483648
    %v5558 = vor.u32 1.1754944e-38, %v5557
    %v5559 = vsel %vm5556, %v5558, %v5554
    %v5560 = vmul.f32 1.0, %v5559
    %v5561 = vrcp.pop %v5515
    %v5562 = vmul.f32 %v5515, %v5561
    %v5563 = vsub.f32 1.0, %v5562
    %v5564 = vmul.f32 %v5561, %v5563
    %v5565 = vadd.f32 %v5561, %v5564
    %vm5566 = vweird.f32 %v5515
    %vm5567 = vweird.f32 %v5561
    %vm5568 = vmor %vm5566, %vm5567
    %v5569 = vsel %vm5568, %v5561, %v5565
    %v5570 = vand.u32 2147483647, %v5515
    %vm5571 = vcmp.eq.f32.partialorder %v5570, 8.507059e+37
    %v5572 = vand.u32 %v5515, 2147483648
    %v5573 = vor.u32 1.1754944e-38, %v5572
    %v5574 = vsel %vm5571, %v5573, %v5569
    %v5575 = vmul.f32 1.0, %v5574
    %v5576 = vrcp.pop %v5516
    %v5577 = vmul.f32 %v5516, %v5576
    %v5578 = vsub.f32 1.0, %v5577
    %v5579 = vmul.f32 %v5576, %v5578
    %v5580 = vadd.f32 %v5576, %v5579
    %vm5581 = vweird.f32 %v5516
    %vm5582 = vweird.f32 %v5576
    %vm5583 = vmor %vm5581, %vm5582
    %v5584 = vsel %vm5583, %v5576, %v5580
    %v5585 = vand.u32 2147483647, %v5516
    %vm5586 = vcmp.eq.f32.partialorder %v5585, 8.507059e+37
    %v5587 = vand.u32 %v5516, 2147483648
    %v5588 = vor.u32 1.1754944e-38, %v5587
    %v5589 = vsel %vm5586, %v5588, %v5584
    %v5590 = vmul.f32 1.0, %v5589
    %v5591 = vrcp.pop %v5517
    %v5592 = vmul.f32 %v5517, %v5591
    %v5593 = vsub.f32 1.0, %v5592
    %v5594 = vmul.f32 %v5591, %v5593
    %v5595 = vadd.f32 %v5591, %v5594
    %vm5596 = vweird.f32 %v5517
    %vm5597 = vweird.f32 %v5591
    %vm5598 = vmor %vm5596, %vm5597
    %v5599 = vsel %vm5598, %v5591, %v5595
    %v5600 = vand.u32 2147483647, %v5517
    %vm5601 = vcmp.eq.f32.partialorder %v5600, 8.507059e+37
    %v5602 = vand.u32 %v5517, 2147483648
    %v5603 = vor.u32 1.1754944e-38, %v5602
    %v5604 = vsel %vm5601, %v5603, %v5599
    %v5605 = vmul.f32 1.0, %v5604
    %v5606 = vrcp.pop %v5518
    %v5607 = vmul.f32 %v5518, %v5606
    %v5608 = vsub.f32 1.0, %v5607
    %v5609 = vmul.f32 %v5606, %v5608
    %v5610 = vadd.f32 %v5606, %v5609
    %vm5611 = vweird.f32 %v5518
    %vm5612 = vweird.f32 %v5606
    %vm5613 = vmor %vm5611, %vm5612
    %v5614 = vsel %vm5613, %v5606, %v5610
    %v5615 = vand.u32 2147483647, %v5518
    %vm5616 = vcmp.eq.f32.partialorder %v5615, 8.507059e+37
    %v5617 = vand.u32 %v5518, 2147483648
    %v5618 = vor.u32 1.1754944e-38, %v5617
    %v5619 = vsel %vm5616, %v5618, %v5614
    %v5620 = vmul.f32 1.0, %v5619
    %v5621 = vrcp.pop %v5519
    %v5622 = vmul.f32 %v5519, %v5621
    %v5623 = vsub.f32 1.0, %v5622
    %v5624 = vmul.f32 %v5621, %v5623
    %v5625 = vadd.f32 %v5621, %v5624
    %vm5626 = vweird.f32 %v5519
    %vm5627 = vweird.f32 %v5621
    %vm5628 = vmor %vm5626, %vm5627
    %v5629 = vsel %vm5628, %v5621, %v5625
    %v5630 = vand.u32 2147483647, %v5519
    %vm5631 = vcmp.eq.f32.partialorder %v5630, 8.507059e+37
    %v5632 = vand.u32 %v5519, 2147483648
    %v5633 = vor.u32 1.1754944e-38, %v5632
    %v5634 = vsel %vm5631, %v5633, %v5629
    %v5635 = vmul.f32 1.0, %v5634
    %v5636 = vrcp.pop %v5520
    %v5637 = vmul.f32 %v5520, %v5636
    %v5638 = vsub.f32 1.0, %v5637
    %v5639 = vmul.f32 %v5636, %v5638
    %v5640 = vadd.f32 %v5636, %v5639
    %vm5641 = vweird.f32 %v5520
    %vm5642 = vweird.f32 %v5636
    %vm5643 = vmor %vm5641, %vm5642
    %v5644 = vsel %vm5643, %v5636, %v5640
    %v5645 = vand.u32 2147483647, %v5520
    %vm5646 = vcmp.eq.f32.partialorder %v5645, 8.507059e+37
    %v5647 = vand.u32 %v5520, 2147483648
    %v5648 = vor.u32 1.1754944e-38, %v5647
    %v5649 = vsel %vm5646, %v5648, %v5644
    %v5650 = vmul.f32 1.0, %v5649
    %v5651 = vrcp.pop %v5521
    %v5652 = vmul.f32 %v5521, %v5651
    %v5653 = vsub.f32 1.0, %v5652
    %v5654 = vmul.f32 %v5651, %v5653
    %v5655 = vadd.f32 %v5651, %v5654
    %vm5656 = vweird.f32 %v5521
    %vm5657 = vweird.f32 %v5651
    %vm5658 = vmor %vm5656, %vm5657
    %v5659 = vsel %vm5658, %v5651, %v5655
    %v5660 = vand.u32 2147483647, %v5521
    %vm5661 = vcmp.eq.f32.partialorder %v5660, 8.507059e+37
    %v5662 = vand.u32 %v5521, 2147483648
    %v5663 = vor.u32 1.1754944e-38, %v5662
    %v5664 = vsel %vm5661, %v5663, %v5659
    %v5665 = vmul.f32 1.0, %v5664
    %v5666 = vrcp.pop %v5522
    %v5667 = vmul.f32 %v5522, %v5666
    %v5668 = vsub.f32 1.0, %v5667
    %v5669 = vmul.f32 %v5666, %v5668
    %v5670 = vadd.f32 %v5666, %v5669
    %vm5671 = vweird.f32 %v5522
    %vm5672 = vweird.f32 %v5666
    %vm5673 = vmor %vm5671, %vm5672
    %v5674 = vsel %vm5673, %v5666, %v5670
    %v5675 = vand.u32 2147483647, %v5522
    %vm5676 = vcmp.eq.f32.partialorder %v5675, 8.507059e+37
    %v5677 = vand.u32 %v5522, 2147483648
    %v5678 = vor.u32 1.1754944e-38, %v5677
    %v5679 = vsel %vm5676, %v5678, %v5674
    %v5680 = vmul.f32 1.0, %v5679
    %v5681 = vrcp.pop %v5523
    %v5682 = vmul.f32 %v5523, %v5681
    %v5683 = vsub.f32 1.0, %v5682
    %v5684 = vmul.f32 %v5681, %v5683
    %v5685 = vadd.f32 %v5681, %v5684
    %vm5686 = vweird.f32 %v5523
    %vm5687 = vweird.f32 %v5681
    %vm5688 = vmor %vm5686, %vm5687
    %v5689 = vsel %vm5688, %v5681, %v5685
    %v5690 = vand.u32 2147483647, %v5523
    %vm5691 = vcmp.eq.f32.partialorder %v5690, 8.507059e+37
    %v5692 = vand.u32 %v5523, 2147483648
    %v5693 = vor.u32 1.1754944e-38, %v5692
    %v5694 = vsel %vm5691, %v5693, %v5689
    %v5695 = vmul.f32 1.0, %v5694
    %v5696 = vrcp.pop %v5524
    %v5697 = vmul.f32 %v5524, %v5696
    %v5698 = vsub.f32 1.0, %v5697
    %v5699 = vmul.f32 %v5696, %v5698
    %v5700 = vadd.f32 %v5696, %v5699
    %vm5701 = vweird.f32 %v5524
    %vm5702 = vweird.f32 %v5696
    %vm5703 = vmor %vm5701, %vm5702
    %v5704 = vsel %vm5703, %v5696, %v5700
    %v5705 = vand.u32 2147483647, %v5524
    %vm5706 = vcmp.eq.f32.partialorder %v5705, 8.507059e+37
    %v5707 = vand.u32 %v5524, 2147483648
    %v5708 = vor.u32 1.1754944e-38, %v5707
    %v5709 = vsel %vm5706, %v5708, %v5704
    %v5710 = vmul.f32 1.0, %v5709
    %v5711 = vrcp.pop %v5525
    %v5712 = vmul.f32 %v5525, %v5711
    %v5713 = vsub.f32 1.0, %v5712
    %v5714 = vmul.f32 %v5711, %v5713
    %v5715 = vadd.f32 %v5711, %v5714
    %vm5716 = vweird.f32 %v5525
    %vm5717 = vweird.f32 %v5711
    %vm5718 = vmor %vm5716, %vm5717
    %v5719 = vsel %vm5718, %v5711, %v5715
    %v5720 = vand.u32 2147483647, %v5525
    %vm5721 = vcmp.eq.f32.partialorder %v5720, 8.507059e+37
    %v5722 = vand.u32 %v5525, 2147483648
    %v5723 = vor.u32 1.1754944e-38, %v5722
    %v5724 = vsel %vm5721, %v5723, %v5719
    %v5725 = vmul.f32 1.0, %v5724
    %v5726 = vrcp.pop %v5526
    %v5727 = vmul.f32 %v5526, %v5726
    %v5728 = vsub.f32 1.0, %v5727
    %v5729 = vmul.f32 %v5726, %v5728
    %v5730 = vadd.f32 %v5726, %v5729
    %vm5731 = vweird.f32 %v5526
    %vm5732 = vweird.f32 %v5726
    %vm5733 = vmor %vm5731, %vm5732
    %v5734 = vsel %vm5733, %v5726, %v5730
    %v5735 = vand.u32 2147483647, %v5526
    %vm5736 = vcmp.eq.f32.partialorder %v5735, 8.507059e+37
    %v5737 = vand.u32 %v5526, 2147483648
    %v5738 = vor.u32 1.1754944e-38, %v5737
    %v5739 = vsel %vm5736, %v5738, %v5734
    %v5740 = vmul.f32 1.0, %v5739
    %v5741 = vrcp.pop %v5527
    %v5742 = vmul.f32 %v5527, %v5741
    %v5743 = vsub.f32 1.0, %v5742
    %v5744 = vmul.f32 %v5741, %v5743
    %v5745 = vadd.f32 %v5741, %v5744
    %vm5746 = vweird.f32 %v5527
    %vm5747 = vweird.f32 %v5741
    %vm5748 = vmor %vm5746, %vm5747
    %v5749 = vsel %vm5748, %v5741, %v5745
    %v5750 = vand.u32 2147483647, %v5527
    %vm5751 = vcmp.eq.f32.partialorder %v5750, 8.507059e+37
    %v5752 = vand.u32 %v5527, 2147483648
    %v5753 = vor.u32 1.1754944e-38, %v5752
    %v5754 = vsel %vm5751, %v5753, %v5749
    %v5755 = vmul.f32 1.0, %v5754
    %v5756 = vrcp.pop %v5528
    %v5757 = vmul.f32 %v5528, %v5756
    %v5758 = vsub.f32 1.0, %v5757
    %v5759 = vmul.f32 %v5756, %v5758
    %v5760 = vadd.f32 %v5756, %v5759
    %vm5761 = vweird.f32 %v5528
    %vm5762 = vweird.f32 %v5756
    %vm5763 = vmor %vm5761, %vm5762
    %v5764 = vsel %vm5763, %v5756, %v5760
    %v5765 = vand.u32 2147483647, %v5528
    %vm5766 = vcmp.eq.f32.partialorder %v5765, 8.507059e+37
    %v5767 = vand.u32 %v5528, 2147483648
    %v5768 = vor.u32 1.1754944e-38, %v5767
    %v5769 = vsel %vm5766, %v5768, %v5764
    %v5770 = vmul.f32 1.0, %v5769
    %v5771 = vrcp.pop %v5529
    %v5772 = vmul.f32 %v5529, %v5771
    %v5773 = vsub.f32 1.0, %v5772
    %v5774 = vmul.f32 %v5771, %v5773
    %v5775 = vadd.f32 %v5771, %v5774
    %vm5776 = vweird.f32 %v5529
    %vm5777 = vweird.f32 %v5771
    %vm5778 = vmor %vm5776, %vm5777
    %v5779 = vsel %vm5778, %v5771, %v5775
    %v5780 = vand.u32 2147483647, %v5529
    %vm5781 = vcmp.eq.f32.partialorder %v5780, 8.507059e+37
    %v5782 = vand.u32 %v5529, 2147483648
    %v5783 = vor.u32 1.1754944e-38, %v5782
    %v5784 = vsel %vm5781, %v5783, %v5779
    %v5785 = vmul.f32 1.0, %v5784
    %v5786 = vrcp.pop %v5530
    %v5787 = vmul.f32 %v5530, %v5786
    %v5788 = vsub.f32 1.0, %v5787
    %v5789 = vmul.f32 %v5786, %v5788
    %v5790 = vadd.f32 %v5786, %v5789
    %vm5791 = vweird.f32 %v5530
    %vm5792 = vweird.f32 %v5786
    %vm5793 = vmor %vm5791, %vm5792
    %v5794 = vsel %vm5793, %v5786, %v5790
    %v5795 = vand.u32 2147483647, %v5530
    %vm5796 = vcmp.eq.f32.partialorder %v5795, 8.507059e+37
    %v5797 = vand.u32 %v5530, 2147483648
    %v5798 = vor.u32 1.1754944e-38, %v5797
    %v5799 = vsel %vm5796, %v5798, %v5794
    %v5800 = vmul.f32 1.0, %v5799
    %v5801 = vrcp.pop %v5531
    %v5802 = vmul.f32 %v5531, %v5801
    %v5803 = vsub.f32 1.0, %v5802
    %v5804 = vmul.f32 %v5801, %v5803
    %v5805 = vadd.f32 %v5801, %v5804
    %vm5806 = vweird.f32 %v5531
    %vm5807 = vweird.f32 %v5801
    %vm5808 = vmor %vm5806, %vm5807
    %v5809 = vsel %vm5808, %v5801, %v5805
    %v5810 = vand.u32 2147483647, %v5531
    %vm5811 = vcmp.eq.f32.partialorder %v5810, 8.507059e+37
    %v5812 = vand.u32 %v5531, 2147483648
    %v5813 = vor.u32 1.1754944e-38, %v5812
    %v5814 = vsel %vm5811, %v5813, %v5809
    %v5815 = vmul.f32 1.0, %v5814
    %v5816 = vrcp.pop %v5532
    %v5817 = vmul.f32 %v5532, %v5816
    %v5818 = vsub.f32 1.0, %v5817
    %v5819 = vmul.f32 %v5816, %v5818
    %v5820 = vadd.f32 %v5816, %v5819
    %vm5821 = vweird.f32 %v5532
    %vm5822 = vweird.f32 %v5816
    %vm5823 = vmor %vm5821, %vm5822
    %v5824 = vsel %vm5823, %v5816, %v5820
    %v5825 = vand.u32 2147483647, %v5532
    %vm5826 = vcmp.eq.f32.partialorder %v5825, 8.507059e+37
    %v5827 = vand.u32 %v5532, 2147483648
    %v5828 = vor.u32 1.1754944e-38, %v5827
    %v5829 = vsel %vm5826, %v5828, %v5824
    %v5830 = vmul.f32 1.0, %v5829
    %v5831 = vrcp.pop %v5533
    %v5832 = vmul.f32 %v5533, %v5831
    %v5833 = vsub.f32 1.0, %v5832
    %v5834 = vmul.f32 %v5831, %v5833
    %v5835 = vadd.f32 %v5831, %v5834
    %vm5836 = vweird.f32 %v5533
    %vm5837 = vweird.f32 %v5831
    %vm5838 = vmor %vm5836, %vm5837
    %v5839 = vsel %vm5838, %v5831, %v5835
    %v5840 = vand.u32 2147483647, %v5533
    %vm5841 = vcmp.eq.f32.partialorder %v5840, 8.507059e+37
    %v5842 = vand.u32 %v5533, 2147483648
    %v5843 = vor.u32 1.1754944e-38, %v5842
    %v5844 = vsel %vm5841, %v5843, %v5839
    %v5845 = vmul.f32 1.0, %v5844
    %v5846 = vrcp.pop %v5534
    %v5847 = vmul.f32 %v5534, %v5846
    %v5848 = vsub.f32 1.0, %v5847
    %v5849 = vmul.f32 %v5846, %v5848
    %v5850 = vadd.f32 %v5846, %v5849
    %vm5851 = vweird.f32 %v5534
    %vm5852 = vweird.f32 %v5846
    %vm5853 = vmor %vm5851, %vm5852
    %v5854 = vsel %vm5853, %v5846, %v5850
    %v5855 = vand.u32 2147483647, %v5534
    %vm5856 = vcmp.eq.f32.partialorder %v5855, 8.507059e+37
    %v5857 = vand.u32 %v5534, 2147483648
    %v5858 = vor.u32 1.1754944e-38, %v5857
    %v5859 = vsel %vm5856, %v5858, %v5854
    %v5860 = vmul.f32 1.0, %v5859
    %v5861 = vrcp.pop %v5535
    %v5862 = vmul.f32 %v5535, %v5861
    %v5863 = vsub.f32 1.0, %v5862
    %v5864 = vmul.f32 %v5861, %v5863
    %v5865 = vadd.f32 %v5861, %v5864
    %vm5866 = vweird.f32 %v5535
    %vm5867 = vweird.f32 %v5861
    %vm5868 = vmor %vm5866, %vm5867
    %v5869 = vsel %vm5868, %v5861, %v5865
    %v5870 = vand.u32 2147483647, %v5535
    %vm5871 = vcmp.eq.f32.partialorder %v5870, 8.507059e+37
    %v5872 = vand.u32 %v5535, 2147483648
    %v5873 = vor.u32 1.1754944e-38, %v5872
    %v5874 = vsel %vm5871, %v5873, %v5869
    %v5875 = vmul.f32 1.0, %v5874
    %v5876 = vrcp.pop %v5536
    %v5877 = vmul.f32 %v5536, %v5876
    %v5878 = vsub.f32 1.0, %v5877
    %v5879 = vmul.f32 %v5876, %v5878
    %v5880 = vadd.f32 %v5876, %v5879
    %vm5881 = vweird.f32 %v5536
    %vm5882 = vweird.f32 %v5876
    %vm5883 = vmor %vm5881, %vm5882
    %v5884 = vsel %vm5883, %v5876, %v5880
    %v5885 = vand.u32 2147483647, %v5536
    %vm5886 = vcmp.eq.f32.partialorder %v5885, 8.507059e+37
    %v5887 = vand.u32 %v5536, 2147483648
    %v5888 = vor.u32 1.1754944e-38, %v5887
    %v5889 = vsel %vm5886, %v5888, %v5884
    %v5890 = vmul.f32 1.0, %v5889
    %v5891 = vrcp.pop %v5537
    %v5892 = vmul.f32 %v5537, %v5891
    %v5893 = vsub.f32 1.0, %v5892
    %v5894 = vmul.f32 %v5891, %v5893
    %v5895 = vadd.f32 %v5891, %v5894
    %vm5896 = vweird.f32 %v5537
    %vm5897 = vweird.f32 %v5891
    %vm5898 = vmor %vm5896, %vm5897
    %v5899 = vsel %vm5898, %v5891, %v5895
    %v5900 = vand.u32 2147483647, %v5537
    %vm5901 = vcmp.eq.f32.partialorder %v5900, 8.507059e+37
    %v5902 = vand.u32 %v5537, 2147483648
    %v5903 = vor.u32 1.1754944e-38, %v5902
    %v5904 = vsel %vm5901, %v5903, %v5899
    %v5905 = vmul.f32 1.0, %v5904
    %v5906 = vrcp.pop %v5538
    %v5907 = vmul.f32 %v5538, %v5906
    %v5908 = vsub.f32 1.0, %v5907
    %v5909 = vmul.f32 %v5906, %v5908
    %v5910 = vadd.f32 %v5906, %v5909
    %vm5911 = vweird.f32 %v5538
    %vm5912 = vweird.f32 %v5906
    %vm5913 = vmor %vm5911, %vm5912
    %v5914 = vsel %vm5913, %v5906, %v5910
    %v5915 = vand.u32 2147483647, %v5538
    %vm5916 = vcmp.eq.f32.partialorder %v5915, 8.507059e+37
    %v5917 = vand.u32 %v5538, 2147483648
    %v5918 = vor.u32 1.1754944e-38, %v5917
    %v5919 = vsel %vm5916, %v5918, %v5914
    %v5920 = vmul.f32 1.0, %v5919
    %v5921 = vrcp.pop %v5539
    %v5922 = vmul.f32 %v5539, %v5921
    %v5923 = vsub.f32 1.0, %v5922
    %v5924 = vmul.f32 %v5921, %v5923
    %v5925 = vadd.f32 %v5921, %v5924
    %vm5926 = vweird.f32 %v5539
    %vm5927 = vweird.f32 %v5921
    %vm5928 = vmor %vm5926, %vm5927
    %v5929 = vsel %vm5928, %v5921, %v5925
    %v5930 = vand.u32 2147483647, %v5539
    %vm5931 = vcmp.eq.f32.partialorder %v5930, 8.507059e+37
    %v5932 = vand.u32 %v5539, 2147483648
    %v5933 = vor.u32 1.1754944e-38, %v5932
    %v5934 = vsel %vm5931, %v5933, %v5929
    %v5935 = vmul.f32 1.0, %v5934
    %v5936 = vrcp.pop %v5540
    %v5937 = vmul.f32 %v5540, %v5936
    %v5938 = vsub.f32 1.0, %v5937
    %v5939 = vmul.f32 %v5936, %v5938
    %v5940 = vadd.f32 %v5936, %v5939
    %vm5941 = vweird.f32 %v5540
    %vm5942 = vweird.f32 %v5936
    %vm5943 = vmor %vm5941, %vm5942
    %v5944 = vsel %vm5943, %v5936, %v5940
    %v5945 = vand.u32 2147483647, %v5540
    %vm5946 = vcmp.eq.f32.partialorder %v5945, 8.507059e+37
    %v5947 = vand.u32 %v5540, 2147483648
    %v5948 = vor.u32 1.1754944e-38, %v5947
    %v5949 = vsel %vm5946, %v5948, %v5944
    %v5950 = vmul.f32 1.0, %v5949
    %v5951 = vrcp.pop %v5541
    %v5952 = vmul.f32 %v5541, %v5951
    %v5953 = vsub.f32 1.0, %v5952
    %v5954 = vmul.f32 %v5951, %v5953
    %v5955 = vadd.f32 %v5951, %v5954
    %vm5956 = vweird.f32 %v5541
    %vm5957 = vweird.f32 %v5951
    %vm5958 = vmor %vm5956, %vm5957
    %v5959 = vsel %vm5958, %v5951, %v5955
    %v5960 = vand.u32 2147483647, %v5541
    %vm5961 = vcmp.eq.f32.partialorder %v5960, 8.507059e+37
    %v5962 = vand.u32 %v5541, 2147483648
    %v5963 = vor.u32 1.1754944e-38, %v5962
    %v5964 = vsel %vm5961, %v5963, %v5959
    %v5965 = vmul.f32 1.0, %v5964
    %v5966 = vrcp.pop %v5542
    %v5967 = vmul.f32 %v5542, %v5966
    %v5968 = vsub.f32 1.0, %v5967
    %v5969 = vmul.f32 %v5966, %v5968
    %v5970 = vadd.f32 %v5966, %v5969
    %vm5971 = vweird.f32 %v5542
    %vm5972 = vweird.f32 %v5966
    %vm5973 = vmor %vm5971, %vm5972
    %v5974 = vsel %vm5973, %v5966, %v5970
    %v5975 = vand.u32 2147483647, %v5542
    %vm5976 = vcmp.eq.f32.partialorder %v5975, 8.507059e+37
    %v5977 = vand.u32 %v5542, 2147483648
    %v5978 = vor.u32 1.1754944e-38, %v5977
    %v5979 = vsel %vm5976, %v5978, %v5974
    %v5980 = vmul.f32 1.0, %v5979
    %v5981 = vrcp.pop %v5543
    %v5982 = vmul.f32 %v5543, %v5981
    %v5983 = vsub.f32 1.0, %v5982
    %v5984 = vmul.f32 %v5981, %v5983
    %v5985 = vadd.f32 %v5981, %v5984
    %vm5986 = vweird.f32 %v5543
    %vm5987 = vweird.f32 %v5981
    %vm5988 = vmor %vm5986, %vm5987
    %v5989 = vsel %vm5988, %v5981, %v5985
    %v5990 = vand.u32 2147483647, %v5543
    %vm5991 = vcmp.eq.f32.partialorder %v5990, 8.507059e+37
    %v5992 = vand.u32 %v5543, 2147483648
    %v5993 = vor.u32 1.1754944e-38, %v5992
    %v5994 = vsel %vm5991, %v5993, %v5989
    %v5995 = vmul.f32 1.0, %v5994
    %v5996 = vrcp.pop %v5544
    %v5997 = vmul.f32 %v5544, %v5996
    %v5998 = vsub.f32 1.0, %v5997
    %v5999 = vmul.f32 %v5996, %v5998
    %v6000 = vadd.f32 %v5996, %v5999
    %vm6001 = vweird.f32 %v5544
    %vm6002 = vweird.f32 %v5996
    %vm6003 = vmor %vm6001, %vm6002
    %v6004 = vsel %vm6003, %v5996, %v6000
    %v6005 = vand.u32 2147483647, %v5544
    %vm6006 = vcmp.eq.f32.partialorder %v6005, 8.507059e+37
    %v6007 = vand.u32 %v5544, 2147483648
    %v6008 = vor.u32 1.1754944e-38, %v6007
    %v6009 = vsel %vm6006, %v6008, %v6004
    %v6010 = vmul.f32 1.0, %v6009
    %v6011 = vrcp.pop %v5545
    %v6012 = vmul.f32 %v5545, %v6011
    %v6013 = vsub.f32 1.0, %v6012
    %v6014 = vmul.f32 %v6011, %v6013
    %v6015 = vadd.f32 %v6011, %v6014
    %vm6016 = vweird.f32 %v5545
    %vm6017 = vweird.f32 %v6011
    %vm6018 = vmor %vm6016, %vm6017
    %v6019 = vsel %vm6018, %v6011, %v6015
    %v6020 = vand.u32 2147483647, %v5545
    %vm6021 = vcmp.eq.f32.partialorder %v6020, 8.507059e+37
    %v6022 = vand.u32 %v5545, 2147483648
    %v6023 = vor.u32 1.1754944e-38, %v6022
    %v6024 = vsel %vm6021, %v6023, %v6019
    %v6025 = vmul.f32 1.0, %v6024
    %v6058 = vrot.slane %v5560, 1
    %v6059 = vrot.slane %v5560, 2
    %v6060 = vrot.slane %v5560, 3
    %v6061 = vrot.slane %v5560, 4
    %v6062 = vrot.slane %v5560, 5
    %v6063 = vrot.slane %v5560, 6
    %v6064 = vrot.slane %v5560, 7
    %v6065 = vrot.slane %v5575, 1
    %v6066 = vrot.slane %v5575, 2
    %v6067 = vrot.slane %v5575, 3
    %v6068 = vrot.slane %v5575, 4
    %v6069 = vrot.slane %v5575, 5
    %v6070 = vrot.slane %v5575, 6
    %v6071 = vrot.slane %v5575, 7
    %v6072 = vrot.slane %v5590, 1
    %v6073 = vrot.slane %v5590, 2
    %v6074 = vrot.slane %v5590, 3
    %v6075 = vrot.slane %v5590, 4
    %v6076 = vrot.slane %v5590, 5
    %v6077 = vrot.slane %v5590, 6
    %v6078 = vrot.slane %v5590, 7
    %v6079 = vrot.slane %v5605, 1
    %v6080 = vrot.slane %v5605, 2
    %v6081 = vrot.slane %v5605, 3
    %v6082 = vrot.slane %v5605, 4
    %v6083 = vrot.slane %v5605, 5
    %v6084 = vrot.slane %v5605, 6
    %v6085 = vrot.slane %v5605, 7
    %v6086 = vrot.slane %v5620, 1
    %v6087 = vrot.slane %v5620, 2
    %v6088 = vrot.slane %v5620, 3
    %v6089 = vrot.slane %v5620, 4
    %v6090 = vrot.slane %v5620, 5
    %v6091 = vrot.slane %v5620, 6
    %v6092 = vrot.slane %v5620, 7
    %v6093 = vrot.slane %v5635, 1
    %v6094 = vrot.slane %v5635, 2
    %v6095 = vrot.slane %v5635, 3
    %v6096 = vrot.slane %v5635, 4
    %v6097 = vrot.slane %v5635, 5
    %v6098 = vrot.slane %v5635, 6
    %v6099 = vrot.slane %v5635, 7
    %v6100 = vrot.slane %v5650, 1
    %v6101 = vrot.slane %v5650, 2
    %v6102 = vrot.slane %v5650, 3
    %v6103 = vrot.slane %v5650, 4
    %v6104 = vrot.slane %v5650, 5
    %v6105 = vrot.slane %v5650, 6
    %v6106 = vrot.slane %v5650, 7
    %v6107 = vrot.slane %v5665, 1
    %v6108 = vrot.slane %v5665, 2
    %v6109 = vrot.slane %v5665, 3
    %v6110 = vrot.slane %v5665, 4
    %v6111 = vrot.slane %v5665, 5
    %v6112 = vrot.slane %v5665, 6
    %v6113 = vrot.slane %v5665, 7
    %v6114 = vrot.slane %v5680, 1
    %v6115 = vrot.slane %v5680, 2
    %v6116 = vrot.slane %v5680, 3
    %v6117 = vrot.slane %v5680, 4
    %v6118 = vrot.slane %v5680, 5
    %v6119 = vrot.slane %v5680, 6
    %v6120 = vrot.slane %v5680, 7
    %v6121 = vrot.slane %v5695, 1
    %v6122 = vrot.slane %v5695, 2
    %v6123 = vrot.slane %v5695, 3
    %v6124 = vrot.slane %v5695, 4
    %v6125 = vrot.slane %v5695, 5
    %v6126 = vrot.slane %v5695, 6
    %v6127 = vrot.slane %v5695, 7
    %v6128 = vrot.slane %v5710, 1
    %v6129 = vrot.slane %v5710, 2
    %v6130 = vrot.slane %v5710, 3
    %v6131 = vrot.slane %v5710, 4
    %v6132 = vrot.slane %v5710, 5
    %v6133 = vrot.slane %v5710, 6
    %v6134 = vrot.slane %v5710, 7
    %v6135 = vrot.slane %v5725, 1
    %v6136 = vrot.slane %v5725, 2
    %v6137 = vrot.slane %v5725, 3
    %v6138 = vrot.slane %v5725, 4
    %v6139 = vrot.slane %v5725, 5
    %v6140 = vrot.slane %v5725, 6
    %v6141 = vrot.slane %v5725, 7
    %v6142 = vrot.slane %v5740, 1
    %v6143 = vrot.slane %v5740, 2
    %v6144 = vrot.slane %v5740, 3
    %v6145 = vrot.slane %v5740, 4
    %v6146 = vrot.slane %v5740, 5
    %v6147 = vrot.slane %v5740, 6
    %v6148 = vrot.slane %v5740, 7
    %v6149 = vrot.slane %v5755, 1
    %v6150 = vrot.slane %v5755, 2
    %v6151 = vrot.slane %v5755, 3
    %v6152 = vrot.slane %v5755, 4
    %v6153 = vrot.slane %v5755, 5
    %v6154 = vrot.slane %v5755, 6
    %v6155 = vrot.slane %v5755, 7
    %v6156 = vrot.slane %v5770, 1
    %v6157 = vrot.slane %v5770, 2
    %v6158 = vrot.slane %v5770, 3
    %v6159 = vrot.slane %v5770, 4
    %v6160 = vrot.slane %v5770, 5
    %v6161 = vrot.slane %v5770, 6
    %v6162 = vrot.slane %v5770, 7
    %v6163 = vrot.slane %v5785, 1
    %v6164 = vrot.slane %v5785, 2
    %v6165 = vrot.slane %v5785, 3
    %v6166 = vrot.slane %v5785, 4
    %v6167 = vrot.slane %v5785, 5
    %v6168 = vrot.slane %v5785, 6
    %v6169 = vrot.slane %v5785, 7
    %v6170 = vrot.slane %v5800, 1
    %v6171 = vrot.slane %v5800, 2
    %v6172 = vrot.slane %v5800, 3
    %v6173 = vrot.slane %v5800, 4
    %v6174 = vrot.slane %v5800, 5
    %v6175 = vrot.slane %v5800, 6
    %v6176 = vrot.slane %v5800, 7
    %v6177 = vrot.slane %v5815, 1
    %v6178 = vrot.slane %v5815, 2
    %v6179 = vrot.slane %v5815, 3
    %v6180 = vrot.slane %v5815, 4
    %v6181 = vrot.slane %v5815, 5
    %v6182 = vrot.slane %v5815, 6
    %v6183 = vrot.slane %v5815, 7
    %v6184 = vrot.slane %v5830, 1
    %v6185 = vrot.slane %v5830, 2
    %v6186 = vrot.slane %v5830, 3
    %v6187 = vrot.slane %v5830, 4
    %v6188 = vrot.slane %v5830, 5
    %v6189 = vrot.slane %v5830, 6
    %v6190 = vrot.slane %v5830, 7
    %v6191 = vrot.slane %v5845, 1
    %v6192 = vrot.slane %v5845, 2
    %v6193 = vrot.slane %v5845, 3
    %v6194 = vrot.slane %v5845, 4
    %v6195 = vrot.slane %v5845, 5
    %v6196 = vrot.slane %v5845, 6
    %v6197 = vrot.slane %v5845, 7
    %v6198 = vrot.slane %v5860, 1
    %v6199 = vrot.slane %v5860, 2
    %v6200 = vrot.slane %v5860, 3
    %v6201 = vrot.slane %v5860, 4
    %v6202 = vrot.slane %v5860, 5
    %v6203 = vrot.slane %v5860, 6
    %v6204 = vrot.slane %v5860, 7
    %v6205 = vrot.slane %v5875, 1
    %v6206 = vrot.slane %v5875, 2
    %v6207 = vrot.slane %v5875, 3
    %v6208 = vrot.slane %v5875, 4
    %v6209 = vrot.slane %v5875, 5
    %v6210 = vrot.slane %v5875, 6
    %v6211 = vrot.slane %v5875, 7
    %v6212 = vrot.slane %v5890, 1
    %v6213 = vrot.slane %v5890, 2
    %v6214 = vrot.slane %v5890, 3
    %v6215 = vrot.slane %v5890, 4
    %v6216 = vrot.slane %v5890, 5
    %v6217 = vrot.slane %v5890, 6
    %v6218 = vrot.slane %v5890, 7
    %v6219 = vrot.slane %v5905, 1
    %v6220 = vrot.slane %v5905, 2
    %v6221 = vrot.slane %v5905, 3
    %v6222 = vrot.slane %v5905, 4
    %v6223 = vrot.slane %v5905, 5
    %v6224 = vrot.slane %v5905, 6
    %v6225 = vrot.slane %v5905, 7
    %v6226 = vrot.slane %v5920, 1
    %v6227 = vrot.slane %v5920, 2
    %v6228 = vrot.slane %v5920, 3
    %v6229 = vrot.slane %v5920, 4
    %v6230 = vrot.slane %v5920, 5
    %v6231 = vrot.slane %v5920, 6
    %v6232 = vrot.slane %v5920, 7
    %v6233 = vrot.slane %v5935, 1
    %v6234 = vrot.slane %v5935, 2
    %v6235 = vrot.slane %v5935, 3
    %v6236 = vrot.slane %v5935, 4
    %v6237 = vrot.slane %v5935, 5
    %v6238 = vrot.slane %v5935, 6
    %v6239 = vrot.slane %v5935, 7
    %v6240 = vrot.slane %v5950, 1
    %v6241 = vrot.slane %v5950, 2
    %v6242 = vrot.slane %v5950, 3
    %v6243 = vrot.slane %v5950, 4
    %v6244 = vrot.slane %v5950, 5
    %v6245 = vrot.slane %v5950, 6
    %v6246 = vrot.slane %v5950, 7
    %v6247 = vrot.slane %v5965, 1
    %v6248 = vrot.slane %v5965, 2
    %v6249 = vrot.slane %v5965, 3
    %v6250 = vrot.slane %v5965, 4
    %v6251 = vrot.slane %v5965, 5
    %v6252 = vrot.slane %v5965, 6
    %v6253 = vrot.slane %v5965, 7
    %v6254 = vrot.slane %v5980, 1
    %v6255 = vrot.slane %v5980, 2
    %v6256 = vrot.slane %v5980, 3
    %v6257 = vrot.slane %v5980, 4
    %v6258 = vrot.slane %v5980, 5
    %v6259 = vrot.slane %v5980, 6
    %v6260 = vrot.slane %v5980, 7
    %v6261 = vrot.slane %v5995, 1
    %v6262 = vrot.slane %v5995, 2
    %v6263 = vrot.slane %v5995, 3
    %v6264 = vrot.slane %v5995, 4
    %v6265 = vrot.slane %v5995, 5
    %v6266 = vrot.slane %v5995, 6
    %v6267 = vrot.slane %v5995, 7
    %v6268 = vrot.slane %v6010, 1
    %v6269 = vrot.slane %v6010, 2
    %v6270 = vrot.slane %v6010, 3
    %v6271 = vrot.slane %v6010, 4
    %v6272 = vrot.slane %v6010, 5
    %v6273 = vrot.slane %v6010, 6
    %v6274 = vrot.slane %v6010, 7
    %v6275 = vrot.slane %v6025, 1
    %v6276 = vrot.slane %v6025, 2
    %v6277 = vrot.slane %v6025, 3
    %v6278 = vrot.slane %v6025, 4
    %v6279 = vrot.slane %v6025, 5
    %v6280 = vrot.slane %v6025, 6
    %v6281 = vrot.slane %v6025, 7
    %6282 = vst [vmem:[#allocation1] ss:$9 sm:$0xff] %v5560
    %s6283 = scalar_lea.vmem [#allocation1], 1
    %6284 = vst [vmem:[%s6283] ss:$9 sm:$0xff] %v6058
    %s6285 = scalar_lea.vmem [#allocation1], 2
    %6286 = vst [vmem:[%s6285] ss:$9 sm:$0xff] %v6059
    %s6287 = scalar_lea.vmem [#allocation1], 3
    %6288 = vst [vmem:[%s6287] ss:$9 sm:$0xff] %v6060
    %s6289 = scalar_lea.vmem [#allocation1], 4
    %6290 = vst [vmem:[%s6289] ss:$9 sm:$0xff] %v6061
    %s6291 = scalar_lea.vmem [#allocation1], 5
    %6292 = vst [vmem:[%s6291] ss:$9 sm:$0xff] %v6062
    %s6293 = scalar_lea.vmem [#allocation1], 6
    %6294 = vst [vmem:[%s6293] ss:$9 sm:$0xff] %v6063
    %s6295 = scalar_lea.vmem [#allocation1], 7
    %6296 = vst [vmem:[%s6295] ss:$9 sm:$0xff] %v6064
    %v6297 = vld [vmem:[#allocation1] sm:$0xff]
    %6298 = vst [vmem:[#allocation1] ss:$9 sm:$0xff] %v5575
    %6299 = vst [vmem:[%s6283] ss:$9 sm:$0xff] %v6065
    %6300 = vst [vmem:[%s6285] ss:$9 sm:$0xff] %v6066
    %6301 = vst [vmem:[%s6287] ss:$9 sm:$0xff] %v6067
    %6302 = vst [vmem:[%s6289] ss:$9 sm:$0xff] %v6068
    %6303 = vst [vmem:[%s6291] ss:$9 sm:$0xff] %v6069
    %6304 = vst [vmem:[%s6293] ss:$9 sm:$0xff] %v6070
    %6305 = vst [vmem:[%s6295] ss:$9 sm:$0xff] %v6071
    %v6306 = vld [vmem:[#allocation1] sm:$0xff]
    %6307 = vst [vmem:[#allocation1] ss:$9 sm:$0xff] %v5590
    %6308 = vst [vmem:[%s6283] ss:$9 sm:$0xff] %v6072
    %6309 = vst [vmem:[%s6285] ss:$9 sm:$0xff] %v6073
    %6310 = vst [vmem:[%s6287] ss:$9 sm:$0xff] %v6074
    %6311 = vst [vmem:[%s6289] ss:$9 sm:$0xff] %v6075
    %6312 = vst [vmem:[%s6291] ss:$9 sm:$0xff] %v6076
    %6313 = vst [vmem:[%s6293] ss:$9 sm:$0xff] %v6077
    %6314 = vst [vmem:[%s6295] ss:$9 sm:$0xff] %v6078
    %v6315 = vld [vmem:[#allocation1] sm:$0xff]
    %6316 = vst [vmem:[#allocation1] ss:$9 sm:$0xff] %v5605
    %6317 = vst [vmem:[%s6283] ss:$9 sm:$0xff] %v6079
    %6318 = vst [vmem:[%s6285] ss:$9 sm:$0xff] %v6080
    %6319 = vst [vmem:[%s6287] ss:$9 sm:$0xff] %v6081
    %6320 = vst [vmem:[%s6289] ss:$9 sm:$0xff] %v6082
    %6321 = vst [vmem:[%s6291] ss:$9 sm:$0xff] %v6083
    %6322 = vst [vmem:[%s6293] ss:$9 sm:$0xff] %v6084
    %6323 = vst [vmem:[%s6295] ss:$9 sm:$0xff] %v6085
    %v6324 = vld [vmem:[#allocation1] sm:$0xff]
    %6325 = vst [vmem:[#allocation1] ss:$9 sm:$0xff] %v5620
    %6326 = vst [vmem:[%s6283] ss:$9 sm:$0xff] %v6086
    %6327 = vst [vmem:[%s6285] ss:$9 sm:$0xff] %v6087
    %6328 = vst [vmem:[%s6287] ss:$9 sm:$0xff] %v6088
    %6329 = vst [vmem:[%s6289] ss:$9 sm:$0xff] %v6089
    %6330 = vst [vmem:[%s6291] ss:$9 sm:$0xff] %v6090
    %6331 = vst [vmem:[%s6293] ss:$9 sm:$0xff] %v6091
    %6332 = vst [vmem:[%s6295] ss:$9 sm:$0xff] %v6092
    %v6333 = vld [vmem:[#allocation1] sm:$0xff]
    %6334 = vst [vmem:[#allocation1] ss:$9 sm:$0xff] %v5635
    %6335 = vst [vmem:[%s6283] ss:$9 sm:$0xff] %v6093
    %6336 = vst [vmem:[%s6285] ss:$9 sm:$0xff] %v6094
    %6337 = vst [vmem:[%s6287] ss:$9 sm:$0xff] %v6095
    %6338 = vst [vmem:[%s6289] ss:$9 sm:$0xff] %v6096
    %6339 = vst [vmem:[%s6291] ss:$9 sm:$0xff] %v6097
    %6340 = vst [vmem:[%s6293] ss:$9 sm:$0xff] %v6098
    %6341 = vst [vmem:[%s6295] ss:$9 sm:$0xff] %v6099
    %v6342 = vld [vmem:[#allocation1] sm:$0xff]
    %6343 = vst [vmem:[#allocation1] ss:$9 sm:$0xff] %v5650
    %6344 = vst [vmem:[%s6283] ss:$9 sm:$0xff] %v6100
    %6345 = vst [vmem:[%s6285] ss:$9 sm:$0xff] %v6101
    %6346 = vst [vmem:[%s6287] ss:$9 sm:$0xff] %v6102
    %6347 = vst [vmem:[%s6289] ss:$9 sm:$0xff] %v6103
    %6348 = vst [vmem:[%s6291] ss:$9 sm:$0xff] %v6104
    %6349 = vst [vmem:[%s6293] ss:$9 sm:$0xff] %v6105
    %6350 = vst [vmem:[%s6295] ss:$9 sm:$0xff] %v6106
    %v6351 = vld [vmem:[#allocation1] sm:$0xff]
    %6352 = vst [vmem:[#allocation1] ss:$9 sm:$0xff] %v5665
    %6353 = vst [vmem:[%s6283] ss:$9 sm:$0xff] %v6107
    %6354 = vst [vmem:[%s6285] ss:$9 sm:$0xff] %v6108
    %6355 = vst [vmem:[%s6287] ss:$9 sm:$0xff] %v6109
    %6356 = vst [vmem:[%s6289] ss:$9 sm:$0xff] %v6110
    %6357 = vst [vmem:[%s6291] ss:$9 sm:$0xff] %v6111
    %6358 = vst [vmem:[%s6293] ss:$9 sm:$0xff] %v6112
    %6359 = vst [vmem:[%s6295] ss:$9 sm:$0xff] %v6113
    %v6360 = vld [vmem:[#allocation1] sm:$0xff]
    %6361 = vst [vmem:[#allocation1] ss:$9 sm:$0xff] %v5680
    %6362 = vst [vmem:[%s6283] ss:$9 sm:$0xff] %v6114
    %6363 = vst [vmem:[%s6285] ss:$9 sm:$0xff] %v6115
    %6364 = vst [vmem:[%s6287] ss:$9 sm:$0xff] %v6116
    %6365 = vst [vmem:[%s6289] ss:$9 sm:$0xff] %v6117
    %6366 = vst [vmem:[%s6291] ss:$9 sm:$0xff] %v6118
    %6367 = vst [vmem:[%s6293] ss:$9 sm:$0xff] %v6119
    %6368 = vst [vmem:[%s6295] ss:$9 sm:$0xff] %v6120
    %v6369 = vld [vmem:[#allocation1] sm:$0xff]
    %6370 = vst [vmem:[#allocation1] ss:$9 sm:$0xff] %v5695
    %6371 = vst [vmem:[%s6283] ss:$9 sm:$0xff] %v6121
    %6372 = vst [vmem:[%s6285] ss:$9 sm:$0xff] %v6122
    %6373 = vst [vmem:[%s6287] ss:$9 sm:$0xff] %v6123
    %6374 = vst [vmem:[%s6289] ss:$9 sm:$0xff] %v6124
    %6375 = vst [vmem:[%s6291] ss:$9 sm:$0xff] %v6125
    %6376 = vst [vmem:[%s6293] ss:$9 sm:$0xff] %v6126
    %6377 = vst [vmem:[%s6295] ss:$9 sm:$0xff] %v6127
    %v6378 = vld [vmem:[#allocation1] sm:$0xff]
    %6379 = vst [vmem:[#allocation1] ss:$9 sm:$0xff] %v5710
    %6380 = vst [vmem:[%s6283] ss:$9 sm:$0xff] %v6128
    %6381 = vst [vmem:[%s6285] ss:$9 sm:$0xff] %v6129
    %6382 = vst [vmem:[%s6287] ss:$9 sm:$0xff] %v6130
    %6383 = vst [vmem:[%s6289] ss:$9 sm:$0xff] %v6131
    %6384 = vst [vmem:[%s6291] ss:$9 sm:$0xff] %v6132
    %6385 = vst [vmem:[%s6293] ss:$9 sm:$0xff] %v6133
    %6386 = vst [vmem:[%s6295] ss:$9 sm:$0xff] %v6134
    %v6387 = vld [vmem:[#allocation1] sm:$0xff]
    %6388 = vst [vmem:[#allocation1] ss:$9 sm:$0xff] %v5725
    %6389 = vst [vmem:[%s6283] ss:$9 sm:$0xff] %v6135
    %6390 = vst [vmem:[%s6285] ss:$9 sm:$0xff] %v6136
    %6391 = vst [vmem:[%s6287] ss:$9 sm:$0xff] %v6137
    %6392 = vst [vmem:[%s6289] ss:$9 sm:$0xff] %v6138
    %6393 = vst [vmem:[%s6291] ss:$9 sm:$0xff] %v6139
    %6394 = vst [vmem:[%s6293] ss:$9 sm:$0xff] %v6140
    %6395 = vst [vmem:[%s6295] ss:$9 sm:$0xff] %v6141
    %v6396 = vld [vmem:[#allocation1] sm:$0xff]
    %6397 = vst [vmem:[#allocation1] ss:$9 sm:$0xff] %v5740
    %6398 = vst [vmem:[%s6283] ss:$9 sm:$0xff] %v6142
    %6399 = vst [vmem:[%s6285] ss:$9 sm:$0xff] %v6143
    %6400 = vst [vmem:[%s6287] ss:$9 sm:$0xff] %v6144
    %6401 = vst [vmem:[%s6289] ss:$9 sm:$0xff] %v6145
    %6402 = vst [vmem:[%s6291] ss:$9 sm:$0xff] %v6146
    %6403 = vst [vmem:[%s6293] ss:$9 sm:$0xff] %v6147
    %6404 = vst [vmem:[%s6295] ss:$9 sm:$0xff] %v6148
    %v6405 = vld [vmem:[#allocation1] sm:$0xff]
    %6406 = vst [vmem:[#allocation1] ss:$9 sm:$0xff] %v5755
    %6407 = vst [vmem:[%s6283] ss:$9 sm:$0xff] %v6149
    %6408 = vst [vmem:[%s6285] ss:$9 sm:$0xff] %v6150
    %6409 = vst [vmem:[%s6287] ss:$9 sm:$0xff] %v6151
    %6410 = vst [vmem:[%s6289] ss:$9 sm:$0xff] %v6152
    %6411 = vst [vmem:[%s6291] ss:$9 sm:$0xff] %v6153
    %6412 = vst [vmem:[%s6293] ss:$9 sm:$0xff] %v6154
    %6413 = vst [vmem:[%s6295] ss:$9 sm:$0xff] %v6155
    %v6414 = vld [vmem:[#allocation1] sm:$0xff]
    %6415 = vst [vmem:[#allocation1] ss:$9 sm:$0xff] %v5770
    %6416 = vst [vmem:[%s6283] ss:$9 sm:$0xff] %v6156
    %6417 = vst [vmem:[%s6285] ss:$9 sm:$0xff] %v6157
    %6418 = vst [vmem:[%s6287] ss:$9 sm:$0xff] %v6158
    %6419 = vst [vmem:[%s6289] ss:$9 sm:$0xff] %v6159
    %6420 = vst [vmem:[%s6291] ss:$9 sm:$0xff] %v6160
    %6421 = vst [vmem:[%s6293] ss:$9 sm:$0xff] %v6161
    %6422 = vst [vmem:[%s6295] ss:$9 sm:$0xff] %v6162
    %v6423 = vld [vmem:[#allocation1] sm:$0xff]
    %6424 = vst [vmem:[#allocation1] ss:$9 sm:$0xff] %v5785
    %6425 = vst [vmem:[%s6283] ss:$9 sm:$0xff] %v6163
    %6426 = vst [vmem:[%s6285] ss:$9 sm:$0xff] %v6164
    %6427 = vst [vmem:[%s6287] ss:$9 sm:$0xff] %v6165
    %6428 = vst [vmem:[%s6289] ss:$9 sm:$0xff] %v6166
    %6429 = vst [vmem:[%s6291] ss:$9 sm:$0xff] %v6167
    %6430 = vst [vmem:[%s6293] ss:$9 sm:$0xff] %v6168
    %6431 = vst [vmem:[%s6295] ss:$9 sm:$0xff] %v6169
    %v6432 = vld [vmem:[#allocation1] sm:$0xff]
    %6433 = vst [vmem:[#allocation1] ss:$9 sm:$0xff] %v5800
    %6434 = vst [vmem:[%s6283] ss:$9 sm:$0xff] %v6170
    %6435 = vst [vmem:[%s6285] ss:$9 sm:$0xff] %v6171
    %6436 = vst [vmem:[%s6287] ss:$9 sm:$0xff] %v6172
    %6437 = vst [vmem:[%s6289] ss:$9 sm:$0xff] %v6173
    %6438 = vst [vmem:[%s6291] ss:$9 sm:$0xff] %v6174
    %6439 = vst [vmem:[%s6293] ss:$9 sm:$0xff] %v6175
    %6440 = vst [vmem:[%s6295] ss:$9 sm:$0xff] %v6176
    %v6441 = vld [vmem:[#allocation1] sm:$0xff]
    %6442 = vst [vmem:[#allocation1] ss:$9 sm:$0xff] %v5815
    %6443 = vst [vmem:[%s6283] ss:$9 sm:$0xff] %v6177
    %6444 = vst [vmem:[%s6285] ss:$9 sm:$0xff] %v6178
    %6445 = vst [vmem:[%s6287] ss:$9 sm:$0xff] %v6179
    %6446 = vst [vmem:[%s6289] ss:$9 sm:$0xff] %v6180
    %6447 = vst [vmem:[%s6291] ss:$9 sm:$0xff] %v6181
    %6448 = vst [vmem:[%s6293] ss:$9 sm:$0xff] %v6182
    %6449 = vst [vmem:[%s6295] ss:$9 sm:$0xff] %v6183
    %v6450 = vld [vmem:[#allocation1] sm:$0xff]
    %6451 = vst [vmem:[#allocation1] ss:$9 sm:$0xff] %v5830
    %6452 = vst [vmem:[%s6283] ss:$9 sm:$0xff] %v6184
    %6453 = vst [vmem:[%s6285] ss:$9 sm:$0xff] %v6185
    %6454 = vst [vmem:[%s6287] ss:$9 sm:$0xff] %v6186
    %6455 = vst [vmem:[%s6289] ss:$9 sm:$0xff] %v6187
    %6456 = vst [vmem:[%s6291] ss:$9 sm:$0xff] %v6188
    %6457 = vst [vmem:[%s6293] ss:$9 sm:$0xff] %v6189
    %6458 = vst [vmem:[%s6295] ss:$9 sm:$0xff] %v6190
    %v6459 = vld [vmem:[#allocation1] sm:$0xff]
    %6460 = vst [vmem:[#allocation1] ss:$9 sm:$0xff] %v5845
    %6461 = vst [vmem:[%s6283] ss:$9 sm:$0xff] %v6191
    %6462 = vst [vmem:[%s6285] ss:$9 sm:$0xff] %v6192
    %6463 = vst [vmem:[%s6287] ss:$9 sm:$0xff] %v6193
    %6464 = vst [vmem:[%s6289] ss:$9 sm:$0xff] %v6194
    %6465 = vst [vmem:[%s6291] ss:$9 sm:$0xff] %v6195
    %6466 = vst [vmem:[%s6293] ss:$9 sm:$0xff] %v6196
    %6467 = vst [vmem:[%s6295] ss:$9 sm:$0xff] %v6197
    %v6468 = vld [vmem:[#allocation1] sm:$0xff]
    %6469 = vst [vmem:[#allocation1] ss:$9 sm:$0xff] %v5860
    %6470 = vst [vmem:[%s6283] ss:$9 sm:$0xff] %v6198
    %6471 = vst [vmem:[%s6285] ss:$9 sm:$0xff] %v6199
    %6472 = vst [vmem:[%s6287] ss:$9 sm:$0xff] %v6200
    %6473 = vst [vmem:[%s6289] ss:$9 sm:$0xff] %v6201
    %6474 = vst [vmem:[%s6291] ss:$9 sm:$0xff] %v6202
    %6475 = vst [vmem:[%s6293] ss:$9 sm:$0xff] %v6203
    %6476 = vst [vmem:[%s6295] ss:$9 sm:$0xff] %v6204
    %v6477 = vld [vmem:[#allocation1] sm:$0xff]
    %6478 = vst [vmem:[#allocation1] ss:$9 sm:$0xff] %v5875
    %6479 = vst [vmem:[%s6283] ss:$9 sm:$0xff] %v6205
    %6480 = vst [vmem:[%s6285] ss:$9 sm:$0xff] %v6206
    %6481 = vst [vmem:[%s6287] ss:$9 sm:$0xff] %v6207
    %6482 = vst [vmem:[%s6289] ss:$9 sm:$0xff] %v6208
    %6483 = vst [vmem:[%s6291] ss:$9 sm:$0xff] %v6209
    %6484 = vst [vmem:[%s6293] ss:$9 sm:$0xff] %v6210
    %6485 = vst [vmem:[%s6295] ss:$9 sm:$0xff] %v6211
    %v6486 = vld [vmem:[#allocation1] sm:$0xff]
    %6487 = vst [vmem:[#allocation1] ss:$9 sm:$0xff] %v5890
    %6488 = vst [vmem:[%s6283] ss:$9 sm:$0xff] %v6212
    %6489 = vst [vmem:[%s6285] ss:$9 sm:$0xff] %v6213
    %6490 = vst [vmem:[%s6287] ss:$9 sm:$0xff] %v6214
    %6491 = vst [vmem:[%s6289] ss:$9 sm:$0xff] %v6215
    %6492 = vst [vmem:[%s6291] ss:$9 sm:$0xff] %v6216
    %6493 = vst [vmem:[%s6293] ss:$9 sm:$0xff] %v6217
    %6494 = vst [vmem:[%s6295] ss:$9 sm:$0xff] %v6218
    %v6495 = vld [vmem:[#allocation1] sm:$0xff]
    %6496 = vst [vmem:[#allocation1] ss:$9 sm:$0xff] %v5905
    %6497 = vst [vmem:[%s6283] ss:$9 sm:$0xff] %v6219
    %6498 = vst [vmem:[%s6285] ss:$9 sm:$0xff] %v6220
    %6499 = vst [vmem:[%s6287] ss:$9 sm:$0xff] %v6221
    %6500 = vst [vmem:[%s6289] ss:$9 sm:$0xff] %v6222
    %6501 = vst [vmem:[%s6291] ss:$9 sm:$0xff] %v6223
    %6502 = vst [vmem:[%s6293] ss:$9 sm:$0xff] %v6224
    %6503 = vst [vmem:[%s6295] ss:$9 sm:$0xff] %v6225
    %v6504 = vld [vmem:[#allocation1] sm:$0xff]
    %6505 = vst [vmem:[#allocation1] ss:$9 sm:$0xff] %v5920
    %6506 = vst [vmem:[%s6283] ss:$9 sm:$0xff] %v6226
    %6507 = vst [vmem:[%s6285] ss:$9 sm:$0xff] %v6227
    %6508 = vst [vmem:[%s6287] ss:$9 sm:$0xff] %v6228
    %6509 = vst [vmem:[%s6289] ss:$9 sm:$0xff] %v6229
    %6510 = vst [vmem:[%s6291] ss:$9 sm:$0xff] %v6230
    %6511 = vst [vmem:[%s6293] ss:$9 sm:$0xff] %v6231
    %6512 = vst [vmem:[%s6295] ss:$9 sm:$0xff] %v6232
    %v6513 = vld [vmem:[#allocation1] sm:$0xff]
    %6514 = vst [vmem:[#allocation1] ss:$9 sm:$0xff] %v5935
    %6515 = vst [vmem:[%s6283] ss:$9 sm:$0xff] %v6233
    %6516 = vst [vmem:[%s6285] ss:$9 sm:$0xff] %v6234
    %6517 = vst [vmem:[%s6287] ss:$9 sm:$0xff] %v6235
    %6518 = vst [vmem:[%s6289] ss:$9 sm:$0xff] %v6236
    %6519 = vst [vmem:[%s6291] ss:$9 sm:$0xff] %v6237
    %6520 = vst [vmem:[%s6293] ss:$9 sm:$0xff] %v6238
    %6521 = vst [vmem:[%s6295] ss:$9 sm:$0xff] %v6239
    %v6522 = vld [vmem:[#allocation1] sm:$0xff]
    %6523 = vst [vmem:[#allocation1] ss:$9 sm:$0xff] %v5950
    %6524 = vst [vmem:[%s6283] ss:$9 sm:$0xff] %v6240
    %6525 = vst [vmem:[%s6285] ss:$9 sm:$0xff] %v6241
    %6526 = vst [vmem:[%s6287] ss:$9 sm:$0xff] %v6242
    %6527 = vst [vmem:[%s6289] ss:$9 sm:$0xff] %v6243
    %6528 = vst [vmem:[%s6291] ss:$9 sm:$0xff] %v6244
    %6529 = vst [vmem:[%s6293] ss:$9 sm:$0xff] %v6245
    %6530 = vst [vmem:[%s6295] ss:$9 sm:$0xff] %v6246
    %v6531 = vld [vmem:[#allocation1] sm:$0xff]
    %6532 = vst [vmem:[#allocation1] ss:$9 sm:$0xff] %v5965
    %6533 = vst [vmem:[%s6283] ss:$9 sm:$0xff] %v6247
    %6534 = vst [vmem:[%s6285] ss:$9 sm:$0xff] %v6248
    %6535 = vst [vmem:[%s6287] ss:$9 sm:$0xff] %v6249
    %6536 = vst [vmem:[%s6289] ss:$9 sm:$0xff] %v6250
    %6537 = vst [vmem:[%s6291] ss:$9 sm:$0xff] %v6251
    %6538 = vst [vmem:[%s6293] ss:$9 sm:$0xff] %v6252
    %6539 = vst [vmem:[%s6295] ss:$9 sm:$0xff] %v6253
    %v6540 = vld [vmem:[#allocation1] sm:$0xff]
    %6541 = vst [vmem:[#allocation1] ss:$9 sm:$0xff] %v5980
    %6542 = vst [vmem:[%s6283] ss:$9 sm:$0xff] %v6254
    %6543 = vst [vmem:[%s6285] ss:$9 sm:$0xff] %v6255
    %6544 = vst [vmem:[%s6287] ss:$9 sm:$0xff] %v6256
    %6545 = vst [vmem:[%s6289] ss:$9 sm:$0xff] %v6257
    %6546 = vst [vmem:[%s6291] ss:$9 sm:$0xff] %v6258
    %6547 = vst [vmem:[%s6293] ss:$9 sm:$0xff] %v6259
    %6548 = vst [vmem:[%s6295] ss:$9 sm:$0xff] %v6260
    %v6549 = vld [vmem:[#allocation1] sm:$0xff]
    %6550 = vst [vmem:[#allocation1] ss:$9 sm:$0xff] %v5995
    %6551 = vst [vmem:[%s6283] ss:$9 sm:$0xff] %v6261
    %6552 = vst [vmem:[%s6285] ss:$9 sm:$0xff] %v6262
    %6553 = vst [vmem:[%s6287] ss:$9 sm:$0xff] %v6263
    %6554 = vst [vmem:[%s6289] ss:$9 sm:$0xff] %v6264
    %6555 = vst [vmem:[%s6291] ss:$9 sm:$0xff] %v6265
    %6556 = vst [vmem:[%s6293] ss:$9 sm:$0xff] %v6266
    %6557 = vst [vmem:[%s6295] ss:$9 sm:$0xff] %v6267
    %v6558 = vld [vmem:[#allocation1] sm:$0xff]
    %6559 = vst [vmem:[#allocation1] ss:$9 sm:$0xff] %v6010
    %6560 = vst [vmem:[%s6283] ss:$9 sm:$0xff] %v6268
    %6561 = vst [vmem:[%s6285] ss:$9 sm:$0xff] %v6269
    %6562 = vst [vmem:[%s6287] ss:$9 sm:$0xff] %v6270
    %6563 = vst [vmem:[%s6289] ss:$9 sm:$0xff] %v6271
    %6564 = vst [vmem:[%s6291] ss:$9 sm:$0xff] %v6272
    %6565 = vst [vmem:[%s6293] ss:$9 sm:$0xff] %v6273
    %6566 = vst [vmem:[%s6295] ss:$9 sm:$0xff] %v6274
    %v6567 = vld [vmem:[#allocation1] sm:$0xff]
    %6568 = vst [vmem:[#allocation1] ss:$9 sm:$0xff] %v6025
    %6569 = vst [vmem:[%s6283] ss:$9 sm:$0xff] %v6275
    %6570 = vst [vmem:[%s6285] ss:$9 sm:$0xff] %v6276
    %6571 = vst [vmem:[%s6287] ss:$9 sm:$0xff] %v6277
    %6572 = vst [vmem:[%s6289] ss:$9 sm:$0xff] %v6278
    %6573 = vst [vmem:[%s6291] ss:$9 sm:$0xff] %v6279
    %6574 = vst [vmem:[%s6293] ss:$9 sm:$0xff] %v6280
    %6575 = vst [vmem:[%s6295] ss:$9 sm:$0xff] %v6281
    %v6576 = vld [vmem:[#allocation1] sm:$0xff]
    %6577 = vset.pattern.permute.xlu0 0
    %6578 = vperm.xlu0 %6577, %v6297
    %v6579 = vpop.permute.xlu0 %6578
    %6580 = vset.pattern.permute.xlu0 0
    %6581 = vperm.xlu0 %6580, %v6306
    %v6582 = vpop.permute.xlu0 %6581
    %6583 = vset.pattern.permute.xlu0 0
    %6584 = vperm.xlu0 %6583, %v6315
    %v6585 = vpop.permute.xlu0 %6584
    %6586 = vset.pattern.permute.xlu0 0
    %6587 = vperm.xlu0 %6586, %v6324
    %v6588 = vpop.permute.xlu0 %6587
    %6589 = vset.pattern.permute.xlu0 0
    %6590 = vperm.xlu0 %6589, %v6333
    %v6591 = vpop.permute.xlu0 %6590
    %6592 = vset.pattern.permute.xlu0 0
    %6593 = vperm.xlu0 %6592, %v6342
    %v6594 = vpop.permute.xlu0 %6593
    %6595 = vset.pattern.permute.xlu0 0
    %6596 = vperm.xlu0 %6595, %v6351
    %v6597 = vpop.permute.xlu0 %6596
    %6598 = vset.pattern.permute.xlu0 0
    %6599 = vperm.xlu0 %6598, %v6360
    %v6600 = vpop.permute.xlu0 %6599
    %6601 = vset.pattern.permute.xlu0 0
    %6602 = vperm.xlu0 %6601, %v6369
    %v6603 = vpop.permute.xlu0 %6602
    %6604 = vset.pattern.permute.xlu0 0
    %6605 = vperm.xlu0 %6604, %v6378
    %v6606 = vpop.permute.xlu0 %6605
    %6607 = vset.pattern.permute.xlu0 0
    %6608 = vperm.xlu0 %6607, %v6387
    %v6609 = vpop.permute.xlu0 %6608
    %6610 = vset.pattern.permute.xlu0 0
    %6611 = vperm.xlu0 %6610, %v6396
    %v6612 = vpop.permute.xlu0 %6611
    %6613 = vset.pattern.permute.xlu0 0
    %6614 = vperm.xlu0 %6613, %v6405
    %v6615 = vpop.permute.xlu0 %6614
    %6616 = vset.pattern.permute.xlu0 0
    %6617 = vperm.xlu0 %6616, %v6414
    %v6618 = vpop.permute.xlu0 %6617
    %6619 = vset.pattern.permute.xlu0 0
    %6620 = vperm.xlu0 %6619, %v6423
    %v6621 = vpop.permute.xlu0 %6620
    %6622 = vset.pattern.permute.xlu0 0
    %6623 = vperm.xlu0 %6622, %v6432
    %v6624 = vpop.permute.xlu0 %6623
    %6625 = vset.pattern.permute.xlu0 0
    %6626 = vperm.xlu0 %6625, %v6441
    %v6627 = vpop.permute.xlu0 %6626
    %6628 = vset.pattern.permute.xlu0 0
    %6629 = vperm.xlu0 %6628, %v6450
    %v6630 = vpop.permute.xlu0 %6629
    %6631 = vset.pattern.permute.xlu0 0
    %6632 = vperm.xlu0 %6631, %v6459
    %v6633 = vpop.permute.xlu0 %6632
    %6634 = vset.pattern.permute.xlu0 0
    %6635 = vperm.xlu0 %6634, %v6468
    %v6636 = vpop.permute.xlu0 %6635
    %6637 = vset.pattern.permute.xlu0 0
    %6638 = vperm.xlu0 %6637, %v6477
    %v6639 = vpop.permute.xlu0 %6638
    %6640 = vset.pattern.permute.xlu0 0
    %6641 = vperm.xlu0 %6640, %v6486
    %v6642 = vpop.permute.xlu0 %6641
    %6643 = vset.pattern.permute.xlu0 0
    %6644 = vperm.xlu0 %6643, %v6495
    %v6645 = vpop.permute.xlu0 %6644
    %6646 = vset.pattern.permute.xlu0 0
    %6647 = vperm.xlu0 %6646, %v6504
    %v6648 = vpop.permute.xlu0 %6647
    %6649 = vset.pattern.permute.xlu0 0
    %6650 = vperm.xlu0 %6649, %v6513
    %v6651 = vpop.permute.xlu0 %6650
    %6652 = vset.pattern.permute.xlu0 0
    %6653 = vperm.xlu0 %6652, %v6522
    %v6654 = vpop.permute.xlu0 %6653
    %6655 = vset.pattern.permute.xlu0 0
    %6656 = vperm.xlu0 %6655, %v6531
    %v6657 = vpop.permute.xlu0 %6656
    %6658 = vset.pattern.permute.xlu0 0
    %6659 = vperm.xlu0 %6658, %v6540
    %v6660 = vpop.permute.xlu0 %6659
    %6661 = vset.pattern.permute.xlu0 0
    %6662 = vperm.xlu0 %6661, %v6549
    %v6663 = vpop.permute.xlu0 %6662
    %6664 = vset.pattern.permute.xlu0 0
    %6665 = vperm.xlu0 %6664, %v6558
    %v6666 = vpop.permute.xlu0 %6665
    %6667 = vset.pattern.permute.xlu0 0
    %6668 = vperm.xlu0 %6667, %v6567
    %v6669 = vpop.permute.xlu0 %6668
    %6670 = vset.pattern.permute.xlu0 0
    %6671 = vperm.xlu0 %6670, %v6576
    %v6672 = vpop.permute.xlu0 %6671
    %v6673 = vlaneseq
    %v6674 = vand.u32 %v6673, 127
    %v6675 = vperm.slane %v6579, %v6674
    %v6676 = vadd.s32 %v6674, 4294967288
    %v6677 = vperm.slane %v6582, %v6676
    %vm6678 = vcmask 130112
    %v6679 = vsel %vm6678, %v6677, %v6675
    %v6680 = vadd.s32 %v6674, 4294967280
    %v6681 = vperm.slane %v6585, %v6680
    %vm6682 = vcmask 195712
    %v6683 = vsel %vm6682, %v6681, %v6679
    %v6684 = vadd.s32 %v6674, 4294967272
    %v6685 = vperm.slane %v6588, %v6684
    %vm6686 = vcmask 261312
    %v6687 = vsel %vm6686, %v6685, %v6683
    %v6688 = vadd.s32 %v6674, 4294967264
    %v6689 = vperm.slane %v6591, %v6688
    %vm6690 = vcmask 326912
    %v6691 = vsel %vm6690, %v6689, %v6687
    %v6692 = vadd.s32 %v6674, 4294967256
    %v6693 = vperm.slane %v6594, %v6692
    %vm6694 = vcmask 392512
    %v6695 = vsel %vm6694, %v6693, %v6691
    %v6696 = vadd.s32 %v6674, 4294967248
    %v6697 = vperm.slane %v6597, %v6696
    %vm6698 = vcmask 458112
    %v6699 = vsel %vm6698, %v6697, %v6695
    %v6700 = vadd.s32 %v6674, 4294967240
    %v6701 = vperm.slane %v6600, %v6700
    %vm6702 = vcmask 523712
    %v6703 = vsel %vm6702, %v6701, %v6699
    %v6704 = vadd.s32 %v6674, 4294967232
    %v6705 = vperm.slane %v6603, %v6704
    %vm6706 = vcmask 589312
    %v6707 = vsel %vm6706, %v6705, %v6703
    %v6708 = vadd.s32 %v6674, 4294967224
    %v6709 = vperm.slane %v6606, %v6708
    %vm6710 = vcmask 654912
    %v6711 = vsel %vm6710, %v6709, %v6707
    %v6712 = vadd.s32 %v6674, 4294967216
    %v6713 = vperm.slane %v6609, %v6712
    %vm6714 = vcmask 720512
    %v6715 = vsel %vm6714, %v6713, %v6711
    %v6716 = vadd.s32 %v6674, 4294967208
    %v6717 = vperm.slane %v6612, %v6716
    %vm6718 = vcmask 786112
    %v6719 = vsel %vm6718, %v6717, %v6715
    %v6720 = vadd.s32 %v6674, 4294967200
    %v6721 = vperm.slane %v6615, %v6720
    %vm6722 = vcmask 851712
    %v6723 = vsel %vm6722, %v6721, %v6719
    %v6724 = vadd.s32 %v6674, 4294967192
    %v6725 = vperm.slane %v6618, %v6724
    %vm6726 = vcmask 917312
    %v6727 = vsel %vm6726, %v6725, %v6723
    %v6728 = vadd.s32 %v6674, 4294967184
    %v6729 = vperm.slane %v6621, %v6728
    %vm6730 = vcmask 982912
    %v6731 = vsel %vm6730, %v6729, %v6727
    %v6732 = vadd.s32 %v6674, 4294967176
    %v6733 = vperm.slane %v6624, %v6732
    %vm6734 = vcmask 1048512
    %v6735 = vsel %vm6734, %v6733, %v6731
    %v6736 = vperm.slane %v6627, %v6674
    %v6737 = vperm.slane %v6630, %v6676
    %v6738 = vsel %vm6678, %v6737, %v6736
    %v6739 = vperm.slane %v6633, %v6680
    %v6740 = vsel %vm6682, %v6739, %v6738
    %v6741 = vperm.slane %v6636, %v6684
    %v6742 = vsel %vm6686, %v6741, %v6740
    %v6743 = vperm.slane %v6639, %v6688
    %v6744 = vsel %vm6690, %v6743, %v6742
    %v6745 = vperm.slane %v6642, %v6692
    %v6746 = vsel %vm6694, %v6745, %v6744
    %v6747 = vperm.slane %v6645, %v6696
    %v6748 = vsel %vm6698, %v6747, %v6746
    %v6749 = vperm.slane %v6648, %v6700
    %v6750 = vsel %vm6702, %v6749, %v6748
    %v6751 = vperm.slane %v6651, %v6704
    %v6752 = vsel %vm6706, %v6751, %v6750
    %v6753 = vperm.slane %v6654, %v6708
    %v6754 = vsel %vm6710, %v6753, %v6752
    %v6755 = vperm.slane %v6657, %v6712
    %v6756 = vsel %vm6714, %v6755, %v6754
    %v6757 = vperm.slane %v6660, %v6716
    %v6758 = vsel %vm6718, %v6757, %v6756
    %v6759 = vperm.slane %v6663, %v6720
    %v6760 = vsel %vm6722, %v6759, %v6758
    %v6761 = vperm.slane %v6666, %v6724
    %v6762 = vsel %vm6726, %v6761, %v6760
    %v6763 = vperm.slane %v6669, %v6728
    %v6764 = vsel %vm6730, %v6763, %v6762
    %v6765 = vperm.slane %v6672, %v6732
    %v6766 = vsel %vm6734, %v6765, %v6764
    %v6767 = vrot.slane %v6766, 7
    %vm6768 = vcmask 1040384
    %v6769 = vsel %vm6768, %v6735, %v6767
    %v6771 = vlaneseq
    %vm6772 = vcmp.ge.s32.totalorder %v6771, 0
    %vm6773 = vcmp.lt.s32.totalorder %v6771, 256
    %vm6774 = vmand %vm6772, %vm6773
    %6775 = vst.msk [vmem:[#allocation5] sm:$0x3] %vm6774, %v6769
    // Predicated region
    $region26: #{tpu_custom_call.1} parent=1 // pred_check
      _
    $region27: #{tpu_custom_call.1} parent=1 // pred_check_branch
      %6777 = sbr.rel (0) target = $region29
    $region28: #{tpu_custom_call.1} parent=1 // pred_region
      %6779 = vsyncadd [#allocation4], 0
      %s6781 = sshll.u32 [#allocation5], 4
      %s6782 = int_to_ptr.vmem [resolvable:$true] %s6781
      %s6783 = sshll.u32 %s5, 4
      %s6784 = int_to_ptr.hbm [resolvable:$true] %s6783
      %6786 = dma.vmem_to_hbm [thread:$0]  %s6782, 32, %s6784, [#allocation4]
    $region29: #{tpu_custom_call.1} parent=1 // pred_fallthru
      _
    // Predicated region
    $region30: #{tpu_custom_call.1} parent=1 // pred_check
      _
    $region31: #{tpu_custom_call.1} parent=1 // pred_check_branch
      %6788 = sbr.rel (0) target = $region33
    $region32: #{tpu_custom_call.1} parent=1 // pred_region
      %6790 = dma.done [#allocation4], 32
    $region33: #{tpu_custom_call.1} parent=1 // pred_fallthru
      _
    %6791 = vsyncpa [#allocation3], 1
    %6792 = vsyncpa [#allocation4], 1

</llo_original>
